<compile_context>
chip_gen: v6e
topology: v6e:2x2x1
jax: 0.10.0
libtpu: 0.0.40
codegen_flags: <defaults>
</compile_context>

<pallas_src>
import functools

import jax
import jax.numpy as jnp
import numpy as np
from jax.experimental import pallas as pl
from jax.experimental.pallas import tpu as pltpu


# ---------------------------------------------------------------------------
# Pallas kernels
# ---------------------------------------------------------------------------
def _linear_kernel(x_ref, w_ref, b_ref, o_ref):
    """make_noise: out = x @ w + b, one VMEM-resident matmul (bf16 in, f32 acc)."""
    acc = jnp.dot(x_ref[...].astype(jnp.bfloat16), w_ref[...],
                  preferred_element_type=jnp.float32)
    o_ref[...] = (acc + b_ref[...]).astype(o_ref.dtype)


def _im2col3x3(x_flat, H, W):
    """im2col for a 3x3 / stride-1 / zero-pad-1 conv on a row-major flattened
    (H*W, C) channels-last image.  Taps are whole-row shifts + a column mask, so
    only 2-D slices/concats are used inside the kernel.  Returns (H*W, 9*C) with
    tap order (kh, kw) matching w.reshape(9*C, Cout) of an HWIO weight."""
    M, C = x_flat.shape
    col = jax.lax.broadcasted_iota(jnp.int32, (W, C), 0)      # w coordinate, one image row
    col = jnp.concatenate([col] * H, axis=0)                  # (H*W, C)
    keep_left = col >= 1                                      # column w-1 exists
    keep_right = col <= W - 2                                 # column w+1 exists
    taps = []
    for dh in (-1, 0, 1):
        for dw in (-1, 0, 1):
            s = dh * W + dw                                   # flat-row offset of this tap
            if s > 0:
                t = jnp.concatenate(
                    [x_flat[s:], jnp.zeros((s, C), x_flat.dtype)], axis=0)
            elif s < 0:
                t = jnp.concatenate(
                    [jnp.zeros((-s, C), x_flat.dtype), x_flat[:s]], axis=0)
            else:
                t = x_flat
            if dw == -1:
                t = jnp.where(keep_left, t, 0.0)
            elif dw == 1:
                t = jnp.where(keep_right, t, 0.0)
            taps.append(t)
    return jnp.concatenate(taps, axis=-1)                     # (H*W, 9*C)


def _conv3x3(x_flat, H, W, w_ref, b_ref):
    """3x3 same conv as ONE im2col matmul with K = 9*Cin. Returns (H*W, Cout) f32."""
    cols = _im2col3x3(x_flat, H, W).astype(jnp.bfloat16)
    return jnp.dot(cols, w_ref[...],
                   preferred_element_type=jnp.float32) + b_ref[...]


def _gen_block_kernel(*refs, H, W, n_skips, has_shortcut, is_final):
    """Fused tnn.AutoGANGenBlock (+ optional to_rgb head) for one batch element."""
    refs = list(refs)
    x_ref = refs.pop(0)                                   # (1, H*W, Cin)
    skip_refs = [refs.pop(0) for _ in range(n_skips)]     # (1, Hs*Ws, Cs)
    u_ref = refs.pop(0)                                   # (Ho*Wo, H*W) upsample matrix
    us_refs = [refs.pop(0) for _ in range(n_skips)]       # per-skip upsample matrices
    w1_ref = refs.pop(0)
    b1_ref = refs.pop(0)
    w2_ref = refs.pop(0)
    b2_ref = refs.pop(0)
    sc_ref = refs.pop(0) if has_shortcut else None
    if n_skips:
        wsk_ref = refs.pop(0)
        bsk_ref = refs.pop(0)
    if is_final:
        wrgb_ref = refs.pop(0)
        brgb_ref = refs.pop(0)
    outs = refs                                           # remaining refs are outputs

    Ho, Wo = 2 * H, 2 * W

    # 2x upsample (exact PyTorch nearest / bilinear align_corners=False) as a matmul.
    up = jnp.dot(u_ref[...], x_ref[0], preferred_element_type=jnp.float32)  # (Mo, Cin)

    # Shortcut branch: 1x1 conv (no bias) if the channel count changes.
    if has_shortcut:
        x_skip = jnp.dot(up.astype(jnp.bfloat16), sc_ref[...],
                         preferred_element_type=jnp.float32)
    else:
        x_skip = up

    # conv1 (3x3) + ReLU.
    h_mid = jnp.maximum(_conv3x3(up, Ho, Wo, w1_ref, b1_ref), 0.0)

    # Fused skip connections: resize each skip (matmul), concat channels, one 1x1.
    h = h_mid
    if n_skips:
        sk_up = [jnp.dot(us_refs[j][...], skip_refs[j][0],
                         preferred_element_type=jnp.float32)
                 for j in range(n_skips)]
        sk_cat = sk_up[0] if n_skips == 1 else jnp.concatenate(sk_up, axis=-1)
        h = h + (jnp.dot(sk_cat.astype(jnp.bfloat16), wsk_ref[...],
                         preferred_element_type=jnp.float32) + bsk_ref[...])

    # conv2 (3x3) + residual shortcut.
    out = _conv3x3(h, Ho, Wo, w2_ref, b2_ref) + x_skip

    if is_final:
        # to_rgb: relu(leaky_relu(x, 0.2)) == relu(x); then conv3x3; then sigmoid.
        y = jnp.maximum(out, 0.0)
        rgb = _conv3x3(y, Ho, Wo, wrgb_ref, brgb_ref)
        rgb = 1.0 / (1.0 + jnp.exp(-rgb))                 # exact sigmoid -> stays in [0, 1]
        outs[0][0] = rgb.astype(outs[0].dtype)            # (Ho*Wo, out_ch)
    else:
        outs[0][0] = out.astype(outs[0].dtype)            # block output
        outs[1][0] = h_mid.astype(outs[1].dtype)          # x_mid, used as a future skip


# ---------------------------------------------------------------------------
# Pallas wrappers
# ---------------------------------------------------------------------------
def linear(x, w, b):
    """x:(M,K) @ w:(K,N) + b, whole problem in one VMEM tile."""
    M, K = x.shape
    N = w.shape[1]
    return pl.pallas_call(
        _linear_kernel,
        out_shape=jax.ShapeDtypeStruct((M, N), jnp.float32),
        grid=(1,),
        in_specs=[pl.BlockSpec((M, K), lambda i: (0, 0)),
                  pl.BlockSpec((K, N), lambda i: (0, 0)),
                  pl.BlockSpec((1, N), lambda i: (0, 0))],
        out_specs=pl.BlockSpec((M, N), lambda i: (0, 0)),
    )(x, w.astype(jnp.bfloat16), b.reshape(1, N).astype(jnp.float32))


def _interp_matrix_1d(out_size, in_size, mode):
    """1-D interpolation matrix matching F.interpolate(nearest / bilinear,
    align_corners=False) for an integer output size."""
    U = np.zeros((out_size, in_size), np.float32)
    rows = np.arange(out_size)
    if mode == "nearest":
        src = (rows * in_size) // out_size
        U[rows, src] = 1.0
    else:
        c = (rows.astype(np.float64) + 0.5) * (in_size / out_size) - 0.5
        c = np.clip(c, 0.0, in_size - 1.0)
        lo = np.floor(c).astype(np.int64)
        hi = np.minimum(lo + 1, in_size - 1)
        frac = (c - lo).astype(np.float32)
        U[rows, lo] += 1.0 - frac
        U[rows, hi] += frac
    return U


def _upsample_matrix(Ho, Wo, Hi, Wi, mode):
    """(Ho*Wo, Hi*Wi) matrix U such that U @ x_flat == F.interpolate(x, (Ho, Wo))."""
    return np.kron(_interp_matrix_1d(Ho, Hi, mode),
                   _interp_matrix_1d(Wo, Wi, mode)).astype(np.float32)


def gen_block(x, skips, p, mode, final=None):
    """Fused AutoGANGenBlock forward as a single pallas_call (grid over batch).

    x: (B, H, W, Cin) channels-last.  skips: list of channels-last activations.
    final: None, or (rgb_w, rgb_b) to additionally fuse the to_rgb head.
    Returns (out, x_mid) channels-last, or rgb maps (B, Ho*Wo, out_ch)."""
    B, H, W, cin = x.shape
    cout = int(p["conv1_b"].shape[0])
    Ho, Wo = 2 * H, 2 * W
    Mi, Mo = H * W, Ho * Wo
    bf16, f32 = jnp.bfloat16, jnp.float32
    n_skips = len(skips)
    has_shortcut = p["shortcut_w"] is not None
    is_final = final is not None

    batch_map = lambda n: (n, 0, 0)
    whole_map = lambda n: (0, 0)

    args, in_specs = [], []

    def add_batched(arr):                 # (B, M, C) arrays, sliced per grid step
        args.append(arr)
        in_specs.append(pl.BlockSpec((1,) + arr.shape[1:], batch_map))

    def add_whole(arr):                   # small 2-D operands, whole array each step
        args.append(arr)
        in_specs.append(pl.BlockSpec(arr.shape, whole_map))

    # activations (flattened channels-last; XLA reshapes are metadata-only)
    add_batched(x.reshape(B, Mi, cin))
    for sk in skips:
        _, Hs, Ws, Cs = sk.shape
        add_batched(sk.reshape(B, Hs * Ws, Cs))

    # interpolation matrices (exact resize as matmul, built at trace time)
    add_whole(jnp.asarray(_upsample_matrix(Ho, Wo, H, W, mode)))
    for sk in skips:
        _, Hs, Ws, _ = sk.shape
        add_whole(jnp.asarray(_upsample_matrix(Ho, Wo, Hs, Ws, mode)))

    # weights (HWIO -> im2col-ready (9*Cin, Cout); bf16 for the MXU)
    add_whole(p["conv1_w"].reshape(9 * cin, cout).astype(bf16))
    add_whole(p["conv1_b"].reshape(1, cout).astype(f32))
    add_whole(p["conv2_w"].reshape(9 * cout, cout).astype(bf16))
    add_whole(p["conv2_b"].reshape(1, cout).astype(f32))
    if has_shortcut:
        add_whole(p["shortcut_w"].astype(bf16))
    if n_skips:
        wsk = jnp.concatenate([w for w, _ in p["skip_convs"][:n_skips]], axis=0)
        bsk = sum(b for _, b in p["skip_convs"][:n_skips])
        add_whole(wsk.astype(bf16))
        add_whole(bsk.reshape(1, cout).astype(f32))
    out_ch = None
    if is_final:
        rgb_w, rgb_b = final
        out_ch = rgb_w.shape[-1]
        add_whole(rgb_w.reshape(9 * cout, out_ch).astype(bf16))
        add_whole(rgb_b.reshape(1, out_ch).astype(f32))

    if is_final:
        out_shape = jax.ShapeDtypeStruct((B, Mo, out_ch), f32)
        out_specs = pl.BlockSpec((1, Mo, out_ch), batch_map)
    else:
        out_shape = (jax.ShapeDtypeStruct((B, Mo, cout), f32),
                     jax.ShapeDtypeStruct((B, Mo, cout), f32))
        out_specs = (pl.BlockSpec((1, Mo, cout), batch_map),
                     pl.BlockSpec((1, Mo, cout), batch_map))

    kernel = functools.partial(_gen_block_kernel, H=H, W=W, n_skips=n_skips,
                               has_shortcut=has_shortcut, is_final=is_final)
    res = pl.pallas_call(
        kernel,
        out_shape=out_shape,
        grid=(B,),
        in_specs=in_specs,
        out_specs=out_specs,
        # batch elements are independent -> v7x can shard them over its 2 TCs
        compiler_params=pltpu.CompilerParams(dimension_semantics=("parallel",)),
    )(*args)
    if is_final:
        return res
    out_flat, h_flat = res
    return out_flat.reshape(B, Ho, Wo, cout), h_flat.reshape(B, Ho, Wo, cout)


# ---------------------------------------------------------------------------
# Model forward
# ---------------------------------------------------------------------------
def autogan_forward(z, params, n_skip_max=2):
    """AutoGAN.forward: z:(B, in_noise) -> images (B, out_ch, S, S) in NCHW."""
    B = z.shape[0]
    c0 = params["fc_b"].shape[0] // 16
    out_ch = params["rgb_w"].shape[-1]
    blocks = params["blocks"]

    # make_noise.  torch's .view() is channel-major; permute the Linear's columns so
    # its output flattens straight to channels-last (B, 4, 4, c0) with no transpose.
    fc_w = params["fc_w"].reshape(-1, c0, 4, 4).transpose(0, 2, 3, 1).reshape(-1, 16 * c0)
    fc_b = params["fc_b"].reshape(c0, 4, 4).transpose(1, 2, 0).reshape(-1)
    x = linear(z, fc_w, fc_b).reshape(B, 4, 4, c0)

    skips = []
    rgb = None
    for i, p in enumerate(blocks):
        mode = "nearest" if i % 2 == 0 else "bilinear"
        is_last = i == len(blocks) - 1
        final = (params["rgb_w"], params["rgb_b"]) if is_last else None
        res = gen_block(x, skips, p, mode, final=final)
        if is_last:
            rgb = res                                   # (B, S*S, out_ch)
        else:
            x, x_mid = res
            skips = ([x_mid] + skips)[:n_skip_max]

    side = 4 * (1 << len(blocks))
    # tiny final NHWC->NCHW permute; stays inside the jitted XLA program
    return jnp.transpose(rgb, (0, 2, 1)).reshape(B, out_ch, side, side)


# ---------------------------------------------------------------------------
# Deterministic parameter init (shapes from AutoGAN.__init__; synthetic values)
# ---------------------------------------------------------------------------
def init_params(key, arch, in_noise, out_ch, n_skip_max):
    keys = iter(jax.random.split(key, 128))

    def nrm(shape, scale=0.05):
        return scale * jax.random.normal(next(keys), shape, jnp.float32)

    params = {
        "fc_w": nrm((in_noise, 4 * 4 * arch[0])),   # Linear(in_noise, 16*arch[0]) stored (K, N)
        "fc_b": nrm((4 * 4 * arch[0],)),
    }
    blocks = []
    in_ch = arch[0]
    lasts = []
    for out in arch[1:]:
        blk = {
            "conv1_w": nrm((3, 3, in_ch, out)),     # HWIO
            "conv1_b": nrm((out,)),
            "conv2_w": nrm((3, 3, out, out)),
            "conv2_b": nrm((out,)),
            "shortcut_w": nrm((in_ch, out)) if in_ch != out else None,   # 1x1, bias=False
            "skip_convs": [(nrm((ch, out)), nrm((out,))) for ch in lasts],
        }
        blocks.append(blk)
        lasts = ([out] + lasts)[:n_skip_max]
        in_ch = out
    params["blocks"] = blocks
    params["rgb_w"] = nrm((3, 3, arch[-1], out_ch))
    params["rgb_b"] = nrm((out_ch,))
    return params


if __name__ == "__main__":
    arch = [32, 16, 8]           # each block doubles resolution: 4x4 -> 8x8 -> 16x16
    in_noise = 32
    out_ch = 3
    batch = 2
    n_skip_max = 2

    params = init_params(jax.random.PRNGKey(0), arch, in_noise, out_ch, n_skip_max)
    z = jax.random.normal(jax.random.PRNGKey(1), (batch, in_noise), jnp.float32)

    fwd = jax.jit(lambda zz, pp: autogan_forward(zz, pp, n_skip_max=n_skip_max))
    imgs = jax.block_until_ready(fwd(z, params))
    assert imgs.shape == (batch, out_ch, 16, 16), imgs.shape
    assert bool(jnp.all((imgs >= 0.0) & (imgs <= 1.0)))
    print("KERNEL_OK")
</pallas_src>

<mosaic_0001>
module attributes {stable_mosaic.version = 11 : i64} {
  func.func @_linear_kernel(%arg0: i32, %arg1: memref<2x32xf32, #tpu.memory_space<vmem>>, %arg2: memref<32x512xbf16, #tpu.memory_space<vmem>>, %arg3: memref<1x512xf32, #tpu.memory_space<vmem>>, %arg4: memref<2x512xf32, #tpu.memory_space<vmem>>) attributes {dimension_semantics = [#tpu.dimension_semantics<arbitrary>], iteration_bounds = array<i64: 1>, scalar_prefetch = 0 : i64, scratch_operands = 0 : i64, tpu.core_type = #tpu.core_type<tc>, window_params = [{pipeline_mode = #tpu.pipeline_mode<synchronous>, transform_indices = @transform_0, window_bounds = array<i64: 2, 32>}, {pipeline_mode = #tpu.pipeline_mode<synchronous>, transform_indices = @transform_1, window_bounds = array<i64: 32, 512>}, {pipeline_mode = #tpu.pipeline_mode<synchronous>, transform_indices = @transform_2, window_bounds = array<i64: 1, 512>}, {pipeline_mode = #tpu.pipeline_mode<synchronous>, transform_indices = @transform_3, window_bounds = array<i64: 2, 512>}]} {
    %c0 = arith.constant 0 : index
    %c0_0 = arith.constant 0 : index
    %0 = vector.load %arg1[%c0, %c0_0] : memref<2x32xf32, #tpu.memory_space<vmem>>, vector<2x32xf32>
    %1 = arith.truncf %0 : vector<2x32xf32> to vector<2x32xbf16>
    %c0_1 = arith.constant 0 : index
    %c0_2 = arith.constant 0 : index
    %2 = vector.load %arg2[%c0_1, %c0_2] : memref<32x512xbf16, #tpu.memory_space<vmem>>, vector<32x512xbf16>
    %cst = arith.constant dense<0.000000e+00> : vector<2x512xf32>
    %3 = tpu.matmul %1, %2, %cst {dimension_numbers = #tpu.dot_dimension_numbers<[1], [0], [0], [1], [0, 0, 1, 1], [], []>} : vector<2x32xbf16>, vector<32x512xbf16>, vector<2x512xf32> -> vector<2x512xf32>
    %c0_3 = arith.constant 0 : index
    %c0_4 = arith.constant 0 : index
    %4 = vector.load %arg3[%c0_3, %c0_4] : memref<1x512xf32, #tpu.memory_space<vmem>>, vector<1x512xf32>
    %5 = vector.broadcast %4 : vector<1x512xf32> to vector<2x512xf32>
    %6 = arith.addf %3, %5 : vector<2x512xf32>
    %c0_5 = arith.constant 0 : index
    %c0_6 = arith.constant 0 : index
    %7 = vector.load %arg4[%c0_5, %c0_6] : memref<2x512xf32, #tpu.memory_space<vmem>>, vector<2x512xf32>
    tpu.vector_store %arg4[%c0_5, %c0_6], %6 {strides = array<i32>} : memref<2x512xf32, #tpu.memory_space<vmem>>, vector<2x512xf32>,
    return
  }
  func.func @transform_0(%arg0: i32) -> (i32, i32) {
    %c0_i32 = arith.constant 0 : i32
    %c0_i32_0 = arith.constant 0 : i32
    %c0_i32_1 = arith.constant 0 : i32
    return %c0_i32, %c0_i32_0 : i32, i32
  }
  func.func @transform_1(%arg0: i32) -> (i32, i32) {
    %c0_i32 = arith.constant 0 : i32
    %c0_i32_0 = arith.constant 0 : i32
    %c0_i32_1 = arith.constant 0 : i32
    return %c0_i32, %c0_i32_0 : i32, i32
  }
  func.func @transform_2(%arg0: i32) -> (i32, i32) {
    %c0_i32 = arith.constant 0 : i32
    %c0_i32_0 = arith.constant 0 : i32
    %c0_i32_1 = arith.constant 0 : i32
    return %c0_i32, %c0_i32_0 : i32, i32
  }
  func.func @transform_3(%arg0: i32) -> (i32, i32) {
    %c0_i32 = arith.constant 0 : i32
    %c0_i32_0 = arith.constant 0 : i32
    %c0_i32_1 = arith.constant 0 : i32
    return %c0_i32, %c0_i32_0 : i32, i32
  }
}

module attributes {stable_mosaic.version = 11 : i64} {
  func.func @_gen_block_kernel(%arg0: i32, %arg1: memref<1x16x32xf32, #tpu.memory_space<vmem>>, %arg2: memref<64x16xf32, #tpu.memory_space<vmem>>, %arg3: memref<288x16xbf16, #tpu.memory_space<vmem>>, %arg4: memref<1x16xf32, #tpu.memory_space<vmem>>, %arg5: memref<144x16xbf16, #tpu.memory_space<vmem>>, %arg6: memref<1x16xf32, #tpu.memory_space<vmem>>, %arg7: memref<32x16xbf16, #tpu.memory_space<vmem>>, %arg8: memref<1x64x16xf32, #tpu.memory_space<vmem>>, %arg9: memref<1x64x16xf32, #tpu.memory_space<vmem>>) attributes {dimension_semantics = [#tpu.dimension_semantics<parallel>], iteration_bounds = array<i64: 2>, scalar_prefetch = 0 : i64, scratch_operands = 0 : i64, tpu.core_type = #tpu.core_type<tc>, window_params = [{transform_indices = @transform_0, window_bounds = array<i64: 1, 16, 32>}, {pipeline_mode = #tpu.pipeline_mode<synchronous>, transform_indices = @transform_1, window_bounds = array<i64: 64, 16>}, {pipeline_mode = #tpu.pipeline_mode<synchronous>, transform_indices = @transform_2, window_bounds = array<i64: 288, 16>}, {pipeline_mode = #tpu.pipeline_mode<synchronous>, transform_indices = @transform_3, window_bounds = array<i64: 1, 16>}, {pipeline_mode = #tpu.pipeline_mode<synchronous>, transform_indices = @transform_4, window_bounds = array<i64: 144, 16>}, {pipeline_mode = #tpu.pipeline_mode<synchronous>, transform_indices = @transform_5, window_bounds = array<i64: 1, 16>}, {pipeline_mode = #tpu.pipeline_mode<synchronous>, transform_indices = @transform_6, window_bounds = array<i64: 32, 16>}, {transform_indices = @transform_7, window_bounds = array<i64: 1, 64, 16>}, {transform_indices = @transform_8, window_bounds = array<i64: 1, 64, 16>}]} {
    %c0 = arith.constant 0 : index
    %c0_0 = arith.constant 0 : index
    %0 = vector.load %arg2[%c0, %c0_0] : memref<64x16xf32, #tpu.memory_space<vmem>>, vector<64x16xf32>
    %c0_1 = arith.constant 0 : index
    %c0_2 = arith.constant 0 : index
    %c0_3 = arith.constant 0 : index
    %1 = vector.load %arg1[%c0_1, %c0_2, %c0_3] : memref<1x16x32xf32, #tpu.memory_space<vmem>>, vector<1x16x32xf32>
    %2 = vector.shape_cast %1 : vector<1x16x32xf32> to vector<16x32xf32>
    %cst = arith.constant dense<0.000000e+00> : vector<64x32xf32>
    %3 = tpu.matmul %0, %2, %cst {dimension_numbers = #tpu.dot_dimension_numbers<[1], [0], [0], [1], [0, 0, 1, 1], [], []>} : vector<64x16xf32>, vector<16x32xf32>, vector<64x32xf32> -> vector<64x32xf32>
    %4 = arith.truncf %3 : vector<64x32xf32> to vector<64x32xbf16>
    %c0_4 = arith.constant 0 : index
    %c0_5 = arith.constant 0 : index
    %5 = vector.load %arg7[%c0_4, %c0_5] : memref<32x16xbf16, #tpu.memory_space<vmem>>, vector<32x16xbf16>
    %cst_6 = arith.constant dense<0.000000e+00> : vector<64x16xf32>
    %6 = tpu.matmul %4, %5, %cst_6 {dimension_numbers = #tpu.dot_dimension_numbers<[1], [0], [0], [1], [0, 0, 1, 1], [], []>} : vector<64x32xbf16>, vector<32x16xbf16>, vector<64x16xf32> -> vector<64x16xf32>
    %7 = tpu.iota {dimensions = array<i32: 0>} : vector<8x32xi32>
    %8 = tpu.concatenate %7, %7, %7, %7, %7, %7, %7, %7 in 0 : vector<8x32xi32>, vector<8x32xi32>, vector<8x32xi32>, vector<8x32xi32>, vector<8x32xi32>, vector<8x32xi32>, vector<8x32xi32>, vector<8x32xi32> -> vector<64x32xi32>
    %c1_i32 = arith.constant 1 : i32
    %9 = vector.broadcast %c1_i32 : i32 to vector<64x32xi32>
    %10 = arith.cmpi sge, %8, %9 : vector<64x32xi32>
    %c6_i32 = arith.constant 6 : i32
    %11 = vector.broadcast %c6_i32 : i32 to vector<64x32xi32>
    %12 = arith.cmpi sle, %8, %11 : vector<64x32xi32>
    %cst_7 = arith.constant 0.000000e+00 : f32
    %13 = vector.broadcast %cst_7 : f32 to vector<9x32xf32>
    %14 = vector.extract_strided_slice %3 {offsets = [0, 0], sizes = [55, 32], strides = [1, 1]} : vector<64x32xf32> to vector<55x32xf32>
    %15 = tpu.concatenate %13, %14 in 0 : vector<9x32xf32>, vector<55x32xf32> -> vector<64x32xf32>
    %cst_8 = arith.constant 0.000000e+00 : f32
    %16 = vector.broadcast %cst_8 : f32 to vector<64x32xf32>
    %17 = arith.select %10, %15, %16 : vector<64x32xi1>, vector<64x32xf32>
    %cst_9 = arith.constant 0.000000e+00 : f32
    %18 = vector.broadcast %cst_9 : f32 to vector<8x32xf32>
    %19 = vector.extract_strided_slice %3 {offsets = [0, 0], sizes = [56, 32], strides = [1, 1]} : vector<64x32xf32> to vector<56x32xf32>
    %20 = tpu.concatenate %18, %19 in 0 : vector<8x32xf32>, vector<56x32xf32> -> vector<64x32xf32>
    %cst_10 = arith.constant 0.000000e+00 : f32
    %21 = vector.broadcast %cst_10 : f32 to vector<7x32xf32>
    %22 = vector.extract_strided_slice %3 {offsets = [0, 0], sizes = [57, 32], strides = [1, 1]} : vector<64x32xf32> to vector<57x32xf32>
    %23 = tpu.concatenate %21, %22 in 0 : vector<7x32xf32>, vector<57x32xf32> -> vector<64x32xf32>
    %cst_11 = arith.constant 0.000000e+00 : f32
    %24 = vector.broadcast %cst_11 : f32 to vector<64x32xf32>
    %25 = arith.select %12, %23, %24 : vector<64x32xi1>, vector<64x32xf32>
    %cst_12 = arith.constant 0.000000e+00 : f32
    %26 = vector.broadcast %cst_12 : f32 to vector<1x32xf32>
    %27 = vector.extract_strided_slice %3 {offsets = [0, 0], sizes = [63, 32], strides = [1, 1]} : vector<64x32xf32> to vector<63x32xf32>
    %28 = tpu.concatenate %26, %27 in 0 : vector<1x32xf32>, vector<63x32xf32> -> vector<64x32xf32>
    %cst_13 = arith.constant 0.000000e+00 : f32
    %29 = vector.broadcast %cst_13 : f32 to vector<64x32xf32>
    %30 = arith.select %10, %28, %29 : vector<64x32xi1>, vector<64x32xf32>
    %31 = vector.extract_strided_slice %3 {offsets = [1, 0], sizes = [63, 32], strides = [1, 1]} : vector<64x32xf32> to vector<63x32xf32>
    %cst_14 = arith.constant 0.000000e+00 : f32
    %32 = vector.broadcast %cst_14 : f32 to vector<1x32xf32>
    %33 = tpu.concatenate %31, %32 in 0 : vector<63x32xf32>, vector<1x32xf32> -> vector<64x32xf32>
    %cst_15 = arith.constant 0.000000e+00 : f32
    %34 = vector.broadcast %cst_15 : f32 to vector<64x32xf32>
    %35 = arith.select %12, %33, %34 : vector<64x32xi1>, vector<64x32xf32>
    %36 = vector.extract_strided_slice %3 {offsets = [7, 0], sizes = [57, 32], strides = [1, 1]} : vector<64x32xf32> to vector<57x32xf32>
    %cst_16 = arith.constant 0.000000e+00 : f32
    %37 = vector.broadcast %cst_16 : f32 to vector<7x32xf32>
    %38 = tpu.concatenate %36, %37 in 0 : vector<57x32xf32>, vector<7x32xf32> -> vector<64x32xf32>
    %cst_17 = arith.constant 0.000000e+00 : f32
    %39 = vector.broadcast %cst_17 : f32 to vector<64x32xf32>
    %40 = arith.select %10, %38, %39 : vector<64x32xi1>, vector<64x32xf32>
    %41 = vector.extract_strided_slice %3 {offsets = [8, 0], sizes = [56, 32], strides = [1, 1]} : vector<64x32xf32> to vector<56x32xf32>
    %cst_18 = arith.constant 0.000000e+00 : f32
    %42 = vector.broadcast %cst_18 : f32 to vector<8x32xf32>
    %43 = tpu.concatenate %41, %42 in 0 : vector<56x32xf32>, vector<8x32xf32> -> vector<64x32xf32>
    %44 = vector.extract_strided_slice %3 {offsets = [9, 0], sizes = [55, 32], strides = [1, 1]} : vector<64x32xf32> to vector<55x32xf32>
    %cst_19 = arith.constant 0.000000e+00 : f32
    %45 = vector.broadcast %cst_19 : f32 to vector<9x32xf32>
    %46 = tpu.concatenate %44, %45 in 0 : vector<55x32xf32>, vector<9x32xf32> -> vector<64x32xf32>
    %cst_20 = arith.constant 0.000000e+00 : f32
    %47 = vector.broadcast %cst_20 : f32 to vector<64x32xf32>
    %48 = arith.select %12, %46, %47 : vector<64x32xi1>, vector<64x32xf32>
    %49 = tpu.concatenate %17, %20, %25, %30, %3, %35, %40, %43, %48 in 1 : vector<64x32xf32>, vector<64x32xf32>, vector<64x32xf32>, vector<64x32xf32>, vector<64x32xf32>, vector<64x32xf32>, vector<64x32xf32>, vector<64x32xf32>, vector<64x32xf32> -> vector<64x288xf32>
    %50 = arith.truncf %49 : vector<64x288xf32> to vector<64x288xbf16>
    %c0_21 = arith.constant 0 : index
    %c0_22 = arith.constant 0 : index
    %51 = vector.load %arg3[%c0_21, %c0_22] : memref<288x16xbf16, #tpu.memory_space<vmem>>, vector<288x16xbf16>
    %cst_23 = arith.constant dense<0.000000e+00> : vector<64x16xf32>
    %52 = tpu.matmul %50, %51, %cst_23 {dimension_numbers = #tpu.dot_dimension_numbers<[1], [0], [0], [1], [0, 0, 1, 1], [], []>} : vector<64x288xbf16>, vector<288x16xbf16>, vector<64x16xf32> -> vector<64x16xf32>
    %c0_24 = arith.constant 0 : index
    %c0_25 = arith.constant 0 : index
    %53 = vector.load %arg4[%c0_24, %c0_25] : memref<1x16xf32, #tpu.memory_space<vmem>>, vector<1x16xf32>
    %54 = vector.broadcast %53 : vector<1x16xf32> to vector<64x16xf32>
    %55 = arith.addf %52, %54 : vector<64x16xf32>
    %cst_26 = arith.constant 0.000000e+00 : f32
    %56 = vector.broadcast %cst_26 : f32 to vector<64x16xf32>
    %57 = arith.maximumf %55, %56 : vector<64x16xf32>
    %58 = tpu.iota {dimensions = array<i32: 0>} : vector<8x16xi32>
    %59 = tpu.concatenate %58, %58, %58, %58, %58, %58, %58, %58 in 0 : vector<8x16xi32>, vector<8x16xi32>, vector<8x16xi32>, vector<8x16xi32>, vector<8x16xi32>, vector<8x16xi32>, vector<8x16xi32>, vector<8x16xi32> -> vector<64x16xi32>
    %c1_i32_27 = arith.constant 1 : i32
    %60 = vector.broadcast %c1_i32_27 : i32 to vector<64x16xi32>
    %61 = arith.cmpi sge, %59, %60 : vector<64x16xi32>
    %c6_i32_28 = arith.constant 6 : i32
    %62 = vector.broadcast %c6_i32_28 : i32 to vector<64x16xi32>
    %63 = arith.cmpi sle, %59, %62 : vector<64x16xi32>
    %cst_29 = arith.constant 0.000000e+00 : f32
    %64 = vector.broadcast %cst_29 : f32 to vector<9x16xf32>
    %65 = vector.extract_strided_slice %57 {offsets = [0, 0], sizes = [55, 16], strides = [1, 1]} : vector<64x16xf32> to vector<55x16xf32>
    %66 = tpu.concatenate %64, %65 in 0 : vector<9x16xf32>, vector<55x16xf32> -> vector<64x16xf32>
    %cst_30 = arith.constant 0.000000e+00 : f32
    %67 = vector.broadcast %cst_30 : f32 to vector<64x16xf32>
    %68 = arith.select %61, %66, %67 : vector<64x16xi1>, vector<64x16xf32>
    %cst_31 = arith.constant 0.000000e+00 : f32
    %69 = vector.broadcast %cst_31 : f32 to vector<8x16xf32>
    %70 = vector.extract_strided_slice %57 {offsets = [0, 0], sizes = [56, 16], strides = [1, 1]} : vector<64x16xf32> to vector<56x16xf32>
    %71 = tpu.concatenate %69, %70 in 0 : vector<8x16xf32>, vector<56x16xf32> -> vector<64x16xf32>
    %cst_32 = arith.constant 0.000000e+00 : f32
    %72 = vector.broadcast %cst_32 : f32 to vector<7x16xf32>
    %73 = vector.extract_strided_slice %57 {offsets = [0, 0], sizes = [57, 16], strides = [1, 1]} : vector<64x16xf32> to vector<57x16xf32>
    %74 = tpu.concatenate %72, %73 in 0 : vector<7x16xf32>, vector<57x16xf32> -> vector<64x16xf32>
    %cst_33 = arith.constant 0.000000e+00 : f32
    %75 = vector.broadcast %cst_33 : f32 to vector<64x16xf32>
    %76 = arith.select %63, %74, %75 : vector<64x16xi1>, vector<64x16xf32>
    %cst_34 = arith.constant 0.000000e+00 : f32
    %77 = vector.broadcast %cst_34 : f32 to vector<1x16xf32>
    %78 = vector.extract_strided_slice %57 {offsets = [0, 0], sizes = [63, 16], strides = [1, 1]} : vector<64x16xf32> to vector<63x16xf32>
    %79 = tpu.concatenate %77, %78 in 0 : vector<1x16xf32>, vector<63x16xf32> -> vector<64x16xf32>
    %cst_35 = arith.constant 0.000000e+00 : f32
    %80 = vector.broadcast %cst_35 : f32 to vector<64x16xf32>
    %81 = arith.select %61, %79, %80 : vector<64x16xi1>, vector<64x16xf32>
    %82 = vector.extract_strided_slice %57 {offsets = [1, 0], sizes = [63, 16], strides = [1, 1]} : vector<64x16xf32> to vector<63x16xf32>
    %cst_36 = arith.constant 0.000000e+00 : f32
    %83 = vector.broadcast %cst_36 : f32 to vector<1x16xf32>
    %84 = tpu.concatenate %82, %83 in 0 : vector<63x16xf32>, vector<1x16xf32> -> vector<64x16xf32>
    %cst_37 = arith.constant 0.000000e+00 : f32
    %85 = vector.broadcast %cst_37 : f32 to vector<64x16xf32>
    %86 = arith.select %63, %84, %85 : vector<64x16xi1>, vector<64x16xf32>
    %87 = vector.extract_strided_slice %57 {offsets = [7, 0], sizes = [57, 16], strides = [1, 1]} : vector<64x16xf32> to vector<57x16xf32>
    %cst_38 = arith.constant 0.000000e+00 : f32
    %88 = vector.broadcast %cst_38 : f32 to vector<7x16xf32>
    %89 = tpu.concatenate %87, %88 in 0 : vector<57x16xf32>, vector<7x16xf32> -> vector<64x16xf32>
    %cst_39 = arith.constant 0.000000e+00 : f32
    %90 = vector.broadcast %cst_39 : f32 to vector<64x16xf32>
    %91 = arith.select %61, %89, %90 : vector<64x16xi1>, vector<64x16xf32>
    %92 = vector.extract_strided_slice %57 {offsets = [8, 0], sizes = [56, 16], strides = [1, 1]} : vector<64x16xf32> to vector<56x16xf32>
    %cst_40 = arith.constant 0.000000e+00 : f32
    %93 = vector.broadcast %cst_40 : f32 to vector<8x16xf32>
    %94 = tpu.concatenate %92, %93 in 0 : vector<56x16xf32>, vector<8x16xf32> -> vector<64x16xf32>
    %95 = vector.extract_strided_slice %57 {offsets = [9, 0], sizes = [55, 16], strides = [1, 1]} : vector<64x16xf32> to vector<55x16xf32>
    %cst_41 = arith.constant 0.000000e+00 : f32
    %96 = vector.broadcast %cst_41 : f32 to vector<9x16xf32>
    %97 = tpu.concatenate %95, %96 in 0 : vector<55x16xf32>, vector<9x16xf32> -> vector<64x16xf32>
    %cst_42 = arith.constant 0.000000e+00 : f32
    %98 = vector.broadcast %cst_42 : f32 to vector<64x16xf32>
    %99 = arith.select %63, %97, %98 : vector<64x16xi1>, vector<64x16xf32>
    %100 = tpu.concatenate %68, %71, %76, %81, %57, %86, %91, %94, %99 in 1 : vector<64x16xf32>, vector<64x16xf32>, vector<64x16xf32>, vector<64x16xf32>, vector<64x16xf32>, vector<64x16xf32>, vector<64x16xf32>, vector<64x16xf32>, vector<64x16xf32> -> vector<64x144xf32>
    %101 = arith.truncf %100 : vector<64x144xf32> to vector<64x144xbf16>
    %c0_43 = arith.constant 0 : index
    %c0_44 = arith.constant 0 : index
    %102 = vector.load %arg5[%c0_43, %c0_44] : memref<144x16xbf16, #tpu.memory_space<vmem>>, vector<144x16xbf16>
    %cst_45 = arith.constant dense<0.000000e+00> : vector<64x16xf32>
    %103 = tpu.matmul %101, %102, %cst_45 {dimension_numbers = #tpu.dot_dimension_numbers<[1], [0], [0], [1], [0, 0, 1, 1], [], []>} : vector<64x144xbf16>, vector<144x16xbf16>, vector<64x16xf32> -> vector<64x16xf32>
    %c0_46 = arith.constant 0 : index
    %c0_47 = arith.constant 0 : index
    %104 = vector.load %arg6[%c0_46, %c0_47] : memref<1x16xf32, #tpu.memory_space<vmem>>, vector<1x16xf32>
    %105 = vector.broadcast %104 : vector<1x16xf32> to vector<64x16xf32>
    %106 = arith.addf %103, %105 : vector<64x16xf32>
    %107 = arith.addf %106, %6 : vector<64x16xf32>
    %c0_48 = arith.constant 0 : index
    %c0_49 = arith.constant 0 : index
    %c0_50 = arith.constant 0 : index
    %108 = vector.load %arg8[%c0_48, %c0_49, %c0_50] : memref<1x64x16xf32, #tpu.memory_space<vmem>>, vector<1x64x16xf32>
    %109 = vector.shape_cast %108 : vector<1x64x16xf32> to vector<64x16xf32>
    %110 = vector.shape_cast %107 : vector<64x16xf32> to vector<1x64x16xf32>
    tpu.vector_store %arg8[%c0_48, %c0_49, %c0_50], %110 {strides = array<i32>} : memref<1x64x16xf32, #tpu.memory_space<vmem>>, vector<1x64x16xf32>,
    %c0_51 = arith.constant 0 : index
    %c0_52 = arith.constant 0 : index
    %c0_53 = arith.constant 0 : index
    %111 = vector.load %arg9[%c0_51, %c0_52, %c0_53] : memref<1x64x16xf32, #tpu.memory_space<vmem>>, vector<1x64x16xf32>
    %112 = vector.shape_cast %111 : vector<1x64x16xf32> to vector<64x16xf32>
    %113 = vector.shape_cast %57 : vector<64x16xf32> to vector<1x64x16xf32>
    tpu.vector_store %arg9[%c0_51, %c0_52, %c0_53], %113 {strides = array<i32>} : memref<1x64x16xf32, #tpu.memory_space<vmem>>, vector<1x64x16xf32>,
    return
  }
  func.func @transform_0(%arg0: i32) -> (i32, i32, i32) {
    %c0_i32 = arith.constant 0 : i32
    %c0_i32_0 = arith.constant 0 : i32
    %c0_i32_1 = arith.constant 0 : i32
    return %arg0, %c0_i32, %c0_i32_0 : i32, i32, i32
  }
  func.func @transform_1(%arg0: i32) -> (i32, i32) {
    %c0_i32 = arith.constant 0 : i32
    %c0_i32_0 = arith.constant 0 : i32
    %c0_i32_1 = arith.constant 0 : i32
    return %c0_i32, %c0_i32_0 : i32, i32
  }
  func.func @transform_2(%arg0: i32) -> (i32, i32) {
    %c0_i32 = arith.constant 0 : i32
    %c0_i32_0 = arith.constant 0 : i32
    %c0_i32_1 = arith.constant 0 : i32
    return %c0_i32, %c0_i32_0 : i32, i32
  }
  func.func @transform_3(%arg0: i32) -> (i32, i32) {
    %c0_i32 = arith.constant 0 : i32
    %c0_i32_0 = arith.constant 0 : i32
    %c0_i32_1 = arith.constant 0 : i32
    return %c0_i32, %c0_i32_0 : i32, i32
  }
  func.func @transform_4(%arg0: i32) -> (i32, i32) {
    %c0_i32 = arith.constant 0 : i32
    %c0_i32_0 = arith.constant 0 : i32
    %c0_i32_1 = arith.constant 0 : i32
    return %c0_i32, %c0_i32_0 : i32, i32
  }
  func.func @transform_5(%arg0: i32) -> (i32, i32) {
    %c0_i32 = arith.constant 0 : i32
    %c0_i32_0 = arith.constant 0 : i32
    %c0_i32_1 = arith.constant 0 : i32
    return %c0_i32, %c0_i32_0 : i32, i32
  }
  func.func @transform_6(%arg0: i32) -> (i32, i32) {
    %c0_i32 = arith.constant 0 : i32
    %c0_i32_0 = arith.constant 0 : i32
    %c0_i32_1 = arith.constant 0 : i32
    return %c0_i32, %c0_i32_0 : i32, i32
  }
  func.func @transform_7(%arg0: i32) -> (i32, i32, i32) {
    %c0_i32 = arith.constant 0 : i32
    %c0_i32_0 = arith.constant 0 : i32
    %c0_i32_1 = arith.constant 0 : i32
    return %arg0, %c0_i32, %c0_i32_0 : i32, i32, i32
  }
  func.func @transform_8(%arg0: i32) -> (i32, i32, i32) {
    %c0_i32 = arith.constant 0 : i32
    %c0_i32_0 = arith.constant 0 : i32
    %c0_i32_1 = arith.constant 0 : i32
    return %arg0, %c0_i32, %c0_i32_0 : i32, i32, i32
  }
}

module attributes {stable_mosaic.version = 11 : i64} {
  func.func @_gen_block_kernel(%arg0: i32, %arg1: memref<1x64x16xf32, #tpu.memory_space<vmem>>, %arg2: memref<1x64x16xf32, #tpu.memory_space<vmem>>, %arg3: memref<256x64xf32, #tpu.memory_space<vmem>>, %arg4: memref<256x64xf32, #tpu.memory_space<vmem>>, %arg5: memref<144x8xbf16, #tpu.memory_space<vmem>>, %arg6: memref<1x8xf32, #tpu.memory_space<vmem>>, %arg7: memref<72x8xbf16, #tpu.memory_space<vmem>>, %arg8: memref<1x8xf32, #tpu.memory_space<vmem>>, %arg9: memref<16x8xbf16, #tpu.memory_space<vmem>>, %arg10: memref<16x8xbf16, #tpu.memory_space<vmem>>, %arg11: memref<1x8xf32, #tpu.memory_space<vmem>>, %arg12: memref<72x3xbf16, #tpu.memory_space<vmem>>, %arg13: memref<1x3xf32, #tpu.memory_space<vmem>>, %arg14: memref<1x256x3xf32, #tpu.memory_space<vmem>>) attributes {dimension_semantics = [#tpu.dimension_semantics<parallel>], iteration_bounds = array<i64: 2>, scalar_prefetch = 0 : i64, scratch_operands = 0 : i64, tpu.core_type = #tpu.core_type<tc>, window_params = [{transform_indices = @transform_0, window_bounds = array<i64: 1, 64, 16>}, {transform_indices = @transform_1, window_bounds = array<i64: 1, 64, 16>}, {pipeline_mode = #tpu.pipeline_mode<synchronous>, transform_indices = @transform_2, window_bounds = array<i64: 256, 64>}, {pipeline_mode = #tpu.pipeline_mode<synchronous>, transform_indices = @transform_3, window_bounds = array<i64: 256, 64>}, {pipeline_mode = #tpu.pipeline_mode<synchronous>, transform_indices = @transform_4, window_bounds = array<i64: 144, 8>}, {pipeline_mode = #tpu.pipeline_mode<synchronous>, transform_indices = @transform_5, window_bounds = array<i64: 1, 8>}, {pipeline_mode = #tpu.pipeline_mode<synchronous>, transform_indices = @transform_6, window_bounds = array<i64: 72, 8>}, {pipeline_mode = #tpu.pipeline_mode<synchronous>, transform_indices = @transform_7, window_bounds = array<i64: 1, 8>}, {pipeline_mode = #tpu.pipeline_mode<synchronous>, transform_indices = @transform_8, window_bounds = array<i64: 16, 8>}, {pipeline_mode = #tpu.pipeline_mode<synchronous>, transform_indices = @transform_9, window_bounds = array<i64: 16, 8>}, {pipeline_mode = #tpu.pipeline_mode<synchronous>, transform_indices = @transform_10, window_bounds = array<i64: 1, 8>}, {pipeline_mode = #tpu.pipeline_mode<synchronous>, transform_indices = @transform_11, window_bounds = array<i64: 72, 3>}, {pipeline_mode = #tpu.pipeline_mode<synchronous>, transform_indices = @transform_12, window_bounds = array<i64: 1, 3>}, {transform_indices = @transform_13, window_bounds = array<i64: 1, 256, 3>}]} {
    %c0 = arith.constant 0 : index
    %c0_0 = arith.constant 0 : index
    %0 = vector.load %arg3[%c0, %c0_0] : memref<256x64xf32, #tpu.memory_space<vmem>>, vector<256x64xf32>
    %c0_1 = arith.constant 0 : index
    %c0_2 = arith.constant 0 : index
    %c0_3 = arith.constant 0 : index
    %1 = vector.load %arg1[%c0_1, %c0_2, %c0_3] : memref<1x64x16xf32, #tpu.memory_space<vmem>>, vector<1x64x16xf32>
    %2 = vector.shape_cast %1 : vector<1x64x16xf32> to vector<64x16xf32>
    %cst = arith.constant dense<0.000000e+00> : vector<256x16xf32>
    %3 = tpu.matmul %0, %2, %cst {dimension_numbers = #tpu.dot_dimension_numbers<[1], [0], [0], [1], [0, 0, 1, 1], [], []>} : vector<256x64xf32>, vector<64x16xf32>, vector<256x16xf32> -> vector<256x16xf32>
    %4 = arith.truncf %3 : vector<256x16xf32> to vector<256x16xbf16>
    %c0_4 = arith.constant 0 : index
    %c0_5 = arith.constant 0 : index
    %5 = vector.load %arg9[%c0_4, %c0_5] : memref<16x8xbf16, #tpu.memory_space<vmem>>, vector<16x8xbf16>
    %cst_6 = arith.constant dense<0.000000e+00> : vector<256x8xf32>
    %6 = tpu.matmul %4, %5, %cst_6 {dimension_numbers = #tpu.dot_dimension_numbers<[1], [0], [0], [1], [0, 0, 1, 1], [], []>} : vector<256x16xbf16>, vector<16x8xbf16>, vector<256x8xf32> -> vector<256x8xf32>
    %7 = tpu.iota {dimensions = array<i32: 0>} : vector<16x16xi32>
    %8 = tpu.concatenate %7, %7, %7, %7, %7, %7, %7, %7, %7, %7, %7, %7, %7, %7, %7, %7 in 0 : vector<16x16xi32>, vector<16x16xi32>, vector<16x16xi32>, vector<16x16xi32>, vector<16x16xi32>, vector<16x16xi32>, vector<16x16xi32>, vector<16x16xi32>, vector<16x16xi32>, vector<16x16xi32>, vector<16x16xi32>, vector<16x16xi32>, vector<16x16xi32>, vector<16x16xi32>, vector<16x16xi32>, vector<16x16xi32> -> vector<256x16xi32>
    %c1_i32 = arith.constant 1 : i32
    %9 = vector.broadcast %c1_i32 : i32 to vector<256x16xi32>
    %10 = arith.cmpi sge, %8, %9 : vector<256x16xi32>
    %c14_i32 = arith.constant 14 : i32
    %11 = vector.broadcast %c14_i32 : i32 to vector<256x16xi32>
    %12 = arith.cmpi sle, %8, %11 : vector<256x16xi32>
    %cst_7 = arith.constant 0.000000e+00 : f32
    %13 = vector.broadcast %cst_7 : f32 to vector<17x16xf32>
    %14 = vector.extract_strided_slice %3 {offsets = [0, 0], sizes = [239, 16], strides = [1, 1]} : vector<256x16xf32> to vector<239x16xf32>
    %15 = tpu.concatenate %13, %14 in 0 : vector<17x16xf32>, vector<239x16xf32> -> vector<256x16xf32>
    %cst_8 = arith.constant 0.000000e+00 : f32
    %16 = vector.broadcast %cst_8 : f32 to vector<256x16xf32>
    %17 = arith.select %10, %15, %16 : vector<256x16xi1>, vector<256x16xf32>
    %cst_9 = arith.constant 0.000000e+00 : f32
    %18 = vector.broadcast %cst_9 : f32 to vector<16x16xf32>
    %19 = vector.extract_strided_slice %3 {offsets = [0, 0], sizes = [240, 16], strides = [1, 1]} : vector<256x16xf32> to vector<240x16xf32>
    %20 = tpu.concatenate %18, %19 in 0 : vector<16x16xf32>, vector<240x16xf32> -> vector<256x16xf32>
    %cst_10 = arith.constant 0.000000e+00 : f32
    %21 = vector.broadcast %cst_10 : f32 to vector<15x16xf32>
    %22 = vector.extract_strided_slice %3 {offsets = [0, 0], sizes = [241, 16], strides = [1, 1]} : vector<256x16xf32> to vector<241x16xf32>
    %23 = tpu.concatenate %21, %22 in 0 : vector<15x16xf32>, vector<241x16xf32> -> vector<256x16xf32>
    %cst_11 = arith.constant 0.000000e+00 : f32
    %24 = vector.broadcast %cst_11 : f32 to vector<256x16xf32>
    %25 = arith.select %12, %23, %24 : vector<256x16xi1>, vector<256x16xf32>
    %cst_12 = arith.constant 0.000000e+00 : f32
    %26 = vector.broadcast %cst_12 : f32 to vector<1x16xf32>
    %27 = vector.extract_strided_slice %3 {offsets = [0, 0], sizes = [255, 16], strides = [1, 1]} : vector<256x16xf32> to vector<255x16xf32>
    %28 = tpu.concatenate %26, %27 in 0 : vector<1x16xf32>, vector<255x16xf32> -> vector<256x16xf32>
    %cst_13 = arith.constant 0.000000e+00 : f32
    %29 = vector.broadcast %cst_13 : f32 to vector<256x16xf32>
    %30 = arith.select %10, %28, %29 : vector<256x16xi1>, vector<256x16xf32>
    %31 = vector.extract_strided_slice %3 {offsets = [1, 0], sizes = [255, 16], strides = [1, 1]} : vector<256x16xf32> to vector<255x16xf32>
    %cst_14 = arith.constant 0.000000e+00 : f32
    %32 = vector.broadcast %cst_14 : f32 to vector<1x16xf32>
    %33 = tpu.concatenate %31, %32 in 0 : vector<255x16xf32>, vector<1x16xf32> -> vector<256x16xf32>
    %cst_15 = arith.constant 0.000000e+00 : f32
    %34 = vector.broadcast %cst_15 : f32 to vector<256x16xf32>
    %35 = arith.select %12, %33, %34 : vector<256x16xi1>, vector<256x16xf32>
    %36 = vector.extract_strided_slice %3 {offsets = [15, 0], sizes = [241, 16], strides = [1, 1]} : vector<256x16xf32> to vector<241x16xf32>
    %cst_16 = arith.constant 0.000000e+00 : f32
    %37 = vector.broadcast %cst_16 : f32 to vector<15x16xf32>
    %38 = tpu.concatenate %36, %37 in 0 : vector<241x16xf32>, vector<15x16xf32> -> vector<256x16xf32>
    %cst_17 = arith.constant 0.000000e+00 : f32
    %39 = vector.broadcast %cst_17 : f32 to vector<256x16xf32>
    %40 = arith.select %10, %38, %39 : vector<256x16xi1>, vector<256x16xf32>
    %41 = vector.extract_strided_slice %3 {offsets = [16, 0], sizes = [240, 16], strides = [1, 1]} : vector<256x16xf32> to vector<240x16xf32>
    %cst_18 = arith.constant 0.000000e+00 : f32
    %42 = vector.broadcast %cst_18 : f32 to vector<16x16xf32>
    %43 = tpu.concatenate %41, %42 in 0 : vector<240x16xf32>, vector<16x16xf32> -> vector<256x16xf32>
    %44 = vector.extract_strided_slice %3 {offsets = [17, 0], sizes = [239, 16], strides = [1, 1]} : vector<256x16xf32> to vector<239x16xf32>
    %cst_19 = arith.constant 0.000000e+00 : f32
    %45 = vector.broadcast %cst_19 : f32 to vector<17x16xf32>
    %46 = tpu.concatenate %44, %45 in 0 : vector<239x16xf32>, vector<17x16xf32> -> vector<256x16xf32>
    %cst_20 = arith.constant 0.000000e+00 : f32
    %47 = vector.broadcast %cst_20 : f32 to vector<256x16xf32>
    %48 = arith.select %12, %46, %47 : vector<256x16xi1>, vector<256x16xf32>
    %49 = tpu.concatenate %17, %20, %25, %30, %3, %35, %40, %43, %48 in 1 : vector<256x16xf32>, vector<256x16xf32>, vector<256x16xf32>, vector<256x16xf32>, vector<256x16xf32>, vector<256x16xf32>, vector<256x16xf32>, vector<256x16xf32>, vector<256x16xf32> -> vector<256x144xf32>
    %50 = arith.truncf %49 : vector<256x144xf32> to vector<256x144xbf16>
    %c0_21 = arith.constant 0 : index
    %c0_22 = arith.constant 0 : index
    %51 = vector.load %arg5[%c0_21, %c0_22] : memref<144x8xbf16, #tpu.memory_space<vmem>>, vector<144x8xbf16>
    %cst_23 = arith.constant dense<0.000000e+00> : vector<256x8xf32>
    %52 = tpu.matmul %50, %51, %cst_23 {dimension_numbers = #tpu.dot_dimension_numbers<[1], [0], [0], [1], [0, 0, 1, 1], [], []>} : vector<256x144xbf16>, vector<144x8xbf16>, vector<256x8xf32> -> vector<256x8xf32>
    %c0_24 = arith.constant 0 : index
    %c0_25 = arith.constant 0 : index
    %53 = vector.load %arg6[%c0_24, %c0_25] : memref<1x8xf32, #tpu.memory_space<vmem>>, vector<1x8xf32>
    %54 = vector.broadcast %53 : vector<1x8xf32> to vector<256x8xf32>
    %55 = arith.addf %52, %54 : vector<256x8xf32>
    %cst_26 = arith.constant 0.000000e+00 : f32
    %56 = vector.broadcast %cst_26 : f32 to vector<256x8xf32>
    %57 = arith.maximumf %55, %56 : vector<256x8xf32>
    %c0_27 = arith.constant 0 : index
    %c0_28 = arith.constant 0 : index
    %58 = vector.load %arg4[%c0_27, %c0_28] : memref<256x64xf32, #tpu.memory_space<vmem>>, vector<256x64xf32>
    %c0_29 = arith.constant 0 : index
    %c0_30 = arith.constant 0 : index
    %c0_31 = arith.constant 0 : index
    %59 = vector.load %arg2[%c0_29, %c0_30, %c0_31] : memref<1x64x16xf32, #tpu.memory_space<vmem>>, vector<1x64x16xf32>
    %60 = vector.shape_cast %59 : vector<1x64x16xf32> to vector<64x16xf32>
    %cst_32 = arith.constant dense<0.000000e+00> : vector<256x16xf32>
    %61 = tpu.matmul %58, %60, %cst_32 {dimension_numbers = #tpu.dot_dimension_numbers<[1], [0], [0], [1], [0, 0, 1, 1], [], []>} : vector<256x64xf32>, vector<64x16xf32>, vector<256x16xf32> -> vector<256x16xf32>
    %62 = arith.truncf %61 : vector<256x16xf32> to vector<256x16xbf16>
    %c0_33 = arith.constant 0 : index
    %c0_34 = arith.constant 0 : index
    %63 = vector.load %arg10[%c0_33, %c0_34] : memref<16x8xbf16, #tpu.memory_space<vmem>>, vector<16x8xbf16>
    %cst_35 = arith.constant dense<0.000000e+00> : vector<256x8xf32>
    %64 = tpu.matmul %62, %63, %cst_35 {dimension_numbers = #tpu.dot_dimension_numbers<[1], [0], [0], [1], [0, 0, 1, 1], [], []>} : vector<256x16xbf16>, vector<16x8xbf16>, vector<256x8xf32> -> vector<256x8xf32>
    %c0_36 = arith.constant 0 : index
    %c0_37 = arith.constant 0 : index
    %65 = vector.load %arg11[%c0_36, %c0_37] : memref<1x8xf32, #tpu.memory_space<vmem>>, vector<1x8xf32>
    %66 = vector.broadcast %65 : vector<1x8xf32> to vector<256x8xf32>
    %67 = arith.addf %64, %66 : vector<256x8xf32>
    %68 = arith.addf %57, %67 : vector<256x8xf32>
    %69 = tpu.iota {dimensions = array<i32: 0>} : vector<16x8xi32>
    %70 = tpu.concatenate %69, %69, %69, %69, %69, %69, %69, %69, %69, %69, %69, %69, %69, %69, %69, %69 in 0 : vector<16x8xi32>, vector<16x8xi32>, vector<16x8xi32>, vector<16x8xi32>, vector<16x8xi32>, vector<16x8xi32>, vector<16x8xi32>, vector<16x8xi32>, vector<16x8xi32>, vector<16x8xi32>, vector<16x8xi32>, vector<16x8xi32>, vector<16x8xi32>, vector<16x8xi32>, vector<16x8xi32>, vector<16x8xi32> -> vector<256x8xi32>
    %c1_i32_38 = arith.constant 1 : i32
    %71 = vector.broadcast %c1_i32_38 : i32 to vector<256x8xi32>
    %72 = arith.cmpi sge, %70, %71 : vector<256x8xi32>
    %c14_i32_39 = arith.constant 14 : i32
    %73 = vector.broadcast %c14_i32_39 : i32 to vector<256x8xi32>
    %74 = arith.cmpi sle, %70, %73 : vector<256x8xi32>
    %cst_40 = arith.constant 0.000000e+00 : f32
    %75 = vector.broadcast %cst_40 : f32 to vector<17x8xf32>
    %76 = vector.extract_strided_slice %68 {offsets = [0, 0], sizes = [239, 8], strides = [1, 1]} : vector<256x8xf32> to vector<239x8xf32>
    %77 = tpu.concatenate %75, %76 in 0 : vector<17x8xf32>, vector<239x8xf32> -> vector<256x8xf32>
    %cst_41 = arith.constant 0.000000e+00 : f32
    %78 = vector.broadcast %cst_41 : f32 to vector<256x8xf32>
    %79 = arith.select %72, %77, %78 : vector<256x8xi1>, vector<256x8xf32>
    %cst_42 = arith.constant 0.000000e+00 : f32
    %80 = vector.broadcast %cst_42 : f32 to vector<16x8xf32>
    %81 = vector.extract_strided_slice %68 {offsets = [0, 0], sizes = [240, 8], strides = [1, 1]} : vector<256x8xf32> to vector<240x8xf32>
    %82 = tpu.concatenate %80, %81 in 0 : vector<16x8xf32>, vector<240x8xf32> -> vector<256x8xf32>
    %cst_43 = arith.constant 0.000000e+00 : f32
    %83 = vector.broadcast %cst_43 : f32 to vector<15x8xf32>
    %84 = vector.extract_strided_slice %68 {offsets = [0, 0], sizes = [241, 8], strides = [1, 1]} : vector<256x8xf32> to vector<241x8xf32>
    %85 = tpu.concatenate %83, %84 in 0 : vector<15x8xf32>, vector<241x8xf32> -> vector<256x8xf32>
    %cst_44 = arith.constant 0.000000e+00 : f32
    %86 = vector.broadcast %cst_44 : f32 to vector<256x8xf32>
    %87 = arith.select %74, %85, %86 : vector<256x8xi1>, vector<256x8xf32>
    %cst_45 = arith.constant 0.000000e+00 : f32
    %88 = vector.broadcast %cst_45 : f32 to vector<1x8xf32>
    %89 = vector.extract_strided_slice %68 {offsets = [0, 0], sizes = [255, 8], strides = [1, 1]} : vector<256x8xf32> to vector<255x8xf32>
    %90 = tpu.concatenate %88, %89 in 0 : vector<1x8xf32>, vector<255x8xf32> -> vector<256x8xf32>
    %cst_46 = arith.constant 0.000000e+00 : f32
    %91 = vector.broadcast %cst_46 : f32 to vector<256x8xf32>
    %92 = arith.select %72, %90, %91 : vector<256x8xi1>, vector<256x8xf32>
    %93 = vector.extract_strided_slice %68 {offsets = [1, 0], sizes = [255, 8], strides = [1, 1]} : vector<256x8xf32> to vector<255x8xf32>
    %cst_47 = arith.constant 0.000000e+00 : f32
    %94 = vector.broadcast %cst_47 : f32 to vector<1x8xf32>
    %95 = tpu.concatenate %93, %94 in 0 : vector<255x8xf32>, vector<1x8xf32> -> vector<256x8xf32>
    %cst_48 = arith.constant 0.000000e+00 : f32
    %96 = vector.broadcast %cst_48 : f32 to vector<256x8xf32>
    %97 = arith.select %74, %95, %96 : vector<256x8xi1>, vector<256x8xf32>
    %98 = vector.extract_strided_slice %68 {offsets = [15, 0], sizes = [241, 8], strides = [1, 1]} : vector<256x8xf32> to vector<241x8xf32>
    %cst_49 = arith.constant 0.000000e+00 : f32
    %99 = vector.broadcast %cst_49 : f32 to vector<15x8xf32>
    %100 = tpu.concatenate %98, %99 in 0 : vector<241x8xf32>, vector<15x8xf32> -> vector<256x8xf32>
    %cst_50 = arith.constant 0.000000e+00 : f32
    %101 = vector.broadcast %cst_50 : f32 to vector<256x8xf32>
    %102 = arith.select %72, %100, %101 : vector<256x8xi1>, vector<256x8xf32>
    %103 = vector.extract_strided_slice %68 {offsets = [16, 0], sizes = [240, 8], strides = [1, 1]} : vector<256x8xf32> to vector<240x8xf32>
    %cst_51 = arith.constant 0.000000e+00 : f32
    %104 = vector.broadcast %cst_51 : f32 to vector<16x8xf32>
    %105 = tpu.concatenate %103, %104 in 0 : vector<240x8xf32>, vector<16x8xf32> -> vector<256x8xf32>
    %106 = vector.extract_strided_slice %68 {offsets = [17, 0], sizes = [239, 8], strides = [1, 1]} : vector<256x8xf32> to vector<239x8xf32>
    %cst_52 = arith.constant 0.000000e+00 : f32
    %107 = vector.broadcast %cst_52 : f32 to vector<17x8xf32>
    %108 = tpu.concatenate %106, %107 in 0 : vector<239x8xf32>, vector<17x8xf32> -> vector<256x8xf32>
    %cst_53 = arith.constant 0.000000e+00 : f32
    %109 = vector.broadcast %cst_53 : f32 to vector<256x8xf32>
    %110 = arith.select %74, %108, %109 : vector<256x8xi1>, vector<256x8xf32>
    %111 = tpu.concatenate %79, %82, %87, %92, %68, %97, %102, %105, %110 in 1 : vector<256x8xf32>, vector<256x8xf32>, vector<256x8xf32>, vector<256x8xf32>, vector<256x8xf32>, vector<256x8xf32>, vector<256x8xf32>, vector<256x8xf32>, vector<256x8xf32> -> vector<256x72xf32>
    %112 = arith.truncf %111 : vector<256x72xf32> to vector<256x72xbf16>
    %c0_54 = arith.constant 0 : index
    %c0_55 = arith.constant 0 : index
    %113 = vector.load %arg7[%c0_54, %c0_55] : memref<72x8xbf16, #tpu.memory_space<vmem>>, vector<72x8xbf16>
    %cst_56 = arith.constant dense<0.000000e+00> : vector<256x8xf32>
    %114 = tpu.matmul %112, %113, %cst_56 {dimension_numbers = #tpu.dot_dimension_numbers<[1], [0], [0], [1], [0, 0, 1, 1], [], []>} : vector<256x72xbf16>, vector<72x8xbf16>, vector<256x8xf32> -> vector<256x8xf32>
    %c0_57 = arith.constant 0 : index
    %c0_58 = arith.constant 0 : index
    %115 = vector.load %arg8[%c0_57, %c0_58] : memref<1x8xf32, #tpu.memory_space<vmem>>, vector<1x8xf32>
    %116 = vector.broadcast %115 : vector<1x8xf32> to vector<256x8xf32>
    %117 = arith.addf %114, %116 : vector<256x8xf32>
    %118 = arith.addf %117, %6 : vector<256x8xf32>
    %cst_59 = arith.constant 0.000000e+00 : f32
    %119 = vector.broadcast %cst_59 : f32 to vector<256x8xf32>
    %120 = arith.maximumf %118, %119 : vector<256x8xf32>
    %121 = tpu.iota {dimensions = array<i32: 0>} : vector<16x8xi32>
    %122 = tpu.concatenate %121, %121, %121, %121, %121, %121, %121, %121, %121, %121, %121, %121, %121, %121, %121, %121 in 0 : vector<16x8xi32>, vector<16x8xi32>, vector<16x8xi32>, vector<16x8xi32>, vector<16x8xi32>, vector<16x8xi32>, vector<16x8xi32>, vector<16x8xi32>, vector<16x8xi32>, vector<16x8xi32>, vector<16x8xi32>, vector<16x8xi32>, vector<16x8xi32>, vector<16x8xi32>, vector<16x8xi32>, vector<16x8xi32> -> vector<256x8xi32>
    %c1_i32_60 = arith.constant 1 : i32
    %123 = vector.broadcast %c1_i32_60 : i32 to vector<256x8xi32>
    %124 = arith.cmpi sge, %122, %123 : vector<256x8xi32>
    %c14_i32_61 = arith.constant 14 : i32
    %125 = vector.broadcast %c14_i32_61 : i32 to vector<256x8xi32>
    %126 = arith.cmpi sle, %122, %125 : vector<256x8xi32>
    %cst_62 = arith.constant 0.000000e+00 : f32
    %127 = vector.broadcast %cst_62 : f32 to vector<17x8xf32>
    %128 = vector.extract_strided_slice %120 {offsets = [0, 0], sizes = [239, 8], strides = [1, 1]} : vector<256x8xf32> to vector<239x8xf32>
    %129 = tpu.concatenate %127, %128 in 0 : vector<17x8xf32>, vector<239x8xf32> -> vector<256x8xf32>
    %cst_63 = arith.constant 0.000000e+00 : f32
    %130 = vector.broadcast %cst_63 : f32 to vector<256x8xf32>
    %131 = arith.select %124, %129, %130 : vector<256x8xi1>, vector<256x8xf32>
    %cst_64 = arith.constant 0.000000e+00 : f32
    %132 = vector.broadcast %cst_64 : f32 to vector<16x8xf32>
    %133 = vector.extract_strided_slice %120 {offsets = [0, 0], sizes = [240, 8], strides = [1, 1]} : vector<256x8xf32> to vector<240x8xf32>
    %134 = tpu.concatenate %132, %133 in 0 : vector<16x8xf32>, vector<240x8xf32> -> vector<256x8xf32>
    %cst_65 = arith.constant 0.000000e+00 : f32
    %135 = vector.broadcast %cst_65 : f32 to vector<15x8xf32>
    %136 = vector.extract_strided_slice %120 {offsets = [0, 0], sizes = [241, 8], strides = [1, 1]} : vector<256x8xf32> to vector<241x8xf32>
    %137 = tpu.concatenate %135, %136 in 0 : vector<15x8xf32>, vector<241x8xf32> -> vector<256x8xf32>
    %cst_66 = arith.constant 0.000000e+00 : f32
    %138 = vector.broadcast %cst_66 : f32 to vector<256x8xf32>
    %139 = arith.select %126, %137, %138 : vector<256x8xi1>, vector<256x8xf32>
    %cst_67 = arith.constant 0.000000e+00 : f32
    %140 = vector.broadcast %cst_67 : f32 to vector<1x8xf32>
    %141 = vector.extract_strided_slice %120 {offsets = [0, 0], sizes = [255, 8], strides = [1, 1]} : vector<256x8xf32> to vector<255x8xf32>
    %142 = tpu.concatenate %140, %141 in 0 : vector<1x8xf32>, vector<255x8xf32> -> vector<256x8xf32>
    %cst_68 = arith.constant 0.000000e+00 : f32
    %143 = vector.broadcast %cst_68 : f32 to vector<256x8xf32>
    %144 = arith.select %124, %142, %143 : vector<256x8xi1>, vector<256x8xf32>
    %145 = vector.extract_strided_slice %120 {offsets = [1, 0], sizes = [255, 8], strides = [1, 1]} : vector<256x8xf32> to vector<255x8xf32>
    %cst_69 = arith.constant 0.000000e+00 : f32
    %146 = vector.broadcast %cst_69 : f32 to vector<1x8xf32>
    %147 = tpu.concatenate %145, %146 in 0 : vector<255x8xf32>, vector<1x8xf32> -> vector<256x8xf32>
    %cst_70 = arith.constant 0.000000e+00 : f32
    %148 = vector.broadcast %cst_70 : f32 to vector<256x8xf32>
    %149 = arith.select %126, %147, %148 : vector<256x8xi1>, vector<256x8xf32>
    %150 = vector.extract_strided_slice %120 {offsets = [15, 0], sizes = [241, 8], strides = [1, 1]} : vector<256x8xf32> to vector<241x8xf32>
    %cst_71 = arith.constant 0.000000e+00 : f32
    %151 = vector.broadcast %cst_71 : f32 to vector<15x8xf32>
    %152 = tpu.concatenate %150, %151 in 0 : vector<241x8xf32>, vector<15x8xf32> -> vector<256x8xf32>
    %cst_72 = arith.constant 0.000000e+00 : f32
    %153 = vector.broadcast %cst_72 : f32 to vector<256x8xf32>
    %154 = arith.select %124, %152, %153 : vector<256x8xi1>, vector<256x8xf32>
    %155 = vector.extract_strided_slice %120 {offsets = [16, 0], sizes = [240, 8], strides = [1, 1]} : vector<256x8xf32> to vector<240x8xf32>
    %cst_73 = arith.constant 0.000000e+00 : f32
    %156 = vector.broadcast %cst_73 : f32 to vector<16x8xf32>
    %157 = tpu.concatenate %155, %156 in 0 : vector<240x8xf32>, vector<16x8xf32> -> vector<256x8xf32>
    %158 = vector.extract_strided_slice %120 {offsets = [17, 0], sizes = [239, 8], strides = [1, 1]} : vector<256x8xf32> to vector<239x8xf32>
    %cst_74 = arith.constant 0.000000e+00 : f32
    %159 = vector.broadcast %cst_74 : f32 to vector<17x8xf32>
    %160 = tpu.concatenate %158, %159 in 0 : vector<239x8xf32>, vector<17x8xf32> -> vector<256x8xf32>
    %cst_75 = arith.constant 0.000000e+00 : f32
    %161 = vector.broadcast %cst_75 : f32 to vector<256x8xf32>
    %162 = arith.select %126, %160, %161 : vector<256x8xi1>, vector<256x8xf32>
    %163 = tpu.concatenate %131, %134, %139, %144, %120, %149, %154, %157, %162 in 1 : vector<256x8xf32>, vector<256x8xf32>, vector<256x8xf32>, vector<256x8xf32>, vector<256x8xf32>, vector<256x8xf32>, vector<256x8xf32>, vector<256x8xf32>, vector<256x8xf32> -> vector<256x72xf32>
    %164 = arith.truncf %163 : vector<256x72xf32> to vector<256x72xbf16>
    %c0_76 = arith.constant 0 : index
    %c0_77 = arith.constant 0 : index
    %165 = vector.load %arg12[%c0_76, %c0_77] : memref<72x3xbf16, #tpu.memory_space<vmem>>, vector<72x3xbf16>
    %cst_78 = arith.constant dense<0.000000e+00> : vector<256x3xf32>
    %166 = tpu.matmul %164, %165, %cst_78 {dimension_numbers = #tpu.dot_dimension_numbers<[1], [0], [0], [1], [0, 0, 1, 1], [], []>} : vector<256x72xbf16>, vector<72x3xbf16>, vector<256x3xf32> -> vector<256x3xf32>
    %c0_79 = arith.constant 0 : index
    %c0_80 = arith.constant 0 : index
    %167 = vector.load %arg13[%c0_79, %c0_80] : memref<1x3xf32, #tpu.memory_space<vmem>>, vector<1x3xf32>
    %168 = vector.broadcast %167 : vector<1x3xf32> to vector<256x3xf32>
    %169 = arith.addf %166, %168 : vector<256x3xf32>
    %cst_81 = arith.constant 0.000000e+00 : f32
    %170 = vector.broadcast %cst_81 : f32 to vector<256x3xf32>
    %171 = arith.subf %170, %169 : vector<256x3xf32>
    %172 = math.exp %171 : vector<256x3xf32>
    %cst_82 = arith.constant 1.000000e+00 : f32
    %173 = vector.broadcast %cst_82 : f32 to vector<256x3xf32>
    %174 = arith.addf %173, %172 : vector<256x3xf32>
    %cst_83 = arith.constant 1.000000e+00 : f32
    %175 = vector.broadcast %cst_83 : f32 to vector<256x3xf32>
    %176 = arith.divf %175, %174 : vector<256x3xf32>
    %c0_84 = arith.constant 0 : index
    %c0_85 = arith.constant 0 : index
    %c0_86 = arith.constant 0 : index
    %177 = vector.load %arg14[%c0_84, %c0_85, %c0_86] : memref<1x256x3xf32, #tpu.memory_space<vmem>>, vector<1x256x3xf32>
    %178 = vector.shape_cast %177 : vector<1x256x3xf32> to vector<256x3xf32>
    %179 = vector.shape_cast %176 : vector<256x3xf32> to vector<1x256x3xf32>
    tpu.vector_store %arg14[%c0_84, %c0_85, %c0_86], %179 {strides = array<i32>} : memref<1x256x3xf32, #tpu.memory_space<vmem>>, vector<1x256x3xf32>,
    return
  }
  func.func @transform_0(%arg0: i32) -> (i32, i32, i32) {
    %c0_i32 = arith.constant 0 : i32
    %c0_i32_0 = arith.constant 0 : i32
    %c0_i32_1 = arith.constant 0 : i32
    return %arg0, %c0_i32, %c0_i32_0 : i32, i32, i32
  }
  func.func @transform_1(%arg0: i32) -> (i32, i32, i32) {
    %c0_i32 = arith.constant 0 : i32
    %c0_i32_0 = arith.constant 0 : i32
    %c0_i32_1 = arith.constant 0 : i32
    return %arg0, %c0_i32, %c0_i32_0 : i32, i32, i32
  }
  func.func @transform_2(%arg0: i32) -> (i32, i32) {
    %c0_i32 = arith.constant 0 : i32
    %c0_i32_0 = arith.constant 0 : i32
    %c0_i32_1 = arith.constant 0 : i32
    return %c0_i32, %c0_i32_0 : i32, i32
  }
  func.func @transform_3(%arg0: i32) -> (i32, i32) {
    %c0_i32 = arith.constant 0 : i32
    %c0_i32_0 = arith.constant 0 : i32
    %c0_i32_1 = arith.constant 0 : i32
    return %c0_i32, %c0_i32_0 : i32, i32
  }
  func.func @transform_4(%arg0: i32) -> (i32, i32) {
    %c0_i32 = arith.constant 0 : i32
    %c0_i32_0 = arith.constant 0 : i32
    %c0_i32_1 = arith.constant 0 : i32
    return %c0_i32, %c0_i32_0 : i32, i32
  }
  func.func @transform_5(%arg0: i32) -> (i32, i32) {
    %c0_i32 = arith.constant 0 : i32
    %c0_i32_0 = arith.constant 0 : i32
    %c0_i32_1 = arith.constant 0 : i32
    return %c0_i32, %c0_i32_0 : i32, i32
  }
  func.func @transform_6(%arg0: i32) -> (i32, i32) {
    %c0_i32 = arith.constant 0 : i32
    %c0_i32_0 = arith.constant 0 : i32
    %c0_i32_1 = arith.constant 0 : i32
    return %c0_i32, %c0_i32_0 : i32, i32
  }
  func.func @transform_7(%arg0: i32) -> (i32, i32) {
    %c0_i32 = arith.constant 0 : i32
    %c0_i32_0 = arith.constant 0 : i32
    %c0_i32_1 = arith.constant 0 : i32
    return %c0_i32, %c0_i32_0 : i32, i32
  }
  func.func @transform_8(%arg0: i32) -> (i32, i32) {
    %c0_i32 = arith.constant 0 : i32
    %c0_i32_0 = arith.constant 0 : i32
    %c0_i32_1 = arith.constant 0 : i32
    return %c0_i32, %c0_i32_0 : i32, i32
  }
  func.func @transform_9(%arg0: i32) -> (i32, i32) {
    %c0_i32 = arith.constant 0 : i32
    %c0_i32_0 = arith.constant 0 : i32
    %c0_i32_1 = arith.constant 0 : i32
    return %c0_i32, %c0_i32_0 : i32, i32
  }
  func.func @transform_10(%arg0: i32) -> (i32, i32) {
    %c0_i32 = arith.constant 0 : i32
    %c0_i32_0 = arith.constant 0 : i32
    %c0_i32_1 = arith.constant 0 : i32
    return %c0_i32, %c0_i32_0 : i32, i32
  }
  func.func @transform_11(%arg0: i32) -> (i32, i32) {
    %c0_i32 = arith.constant 0 : i32
    %c0_i32_0 = arith.constant 0 : i32
    %c0_i32_1 = arith.constant 0 : i32
    return %c0_i32, %c0_i32_0 : i32, i32
  }
  func.func @transform_12(%arg0: i32) -> (i32, i32) {
    %c0_i32 = arith.constant 0 : i32
    %c0_i32_0 = arith.constant 0 : i32
    %c0_i32_1 = arith.constant 0 : i32
    return %c0_i32, %c0_i32_0 : i32, i32
  }
  func.func @transform_13(%arg0: i32) -> (i32, i32, i32) {
    %c0_i32 = arith.constant 0 : i32
    %c0_i32_0 = arith.constant 0 : i32
    %c0_i32_1 = arith.constant 0 : i32
    return %arg0, %c0_i32, %c0_i32_0 : i32, i32, i32
  }
}

</mosaic_0001>

<llo_original>
// kernel: _lambda_.3
$region0: #{_lambda_.3}
  #allocation0 [shape = 'u32[]', space=smem, size = 0x4, offset = 0x4, fixed_abs, tag = 'smem constant byte address 0x4 - core index']
  #allocation1 [shape = 'u32[144,128]{1,0:T(1,128)}', space=vmem, size = 0x12000, scoped, tag = 'internal scratch']
  %s0 = inlined_call_operand.vmem [shape: f32[2,32], index: 0, kind: input, shape index: {}]
  %s1 = inlined_call_operand.vmem [shape: bf16[32,512], index: 1, kind: input, shape index: {}]
  %s2 = inlined_call_operand.vmem [shape: f32[1,512], index: 2, kind: input, shape index: {}]
  %s3 = inlined_call_operand.vmem [shape: f32[2,512], index: 3, kind: output, shape index: {}]
  %s4 = sld [smem:[#allocation0]]
  $region22: #{_lambda_.3} parent=0
    _
  %s6 = ssub.s32 1, %s4
  %s7 = scalar_select 0, %s6, %s4
  // Predicated region
  $region2: #{_lambda_.3} parent=0 // pred_check
    _
  $region3: #{_lambda_.3} parent=0 // pred_check_branch
    %9 = sbr.rel (0) target = $region5
  $region4: #{_lambda_.3} parent=0 // pred_region
    _
  $region5: #{_lambda_.3} parent=0 // pred_fallthru
    _
  // Predicated region
  $region6: #{_lambda_.3} parent=0 // pred_check
    _
  $region7: #{_lambda_.3} parent=0 // pred_check_branch
    %11 = sbr.rel (0) target = $region9
  $region8: #{_lambda_.3} parent=0 // pred_region
    _
  $region9: #{_lambda_.3} parent=0 // pred_fallthru
    _
  // Predicated region
  $region10: #{_lambda_.3} parent=0 // pred_check
    _
  $region11: #{_lambda_.3} parent=0 // pred_check_branch
    %13 = sbr.rel (0) target = $region13
  $region12: #{_lambda_.3} parent=0 // pred_region
    _
  $region13: #{_lambda_.3} parent=0 // pred_fallthru
    _
  %v15 = vld [vmem:[%s0] sm:$0x3]
  %v16 = vpack.c.bf16 %v15, %v15
  %v17 = vld [vmem:[%s1] sm:$0xff]
  %v18 = vld [vmem:[%s1 + $0x8] sm:$0xff]
  %v19 = vld [vmem:[%s1 + $0x10] sm:$0xff]
  %v20 = vld [vmem:[%s1 + $0x18] sm:$0xff]
  %v21 = vld [vmem:[%s1 + $0x20] sm:$0xff]
  %v22 = vld [vmem:[%s1 + $0x28] sm:$0xff]
  %v23 = vld [vmem:[%s1 + $0x30] sm:$0xff]
  %v24 = vld [vmem:[%s1 + $0x38] sm:$0xff]
  %v25 = vld [vmem:[%s2] sm:$0xf]
  %v27 = vlaneseq
  %v28 = vshrl.u32 %v27, 7
  %v29 = vsub.s32 0, %v28
  %v30 = vrot.slane %v25, %v29
  %v31 = vlaneseq
  %v32 = vshrl.u32 %v31, 7
  %v33 = vsub.s32 1, %v32
  %v34 = vrot.slane %v25, %v33
  %v35 = vlaneseq
  %v36 = vshrl.u32 %v35, 7
  %v37 = vsub.s32 2, %v36
  %v38 = vrot.slane %v25, %v37
  %v39 = vlaneseq
  %v40 = vshrl.u32 %v39, 7
  %v41 = vsub.s32 3, %v40
  %v42 = vrot.slane %v25, %v41
  %v55 = vunpack.c.l.b16 %v17
  %v56 = vunpack.c.h.b16 %v17
  %v57 = vunpack.c.l.b16 %v18
  %v58 = vunpack.c.h.b16 %v18
  %v59 = vunpack.c.l.b16 %v19
  %v60 = vunpack.c.h.b16 %v19
  %v61 = vunpack.c.l.b16 %v20
  %v62 = vunpack.c.h.b16 %v20
  %v63 = vunpack.c.l.b16 %v21
  %v64 = vunpack.c.h.b16 %v21
  %v65 = vunpack.c.l.b16 %v22
  %v66 = vunpack.c.h.b16 %v22
  %v67 = vunpack.c.l.b16 %v23
  %v68 = vunpack.c.h.b16 %v23
  %v69 = vunpack.c.l.b16 %v24
  %v70 = vunpack.c.h.b16 %v24
  %v71 = vpack.c.b16 %v59, %v55
  %v72 = vpack.c.b16 %v60, %v56
  %v73 = vpack.c.b16 %v61, %v57
  %v74 = vpack.c.b16 %v62, %v58
  %v75 = vpack.c.b16 %v67, %v63
  %v76 = vpack.c.b16 %v68, %v64
  %v77 = vpack.c.b16 %v69, %v65
  %v78 = vpack.c.b16 %v70, %v66
  %vm87 = vcmask 261120
  %v89 = vsel %vm87, %v16, 0
  %91 = vmatprep.subr.bf16.mxu0 0
  %92 = vmatpush1.bf16.msra.mxu0 0
  %93 = vmatprep.subr.bf16.mxu0 0
  %94 = vmatpush1.bf16.msra.mxu0 0
  %95 = vmatprep.subr.bf16.mxu0 0
  %96 = vmatpush1.bf16.msra.mxu0 0
  %97 = vmatprep.subr.bf16.mxu0 0
  %98 = vmatpush1.bf16.msra.mxu0 0
  %99 = vmatprep.subr.bf16.mxu0 0
  %100 = vmatpush1.bf16.msra.mxu0 0
  %101 = vmatprep.subr.bf16.mxu0 0
  %102 = vmatpush1.bf16.msra.mxu0 0
  %103 = vmatprep.subr.bf16.mxu0 %v76
  %104 = vmatpush1.bf16.msra.mxu0 %v75
  %105 = vmatprep.subr.bf16.mxu0 %v72
  %106 = vmatpush1.bf16.msra.mxu0 %v71
  %107 = vmatprep.subr.bf16.mxu0 0
  %108 = vmatpush2.bf16.msra.mxu0 0
  %109 = vmatprep.subr.bf16.mxu0 0
  %110 = vmatpush2.bf16.msra.mxu0 0
  %111 = vmatprep.subr.bf16.mxu0 0
  %112 = vmatpush2.bf16.msra.mxu0 0
  %113 = vmatprep.subr.bf16.mxu0 0
  %114 = vmatpush2.bf16.msra.mxu0 0
  %115 = vmatprep.subr.bf16.mxu0 0
  %116 = vmatpush2.bf16.msra.mxu0 0
  %117 = vmatprep.subr.bf16.mxu0 0
  %118 = vmatpush2.bf16.msra.mxu0 0
  %119 = vmatprep.subr.bf16.mxu0 0
  %120 = vmatpush2.bf16.msra.mxu0 0
  %121 = vmatprep.subr.bf16.mxu0 0
  %122 = vmatpush2.bf16.msra.mxu0 0
  %123 = vmatprep.mubr.bf16.mxu0 0
  %124 = vmatmul.mubr.bf16.gmra.mxu0 %v89
  %v125 = vpop.f32.mrf.mxu0
  %v126 = vadd.f32 %v30, %v125
  %v127 = vpop.f32.mrf.mxu0
  %v128 = vadd.f32 %v34, %v127
  %v129 = vpop.f32.mrf.mxu0
  %v130 = vpop.f32.mrf.mxu0
  %131 = vdwg.mxu0
  %132 = vmatprep.subr.bf16.mxu0 0
  %133 = vmatpush1.bf16.msra.mxu0 0
  %134 = vmatprep.subr.bf16.mxu0 0
  %135 = vmatpush1.bf16.msra.mxu0 0
  %136 = vmatprep.subr.bf16.mxu0 0
  %137 = vmatpush1.bf16.msra.mxu0 0
  %138 = vmatprep.subr.bf16.mxu0 0
  %139 = vmatpush1.bf16.msra.mxu0 0
  %140 = vmatprep.subr.bf16.mxu0 0
  %141 = vmatpush1.bf16.msra.mxu0 0
  %142 = vmatprep.subr.bf16.mxu0 0
  %143 = vmatpush1.bf16.msra.mxu0 0
  %144 = vmatprep.subr.bf16.mxu0 %v78
  %145 = vmatpush1.bf16.msra.mxu0 %v77
  %146 = vmatprep.subr.bf16.mxu0 %v74
  %147 = vmatpush1.bf16.msra.mxu0 %v73
  %148 = vmatprep.subr.bf16.mxu0 0
  %149 = vmatpush2.bf16.msra.mxu0 0
  %150 = vmatprep.subr.bf16.mxu0 0
  %151 = vmatpush2.bf16.msra.mxu0 0
  %152 = vmatprep.subr.bf16.mxu0 0
  %153 = vmatpush2.bf16.msra.mxu0 0
  %154 = vmatprep.subr.bf16.mxu0 0
  %155 = vmatpush2.bf16.msra.mxu0 0
  %156 = vmatprep.subr.bf16.mxu0 0
  %157 = vmatpush2.bf16.msra.mxu0 0
  %158 = vmatprep.subr.bf16.mxu0 0
  %159 = vmatpush2.bf16.msra.mxu0 0
  %160 = vmatprep.subr.bf16.mxu0 0
  %161 = vmatpush2.bf16.msra.mxu0 0
  %162 = vmatprep.subr.bf16.mxu0 0
  %163 = vmatpush2.bf16.msra.mxu0 0
  %164 = vmatprep.mubr.bf16.mxu0 0
  %165 = vmatmul.mubr.bf16.gmra.mxu0 %v89
  %v166 = vpop.f32.mrf.mxu0
  %v167 = vadd.f32 %v38, %v166
  %v168 = vpop.f32.mrf.mxu0
  %v169 = vadd.f32 %v42, %v168
  %v170 = vpop.f32.mrf.mxu0
  %v171 = vpop.f32.mrf.mxu0
  %172 = vdwg.mxu0
  %v177 = vcombine.low %v126, %v128
  %v178 = vcombine.low %v167, %v169
  %v180 = vunpack.c.l.s4 1983009808
  %v181 = vunpack.c.0.s8 %v180
  %v182 = vlaneseq
  %v183 = vshrl.u32 %v182, 7
  %v184 = vsub.s32 %v181, %v183
  %v185 = vrot.slane %v177, %v184
  %v187 = vunpack.c.l.s4 1983009808
  %v188 = vunpack.c.0.s8 %v187
  %v189 = vlaneseq
  %v190 = vshrl.u32 %v189, 7
  %v191 = vsub.s32 %v188, %v190
  %v192 = vrot.slane %v178, %v191
  %v193 = vcombine.low %v185, %v192
  %195 = vst [vmem:[%s3] sm:$0xff] %v193
  // Predicated region
  $region14: #{_lambda_.3} parent=0 // pred_check
    _
  $region15: #{_lambda_.3} parent=0 // pred_check_branch
    %197 = sbr.rel (0) target = $region17
  $region16: #{_lambda_.3} parent=0 // pred_region
    _
  $region17: #{_lambda_.3} parent=0 // pred_fallthru
    _
  // Predicated region
  $region18: #{_lambda_.3} parent=0 // pred_check
    _
  $region19: #{_lambda_.3} parent=0 // pred_check_branch
    %199 = sbr.rel (0) target = $region21
  $region20: #{_lambda_.3} parent=0 // pred_region
    _
  $region21: #{_lambda_.3} parent=0 // pred_fallthru
    _

// kernel: _lambda_.4
$region0: #{_lambda_.4}
  #allocation0 [shape = 'u32[]', space=smem, size = 0x4, offset = 0x4, fixed_abs, tag = 'smem constant byte address 0x4 - core index']
  #allocation1 [shape = 'u32[144,128]{1,0:T(1,128)}', space=vmem, size = 0x12000, scoped, tag = 'internal scratch']
  %s0 = inlined_call_operand.vmem [shape: f32[2,16,32], index: 0, kind: input, shape index: {}]
  %s1 = inlined_call_operand.vmem [shape: f32[64,16], index: 1, kind: input, shape index: {}]
  %s2 = inlined_call_operand.vmem [shape: bf16[288,16], index: 2, kind: input, shape index: {}]
  %s3 = inlined_call_operand.vmem [shape: f32[1,16], index: 3, kind: input, shape index: {}]
  %s4 = inlined_call_operand.vmem [shape: bf16[144,16], index: 4, kind: input, shape index: {}]
  %s5 = inlined_call_operand.vmem [shape: f32[1,16], index: 5, kind: input, shape index: {}]
  %s6 = inlined_call_operand.vmem [shape: bf16[32,16], index: 6, kind: input, shape index: {}]
  %s7 = inlined_call_operand.vmem [shape: f32[2,64,16], index: 7, kind: output, shape index: {0}]
  %s8 = inlined_call_operand.vmem [shape: f32[2,64,16], index: 8, kind: output, shape index: {1}]
  %9 = xla_tuple %s7, %s8
  %s10 = sld [smem:[#allocation0]]
  $region69: #{_lambda_.4} parent=0
    _
  %s12 = ssub.s32 1, %s10
  %s13 = scalar_select 0, %s12, %s10
  loop: start=0, step=1, limit=4
  $region2: #{_lambda_.4} parent=0 // loop_pre_header
    _
  $region3: #{_lambda_.4} parent=0 // loop_header
    %s15 = sphi 0, %s19
    %p16 = scmp.ge.s32.totalorder %s15, 4
    %s25 = sphi 0, %s27
    %s28 = sphi 0, %s25
    %s29 = sphi 0, %s28
    %s45 = sphi 0, %s29
    %s49 = sphi 0, %s49
    %s51 = sphi 0, %s49
    %s52 = sphi 0, %s51
    %s66 = sphi 0, %s52
    %s70 = sphi 0, %s70
    %s72 = sphi 0, %s70
    %s73 = sphi 0, %s72
    %s87 = sphi 0, %s73
    %s91 = sphi 0, %s91
    %s93 = sphi 0, %s91
    %s94 = sphi 0, %s93
    %s108 = sphi 0, %s94
    %s112 = sphi 0, %s112
    %s114 = sphi 0, %s112
    %s115 = sphi 0, %s114
    %s129 = sphi 0, %s115
    %s133 = sphi 0, %s133
    %s135 = sphi 0, %s133
    %s136 = sphi 0, %s135
    %s150 = sphi 0, %s136
    %s154 = sphi 0, %s154
    %s156 = sphi 0, %s154
    %s157 = sphi 0, %s156
    %s171 = sphi 0, %s157
    %s177 = sphi 0, %s179
    %s180 = sphi 0, %s177
    %s181 = sphi 0, %s180
    %s197 = sphi 0, %s181
    %s203 = sphi 0, %s205
    %s206 = sphi 0, %s203
    %s207 = sphi 0, %s206
    %s223 = sphi 0, %s207
  $region4: #{_lambda_.4} parent=0 // loop_header_branch
    %18 = sbr.rel (%p16) target = $region8
  $region5: #{_lambda_.4} parent=0 // loop_body
    %s20 = ssub.s32 %s15, 1
    %s21 = ssub.s32 %s15, 2
    %s22 = sadd.s32 %s15, 1
    %s23 = ssub.s32 %s15, %s22
    %p24 = scmp.eq.s32.totalorder %s23, 0
    %s26 = sadd.s32 %s25, 1
    %s27 = scalar_select %p24, %s25, %s26
    %p30 = pneg %p24
    %p31 = scmp.eq.s32.totalorder %s15, 1
    %p32 = por %p30, %p31
    %p33 = scmp.ne.s32.totalorder %s25, %s28
    %p34 = scmp.eq.s32.totalorder %s15, 0
    %p35 = por %p33, %p34
    %p36 = scmp.ne.s32.totalorder %s25, %s28
    %p37 = scmp.eq.s32.totalorder %s20, 1
    %p38 = por %p36, %p37
    %p39 = scmp.ne.s32.totalorder %s28, %s29
    %p40 = scmp.eq.s32.totalorder %s20, 0
    %p41 = por %p39, %p40
    %p42 = scmp.ne.s32.totalorder %s28, %s29
    %p43 = scmp.eq.s32.totalorder %s21, 1
    %p44 = por %p42, %p43
    %p46 = scmp.ne.s32.totalorder %s29, %s45
    %p47 = scmp.eq.s32.totalorder %s21, 0
    %p48 = por %p46, %p47
    %s50 = sadd.s32 %s49, 1
    %p53 = scmp.eq.s32.totalorder %s15, 1
    %p54 = scmp.ne.s32.totalorder %s49, %s51
    %p55 = scmp.eq.s32.totalorder %s15, 0
    %p56 = por %p54, %p55
    %p57 = scmp.ne.s32.totalorder %s49, %s51
    %p58 = scmp.eq.s32.totalorder %s20, 1
    %p59 = por %p57, %p58
    %p60 = scmp.ne.s32.totalorder %s51, %s52
    %p61 = scmp.eq.s32.totalorder %s20, 0
    %p62 = por %p60, %p61
    %p63 = scmp.ne.s32.totalorder %s51, %s52
    %p64 = scmp.eq.s32.totalorder %s21, 1
    %p65 = por %p63, %p64
    %p67 = scmp.ne.s32.totalorder %s52, %s66
    %p68 = scmp.eq.s32.totalorder %s21, 0
    %p69 = por %p67, %p68
    %s71 = sadd.s32 %s70, 1
    %p74 = scmp.eq.s32.totalorder %s15, 1
    %p75 = scmp.ne.s32.totalorder %s70, %s72
    %p76 = scmp.eq.s32.totalorder %s15, 0
    %p77 = por %p75, %p76
    %p78 = scmp.ne.s32.totalorder %s70, %s72
    %p79 = scmp.eq.s32.totalorder %s20, 1
    %p80 = por %p78, %p79
    %p81 = scmp.ne.s32.totalorder %s72, %s73
    %p82 = scmp.eq.s32.totalorder %s20, 0
    %p83 = por %p81, %p82
    %p84 = scmp.ne.s32.totalorder %s72, %s73
    %p85 = scmp.eq.s32.totalorder %s21, 1
    %p86 = por %p84, %p85
    %p88 = scmp.ne.s32.totalorder %s73, %s87
    %p89 = scmp.eq.s32.totalorder %s21, 0
    %p90 = por %p88, %p89
    %s92 = sadd.s32 %s91, 1
    %p95 = scmp.eq.s32.totalorder %s15, 1
    %p96 = scmp.ne.s32.totalorder %s91, %s93
    %p97 = scmp.eq.s32.totalorder %s15, 0
    %p98 = por %p96, %p97
    %p99 = scmp.ne.s32.totalorder %s91, %s93
    %p100 = scmp.eq.s32.totalorder %s20, 1
    %p101 = por %p99, %p100
    %p102 = scmp.ne.s32.totalorder %s93, %s94
    %p103 = scmp.eq.s32.totalorder %s20, 0
    %p104 = por %p102, %p103
    %p105 = scmp.ne.s32.totalorder %s93, %s94
    %p106 = scmp.eq.s32.totalorder %s21, 1
    %p107 = por %p105, %p106
    %p109 = scmp.ne.s32.totalorder %s94, %s108
    %p110 = scmp.eq.s32.totalorder %s21, 0
    %p111 = por %p109, %p110
    %s113 = sadd.s32 %s112, 1
    %p116 = scmp.eq.s32.totalorder %s15, 1
    %p117 = scmp.ne.s32.totalorder %s112, %s114
    %p118 = scmp.eq.s32.totalorder %s15, 0
    %p119 = por %p117, %p118
    %p120 = scmp.ne.s32.totalorder %s112, %s114
    %p121 = scmp.eq.s32.totalorder %s20, 1
    %p122 = por %p120, %p121
    %p123 = scmp.ne.s32.totalorder %s114, %s115
    %p124 = scmp.eq.s32.totalorder %s20, 0
    %p125 = por %p123, %p124
    %p126 = scmp.ne.s32.totalorder %s114, %s115
    %p127 = scmp.eq.s32.totalorder %s21, 1
    %p128 = por %p126, %p127
    %p130 = scmp.ne.s32.totalorder %s115, %s129
    %p131 = scmp.eq.s32.totalorder %s21, 0
    %p132 = por %p130, %p131
    %s134 = sadd.s32 %s133, 1
    %p137 = scmp.eq.s32.totalorder %s15, 1
    %p138 = scmp.ne.s32.totalorder %s133, %s135
    %p139 = scmp.eq.s32.totalorder %s15, 0
    %p140 = por %p138, %p139
    %p141 = scmp.ne.s32.totalorder %s133, %s135
    %p142 = scmp.eq.s32.totalorder %s20, 1
    %p143 = por %p141, %p142
    %p144 = scmp.ne.s32.totalorder %s135, %s136
    %p145 = scmp.eq.s32.totalorder %s20, 0
    %p146 = por %p144, %p145
    %p147 = scmp.ne.s32.totalorder %s135, %s136
    %p148 = scmp.eq.s32.totalorder %s21, 1
    %p149 = por %p147, %p148
    %p151 = scmp.ne.s32.totalorder %s136, %s150
    %p152 = scmp.eq.s32.totalorder %s21, 0
    %p153 = por %p151, %p152
    %s155 = sadd.s32 %s154, 1
    %p158 = scmp.eq.s32.totalorder %s15, 1
    %p159 = scmp.ne.s32.totalorder %s154, %s156
    %p160 = scmp.eq.s32.totalorder %s15, 0
    %p161 = por %p159, %p160
    %p162 = scmp.ne.s32.totalorder %s154, %s156
    %p163 = scmp.eq.s32.totalorder %s20, 1
    %p164 = por %p162, %p163
    %p165 = scmp.ne.s32.totalorder %s156, %s157
    %p166 = scmp.eq.s32.totalorder %s20, 0
    %p167 = por %p165, %p166
    %p168 = scmp.ne.s32.totalorder %s156, %s157
    %p169 = scmp.eq.s32.totalorder %s21, 1
    %p170 = por %p168, %p169
    %p172 = scmp.ne.s32.totalorder %s157, %s171
    %p173 = scmp.eq.s32.totalorder %s21, 0
    %p174 = por %p172, %p173
    %s175 = ssub.s32 %s15, %s22
    %p176 = scmp.eq.s32.totalorder %s175, 0
    %s178 = sadd.s32 %s177, 1
    %s179 = scalar_select %p176, %s177, %s178
    %p182 = pneg %p176
    %p183 = scmp.eq.s32.totalorder %s15, 1
    %p184 = por %p182, %p183
    %p185 = scmp.ne.s32.totalorder %s177, %s180
    %p186 = scmp.eq.s32.totalorder %s15, 0
    %p187 = por %p185, %p186
    %p188 = scmp.ne.s32.totalorder %s177, %s180
    %p189 = scmp.eq.s32.totalorder %s20, 1
    %p190 = por %p188, %p189
    %p191 = scmp.ne.s32.totalorder %s180, %s181
    %p192 = scmp.eq.s32.totalorder %s20, 0
    %p193 = por %p191, %p192
    %p194 = scmp.ne.s32.totalorder %s180, %s181
    %p195 = scmp.eq.s32.totalorder %s21, 1
    %p196 = por %p194, %p195
    %p198 = scmp.ne.s32.totalorder %s181, %s197
    %p199 = scmp.eq.s32.totalorder %s21, 0
    %p200 = por %p198, %p199
    %s201 = ssub.s32 %s15, %s22
    %p202 = scmp.eq.s32.totalorder %s201, 0
    %s204 = sadd.s32 %s203, 1
    %s205 = scalar_select %p202, %s203, %s204
    %p208 = pneg %p202
    %p209 = scmp.eq.s32.totalorder %s15, 1
    %p210 = por %p208, %p209
    %p211 = scmp.ne.s32.totalorder %s203, %s206
    %p212 = scmp.eq.s32.totalorder %s15, 0
    %p213 = por %p211, %p212
    %p214 = scmp.ne.s32.totalorder %s203, %s206
    %p215 = scmp.eq.s32.totalorder %s20, 1
    %p216 = por %p214, %p215
    %p217 = scmp.ne.s32.totalorder %s206, %s207
    %p218 = scmp.eq.s32.totalorder %s20, 0
    %p219 = por %p217, %p218
    %p220 = scmp.ne.s32.totalorder %s206, %s207
    %p221 = scmp.eq.s32.totalorder %s21, 1
    %p222 = por %p220, %p221
    %p224 = scmp.ne.s32.totalorder %s207, %s223
    %p225 = scmp.eq.s32.totalorder %s21, 0
    %p226 = por %p224, %p225
    %p227 = scmp.le.s32.totalorder 1, %s15
    %p228 = scmp.lt.s32.totalorder %s15, 3
    %p229 = pnand %p227, %p228
    %p230 = pneg %p229
    // Predicated region
    $region9: #{_lambda_.4} parent=5 // pred_check
      _
    $region10: #{_lambda_.4} parent=5 // pred_check_branch
      %232 = sbr.rel (%p229) target = $region12
    $region11: #{_lambda_.4} parent=5 // pred_region
      %s233 = ssub.s32 %s15, 1
      // Predicated region
      $region13: #{_lambda_.4} parent=11 // pred_check
        %p234 = pneg %p62
      $region14: #{_lambda_.4} parent=11 // pred_check_branch
        %236 = sbr.rel (%p234) target = $region16
      $region15: #{_lambda_.4} parent=11 // pred_region
        _
      $region16: #{_lambda_.4} parent=11 // pred_fallthru
        _
      // Predicated region
      $region17: #{_lambda_.4} parent=11 // pred_check
        %p237 = pneg %p83
      $region18: #{_lambda_.4} parent=11 // pred_check_branch
        %239 = sbr.rel (%p237) target = $region20
      $region19: #{_lambda_.4} parent=11 // pred_region
        _
      $region20: #{_lambda_.4} parent=11 // pred_fallthru
        _
      // Predicated region
      $region21: #{_lambda_.4} parent=11 // pred_check
        %p240 = pneg %p104
      $region22: #{_lambda_.4} parent=11 // pred_check_branch
        %242 = sbr.rel (%p240) target = $region24
      $region23: #{_lambda_.4} parent=11 // pred_region
        _
      $region24: #{_lambda_.4} parent=11 // pred_fallthru
        _
      // Predicated region
      $region25: #{_lambda_.4} parent=11 // pred_check
        %p243 = pneg %p125
      $region26: #{_lambda_.4} parent=11 // pred_check_branch
        %245 = sbr.rel (%p243) target = $region28
      $region27: #{_lambda_.4} parent=11 // pred_region
        _
      $region28: #{_lambda_.4} parent=11 // pred_fallthru
        _
      // Predicated region
      $region29: #{_lambda_.4} parent=11 // pred_check
        %p246 = pneg %p146
      $region30: #{_lambda_.4} parent=11 // pred_check_branch
        %248 = sbr.rel (%p246) target = $region32
      $region31: #{_lambda_.4} parent=11 // pred_region
        _
      $region32: #{_lambda_.4} parent=11 // pred_fallthru
        _
      // Predicated region
      $region33: #{_lambda_.4} parent=11 // pred_check
        %p249 = pneg %p167
      $region34: #{_lambda_.4} parent=11 // pred_check_branch
        %251 = sbr.rel (%p249) target = $region36
      $region35: #{_lambda_.4} parent=11 // pred_region
        _
      $region36: #{_lambda_.4} parent=11 // pred_fallthru
        _
    $region12: #{_lambda_.4} parent=5 // pred_fallthru
      _
    %p252 = scmp.lt.s32.totalorder %s15, 2
    // Predicated region
    $region37: #{_lambda_.4} parent=5 // pred_check
      %p253 = pneg %p252
    $region38: #{_lambda_.4} parent=5 // pred_check_branch
      %255 = sbr.rel (%p253) target = $region40
    $region39: #{_lambda_.4} parent=5 // pred_region
      // Predicated region
      $region41: #{_lambda_.4} parent=39 // pred_check
        %p256 = pneg %p35
      $region42: #{_lambda_.4} parent=39 // pred_check_branch
        %258 = sbr.rel (%p256) target = $region44
      $region43: #{_lambda_.4} parent=39 // pred_region
        %p259 = scmp.lt.s32.totalorder %s15, 1
        %s260 = scalar_select %p259, %s15, 1
        %s261 = smul.addr %s260, 2
        %s262 = smul.addr %s261, 8
        %s263 = scalar_lea.vmem %s0, %s262
      $region44: #{_lambda_.4} parent=39 // pred_fallthru
        _
    $region40: #{_lambda_.4} parent=5 // pred_fallthru
      _
    %p264 = scmp.le.s32.totalorder 1, %s15
    %p265 = scmp.lt.s32.totalorder %s15, 3
    %p266 = pnand %p264, %p265
    %p267 = pneg %p266
    // Predicated region
    $region45: #{_lambda_.4} parent=5 // pred_check
      _
    $region46: #{_lambda_.4} parent=5 // pred_check_branch
      %269 = sbr.rel (%p266) target = $region48
    $region47: #{_lambda_.4} parent=5 // pred_region
      %s270 = ssub.s32 %s15, 1
      %p271 = scmp.lt.s32.totalorder %s20, 1
      %s272 = scalar_select %p271, %s20, 1
      %s273 = smul.addr %s272, 2
      %s274 = smul.addr %s273, 8
      %s275 = scalar_lea.vmem %s0, %s274
      %p276 = pneg %p41
      %p277 = pneg %p38
      %p278 = pneg %p62
      %p279 = pneg %p59
      %p280 = pneg %p83
      %p281 = pneg %p80
      %p282 = pneg %p104
      %p283 = pneg %p101
      %p284 = pneg %p125
      %p285 = pneg %p122
      %p286 = pneg %p146
      %p287 = pneg %p143
      %p288 = pneg %p167
      %p289 = pneg %p164
      %p290 = pneg %p193
      %p291 = pneg %p190
      %p292 = scmp.lt.s32.totalorder %s20, 1
      %s293 = scalar_select %p292, %s20, 1
      %s294 = smul.addr %s293, 8
      %s295 = smul.addr %s294, 8
      %s296 = scalar_lea.vmem %s7, %s295
      %p297 = pneg %p219
      %p298 = pneg %p216
      %p299 = scmp.lt.s32.totalorder %s20, 1
      %s300 = scalar_select %p299, %s20, 1
      %s301 = smul.addr %s300, 8
      %s302 = smul.addr %s301, 8
      %s303 = scalar_lea.vmem %s8, %s302
      %p304 = scmp.lt.s32.totalorder %s20, 1
      %s305 = scalar_select %p304, %s20, 1
      %s306 = smul.addr %s305, 2
      %s307 = smul.addr %s306, 8
      %s308 = scalar_lea.vmem %s0, %s307
      %p309 = scmp.lt.s32.totalorder %s20, 1
      %s310 = scalar_select %p309, %s20, 1
      %s311 = smul.addr %s310, 8
      %s312 = smul.addr %s311, 8
      %s313 = scalar_lea.vmem %s7, %s312
      %p314 = scmp.lt.s32.totalorder %s20, 1
      %s315 = scalar_select %p314, %s20, 1
      %s316 = smul.addr %s315, 8
      %s317 = smul.addr %s316, 8
      %s318 = scalar_lea.vmem %s8, %s317
      %v320 = vld [vmem:[%s1] sm:$0xff]
      %v321 = vld [vmem:[%s1 + $0x8] sm:$0xff]
      %v322 = vld [vmem:[%s1 + $0x10] sm:$0xff]
      %v323 = vld [vmem:[%s1 + $0x18] sm:$0xff]
      %v324 = vld [vmem:[%s1 + $0x20] sm:$0xff]
      %v325 = vld [vmem:[%s1 + $0x28] sm:$0xff]
      %v326 = vld [vmem:[%s1 + $0x30] sm:$0xff]
      %v327 = vld [vmem:[%s1 + $0x38] sm:$0xff]
      %v328 = vld [vmem:[%s308] sm:$0xff]
      %v329 = vld [vmem:[%s308 + $0x8] sm:$0xff]
      %vm330 = vcmask 130048
      %v332 = vsel %vm330, %v320, 0
      %v335 = vsel %vm330, %v321, 0
      %v338 = vsel %vm330, %v322, 0
      %v341 = vsel %vm330, %v323, 0
      %v344 = vsel %vm330, %v324, 0
      %v347 = vsel %vm330, %v325, 0
      %v350 = vsel %vm330, %v326, 0
      %v353 = vsel %vm330, %v327, 0
      %355 = vmatprep.subr.mxu0 0.0
      %356 = vmatpush1.msra.mxu0 0.0
      %357 = vmatprep.subr.mxu0 0.0
      %358 = vmatpush1.msra.mxu0 0.0
      %359 = vmatprep.subr.mxu0 0.0
      %360 = vmatpush1.msra.mxu0 0.0
      %361 = vmatprep.subr.mxu0 0.0
      %362 = vmatpush1.msra.mxu0 0.0
      %363 = vmatprep.subr.mxu0 0.0
      %364 = vmatpush1.msra.mxu0 0.0
      %365 = vmatprep.subr.mxu0 0.0
      %366 = vmatpush1.msra.mxu0 0.0
      %367 = vmatprep.subr.mxu0 0.0
      %368 = vmatpush1.msra.mxu0 0.0
      %369 = vmatprep.subr.mxu0 0.0
      %370 = vmatpush1.msra.mxu0 0.0
      %371 = vmatprep.subr.mxu0 0.0
      %372 = vmatpush1.msra.mxu0 0.0
      %373 = vmatprep.subr.mxu0 0.0
      %374 = vmatpush1.msra.mxu0 0.0
      %375 = vmatprep.subr.mxu0 0.0
      %376 = vmatpush1.msra.mxu0 0.0
      %377 = vmatprep.subr.mxu0 0.0
      %378 = vmatpush1.msra.mxu0 0.0
      %379 = vmatprep.subr.mxu0 0.0
      %380 = vmatpush1.msra.mxu0 0.0
      %381 = vmatprep.subr.mxu0 0.0
      %382 = vmatpush1.msra.mxu0 0.0
      %383 = vmatprep.subr.mxu0 0.0
      %384 = vmatpush1.msra.mxu0 %v329
      %385 = vmatprep.subr.mxu0 0.0
      %386 = vmatpush1.msra.mxu0 %v328
      %387 = vmatprep.subr.mxu0 0.0
      %388 = vmatpush2.msra.mxu0 0.0
      %389 = vmatprep.subr.mxu0 0.0
      %390 = vmatpush2.msra.mxu0 0.0
      %391 = vmatprep.subr.mxu0 0.0
      %392 = vmatpush2.msra.mxu0 0.0
      %393 = vmatprep.subr.mxu0 0.0
      %394 = vmatpush2.msra.mxu0 0.0
      %395 = vmatprep.subr.mxu0 0.0
      %396 = vmatpush2.msra.mxu0 0.0
      %397 = vmatprep.subr.mxu0 0.0
      %398 = vmatpush2.msra.mxu0 0.0
      %399 = vmatprep.subr.mxu0 0.0
      %400 = vmatpush2.msra.mxu0 0.0
      %401 = vmatprep.subr.mxu0 0.0
      %402 = vmatpush2.msra.mxu0 0.0
      %403 = vmatprep.subr.mxu0 0.0
      %404 = vmatpush2.msra.mxu0 0.0
      %405 = vmatprep.subr.mxu0 0.0
      %406 = vmatpush2.msra.mxu0 0.0
      %407 = vmatprep.subr.mxu0 0.0
      %408 = vmatpush2.msra.mxu0 0.0
      %409 = vmatprep.subr.mxu0 0.0
      %410 = vmatpush2.msra.mxu0 0.0
      %411 = vmatprep.subr.mxu0 0.0
      %412 = vmatpush2.msra.mxu0 0.0
      %413 = vmatprep.subr.mxu0 0.0
      %414 = vmatpush2.msra.mxu0 0.0
      %415 = vmatprep.subr.mxu0 0.0
      %416 = vmatpush2.msra.mxu0 0.0
      %417 = vmatprep.subr.mxu0 0.0
      %418 = vmatpush2.msra.mxu0 0.0
      %419 = vmatprep.mubr.f32.mxu0 0.0
      %420 = vmatmul.mubr.f32.gmra.mxu0 %v332
      %v421 = vpop.f32.mrf.mxu0
      %v422 = vadd.f32 0.0, %v421
      %v423 = vpop.f32.mrf.mxu0
      %424 = vmatprep.mubr.f32.mxu0 0.0
      %425 = vmatmul.mubr.f32.gmra.mxu0 %v335
      %v426 = vpop.f32.mrf.mxu0
      %v427 = vadd.f32 0.0, %v426
      %v428 = vpop.f32.mrf.mxu0
      %429 = vmatprep.mubr.f32.mxu0 0.0
      %430 = vmatmul.mubr.f32.gmra.mxu0 %v338
      %v431 = vpop.f32.mrf.mxu0
      %v432 = vadd.f32 0.0, %v431
      %v433 = vpop.f32.mrf.mxu0
      %434 = vmatprep.mubr.f32.mxu0 0.0
      %435 = vmatmul.mubr.f32.gmra.mxu0 %v341
      %v436 = vpop.f32.mrf.mxu0
      %v437 = vadd.f32 0.0, %v436
      %v438 = vpop.f32.mrf.mxu0
      %439 = vmatprep.mubr.f32.mxu0 0.0
      %440 = vmatmul.mubr.f32.gmra.mxu0 %v344
      %v441 = vpop.f32.mrf.mxu0
      %v442 = vadd.f32 0.0, %v441
      %v443 = vpop.f32.mrf.mxu0
      %444 = vmatprep.mubr.f32.mxu0 0.0
      %445 = vmatmul.mubr.f32.gmra.mxu0 %v347
      %v446 = vpop.f32.mrf.mxu0
      %v447 = vadd.f32 0.0, %v446
      %v448 = vpop.f32.mrf.mxu0
      %449 = vmatprep.mubr.f32.mxu0 0.0
      %450 = vmatmul.mubr.f32.gmra.mxu0 %v350
      %v451 = vpop.f32.mrf.mxu0
      %v452 = vadd.f32 0.0, %v451
      %v453 = vpop.f32.mrf.mxu0
      %454 = vmatprep.mubr.f32.mxu0 0.0
      %455 = vmatmul.mubr.f32.gmra.mxu0 %v353
      %v456 = vpop.f32.mrf.mxu0
      %v457 = vadd.f32 0.0, %v456
      %v458 = vpop.f32.mrf.mxu0
      %459 = vdwg.mxu0
      %v460 = vpack.c.bf16 %v427, %v422
      %v461 = vpack.c.bf16 %v437, %v432
      %v462 = vpack.c.bf16 %v447, %v442
      %v463 = vpack.c.bf16 %v457, %v452
      %v464 = vld [vmem:[%s6] sm:$0xf]
      %v465 = vld [vmem:[%s6 + $0x4] sm:$0xf]
      %v466 = vld [vmem:[%s6 + $0x8] sm:$0xf]
      %v467 = vld [vmem:[%s6 + $0xc] sm:$0xf]
      %v472 = vunpack.c.l.b16 %v464
      %v473 = vunpack.c.l.b16 %v465
      %v474 = vunpack.c.l.b16 %v466
      %v475 = vunpack.c.l.b16 %v467
      %v476 = vpack.c.b16 %v473, %v472
      %v477 = vpack.c.b16 %v475, %v474
      %vm480 = vcmask 261120
      %v482 = vsel %vm480, %v460, 0
      %v485 = vsel %vm480, %v461, 0
      %v488 = vsel %vm480, %v462, 0
      %v491 = vsel %vm480, %v463, 0
      %493 = vmatprep.subr.bf16.mxu0 0
      %494 = vmatpush1.bf16.msra.mxu0 0
      %495 = vmatprep.subr.bf16.mxu0 0
      %496 = vmatpush1.bf16.msra.mxu0 0
      %497 = vmatprep.subr.bf16.mxu0 0
      %498 = vmatpush1.bf16.msra.mxu0 0
      %499 = vmatprep.subr.bf16.mxu0 0
      %500 = vmatpush1.bf16.msra.mxu0 0
      %501 = vmatprep.subr.bf16.mxu0 0
      %502 = vmatpush1.bf16.msra.mxu0 0
      %503 = vmatprep.subr.bf16.mxu0 0
      %504 = vmatpush1.bf16.msra.mxu0 0
      %505 = vmatprep.subr.bf16.mxu0 0
      %506 = vmatpush1.bf16.msra.mxu0 %v477
      %507 = vmatprep.subr.bf16.mxu0 0
      %508 = vmatpush1.bf16.msra.mxu0 %v476
      %509 = vmatprep.subr.bf16.mxu0 0
      %510 = vmatpush2.bf16.msra.mxu0 0
      %511 = vmatprep.subr.bf16.mxu0 0
      %512 = vmatpush2.bf16.msra.mxu0 0
      %513 = vmatprep.subr.bf16.mxu0 0
      %514 = vmatpush2.bf16.msra.mxu0 0
      %515 = vmatprep.subr.bf16.mxu0 0
      %516 = vmatpush2.bf16.msra.mxu0 0
      %517 = vmatprep.subr.bf16.mxu0 0
      %518 = vmatpush2.bf16.msra.mxu0 0
      %519 = vmatprep.subr.bf16.mxu0 0
      %520 = vmatpush2.bf16.msra.mxu0 0
      %521 = vmatprep.subr.bf16.mxu0 0
      %522 = vmatpush2.bf16.msra.mxu0 0
      %523 = vmatprep.subr.bf16.mxu0 0
      %524 = vmatpush2.bf16.msra.mxu0 0
      %525 = vmatprep.mubr.bf16.mxu0 0
      %526 = vmatmul.mubr.bf16.gmra.mxu0 %v482
      %v527 = vpop.f32.mrf.mxu0
      %v528 = vadd.f32 0.0, %v527
      %v529 = vpop.f32.mrf.mxu0
      %v530 = vpop.f32.mrf.mxu0
      %v531 = vadd.f32 0.0, %v530
      %v532 = vpop.f32.mrf.mxu0
      %533 = vmatprep.mubr.bf16.mxu0 0
      %534 = vmatmul.mubr.bf16.gmra.mxu0 %v485
      %v535 = vpop.f32.mrf.mxu0
      %v536 = vadd.f32 0.0, %v535
      %v537 = vpop.f32.mrf.mxu0
      %v538 = vpop.f32.mrf.mxu0
      %v539 = vadd.f32 0.0, %v538
      %v540 = vpop.f32.mrf.mxu0
      %541 = vmatprep.mubr.bf16.mxu0 0
      %542 = vmatmul.mubr.bf16.gmra.mxu0 %v488
      %v543 = vpop.f32.mrf.mxu0
      %v544 = vadd.f32 0.0, %v543
      %v545 = vpop.f32.mrf.mxu0
      %v546 = vpop.f32.mrf.mxu0
      %v547 = vadd.f32 0.0, %v546
      %v548 = vpop.f32.mrf.mxu0
      %549 = vmatprep.mubr.bf16.mxu0 0
      %550 = vmatmul.mubr.bf16.gmra.mxu0 %v491
      %v551 = vpop.f32.mrf.mxu0
      %v552 = vadd.f32 0.0, %v551
      %v553 = vpop.f32.mrf.mxu0
      %v554 = vpop.f32.mrf.mxu0
      %v555 = vadd.f32 0.0, %v554
      %v556 = vpop.f32.mrf.mxu0
      %557 = vdwg.mxu0
      %v558 = vlaneseq
      %v559 = vshrl.u32 %v558, 7
      %vm560 = vcmp.ge.s32.totalorder %v559, 1
      %vm561 = vcmp.le.s32.totalorder %v559, 6
      %vm569 = vcmask 1040384
      %v570 = vrot.slane %v422, 7
      %v571 = vrot.slane %v427, 7
      %v572 = vsel %vm569, %v570, %v571
      %v573 = vrot.slane %v432, 7
      %v574 = vsel %vm569, %v571, %v573
      %v575 = vrot.slane %v437, 7
      %v576 = vsel %vm569, %v573, %v575
      %v577 = vrot.slane %v442, 7
      %v578 = vsel %vm569, %v575, %v577
      %v579 = vrot.slane %v447, 7
      %v580 = vsel %vm569, %v577, %v579
      %v581 = vrot.slane %v452, 7
      %v582 = vsel %vm569, %v579, %v581
      %v590 = vsel %vm569, 0.0, %v570
      %v591 = vsel %vm560, %v590, 0.0
      %v592 = vsel %vm560, %v572, 0.0
      %v593 = vsel %vm560, %v574, 0.0
      %v594 = vsel %vm560, %v576, 0.0
      %v595 = vsel %vm560, %v578, 0.0
      %v596 = vsel %vm560, %v580, 0.0
      %v597 = vsel %vm560, %v582, 0.0
      %vm599 = vcmask 1046528
      %v600 = vrot.slane %v422, 1
      %v601 = vrot.slane %v427, 1
      %v602 = vsel %vm599, %v600, %v601
      %v603 = vrot.slane %v432, 1
      %v604 = vsel %vm599, %v601, %v603
      %v605 = vrot.slane %v437, 1
      %v606 = vsel %vm599, %v603, %v605
      %v607 = vrot.slane %v442, 1
      %v608 = vsel %vm599, %v605, %v607
      %v609 = vrot.slane %v447, 1
      %v610 = vsel %vm599, %v607, %v609
      %v611 = vrot.slane %v452, 1
      %v612 = vsel %vm599, %v609, %v611
      %v613 = vrot.slane %v457, 1
      %v614 = vsel %vm599, %v611, %v613
      %v623 = vsel %vm599, 0.0, %v600
      %v624 = vsel %vm561, %v623, 0.0
      %v625 = vsel %vm561, %v602, 0.0
      %v626 = vsel %vm561, %v604, 0.0
      %v627 = vsel %vm561, %v606, 0.0
      %v628 = vsel %vm561, %v608, 0.0
      %v629 = vsel %vm561, %v610, 0.0
      %v630 = vsel %vm561, %v612, 0.0
      %v631 = vsel %vm561, %v614, 0.0
      %v632 = vrot.slane %v457, 7
      %v633 = vsel %vm569, %v581, %v632
      %v635 = vsel %vm560, %v633, 0.0
      %v637 = vsel %vm599, %v613, 0.0
      %v638 = vsel %vm561, %v637, 0.0
      %v640 = vsel %vm569, %v632, 0.0
      %v641 = vsel %vm560, %v640, 0.0
      %643 = vrot.lane.b32.xlu0 0.0, 32
      %v644 = vpop.permute.xlu0 %643
      %645 = vrot.lane.b32.xlu0 %v422, 32
      %v646 = vpop.permute.xlu0 %645
      %647 = vrot.lane.b32.xlu0 %v427, 32
      %v648 = vpop.permute.xlu0 %647
      %649 = vrot.lane.b32.xlu0 %v432, 32
      %v650 = vpop.permute.xlu0 %649
      %651 = vrot.lane.b32.xlu0 %v437, 32
      %v652 = vpop.permute.xlu0 %651
      %653 = vrot.lane.b32.xlu0 %v442, 32
      %v654 = vpop.permute.xlu0 %653
      %655 = vrot.lane.b32.xlu0 %v447, 32
      %v656 = vpop.permute.xlu0 %655
      %657 = vrot.lane.b32.xlu0 %v452, 32
      %v658 = vpop.permute.xlu0 %657
      %675 = vrot.lane.b32.xlu0 %v624, 64
      %v676 = vpop.permute.xlu0 %675
      %677 = vrot.lane.b32.xlu0 %v625, 64
      %v678 = vpop.permute.xlu0 %677
      %679 = vrot.lane.b32.xlu0 %v626, 64
      %v680 = vpop.permute.xlu0 %679
      %681 = vrot.lane.b32.xlu0 %v627, 64
      %v682 = vpop.permute.xlu0 %681
      %683 = vrot.lane.b32.xlu0 %v628, 64
      %v684 = vpop.permute.xlu0 %683
      %685 = vrot.lane.b32.xlu0 %v629, 64
      %v686 = vpop.permute.xlu0 %685
      %687 = vrot.lane.b32.xlu0 %v630, 64
      %v688 = vpop.permute.xlu0 %687
      %689 = vrot.lane.b32.xlu0 %v631, 64
      %v690 = vpop.permute.xlu0 %689
      %707 = vrot.lane.b32.xlu0 %v591, 96
      %v708 = vpop.permute.xlu0 %707
      %709 = vrot.lane.b32.xlu0 %v592, 96
      %v710 = vpop.permute.xlu0 %709
      %711 = vrot.lane.b32.xlu0 %v593, 96
      %v712 = vpop.permute.xlu0 %711
      %713 = vrot.lane.b32.xlu0 %v594, 96
      %v714 = vpop.permute.xlu0 %713
      %715 = vrot.lane.b32.xlu0 %v595, 96
      %v716 = vpop.permute.xlu0 %715
      %717 = vrot.lane.b32.xlu0 %v596, 96
      %v718 = vpop.permute.xlu0 %717
      %719 = vrot.lane.b32.xlu0 %v597, 96
      %v720 = vpop.permute.xlu0 %719
      %721 = vrot.lane.b32.xlu0 %v635, 96
      %v722 = vpop.permute.xlu0 %721
      %732 = vrot.lane.b32.xlu0 %v625, 32
      %v733 = vpop.permute.xlu0 %732
      %734 = vrot.lane.b32.xlu0 %v626, 32
      %v735 = vpop.permute.xlu0 %734
      %736 = vrot.lane.b32.xlu0 %v627, 32
      %v737 = vpop.permute.xlu0 %736
      %738 = vrot.lane.b32.xlu0 %v628, 32
      %v739 = vpop.permute.xlu0 %738
      %740 = vrot.lane.b32.xlu0 %v629, 32
      %v741 = vpop.permute.xlu0 %740
      %742 = vrot.lane.b32.xlu0 %v630, 32
      %v743 = vpop.permute.xlu0 %742
      %744 = vrot.lane.b32.xlu0 %v631, 32
      %v745 = vpop.permute.xlu0 %744
      %746 = vrot.lane.b32.xlu0 %v638, 32
      %v747 = vpop.permute.xlu0 %746
      %757 = vrot.lane.b32.xlu0 %v592, 64
      %v758 = vpop.permute.xlu0 %757
      %759 = vrot.lane.b32.xlu0 %v593, 64
      %v760 = vpop.permute.xlu0 %759
      %761 = vrot.lane.b32.xlu0 %v594, 64
      %v762 = vpop.permute.xlu0 %761
      %763 = vrot.lane.b32.xlu0 %v595, 64
      %v764 = vpop.permute.xlu0 %763
      %765 = vrot.lane.b32.xlu0 %v596, 64
      %v766 = vpop.permute.xlu0 %765
      %767 = vrot.lane.b32.xlu0 %v597, 64
      %v768 = vpop.permute.xlu0 %767
      %769 = vrot.lane.b32.xlu0 %v635, 64
      %v770 = vpop.permute.xlu0 %769
      %771 = vrot.lane.b32.xlu0 %v641, 64
      %v772 = vpop.permute.xlu0 %771
      %781 = vrot.lane.b32.xlu0 %v427, 96
      %v782 = vpop.permute.xlu0 %781
      %783 = vrot.lane.b32.xlu0 %v432, 96
      %v784 = vpop.permute.xlu0 %783
      %785 = vrot.lane.b32.xlu0 %v437, 96
      %v786 = vpop.permute.xlu0 %785
      %787 = vrot.lane.b32.xlu0 %v442, 96
      %v788 = vpop.permute.xlu0 %787
      %789 = vrot.lane.b32.xlu0 %v447, 96
      %v790 = vpop.permute.xlu0 %789
      %791 = vrot.lane.b32.xlu0 %v452, 96
      %v792 = vpop.permute.xlu0 %791
      %793 = vrot.lane.b32.xlu0 %v457, 96
      %v794 = vpop.permute.xlu0 %793
      %795 = vrot.lane.b32.xlu0 0.0, 96
      %v796 = vpop.permute.xlu0 %795
      %v805 = vsel %vm480, 0.0, %v644
      %v806 = vsel %vm480, %v591, %v646
      %v807 = vsel %vm480, %v592, %v648
      %v808 = vsel %vm480, %v593, %v650
      %v809 = vsel %vm480, %v594, %v652
      %v810 = vsel %vm480, %v595, %v654
      %v811 = vsel %vm480, %v596, %v656
      %v812 = vsel %vm480, %v597, %v658
      %vm813 = vcmask 523264
      %v814 = vsel %vm813, %v805, %v676
      %v815 = vsel %vm813, %v806, %v678
      %v816 = vsel %vm813, %v807, %v680
      %v817 = vsel %vm813, %v808, %v682
      %v818 = vsel %vm813, %v809, %v684
      %v819 = vsel %vm813, %v810, %v686
      %v820 = vsel %vm813, %v811, %v688
      %v821 = vsel %vm813, %v812, %v690
      %vm822 = vcmask 785408
      %v823 = vsel %vm822, %v814, %v708
      %v824 = vsel %vm822, %v815, %v710
      %v825 = vsel %vm822, %v816, %v712
      %v826 = vsel %vm822, %v817, %v714
      %v827 = vsel %vm822, %v818, %v716
      %v828 = vsel %vm822, %v819, %v718
      %v829 = vsel %vm822, %v820, %v720
      %v830 = vsel %vm822, %v821, %v722
      %v831 = vsel %vm480, %v422, %v733
      %v832 = vsel %vm480, %v427, %v735
      %v833 = vsel %vm480, %v432, %v737
      %v834 = vsel %vm480, %v437, %v739
      %v835 = vsel %vm480, %v442, %v741
      %v836 = vsel %vm480, %v447, %v743
      %v837 = vsel %vm480, %v452, %v745
      %v838 = vsel %vm480, %v457, %v747
      %v839 = vsel %vm813, %v831, %v758
      %v840 = vsel %vm813, %v832, %v760
      %v841 = vsel %vm813, %v833, %v762
      %v842 = vsel %vm813, %v834, %v764
      %v843 = vsel %vm813, %v835, %v766
      %v844 = vsel %vm813, %v836, %v768
      %v845 = vsel %vm813, %v837, %v770
      %v846 = vsel %vm813, %v838, %v772
      %v847 = vsel %vm822, %v839, %v782
      %v848 = vsel %vm822, %v840, %v784
      %v849 = vsel %vm822, %v841, %v786
      %v850 = vsel %vm822, %v842, %v788
      %v851 = vsel %vm822, %v843, %v790
      %v852 = vsel %vm822, %v844, %v792
      %v853 = vsel %vm822, %v845, %v794
      %v854 = vsel %vm822, %v846, %v796
      %v855 = vpack.c.bf16 %v824, %v823
      %v856 = vpack.c.bf16 %v848, %v847
      %v857 = vpack.c.bf16 %v627, %v626
      %v858 = vpack.c.bf16 %v826, %v825
      %v859 = vpack.c.bf16 %v850, %v849
      %v860 = vpack.c.bf16 %v629, %v628
      %v861 = vpack.c.bf16 %v828, %v827
      %v862 = vpack.c.bf16 %v852, %v851
      %v863 = vpack.c.bf16 %v631, %v630
      %v864 = vpack.c.bf16 %v830, %v829
      %v865 = vpack.c.bf16 %v854, %v853
      %v866 = vpack.c.bf16 0.0, %v638
      %v867 = vld [vmem:[%s2] sm:$0xf]
      %v868 = vld [vmem:[%s2 + $0x4] sm:$0xf]
      %v869 = vld [vmem:[%s2 + $0x8] sm:$0xf]
      %v870 = vld [vmem:[%s2 + $0xc] sm:$0xf]
      %v871 = vld [vmem:[%s2 + $0x10] sm:$0xf]
      %v872 = vld [vmem:[%s2 + $0x14] sm:$0xf]
      %v873 = vld [vmem:[%s2 + $0x18] sm:$0xf]
      %v874 = vld [vmem:[%s2 + $0x1c] sm:$0xf]
      %v875 = vld [vmem:[%s2 + $0x20] sm:$0xf]
      %v876 = vld [vmem:[%s2 + $0x24] sm:$0xf]
      %v877 = vld [vmem:[%s2 + $0x28] sm:$0xf]
      %v878 = vld [vmem:[%s2 + $0x2c] sm:$0xf]
      %v879 = vld [vmem:[%s2 + $0x30] sm:$0xf]
      %v880 = vld [vmem:[%s2 + $0x34] sm:$0xf]
      %v881 = vld [vmem:[%s2 + $0x38] sm:$0xf]
      %v882 = vld [vmem:[%s2 + $0x3c] sm:$0xf]
      %v883 = vld [vmem:[%s2 + $0x40] sm:$0xf]
      %v884 = vld [vmem:[%s2 + $0x44] sm:$0xf]
      %v885 = vld [vmem:[%s2 + $0x48] sm:$0xf]
      %v886 = vld [vmem:[%s2 + $0x4c] sm:$0xf]
      %v887 = vld [vmem:[%s2 + $0x50] sm:$0xf]
      %v888 = vld [vmem:[%s2 + $0x54] sm:$0xf]
      %v889 = vld [vmem:[%s2 + $0x58] sm:$0xf]
      %v890 = vld [vmem:[%s2 + $0x5c] sm:$0xf]
      %v891 = vld [vmem:[%s2 + $0x60] sm:$0xf]
      %v892 = vld [vmem:[%s2 + $0x64] sm:$0xf]
      %v893 = vld [vmem:[%s2 + $0x68] sm:$0xf]
      %v894 = vld [vmem:[%s2 + $0x6c] sm:$0xf]
      %v895 = vld [vmem:[%s2 + $0x70] sm:$0xf]
      %v896 = vld [vmem:[%s2 + $0x74] sm:$0xf]
      %v897 = vld [vmem:[%s2 + $0x78] sm:$0xf]
      %v898 = vld [vmem:[%s2 + $0x7c] sm:$0xf]
      %v899 = vld [vmem:[%s2 + $0x80] sm:$0xf]
      %v900 = vld [vmem:[%s2 + $0x84] sm:$0xf]
      %v901 = vld [vmem:[%s2 + $0x88] sm:$0xf]
      %v902 = vld [vmem:[%s2 + $0x8c] sm:$0xf]
      %v903 = vld [vmem:[%s3] sm:$0x1]
      %v905 = vlaneseq
      %v906 = vshrl.u32 %v905, 7
      %v907 = vsub.s32 0, %v906
      %v908 = vrot.slane %v903, %v907
      %v946 = vunpack.c.l.b16 %v867
      %v947 = vunpack.c.l.b16 %v868
      %v948 = vunpack.c.l.b16 %v869
      %v949 = vunpack.c.l.b16 %v870
      %v950 = vunpack.c.l.b16 %v871
      %v951 = vunpack.c.l.b16 %v872
      %v952 = vunpack.c.l.b16 %v873
      %v953 = vunpack.c.l.b16 %v874
      %v954 = vunpack.c.l.b16 %v875
      %v955 = vunpack.c.l.b16 %v876
      %v956 = vunpack.c.l.b16 %v877
      %v957 = vunpack.c.l.b16 %v878
      %v958 = vunpack.c.l.b16 %v879
      %v959 = vunpack.c.l.b16 %v880
      %v960 = vunpack.c.l.b16 %v881
      %v961 = vunpack.c.l.b16 %v882
      %v962 = vunpack.c.l.b16 %v883
      %v963 = vunpack.c.l.b16 %v884
      %v964 = vunpack.c.l.b16 %v885
      %v965 = vunpack.c.l.b16 %v886
      %v966 = vunpack.c.l.b16 %v887
      %v967 = vunpack.c.l.b16 %v888
      %v968 = vunpack.c.l.b16 %v889
      %v969 = vunpack.c.l.b16 %v890
      %v970 = vunpack.c.l.b16 %v891
      %v971 = vunpack.c.l.b16 %v892
      %v972 = vunpack.c.l.b16 %v893
      %v973 = vunpack.c.l.b16 %v894
      %v974 = vunpack.c.l.b16 %v895
      %v975 = vunpack.c.l.b16 %v896
      %v976 = vunpack.c.l.b16 %v897
      %v977 = vunpack.c.l.b16 %v898
      %v978 = vunpack.c.l.b16 %v899
      %v979 = vunpack.c.l.b16 %v900
      %v980 = vunpack.c.l.b16 %v901
      %v981 = vunpack.c.l.b16 %v902
      %v982 = vpack.c.b16 %v947, %v946
      %v983 = vpack.c.b16 %v949, %v948
      %v984 = vpack.c.b16 %v951, %v950
      %v985 = vpack.c.b16 %v953, %v952
      %v986 = vpack.c.b16 %v955, %v954
      %v987 = vpack.c.b16 %v957, %v956
      %v988 = vpack.c.b16 %v959, %v958
      %v989 = vpack.c.b16 %v961, %v960
      %v990 = vpack.c.b16 %v963, %v962
      %v991 = vpack.c.b16 %v965, %v964
      %v992 = vpack.c.b16 %v967, %v966
      %v993 = vpack.c.b16 %v969, %v968
      %v994 = vpack.c.b16 %v971, %v970
      %v995 = vpack.c.b16 %v973, %v972
      %v996 = vpack.c.b16 %v975, %v974
      %v997 = vpack.c.b16 %v977, %v976
      %v998 = vpack.c.b16 %v979, %v978
      %v999 = vpack.c.b16 %v981, %v980
      %v1019 = vsel %vm480, %v857, 0
      %v1022 = vsel %vm480, %v860, 0
      %v1025 = vsel %vm480, %v863, 0
      %v1028 = vsel %vm480, %v866, 0
      %1030 = vmatprep.subr.bf16.mxu0 0
      %1031 = vmatpush1.bf16.msra.mxu0 %v989
      %1032 = vmatprep.subr.bf16.mxu0 0
      %1033 = vmatpush1.bf16.msra.mxu0 %v988
      %1034 = vmatprep.subr.bf16.mxu0 0
      %1035 = vmatpush1.bf16.msra.mxu0 %v987
      %1036 = vmatprep.subr.bf16.mxu0 0
      %1037 = vmatpush1.bf16.msra.mxu0 %v986
      %1038 = vmatprep.subr.bf16.mxu0 0
      %1039 = vmatpush1.bf16.msra.mxu0 %v985
      %1040 = vmatprep.subr.bf16.mxu0 0
      %1041 = vmatpush1.bf16.msra.mxu0 %v984
      %1042 = vmatprep.subr.bf16.mxu0 0
      %1043 = vmatpush1.bf16.msra.mxu0 %v983
      %1044 = vmatprep.subr.bf16.mxu0 0
      %1045 = vmatpush1.bf16.msra.mxu0 %v982
      %1046 = vmatprep.subr.bf16.mxu0 0
      %1047 = vmatpush2.bf16.msra.mxu0 %v997
      %1048 = vmatprep.subr.bf16.mxu0 0
      %1049 = vmatpush2.bf16.msra.mxu0 %v996
      %1050 = vmatprep.subr.bf16.mxu0 0
      %1051 = vmatpush2.bf16.msra.mxu0 %v995
      %1052 = vmatprep.subr.bf16.mxu0 0
      %1053 = vmatpush2.bf16.msra.mxu0 %v994
      %1054 = vmatprep.subr.bf16.mxu0 0
      %1055 = vmatpush2.bf16.msra.mxu0 %v993
      %1056 = vmatprep.subr.bf16.mxu0 0
      %1057 = vmatpush2.bf16.msra.mxu0 %v992
      %1058 = vmatprep.subr.bf16.mxu0 0
      %1059 = vmatpush2.bf16.msra.mxu0 %v991
      %1060 = vmatprep.subr.bf16.mxu0 0
      %1061 = vmatpush2.bf16.msra.mxu0 %v990
      %1062 = vmatprep.mubr.bf16.mxu0 %v856
      %1063 = vmatmul.mubr.bf16.gmra.mxu0 %v855
      %v1064 = vpop.f32.mrf.mxu0
      %v1065 = vadd.f32 %v908, %v1064
      %v1066 = vpop.f32.mrf.mxu0
      %v1067 = vpop.f32.mrf.mxu0
      %v1068 = vadd.f32 %v908, %v1067
      %v1069 = vpop.f32.mrf.mxu0
      %1070 = vmatprep.mubr.bf16.mxu0 %v859
      %1071 = vmatmul.mubr.bf16.gmra.mxu0 %v858
      %v1072 = vpop.f32.mrf.mxu0
      %v1073 = vadd.f32 %v908, %v1072
      %v1074 = vpop.f32.mrf.mxu0
      %v1075 = vpop.f32.mrf.mxu0
      %v1076 = vadd.f32 %v908, %v1075
      %v1077 = vpop.f32.mrf.mxu0
      %1078 = vmatprep.mubr.bf16.mxu0 %v862
      %1079 = vmatmul.mubr.bf16.gmra.mxu0 %v861
      %v1080 = vpop.f32.mrf.mxu0
      %v1081 = vadd.f32 %v908, %v1080
      %v1082 = vpop.f32.mrf.mxu0
      %v1083 = vpop.f32.mrf.mxu0
      %v1084 = vadd.f32 %v908, %v1083
      %v1085 = vpop.f32.mrf.mxu0
      %1086 = vmatprep.mubr.bf16.mxu0 %v865
      %1087 = vmatmul.mubr.bf16.gmra.mxu0 %v864
      %v1088 = vpop.f32.mrf.mxu0
      %v1089 = vadd.f32 %v908, %v1088
      %v1090 = vpop.f32.mrf.mxu0
      %v1091 = vpop.f32.mrf.mxu0
      %v1092 = vadd.f32 %v908, %v1091
      %v1093 = vpop.f32.mrf.mxu0
      %1094 = vdwg.mxu0
      %1095 = vmatprep.subr.bf16.mxu0 0
      %1096 = vmatpush1.bf16.msra.mxu0 0
      %1097 = vmatprep.subr.bf16.mxu0 0
      %1098 = vmatpush1.bf16.msra.mxu0 0
      %1099 = vmatprep.subr.bf16.mxu0 0
      %1100 = vmatpush1.bf16.msra.mxu0 0
      %1101 = vmatprep.subr.bf16.mxu0 0
      %1102 = vmatpush1.bf16.msra.mxu0 0
      %1103 = vmatprep.subr.bf16.mxu0 0
      %1104 = vmatpush1.bf16.msra.mxu0 0
      %1105 = vmatprep.subr.bf16.mxu0 0
      %1106 = vmatpush1.bf16.msra.mxu0 0
      %1107 = vmatprep.subr.bf16.mxu0 0
      %1108 = vmatpush1.bf16.msra.mxu0 %v999
      %1109 = vmatprep.subr.bf16.mxu0 0
      %1110 = vmatpush1.bf16.msra.mxu0 %v998
      %1111 = vmatprep.subr.bf16.mxu0 0
      %1112 = vmatpush2.bf16.msra.mxu0 0
      %1113 = vmatprep.subr.bf16.mxu0 0
      %1114 = vmatpush2.bf16.msra.mxu0 0
      %1115 = vmatprep.subr.bf16.mxu0 0
      %1116 = vmatpush2.bf16.msra.mxu0 0
      %1117 = vmatprep.subr.bf16.mxu0 0
      %1118 = vmatpush2.bf16.msra.mxu0 0
      %1119 = vmatprep.subr.bf16.mxu0 0
      %1120 = vmatpush2.bf16.msra.mxu0 0
      %1121 = vmatprep.subr.bf16.mxu0 0
      %1122 = vmatpush2.bf16.msra.mxu0 0
      %1123 = vmatprep.subr.bf16.mxu0 0
      %1124 = vmatpush2.bf16.msra.mxu0 0
      %1125 = vmatprep.subr.bf16.mxu0 0
      %1126 = vmatpush2.bf16.msra.mxu0 0
      %1127 = vmatprep.mubr.bf16.mxu0 0
      %1128 = vmatmul.mubr.bf16.gmra.mxu0 %v1019
      %v1129 = vpop.f32.mrf.mxu0
      %v1130 = vadd.f32 %v1065, %v1129
      %v1131 = vpop.f32.mrf.mxu0
      %v1132 = vpop.f32.mrf.mxu0
      %v1133 = vadd.f32 %v1068, %v1132
      %v1134 = vpop.f32.mrf.mxu0
      %1135 = vmatprep.mubr.bf16.mxu0 0
      %1136 = vmatmul.mubr.bf16.gmra.mxu0 %v1022
      %v1137 = vpop.f32.mrf.mxu0
      %v1138 = vadd.f32 %v1073, %v1137
      %v1139 = vpop.f32.mrf.mxu0
      %v1140 = vpop.f32.mrf.mxu0
      %v1141 = vadd.f32 %v1076, %v1140
      %v1142 = vpop.f32.mrf.mxu0
      %1143 = vmatprep.mubr.bf16.mxu0 0
      %1144 = vmatmul.mubr.bf16.gmra.mxu0 %v1025
      %v1145 = vpop.f32.mrf.mxu0
      %v1146 = vadd.f32 %v1081, %v1145
      %v1147 = vpop.f32.mrf.mxu0
      %v1148 = vpop.f32.mrf.mxu0
      %v1149 = vadd.f32 %v1084, %v1148
      %v1150 = vpop.f32.mrf.mxu0
      %1151 = vmatprep.mubr.bf16.mxu0 0
      %1152 = vmatmul.mubr.bf16.gmra.mxu0 %v1028
      %v1153 = vpop.f32.mrf.mxu0
      %v1154 = vadd.f32 %v1089, %v1153
      %v1155 = vpop.f32.mrf.mxu0
      %v1156 = vpop.f32.mrf.mxu0
      %v1157 = vadd.f32 %v1092, %v1156
      %v1158 = vpop.f32.mrf.mxu0
      %1159 = vdwg.mxu0
      %v1160 = vmax.f32 %v1130, 0.0
      %v1161 = vmax.f32 %v1133, 0.0
      %v1162 = vmax.f32 %v1138, 0.0
      %v1163 = vmax.f32 %v1141, 0.0
      %v1164 = vmax.f32 %v1146, 0.0
      %v1165 = vmax.f32 %v1149, 0.0
      %v1166 = vmax.f32 %v1154, 0.0
      %v1167 = vmax.f32 %v1157, 0.0
      %v1175 = vrot.slane %v1160, 7
      %v1176 = vrot.slane %v1161, 7
      %v1177 = vsel %vm569, %v1175, %v1176
      %v1178 = vrot.slane %v1162, 7
      %v1179 = vsel %vm569, %v1176, %v1178
      %v1180 = vrot.slane %v1163, 7
      %v1181 = vsel %vm569, %v1178, %v1180
      %v1182 = vrot.slane %v1164, 7
      %v1183 = vsel %vm569, %v1180, %v1182
      %v1184 = vrot.slane %v1165, 7
      %v1185 = vsel %vm569, %v1182, %v1184
      %v1186 = vrot.slane %v1166, 7
      %v1187 = vsel %vm569, %v1184, %v1186
      %v1195 = vsel %vm569, 0.0, %v1175
      %v1196 = vsel %vm560, %v1195, 0.0
      %v1197 = vsel %vm560, %v1177, 0.0
      %v1198 = vsel %vm560, %v1179, 0.0
      %v1199 = vsel %vm560, %v1181, 0.0
      %v1200 = vsel %vm560, %v1183, 0.0
      %v1201 = vsel %vm560, %v1185, 0.0
      %v1202 = vsel %vm560, %v1187, 0.0
      %v1204 = vrot.slane %v1160, 1
      %v1205 = vrot.slane %v1161, 1
      %v1206 = vsel %vm599, %v1204, %v1205
      %v1207 = vrot.slane %v1162, 1
      %v1208 = vsel %vm599, %v1205, %v1207
      %v1209 = vrot.slane %v1163, 1
      %v1210 = vsel %vm599, %v1207, %v1209
      %v1211 = vrot.slane %v1164, 1
      %v1212 = vsel %vm599, %v1209, %v1211
      %v1213 = vrot.slane %v1165, 1
      %v1214 = vsel %vm599, %v1211, %v1213
      %v1215 = vrot.slane %v1166, 1
      %v1216 = vsel %vm599, %v1213, %v1215
      %v1217 = vrot.slane %v1167, 1
      %v1218 = vsel %vm599, %v1215, %v1217
      %v1227 = vsel %vm599, 0.0, %v1204
      %v1228 = vsel %vm561, %v1227, 0.0
      %v1229 = vsel %vm561, %v1206, 0.0
      %v1230 = vsel %vm561, %v1208, 0.0
      %v1231 = vsel %vm561, %v1210, 0.0
      %v1232 = vsel %vm561, %v1212, 0.0
      %v1233 = vsel %vm561, %v1214, 0.0
      %v1234 = vsel %vm561, %v1216, 0.0
      %v1235 = vsel %vm561, %v1218, 0.0
      %v1236 = vrot.slane %v1167, 7
      %v1237 = vsel %vm569, %v1186, %v1236
      %v1239 = vsel %vm560, %v1237, 0.0
      %v1241 = vsel %vm599, %v1217, 0.0
      %v1242 = vsel %vm561, %v1241, 0.0
      %v1244 = vsel %vm569, %v1236, 0.0
      %v1245 = vsel %vm560, %v1244, 0.0
      %1246 = vrot.lane.b32.xlu0 0.0, 16
      %v1247 = vpop.permute.xlu0 %1246
      %1248 = vrot.lane.b32.xlu0 %v1160, 16
      %v1249 = vpop.permute.xlu0 %1248
      %1250 = vrot.lane.b32.xlu0 %v1161, 16
      %v1251 = vpop.permute.xlu0 %1250
      %1252 = vrot.lane.b32.xlu0 %v1162, 16
      %v1253 = vpop.permute.xlu0 %1252
      %1254 = vrot.lane.b32.xlu0 %v1163, 16
      %v1255 = vpop.permute.xlu0 %1254
      %1256 = vrot.lane.b32.xlu0 %v1164, 16
      %v1257 = vpop.permute.xlu0 %1256
      %1258 = vrot.lane.b32.xlu0 %v1165, 16
      %v1259 = vpop.permute.xlu0 %1258
      %1260 = vrot.lane.b32.xlu0 %v1166, 16
      %v1261 = vpop.permute.xlu0 %1260
      %1278 = vrot.lane.b32.xlu0 %v1228, 32
      %v1279 = vpop.permute.xlu0 %1278
      %1280 = vrot.lane.b32.xlu0 %v1229, 32
      %v1281 = vpop.permute.xlu0 %1280
      %1282 = vrot.lane.b32.xlu0 %v1230, 32
      %v1283 = vpop.permute.xlu0 %1282
      %1284 = vrot.lane.b32.xlu0 %v1231, 32
      %v1285 = vpop.permute.xlu0 %1284
      %1286 = vrot.lane.b32.xlu0 %v1232, 32
      %v1287 = vpop.permute.xlu0 %1286
      %1288 = vrot.lane.b32.xlu0 %v1233, 32
      %v1289 = vpop.permute.xlu0 %1288
      %1290 = vrot.lane.b32.xlu0 %v1234, 32
      %v1291 = vpop.permute.xlu0 %1290
      %1292 = vrot.lane.b32.xlu0 %v1235, 32
      %v1293 = vpop.permute.xlu0 %1292
      %1310 = vrot.lane.b32.xlu0 %v1196, 48
      %v1311 = vpop.permute.xlu0 %1310
      %1312 = vrot.lane.b32.xlu0 %v1197, 48
      %v1313 = vpop.permute.xlu0 %1312
      %1314 = vrot.lane.b32.xlu0 %v1198, 48
      %v1315 = vpop.permute.xlu0 %1314
      %1316 = vrot.lane.b32.xlu0 %v1199, 48
      %v1317 = vpop.permute.xlu0 %1316
      %1318 = vrot.lane.b32.xlu0 %v1200, 48
      %v1319 = vpop.permute.xlu0 %1318
      %1320 = vrot.lane.b32.xlu0 %v1201, 48
      %v1321 = vpop.permute.xlu0 %1320
      %1322 = vrot.lane.b32.xlu0 %v1202, 48
      %v1323 = vpop.permute.xlu0 %1322
      %1324 = vrot.lane.b32.xlu0 %v1239, 48
      %v1325 = vpop.permute.xlu0 %1324
      %1334 = vrot.lane.b32.xlu0 %v1160, 64
      %v1335 = vpop.permute.xlu0 %1334
      %1336 = vrot.lane.b32.xlu0 %v1161, 64
      %v1337 = vpop.permute.xlu0 %1336
      %1338 = vrot.lane.b32.xlu0 %v1162, 64
      %v1339 = vpop.permute.xlu0 %1338
      %1340 = vrot.lane.b32.xlu0 %v1163, 64
      %v1341 = vpop.permute.xlu0 %1340
      %1342 = vrot.lane.b32.xlu0 %v1164, 64
      %v1343 = vpop.permute.xlu0 %1342
      %1344 = vrot.lane.b32.xlu0 %v1165, 64
      %v1345 = vpop.permute.xlu0 %1344
      %1346 = vrot.lane.b32.xlu0 %v1166, 64
      %v1347 = vpop.permute.xlu0 %1346
      %1348 = vrot.lane.b32.xlu0 %v1167, 64
      %v1349 = vpop.permute.xlu0 %1348
      %1359 = vrot.lane.b32.xlu0 %v1229, 80
      %v1360 = vpop.permute.xlu0 %1359
      %1361 = vrot.lane.b32.xlu0 %v1230, 80
      %v1362 = vpop.permute.xlu0 %1361
      %1363 = vrot.lane.b32.xlu0 %v1231, 80
      %v1364 = vpop.permute.xlu0 %1363
      %1365 = vrot.lane.b32.xlu0 %v1232, 80
      %v1366 = vpop.permute.xlu0 %1365
      %1367 = vrot.lane.b32.xlu0 %v1233, 80
      %v1368 = vpop.permute.xlu0 %1367
      %1369 = vrot.lane.b32.xlu0 %v1234, 80
      %v1370 = vpop.permute.xlu0 %1369
      %1371 = vrot.lane.b32.xlu0 %v1235, 80
      %v1372 = vpop.permute.xlu0 %1371
      %1373 = vrot.lane.b32.xlu0 %v1242, 80
      %v1374 = vpop.permute.xlu0 %1373
      %1384 = vrot.lane.b32.xlu0 %v1197, 96
      %v1385 = vpop.permute.xlu0 %1384
      %1386 = vrot.lane.b32.xlu0 %v1198, 96
      %v1387 = vpop.permute.xlu0 %1386
      %1388 = vrot.lane.b32.xlu0 %v1199, 96
      %v1389 = vpop.permute.xlu0 %1388
      %1390 = vrot.lane.b32.xlu0 %v1200, 96
      %v1391 = vpop.permute.xlu0 %1390
      %1392 = vrot.lane.b32.xlu0 %v1201, 96
      %v1393 = vpop.permute.xlu0 %1392
      %1394 = vrot.lane.b32.xlu0 %v1202, 96
      %v1395 = vpop.permute.xlu0 %1394
      %1396 = vrot.lane.b32.xlu0 %v1239, 96
      %v1397 = vpop.permute.xlu0 %1396
      %1398 = vrot.lane.b32.xlu0 %v1245, 96
      %v1399 = vpop.permute.xlu0 %1398
      %1408 = vrot.lane.b32.xlu0 %v1161, 112
      %v1409 = vpop.permute.xlu0 %1408
      %1410 = vrot.lane.b32.xlu0 %v1162, 112
      %v1411 = vpop.permute.xlu0 %1410
      %1412 = vrot.lane.b32.xlu0 %v1163, 112
      %v1413 = vpop.permute.xlu0 %1412
      %1414 = vrot.lane.b32.xlu0 %v1164, 112
      %v1415 = vpop.permute.xlu0 %1414
      %1416 = vrot.lane.b32.xlu0 %v1165, 112
      %v1417 = vpop.permute.xlu0 %1416
      %1418 = vrot.lane.b32.xlu0 %v1166, 112
      %v1419 = vpop.permute.xlu0 %1418
      %1420 = vrot.lane.b32.xlu0 %v1167, 112
      %v1421 = vpop.permute.xlu0 %1420
      %1422 = vrot.lane.b32.xlu0 0.0, 112
      %v1423 = vpop.permute.xlu0 %1422
      %v1432 = vsel %vm330, 0.0, %v1247
      %v1433 = vsel %vm330, %v1196, %v1249
      %v1434 = vsel %vm330, %v1197, %v1251
      %v1435 = vsel %vm330, %v1198, %v1253
      %v1436 = vsel %vm330, %v1199, %v1255
      %v1437 = vsel %vm330, %v1200, %v1257
      %v1438 = vsel %vm330, %v1201, %v1259
      %v1439 = vsel %vm330, %v1202, %v1261
      %v1440 = vsel %vm480, %v1432, %v1279
      %v1441 = vsel %vm480, %v1433, %v1281
      %v1442 = vsel %vm480, %v1434, %v1283
      %v1443 = vsel %vm480, %v1435, %v1285
      %v1444 = vsel %vm480, %v1436, %v1287
      %v1445 = vsel %vm480, %v1437, %v1289
      %v1446 = vsel %vm480, %v1438, %v1291
      %v1447 = vsel %vm480, %v1439, %v1293
      %vm1448 = vcmask 392192
      %v1449 = vsel %vm1448, %v1440, %v1311
      %v1450 = vsel %vm1448, %v1441, %v1313
      %v1451 = vsel %vm1448, %v1442, %v1315
      %v1452 = vsel %vm1448, %v1443, %v1317
      %v1453 = vsel %vm1448, %v1444, %v1319
      %v1454 = vsel %vm1448, %v1445, %v1321
      %v1455 = vsel %vm1448, %v1446, %v1323
      %v1456 = vsel %vm1448, %v1447, %v1325
      %v1457 = vsel %vm813, %v1449, %v1335
      %v1458 = vsel %vm813, %v1450, %v1337
      %v1459 = vsel %vm813, %v1451, %v1339
      %v1460 = vsel %vm813, %v1452, %v1341
      %v1461 = vsel %vm813, %v1453, %v1343
      %v1462 = vsel %vm813, %v1454, %v1345
      %v1463 = vsel %vm813, %v1455, %v1347
      %v1464 = vsel %vm813, %v1456, %v1349
      %vm1465 = vcmask 654336
      %v1466 = vsel %vm1465, %v1457, %v1360
      %v1467 = vsel %vm1465, %v1458, %v1362
      %v1468 = vsel %vm1465, %v1459, %v1364
      %v1469 = vsel %vm1465, %v1460, %v1366
      %v1470 = vsel %vm1465, %v1461, %v1368
      %v1471 = vsel %vm1465, %v1462, %v1370
      %v1472 = vsel %vm1465, %v1463, %v1372
      %v1473 = vsel %vm1465, %v1464, %v1374
      %v1474 = vsel %vm822, %v1466, %v1385
      %v1475 = vsel %vm822, %v1467, %v1387
      %v1476 = vsel %vm822, %v1468, %v1389
      %v1477 = vsel %vm822, %v1469, %v1391
      %v1478 = vsel %vm822, %v1470, %v1393
      %v1479 = vsel %vm822, %v1471, %v1395
      %v1480 = vsel %vm822, %v1472, %v1397
      %v1481 = vsel %vm822, %v1473, %v1399
      %vm1482 = vcmask 916480
      %v1483 = vsel %vm1482, %v1474, %v1409
      %v1484 = vsel %vm1482, %v1475, %v1411
      %v1485 = vsel %vm1482, %v1476, %v1413
      %v1486 = vsel %vm1482, %v1477, %v1415
      %v1487 = vsel %vm1482, %v1478, %v1417
      %v1488 = vsel %vm1482, %v1479, %v1419
      %v1489 = vsel %vm1482, %v1480, %v1421
      %v1490 = vsel %vm1482, %v1481, %v1423
      %v1491 = vpack.c.bf16 %v1484, %v1483
      %v1492 = vpack.c.bf16 %v1231, %v1230
      %v1493 = vpack.c.bf16 %v1486, %v1485
      %v1494 = vpack.c.bf16 %v1233, %v1232
      %v1495 = vpack.c.bf16 %v1488, %v1487
      %v1496 = vpack.c.bf16 %v1235, %v1234
      %v1497 = vpack.c.bf16 %v1490, %v1489
      %v1498 = vpack.c.bf16 0.0, %v1242
      %v1499 = vld [vmem:[%s4] sm:$0xf]
      %v1500 = vld [vmem:[%s4 + $0x4] sm:$0xf]
      %v1501 = vld [vmem:[%s4 + $0x8] sm:$0xf]
      %v1502 = vld [vmem:[%s4 + $0xc] sm:$0xf]
      %v1503 = vld [vmem:[%s4 + $0x10] sm:$0xf]
      %v1504 = vld [vmem:[%s4 + $0x14] sm:$0xf]
      %v1505 = vld [vmem:[%s4 + $0x18] sm:$0xf]
      %v1506 = vld [vmem:[%s4 + $0x1c] sm:$0xf]
      %v1507 = vld [vmem:[%s4 + $0x20] sm:$0xf]
      %v1508 = vld [vmem:[%s4 + $0x24] sm:$0xf]
      %v1509 = vld [vmem:[%s4 + $0x28] sm:$0xf]
      %v1510 = vld [vmem:[%s4 + $0x2c] sm:$0xf]
      %v1511 = vld [vmem:[%s4 + $0x30] sm:$0xf]
      %v1512 = vld [vmem:[%s4 + $0x34] sm:$0xf]
      %v1513 = vld [vmem:[%s4 + $0x38] sm:$0xf]
      %v1514 = vld [vmem:[%s4 + $0x3c] sm:$0xf]
      %v1515 = vld [vmem:[%s4 + $0x40] sm:$0xf]
      %v1516 = vld [vmem:[%s4 + $0x44] sm:$0xf]
      %v1517 = vld [vmem:[%s5] sm:$0x1]
      %v1519 = vlaneseq
      %v1520 = vshrl.u32 %v1519, 7
      %v1521 = vsub.s32 0, %v1520
      %v1522 = vrot.slane %v1517, %v1521
      %v1542 = vunpack.c.l.b16 %v1499
      %v1543 = vunpack.c.l.b16 %v1500
      %v1544 = vunpack.c.l.b16 %v1501
      %v1545 = vunpack.c.l.b16 %v1502
      %v1546 = vunpack.c.l.b16 %v1503
      %v1547 = vunpack.c.l.b16 %v1504
      %v1548 = vunpack.c.l.b16 %v1505
      %v1549 = vunpack.c.l.b16 %v1506
      %v1550 = vunpack.c.l.b16 %v1507
      %v1551 = vunpack.c.l.b16 %v1508
      %v1552 = vunpack.c.l.b16 %v1509
      %v1553 = vunpack.c.l.b16 %v1510
      %v1554 = vunpack.c.l.b16 %v1511
      %v1555 = vunpack.c.l.b16 %v1512
      %v1556 = vunpack.c.l.b16 %v1513
      %v1557 = vunpack.c.l.b16 %v1514
      %v1558 = vunpack.c.l.b16 %v1515
      %v1559 = vunpack.c.l.b16 %v1516
      %v1560 = vpack.c.b16 %v1543, %v1542
      %v1561 = vpack.c.b16 %v1545, %v1544
      %v1562 = vpack.c.b16 %v1547, %v1546
      %v1563 = vpack.c.b16 %v1549, %v1548
      %v1564 = vpack.c.b16 %v1551, %v1550
      %v1565 = vpack.c.b16 %v1553, %v1552
      %v1566 = vpack.c.b16 %v1555, %v1554
      %v1567 = vpack.c.b16 %v1557, %v1556
      %v1568 = vpack.c.b16 %v1559, %v1558
      %v1579 = vsel %vm330, %v1492, 0
      %v1582 = vsel %vm330, %v1494, 0
      %v1585 = vsel %vm330, %v1496, 0
      %v1588 = vsel %vm330, %v1498, 0
      %1590 = vmatprep.subr.bf16.mxu0 0
      %1591 = vmatpush1.bf16.msra.mxu0 %v1567
      %1592 = vmatprep.subr.bf16.mxu0 0
      %1593 = vmatpush1.bf16.msra.mxu0 %v1566
      %1594 = vmatprep.subr.bf16.mxu0 0
      %1595 = vmatpush1.bf16.msra.mxu0 %v1565
      %1596 = vmatprep.subr.bf16.mxu0 0
      %1597 = vmatpush1.bf16.msra.mxu0 %v1564
      %1598 = vmatprep.subr.bf16.mxu0 0
      %1599 = vmatpush1.bf16.msra.mxu0 %v1563
      %1600 = vmatprep.subr.bf16.mxu0 0
      %1601 = vmatpush1.bf16.msra.mxu0 %v1562
      %1602 = vmatprep.subr.bf16.mxu0 0
      %1603 = vmatpush1.bf16.msra.mxu0 %v1561
      %1604 = vmatprep.subr.bf16.mxu0 0
      %1605 = vmatpush1.bf16.msra.mxu0 %v1560
      %1606 = vmatprep.subr.bf16.mxu0 0
      %1607 = vmatpush2.bf16.msra.mxu0 0
      %1608 = vmatprep.subr.bf16.mxu0 0
      %1609 = vmatpush2.bf16.msra.mxu0 0
      %1610 = vmatprep.subr.bf16.mxu0 0
      %1611 = vmatpush2.bf16.msra.mxu0 0
      %1612 = vmatprep.subr.bf16.mxu0 0
      %1613 = vmatpush2.bf16.msra.mxu0 0
      %1614 = vmatprep.subr.bf16.mxu0 0
      %1615 = vmatpush2.bf16.msra.mxu0 0
      %1616 = vmatprep.subr.bf16.mxu0 0
      %1617 = vmatpush2.bf16.msra.mxu0 0
      %1618 = vmatprep.subr.bf16.mxu0 0
      %1619 = vmatpush2.bf16.msra.mxu0 0
      %1620 = vmatprep.subr.bf16.mxu0 0
      %1621 = vmatpush2.bf16.msra.mxu0 %v1568
      %1622 = vmatprep.mubr.bf16.mxu0 %v1579
      %1623 = vmatmul.mubr.bf16.gmra.mxu0 %v1491
      %v1624 = vpop.f32.mrf.mxu0
      %v1625 = vadd.f32 %v1522, %v1624
      %v1626 = vpop.f32.mrf.mxu0
      %v1627 = vpop.f32.mrf.mxu0
      %v1628 = vadd.f32 %v1522, %v1627
      %v1629 = vpop.f32.mrf.mxu0
      %1630 = vmatprep.mubr.bf16.mxu0 %v1582
      %1631 = vmatmul.mubr.bf16.gmra.mxu0 %v1493
      %v1632 = vpop.f32.mrf.mxu0
      %v1633 = vadd.f32 %v1522, %v1632
      %v1634 = vpop.f32.mrf.mxu0
      %v1635 = vpop.f32.mrf.mxu0
      %v1636 = vadd.f32 %v1522, %v1635
      %v1637 = vpop.f32.mrf.mxu0
      %1638 = vmatprep.mubr.bf16.mxu0 %v1585
      %1639 = vmatmul.mubr.bf16.gmra.mxu0 %v1495
      %v1640 = vpop.f32.mrf.mxu0
      %v1641 = vadd.f32 %v1522, %v1640
      %v1642 = vpop.f32.mrf.mxu0
      %v1643 = vpop.f32.mrf.mxu0
      %v1644 = vadd.f32 %v1522, %v1643
      %v1645 = vpop.f32.mrf.mxu0
      %1646 = vmatprep.mubr.bf16.mxu0 %v1588
      %1647 = vmatmul.mubr.bf16.gmra.mxu0 %v1497
      %v1648 = vpop.f32.mrf.mxu0
      %v1649 = vadd.f32 %v1522, %v1648
      %v1650 = vpop.f32.mrf.mxu0
      %v1651 = vpop.f32.mrf.mxu0
      %v1652 = vadd.f32 %v1522, %v1651
      %v1653 = vpop.f32.mrf.mxu0
      %1654 = vdwg.mxu0
      %v1655 = vadd.f32 %v1625, %v528
      %v1656 = vadd.f32 %v1628, %v531
      %v1657 = vadd.f32 %v1633, %v536
      %v1658 = vadd.f32 %v1636, %v539
      %v1659 = vadd.f32 %v1641, %v544
      %v1660 = vadd.f32 %v1644, %v547
      %v1661 = vadd.f32 %v1649, %v552
      %v1662 = vadd.f32 %v1652, %v555
      %1663 = vst.msk [vmem:[%s313] sm:$0xff] %vm330, %v1655
      %1664 = vst.msk [vmem:[%s313 + $0x8] sm:$0xff] %vm330, %v1656
      %1665 = vst.msk [vmem:[%s313 + $0x10] sm:$0xff] %vm330, %v1657
      %1666 = vst.msk [vmem:[%s313 + $0x18] sm:$0xff] %vm330, %v1658
      %1667 = vst.msk [vmem:[%s313 + $0x20] sm:$0xff] %vm330, %v1659
      %1668 = vst.msk [vmem:[%s313 + $0x28] sm:$0xff] %vm330, %v1660
      %1669 = vst.msk [vmem:[%s313 + $0x30] sm:$0xff] %vm330, %v1661
      %1670 = vst.msk [vmem:[%s313 + $0x38] sm:$0xff] %vm330, %v1662
      %1671 = vst.msk [vmem:[%s318] sm:$0xff] %vm330, %v1160
      %1672 = vst.msk [vmem:[%s318 + $0x8] sm:$0xff] %vm330, %v1161
      %1673 = vst.msk [vmem:[%s318 + $0x10] sm:$0xff] %vm330, %v1162
      %1674 = vst.msk [vmem:[%s318 + $0x18] sm:$0xff] %vm330, %v1163
      %1675 = vst.msk [vmem:[%s318 + $0x20] sm:$0xff] %vm330, %v1164
      %1676 = vst.msk [vmem:[%s318 + $0x28] sm:$0xff] %vm330, %v1165
      %1677 = vst.msk [vmem:[%s318 + $0x30] sm:$0xff] %vm330, %v1166
      %1678 = vst.msk [vmem:[%s318 + $0x38] sm:$0xff] %vm330, %v1167
      %p1679 = scmp.lt.s32.totalorder %s20, 1
      %s1680 = scalar_select %p1679, %s20, 1
      %s1681 = smul.addr %s1680, 8
      %s1682 = smul.addr %s1681, 8
      %s1683 = scalar_lea.vmem %s7, %s1682
      %p1684 = scmp.lt.s32.totalorder %s20, 1
      %s1685 = scalar_select %p1684, %s20, 1
      %s1686 = smul.addr %s1685, 8
      %s1687 = smul.addr %s1686, 8
      %s1688 = scalar_lea.vmem %s8, %s1687
      // Predicated region
      $region49: #{_lambda_.4} parent=47 // pred_check
        %p1689 = pneg %p190
      $region50: #{_lambda_.4} parent=47 // pred_check_branch
        %1691 = sbr.rel (%p1689) target = $region52
      $region51: #{_lambda_.4} parent=47 // pred_region
        _
      $region52: #{_lambda_.4} parent=47 // pred_fallthru
        _
      // Predicated region
      $region53: #{_lambda_.4} parent=47 // pred_check
        %p1692 = pneg %p216
      $region54: #{_lambda_.4} parent=47 // pred_check_branch
        %1694 = sbr.rel (%p1692) target = $region56
      $region55: #{_lambda_.4} parent=47 // pred_region
        _
      $region56: #{_lambda_.4} parent=47 // pred_fallthru
        _
    $region48: #{_lambda_.4} parent=5 // pred_fallthru
      _
    %p1695 = scmp.le.s32.totalorder 2, %s15
    // Predicated region
    $region57: #{_lambda_.4} parent=5 // pred_check
      %p1696 = pneg %p1695
    $region58: #{_lambda_.4} parent=5 // pred_check_branch
      %1698 = sbr.rel (%p1696) target = $region60
    $region59: #{_lambda_.4} parent=5 // pred_region
      %s1699 = ssub.s32 %s15, 2
      // Predicated region
      $region61: #{_lambda_.4} parent=59 // pred_check
        %p1700 = pneg %p196
      $region62: #{_lambda_.4} parent=59 // pred_check_branch
        %1702 = sbr.rel (%p1700) target = $region64
      $region63: #{_lambda_.4} parent=59 // pred_region
        %p1703 = scmp.lt.s32.totalorder %s21, 1
        %s1704 = scalar_select %p1703, %s21, 1
        %s1705 = smul.addr %s1704, 8
        %s1706 = smul.addr %s1705, 8
        %s1707 = scalar_lea.vmem %s7, %s1706
      $region64: #{_lambda_.4} parent=59 // pred_fallthru
        _
      // Predicated region
      $region65: #{_lambda_.4} parent=59 // pred_check
        %p1708 = pneg %p222
      $region66: #{_lambda_.4} parent=59 // pred_check_branch
        %1710 = sbr.rel (%p1708) target = $region68
      $region67: #{_lambda_.4} parent=59 // pred_region
        %p1711 = scmp.lt.s32.totalorder %s21, 1
        %s1712 = scalar_select %p1711, %s21, 1
        %s1713 = smul.addr %s1712, 8
        %s1714 = smul.addr %s1713, 8
        %s1715 = scalar_lea.vmem %s8, %s1714
      $region68: #{_lambda_.4} parent=59 // pred_fallthru
        _
    $region60: #{_lambda_.4} parent=5 // pred_fallthru
      _
  $region6: #{_lambda_.4} parent=0 // loop_footer
    %s19 = sadd.s32 1, %s15
  $region7: #{_lambda_.4} parent=0 // loop_footer_branch
    %14 = sbr.rel target = $region3
  $region8: #{_lambda_.4} parent=0 // loop_exit
    _

// kernel: _lambda_.5
$region0: #{_lambda_.5}
  #allocation0 [shape = 'u32[]', space=smem, size = 0x4, offset = 0x4, fixed_abs, tag = 'smem constant byte address 0x4 - core index']
  #allocation1 [shape = 'u32[144,128]{1,0:T(1,128)}', space=vmem, size = 0x12000, scoped, tag = 'internal scratch']
  %s0 = inlined_call_operand.vmem [shape: f32[2,64,16], index: 0, kind: input, shape index: {}]
  %s1 = inlined_call_operand.vmem [shape: f32[2,64,16], index: 1, kind: input, shape index: {}]
  %s2 = inlined_call_operand.vmem [shape: f32[256,64], index: 2, kind: input, shape index: {}, may-alias: {2,3}]
  %s3 = inlined_call_operand.vmem [shape: f32[256,64], index: 3, kind: input, shape index: {}, may-alias: {2,3}]
  %s4 = inlined_call_operand.vmem [shape: bf16[144,8], index: 4, kind: input, shape index: {}]
  %s5 = inlined_call_operand.vmem [shape: f32[1,8], index: 5, kind: input, shape index: {}]
  %s6 = inlined_call_operand.vmem [shape: bf16[72,8], index: 6, kind: input, shape index: {}]
  %s7 = inlined_call_operand.vmem [shape: f32[1,8], index: 7, kind: input, shape index: {}]
  %s8 = inlined_call_operand.vmem [shape: bf16[16,8], index: 8, kind: input, shape index: {}]
  %s9 = inlined_call_operand.vmem [shape: bf16[16,8], index: 9, kind: input, shape index: {}]
  %s10 = inlined_call_operand.vmem [shape: f32[1,8], index: 10, kind: input, shape index: {}]
  %s11 = inlined_call_operand.vmem [shape: bf16[72,3], index: 11, kind: input, shape index: {}]
  %s12 = inlined_call_operand.vmem [shape: f32[1,3], index: 12, kind: input, shape index: {}]
  %s13 = inlined_call_operand.vmem [shape: f32[2,256,3], index: 13, kind: output, shape index: {}]
  %s14 = sld [smem:[#allocation0]]
  $region85: #{_lambda_.5} parent=0
    _
  %s16 = ssub.s32 1, %s14
  %s17 = scalar_select 0, %s16, %s14
  loop: start=0, step=1, limit=4
  $region2: #{_lambda_.5} parent=0 // loop_pre_header
    _
  $region3: #{_lambda_.5} parent=0 // loop_header
    %s19 = sphi 0, %s23
    %p20 = scmp.ge.s32.totalorder %s19, 4
    %s29 = sphi 0, %s31
    %s32 = sphi 0, %s29
    %s33 = sphi 0, %s32
    %s49 = sphi 0, %s33
    %s55 = sphi 0, %s57
    %s58 = sphi 0, %s55
    %s59 = sphi 0, %s58
    %s75 = sphi 0, %s59
    %s79 = sphi 0, %s79
    %s81 = sphi 0, %s79
    %s82 = sphi 0, %s81
    %s96 = sphi 0, %s82
    %s100 = sphi 0, %s100
    %s102 = sphi 0, %s100
    %s103 = sphi 0, %s102
    %s117 = sphi 0, %s103
    %s121 = sphi 0, %s121
    %s123 = sphi 0, %s121
    %s124 = sphi 0, %s123
    %s138 = sphi 0, %s124
    %s142 = sphi 0, %s142
    %s144 = sphi 0, %s142
    %s145 = sphi 0, %s144
    %s159 = sphi 0, %s145
    %s163 = sphi 0, %s163
    %s165 = sphi 0, %s163
    %s166 = sphi 0, %s165
    %s180 = sphi 0, %s166
    %s184 = sphi 0, %s184
    %s186 = sphi 0, %s184
    %s187 = sphi 0, %s186
    %s201 = sphi 0, %s187
    %s205 = sphi 0, %s205
    %s207 = sphi 0, %s205
    %s208 = sphi 0, %s207
    %s222 = sphi 0, %s208
    %s226 = sphi 0, %s226
    %s228 = sphi 0, %s226
    %s229 = sphi 0, %s228
    %s243 = sphi 0, %s229
    %s247 = sphi 0, %s247
    %s249 = sphi 0, %s247
    %s250 = sphi 0, %s249
    %s264 = sphi 0, %s250
    %s268 = sphi 0, %s268
    %s270 = sphi 0, %s268
    %s271 = sphi 0, %s270
    %s285 = sphi 0, %s271
    %s289 = sphi 0, %s289
    %s291 = sphi 0, %s289
    %s292 = sphi 0, %s291
    %s306 = sphi 0, %s292
    %s312 = sphi 0, %s314
    %s315 = sphi 0, %s312
    %s316 = sphi 0, %s315
    %s332 = sphi 0, %s316
  $region4: #{_lambda_.5} parent=0 // loop_header_branch
    %22 = sbr.rel (%p20) target = $region8
  $region5: #{_lambda_.5} parent=0 // loop_body
    %s24 = ssub.s32 %s19, 1
    %s25 = ssub.s32 %s19, 2
    %s26 = sadd.s32 %s19, 1
    %s27 = ssub.s32 %s19, %s26
    %p28 = scmp.eq.s32.totalorder %s27, 0
    %s30 = sadd.s32 %s29, 1
    %s31 = scalar_select %p28, %s29, %s30
    %p34 = pneg %p28
    %p35 = scmp.eq.s32.totalorder %s19, 1
    %p36 = por %p34, %p35
    %p37 = scmp.ne.s32.totalorder %s29, %s32
    %p38 = scmp.eq.s32.totalorder %s19, 0
    %p39 = por %p37, %p38
    %p40 = scmp.ne.s32.totalorder %s29, %s32
    %p41 = scmp.eq.s32.totalorder %s24, 1
    %p42 = por %p40, %p41
    %p43 = scmp.ne.s32.totalorder %s32, %s33
    %p44 = scmp.eq.s32.totalorder %s24, 0
    %p45 = por %p43, %p44
    %p46 = scmp.ne.s32.totalorder %s32, %s33
    %p47 = scmp.eq.s32.totalorder %s25, 1
    %p48 = por %p46, %p47
    %p50 = scmp.ne.s32.totalorder %s33, %s49
    %p51 = scmp.eq.s32.totalorder %s25, 0
    %p52 = por %p50, %p51
    %s53 = ssub.s32 %s19, %s26
    %p54 = scmp.eq.s32.totalorder %s53, 0
    %s56 = sadd.s32 %s55, 1
    %s57 = scalar_select %p54, %s55, %s56
    %p60 = pneg %p54
    %p61 = scmp.eq.s32.totalorder %s19, 1
    %p62 = por %p60, %p61
    %p63 = scmp.ne.s32.totalorder %s55, %s58
    %p64 = scmp.eq.s32.totalorder %s19, 0
    %p65 = por %p63, %p64
    %p66 = scmp.ne.s32.totalorder %s55, %s58
    %p67 = scmp.eq.s32.totalorder %s24, 1
    %p68 = por %p66, %p67
    %p69 = scmp.ne.s32.totalorder %s58, %s59
    %p70 = scmp.eq.s32.totalorder %s24, 0
    %p71 = por %p69, %p70
    %p72 = scmp.ne.s32.totalorder %s58, %s59
    %p73 = scmp.eq.s32.totalorder %s25, 1
    %p74 = por %p72, %p73
    %p76 = scmp.ne.s32.totalorder %s59, %s75
    %p77 = scmp.eq.s32.totalorder %s25, 0
    %p78 = por %p76, %p77
    %s80 = sadd.s32 %s79, 1
    %p83 = scmp.eq.s32.totalorder %s19, 1
    %p84 = scmp.ne.s32.totalorder %s79, %s81
    %p85 = scmp.eq.s32.totalorder %s19, 0
    %p86 = por %p84, %p85
    %p87 = scmp.ne.s32.totalorder %s79, %s81
    %p88 = scmp.eq.s32.totalorder %s24, 1
    %p89 = por %p87, %p88
    %p90 = scmp.ne.s32.totalorder %s81, %s82
    %p91 = scmp.eq.s32.totalorder %s24, 0
    %p92 = por %p90, %p91
    %p93 = scmp.ne.s32.totalorder %s81, %s82
    %p94 = scmp.eq.s32.totalorder %s25, 1
    %p95 = por %p93, %p94
    %p97 = scmp.ne.s32.totalorder %s82, %s96
    %p98 = scmp.eq.s32.totalorder %s25, 0
    %p99 = por %p97, %p98
    %s101 = sadd.s32 %s100, 1
    %p104 = scmp.eq.s32.totalorder %s19, 1
    %p105 = scmp.ne.s32.totalorder %s100, %s102
    %p106 = scmp.eq.s32.totalorder %s19, 0
    %p107 = por %p105, %p106
    %p108 = scmp.ne.s32.totalorder %s100, %s102
    %p109 = scmp.eq.s32.totalorder %s24, 1
    %p110 = por %p108, %p109
    %p111 = scmp.ne.s32.totalorder %s102, %s103
    %p112 = scmp.eq.s32.totalorder %s24, 0
    %p113 = por %p111, %p112
    %p114 = scmp.ne.s32.totalorder %s102, %s103
    %p115 = scmp.eq.s32.totalorder %s25, 1
    %p116 = por %p114, %p115
    %p118 = scmp.ne.s32.totalorder %s103, %s117
    %p119 = scmp.eq.s32.totalorder %s25, 0
    %p120 = por %p118, %p119
    %s122 = sadd.s32 %s121, 1
    %p125 = scmp.eq.s32.totalorder %s19, 1
    %p126 = scmp.ne.s32.totalorder %s121, %s123
    %p127 = scmp.eq.s32.totalorder %s19, 0
    %p128 = por %p126, %p127
    %p129 = scmp.ne.s32.totalorder %s121, %s123
    %p130 = scmp.eq.s32.totalorder %s24, 1
    %p131 = por %p129, %p130
    %p132 = scmp.ne.s32.totalorder %s123, %s124
    %p133 = scmp.eq.s32.totalorder %s24, 0
    %p134 = por %p132, %p133
    %p135 = scmp.ne.s32.totalorder %s123, %s124
    %p136 = scmp.eq.s32.totalorder %s25, 1
    %p137 = por %p135, %p136
    %p139 = scmp.ne.s32.totalorder %s124, %s138
    %p140 = scmp.eq.s32.totalorder %s25, 0
    %p141 = por %p139, %p140
    %s143 = sadd.s32 %s142, 1
    %p146 = scmp.eq.s32.totalorder %s19, 1
    %p147 = scmp.ne.s32.totalorder %s142, %s144
    %p148 = scmp.eq.s32.totalorder %s19, 0
    %p149 = por %p147, %p148
    %p150 = scmp.ne.s32.totalorder %s142, %s144
    %p151 = scmp.eq.s32.totalorder %s24, 1
    %p152 = por %p150, %p151
    %p153 = scmp.ne.s32.totalorder %s144, %s145
    %p154 = scmp.eq.s32.totalorder %s24, 0
    %p155 = por %p153, %p154
    %p156 = scmp.ne.s32.totalorder %s144, %s145
    %p157 = scmp.eq.s32.totalorder %s25, 1
    %p158 = por %p156, %p157
    %p160 = scmp.ne.s32.totalorder %s145, %s159
    %p161 = scmp.eq.s32.totalorder %s25, 0
    %p162 = por %p160, %p161
    %s164 = sadd.s32 %s163, 1
    %p167 = scmp.eq.s32.totalorder %s19, 1
    %p168 = scmp.ne.s32.totalorder %s163, %s165
    %p169 = scmp.eq.s32.totalorder %s19, 0
    %p170 = por %p168, %p169
    %p171 = scmp.ne.s32.totalorder %s163, %s165
    %p172 = scmp.eq.s32.totalorder %s24, 1
    %p173 = por %p171, %p172
    %p174 = scmp.ne.s32.totalorder %s165, %s166
    %p175 = scmp.eq.s32.totalorder %s24, 0
    %p176 = por %p174, %p175
    %p177 = scmp.ne.s32.totalorder %s165, %s166
    %p178 = scmp.eq.s32.totalorder %s25, 1
    %p179 = por %p177, %p178
    %p181 = scmp.ne.s32.totalorder %s166, %s180
    %p182 = scmp.eq.s32.totalorder %s25, 0
    %p183 = por %p181, %p182
    %s185 = sadd.s32 %s184, 1
    %p188 = scmp.eq.s32.totalorder %s19, 1
    %p189 = scmp.ne.s32.totalorder %s184, %s186
    %p190 = scmp.eq.s32.totalorder %s19, 0
    %p191 = por %p189, %p190
    %p192 = scmp.ne.s32.totalorder %s184, %s186
    %p193 = scmp.eq.s32.totalorder %s24, 1
    %p194 = por %p192, %p193
    %p195 = scmp.ne.s32.totalorder %s186, %s187
    %p196 = scmp.eq.s32.totalorder %s24, 0
    %p197 = por %p195, %p196
    %p198 = scmp.ne.s32.totalorder %s186, %s187
    %p199 = scmp.eq.s32.totalorder %s25, 1
    %p200 = por %p198, %p199
    %p202 = scmp.ne.s32.totalorder %s187, %s201
    %p203 = scmp.eq.s32.totalorder %s25, 0
    %p204 = por %p202, %p203
    %s206 = sadd.s32 %s205, 1
    %p209 = scmp.eq.s32.totalorder %s19, 1
    %p210 = scmp.ne.s32.totalorder %s205, %s207
    %p211 = scmp.eq.s32.totalorder %s19, 0
    %p212 = por %p210, %p211
    %p213 = scmp.ne.s32.totalorder %s205, %s207
    %p214 = scmp.eq.s32.totalorder %s24, 1
    %p215 = por %p213, %p214
    %p216 = scmp.ne.s32.totalorder %s207, %s208
    %p217 = scmp.eq.s32.totalorder %s24, 0
    %p218 = por %p216, %p217
    %p219 = scmp.ne.s32.totalorder %s207, %s208
    %p220 = scmp.eq.s32.totalorder %s25, 1
    %p221 = por %p219, %p220
    %p223 = scmp.ne.s32.totalorder %s208, %s222
    %p224 = scmp.eq.s32.totalorder %s25, 0
    %p225 = por %p223, %p224
    %s227 = sadd.s32 %s226, 1
    %p230 = scmp.eq.s32.totalorder %s19, 1
    %p231 = scmp.ne.s32.totalorder %s226, %s228
    %p232 = scmp.eq.s32.totalorder %s19, 0
    %p233 = por %p231, %p232
    %p234 = scmp.ne.s32.totalorder %s226, %s228
    %p235 = scmp.eq.s32.totalorder %s24, 1
    %p236 = por %p234, %p235
    %p237 = scmp.ne.s32.totalorder %s228, %s229
    %p238 = scmp.eq.s32.totalorder %s24, 0
    %p239 = por %p237, %p238
    %p240 = scmp.ne.s32.totalorder %s228, %s229
    %p241 = scmp.eq.s32.totalorder %s25, 1
    %p242 = por %p240, %p241
    %p244 = scmp.ne.s32.totalorder %s229, %s243
    %p245 = scmp.eq.s32.totalorder %s25, 0
    %p246 = por %p244, %p245
    %s248 = sadd.s32 %s247, 1
    %p251 = scmp.eq.s32.totalorder %s19, 1
    %p252 = scmp.ne.s32.totalorder %s247, %s249
    %p253 = scmp.eq.s32.totalorder %s19, 0
    %p254 = por %p252, %p253
    %p255 = scmp.ne.s32.totalorder %s247, %s249
    %p256 = scmp.eq.s32.totalorder %s24, 1
    %p257 = por %p255, %p256
    %p258 = scmp.ne.s32.totalorder %s249, %s250
    %p259 = scmp.eq.s32.totalorder %s24, 0
    %p260 = por %p258, %p259
    %p261 = scmp.ne.s32.totalorder %s249, %s250
    %p262 = scmp.eq.s32.totalorder %s25, 1
    %p263 = por %p261, %p262
    %p265 = scmp.ne.s32.totalorder %s250, %s264
    %p266 = scmp.eq.s32.totalorder %s25, 0
    %p267 = por %p265, %p266
    %s269 = sadd.s32 %s268, 1
    %p272 = scmp.eq.s32.totalorder %s19, 1
    %p273 = scmp.ne.s32.totalorder %s268, %s270
    %p274 = scmp.eq.s32.totalorder %s19, 0
    %p275 = por %p273, %p274
    %p276 = scmp.ne.s32.totalorder %s268, %s270
    %p277 = scmp.eq.s32.totalorder %s24, 1
    %p278 = por %p276, %p277
    %p279 = scmp.ne.s32.totalorder %s270, %s271
    %p280 = scmp.eq.s32.totalorder %s24, 0
    %p281 = por %p279, %p280
    %p282 = scmp.ne.s32.totalorder %s270, %s271
    %p283 = scmp.eq.s32.totalorder %s25, 1
    %p284 = por %p282, %p283
    %p286 = scmp.ne.s32.totalorder %s271, %s285
    %p287 = scmp.eq.s32.totalorder %s25, 0
    %p288 = por %p286, %p287
    %s290 = sadd.s32 %s289, 1
    %p293 = scmp.eq.s32.totalorder %s19, 1
    %p294 = scmp.ne.s32.totalorder %s289, %s291
    %p295 = scmp.eq.s32.totalorder %s19, 0
    %p296 = por %p294, %p295
    %p297 = scmp.ne.s32.totalorder %s289, %s291
    %p298 = scmp.eq.s32.totalorder %s24, 1
    %p299 = por %p297, %p298
    %p300 = scmp.ne.s32.totalorder %s291, %s292
    %p301 = scmp.eq.s32.totalorder %s24, 0
    %p302 = por %p300, %p301
    %p303 = scmp.ne.s32.totalorder %s291, %s292
    %p304 = scmp.eq.s32.totalorder %s25, 1
    %p305 = por %p303, %p304
    %p307 = scmp.ne.s32.totalorder %s292, %s306
    %p308 = scmp.eq.s32.totalorder %s25, 0
    %p309 = por %p307, %p308
    %s310 = ssub.s32 %s19, %s26
    %p311 = scmp.eq.s32.totalorder %s310, 0
    %s313 = sadd.s32 %s312, 1
    %s314 = scalar_select %p311, %s312, %s313
    %p317 = pneg %p311
    %p318 = scmp.eq.s32.totalorder %s19, 1
    %p319 = por %p317, %p318
    %p320 = scmp.ne.s32.totalorder %s312, %s315
    %p321 = scmp.eq.s32.totalorder %s19, 0
    %p322 = por %p320, %p321
    %p323 = scmp.ne.s32.totalorder %s312, %s315
    %p324 = scmp.eq.s32.totalorder %s24, 1
    %p325 = por %p323, %p324
    %p326 = scmp.ne.s32.totalorder %s315, %s316
    %p327 = scmp.eq.s32.totalorder %s24, 0
    %p328 = por %p326, %p327
    %p329 = scmp.ne.s32.totalorder %s315, %s316
    %p330 = scmp.eq.s32.totalorder %s25, 1
    %p331 = por %p329, %p330
    %p333 = scmp.ne.s32.totalorder %s316, %s332
    %p334 = scmp.eq.s32.totalorder %s25, 0
    %p335 = por %p333, %p334
    %p336 = scmp.le.s32.totalorder 1, %s19
    %p337 = scmp.lt.s32.totalorder %s19, 3
    %p338 = pnand %p336, %p337
    %p339 = pneg %p338
    // Predicated region
    $region9: #{_lambda_.5} parent=5 // pred_check
      _
    $region10: #{_lambda_.5} parent=5 // pred_check_branch
      %341 = sbr.rel (%p338) target = $region12
    $region11: #{_lambda_.5} parent=5 // pred_region
      %s342 = ssub.s32 %s19, 1
      // Predicated region
      $region13: #{_lambda_.5} parent=11 // pred_check
        %p343 = pneg %p92
      $region14: #{_lambda_.5} parent=11 // pred_check_branch
        %345 = sbr.rel (%p343) target = $region16
      $region15: #{_lambda_.5} parent=11 // pred_region
        _
      $region16: #{_lambda_.5} parent=11 // pred_fallthru
        _
      // Predicated region
      $region17: #{_lambda_.5} parent=11 // pred_check
        %p346 = pneg %p113
      $region18: #{_lambda_.5} parent=11 // pred_check_branch
        %348 = sbr.rel (%p346) target = $region20
      $region19: #{_lambda_.5} parent=11 // pred_region
        _
      $region20: #{_lambda_.5} parent=11 // pred_fallthru
        _
      // Predicated region
      $region21: #{_lambda_.5} parent=11 // pred_check
        %p349 = pneg %p134
      $region22: #{_lambda_.5} parent=11 // pred_check_branch
        %351 = sbr.rel (%p349) target = $region24
      $region23: #{_lambda_.5} parent=11 // pred_region
        _
      $region24: #{_lambda_.5} parent=11 // pred_fallthru
        _
      // Predicated region
      $region25: #{_lambda_.5} parent=11 // pred_check
        %p352 = pneg %p155
      $region26: #{_lambda_.5} parent=11 // pred_check_branch
        %354 = sbr.rel (%p352) target = $region28
      $region27: #{_lambda_.5} parent=11 // pred_region
        _
      $region28: #{_lambda_.5} parent=11 // pred_fallthru
        _
      // Predicated region
      $region29: #{_lambda_.5} parent=11 // pred_check
        %p355 = pneg %p176
      $region30: #{_lambda_.5} parent=11 // pred_check_branch
        %357 = sbr.rel (%p355) target = $region32
      $region31: #{_lambda_.5} parent=11 // pred_region
        _
      $region32: #{_lambda_.5} parent=11 // pred_fallthru
        _
      // Predicated region
      $region33: #{_lambda_.5} parent=11 // pred_check
        %p358 = pneg %p197
      $region34: #{_lambda_.5} parent=11 // pred_check_branch
        %360 = sbr.rel (%p358) target = $region36
      $region35: #{_lambda_.5} parent=11 // pred_region
        _
      $region36: #{_lambda_.5} parent=11 // pred_fallthru
        _
      // Predicated region
      $region37: #{_lambda_.5} parent=11 // pred_check
        %p361 = pneg %p218
      $region38: #{_lambda_.5} parent=11 // pred_check_branch
        %363 = sbr.rel (%p361) target = $region40
      $region39: #{_lambda_.5} parent=11 // pred_region
        _
      $region40: #{_lambda_.5} parent=11 // pred_fallthru
        _
      // Predicated region
      $region41: #{_lambda_.5} parent=11 // pred_check
        %p364 = pneg %p239
      $region42: #{_lambda_.5} parent=11 // pred_check_branch
        %366 = sbr.rel (%p364) target = $region44
      $region43: #{_lambda_.5} parent=11 // pred_region
        _
      $region44: #{_lambda_.5} parent=11 // pred_fallthru
        _
      // Predicated region
      $region45: #{_lambda_.5} parent=11 // pred_check
        %p367 = pneg %p260
      $region46: #{_lambda_.5} parent=11 // pred_check_branch
        %369 = sbr.rel (%p367) target = $region48
      $region47: #{_lambda_.5} parent=11 // pred_region
        _
      $region48: #{_lambda_.5} parent=11 // pred_fallthru
        _
      // Predicated region
      $region49: #{_lambda_.5} parent=11 // pred_check
        %p370 = pneg %p281
      $region50: #{_lambda_.5} parent=11 // pred_check_branch
        %372 = sbr.rel (%p370) target = $region52
      $region51: #{_lambda_.5} parent=11 // pred_region
        _
      $region52: #{_lambda_.5} parent=11 // pred_fallthru
        _
      // Predicated region
      $region53: #{_lambda_.5} parent=11 // pred_check
        %p373 = pneg %p302
      $region54: #{_lambda_.5} parent=11 // pred_check_branch
        %375 = sbr.rel (%p373) target = $region56
      $region55: #{_lambda_.5} parent=11 // pred_region
        _
      $region56: #{_lambda_.5} parent=11 // pred_fallthru
        _
    $region12: #{_lambda_.5} parent=5 // pred_fallthru
      _
    %p376 = scmp.lt.s32.totalorder %s19, 2
    // Predicated region
    $region57: #{_lambda_.5} parent=5 // pred_check
      %p377 = pneg %p376
    $region58: #{_lambda_.5} parent=5 // pred_check_branch
      %379 = sbr.rel (%p377) target = $region60
    $region59: #{_lambda_.5} parent=5 // pred_region
      // Predicated region
      $region61: #{_lambda_.5} parent=59 // pred_check
        %p380 = pneg %p39
      $region62: #{_lambda_.5} parent=59 // pred_check_branch
        %382 = sbr.rel (%p380) target = $region64
      $region63: #{_lambda_.5} parent=59 // pred_region
        %p383 = scmp.lt.s32.totalorder %s19, 1
        %s384 = scalar_select %p383, %s19, 1
        %s385 = smul.addr %s384, 8
        %s386 = smul.addr %s385, 8
        %s387 = scalar_lea.vmem %s0, %s386
      $region64: #{_lambda_.5} parent=59 // pred_fallthru
        _
      // Predicated region
      $region65: #{_lambda_.5} parent=59 // pred_check
        %p388 = pneg %p65
      $region66: #{_lambda_.5} parent=59 // pred_check_branch
        %390 = sbr.rel (%p388) target = $region68
      $region67: #{_lambda_.5} parent=59 // pred_region
        %p391 = scmp.lt.s32.totalorder %s19, 1
        %s392 = scalar_select %p391, %s19, 1
        %s393 = smul.addr %s392, 8
        %s394 = smul.addr %s393, 8
        %s395 = scalar_lea.vmem %s1, %s394
      $region68: #{_lambda_.5} parent=59 // pred_fallthru
        _
    $region60: #{_lambda_.5} parent=5 // pred_fallthru
      _
    %p396 = scmp.le.s32.totalorder 1, %s19
    %p397 = scmp.lt.s32.totalorder %s19, 3
    %p398 = pnand %p396, %p397
    %p399 = pneg %p398
    // Predicated region
    $region69: #{_lambda_.5} parent=5 // pred_check
      _
    $region70: #{_lambda_.5} parent=5 // pred_check_branch
      %401 = sbr.rel (%p398) target = $region72
    $region71: #{_lambda_.5} parent=5 // pred_region
      %s402 = ssub.s32 %s19, 1
      %p403 = scmp.lt.s32.totalorder %s24, 1
      %s404 = scalar_select %p403, %s24, 1
      %s405 = smul.addr %s404, 8
      %s406 = smul.addr %s405, 8
      %s407 = scalar_lea.vmem %s0, %s406
      %p408 = pneg %p45
      %p409 = pneg %p42
      %p410 = scmp.lt.s32.totalorder %s24, 1
      %s411 = scalar_select %p410, %s24, 1
      %s412 = smul.addr %s411, 8
      %s413 = smul.addr %s412, 8
      %s414 = scalar_lea.vmem %s1, %s413
      %p415 = pneg %p71
      %p416 = pneg %p68
      %p417 = pneg %p92
      %p418 = pneg %p89
      %p419 = pneg %p113
      %p420 = pneg %p110
      %p421 = pneg %p134
      %p422 = pneg %p131
      %p423 = pneg %p155
      %p424 = pneg %p152
      %p425 = pneg %p176
      %p426 = pneg %p173
      %p427 = pneg %p197
      %p428 = pneg %p194
      %p429 = pneg %p218
      %p430 = pneg %p215
      %p431 = pneg %p239
      %p432 = pneg %p236
      %p433 = pneg %p260
      %p434 = pneg %p257
      %p435 = pneg %p281
      %p436 = pneg %p278
      %p437 = pneg %p302
      %p438 = pneg %p299
      %p439 = pneg %p328
      %p440 = pneg %p325
      %p441 = scmp.lt.s32.totalorder %s24, 1
      %s442 = scalar_select %p441, %s24, 1
      %s443 = smul.addr %s442, 32
      %s444 = smul.addr %s443, 8
      %s445 = scalar_lea.vmem %s13, %s444
      %p446 = scmp.lt.s32.totalorder %s24, 1
      %s447 = scalar_select %p446, %s24, 1
      %s448 = smul.addr %s447, 8
      %s449 = smul.addr %s448, 8
      %s450 = scalar_lea.vmem %s0, %s449
      %p451 = scmp.lt.s32.totalorder %s24, 1
      %s452 = scalar_select %p451, %s24, 1
      %s453 = smul.addr %s452, 8
      %s454 = smul.addr %s453, 8
      %s455 = scalar_lea.vmem %s1, %s454
      %p456 = scmp.lt.s32.totalorder %s24, 1
      %s457 = scalar_select %p456, %s24, 1
      %s458 = smul.addr %s457, 32
      %s459 = smul.addr %s458, 8
      %s460 = scalar_lea.vmem %s13, %s459
      %v462 = vld [vmem:[%s2] sm:$0xff]
      %v463 = vld [vmem:[%s2 + $0x8] sm:$0xff]
      %v464 = vld [vmem:[%s2 + $0x10] sm:$0xff]
      %v465 = vld [vmem:[%s2 + $0x18] sm:$0xff]
      %v466 = vld [vmem:[%s2 + $0x20] sm:$0xff]
      %v467 = vld [vmem:[%s2 + $0x28] sm:$0xff]
      %v468 = vld [vmem:[%s2 + $0x30] sm:$0xff]
      %v469 = vld [vmem:[%s2 + $0x38] sm:$0xff]
      %v470 = vld [vmem:[%s2 + $0x40] sm:$0xff]
      %v471 = vld [vmem:[%s2 + $0x48] sm:$0xff]
      %v472 = vld [vmem:[%s2 + $0x50] sm:$0xff]
      %v473 = vld [vmem:[%s2 + $0x58] sm:$0xff]
      %v474 = vld [vmem:[%s2 + $0x60] sm:$0xff]
      %v475 = vld [vmem:[%s2 + $0x68] sm:$0xff]
      %v476 = vld [vmem:[%s2 + $0x70] sm:$0xff]
      %v477 = vld [vmem:[%s2 + $0x78] sm:$0xff]
      %v478 = vld [vmem:[%s2 + $0x80] sm:$0xff]
      %v479 = vld [vmem:[%s2 + $0x88] sm:$0xff]
      %v480 = vld [vmem:[%s2 + $0x90] sm:$0xff]
      %v481 = vld [vmem:[%s2 + $0x98] sm:$0xff]
      %v482 = vld [vmem:[%s2 + $0xa0] sm:$0xff]
      %v483 = vld [vmem:[%s2 + $0xa8] sm:$0xff]
      %v484 = vld [vmem:[%s2 + $0xb0] sm:$0xff]
      %v485 = vld [vmem:[%s2 + $0xb8] sm:$0xff]
      %v486 = vld [vmem:[%s2 + $0xc0] sm:$0xff]
      %v487 = vld [vmem:[%s2 + $0xc8] sm:$0xff]
      %v488 = vld [vmem:[%s2 + $0xd0] sm:$0xff]
      %v489 = vld [vmem:[%s2 + $0xd8] sm:$0xff]
      %v490 = vld [vmem:[%s2 + $0xe0] sm:$0xff]
      %v491 = vld [vmem:[%s2 + $0xe8] sm:$0xff]
      %v492 = vld [vmem:[%s2 + $0xf0] sm:$0xff]
      %v493 = vld [vmem:[%s2 + $0xf8] sm:$0xff]
      %v494 = vld [vmem:[%s450] sm:$0xff]
      %v495 = vld [vmem:[%s450 + $0x8] sm:$0xff]
      %v496 = vld [vmem:[%s450 + $0x10] sm:$0xff]
      %v497 = vld [vmem:[%s450 + $0x18] sm:$0xff]
      %v498 = vld [vmem:[%s450 + $0x20] sm:$0xff]
      %v499 = vld [vmem:[%s450 + $0x28] sm:$0xff]
      %v500 = vld [vmem:[%s450 + $0x30] sm:$0xff]
      %v501 = vld [vmem:[%s450 + $0x38] sm:$0xff]
      %vm502 = vcmask 523264
      %v504 = vsel %vm502, %v462, 0
      %v507 = vsel %vm502, %v463, 0
      %v510 = vsel %vm502, %v464, 0
      %v513 = vsel %vm502, %v465, 0
      %v516 = vsel %vm502, %v466, 0
      %v519 = vsel %vm502, %v467, 0
      %v522 = vsel %vm502, %v468, 0
      %v525 = vsel %vm502, %v469, 0
      %v528 = vsel %vm502, %v470, 0
      %v531 = vsel %vm502, %v471, 0
      %v534 = vsel %vm502, %v472, 0
      %v537 = vsel %vm502, %v473, 0
      %v540 = vsel %vm502, %v474, 0
      %v543 = vsel %vm502, %v475, 0
      %v546 = vsel %vm502, %v476, 0
      %v549 = vsel %vm502, %v477, 0
      %v552 = vsel %vm502, %v478, 0
      %v555 = vsel %vm502, %v479, 0
      %v558 = vsel %vm502, %v480, 0
      %v561 = vsel %vm502, %v481, 0
      %v564 = vsel %vm502, %v482, 0
      %v567 = vsel %vm502, %v483, 0
      %v570 = vsel %vm502, %v484, 0
      %v573 = vsel %vm502, %v485, 0
      %v576 = vsel %vm502, %v486, 0
      %v579 = vsel %vm502, %v487, 0
      %v582 = vsel %vm502, %v488, 0
      %v585 = vsel %vm502, %v489, 0
      %v588 = vsel %vm502, %v490, 0
      %v591 = vsel %vm502, %v491, 0
      %v594 = vsel %vm502, %v492, 0
      %v597 = vsel %vm502, %v493, 0
      %599 = vmatprep.subr.mxu0 0.0
      %600 = vmatpush1.msra.mxu0 0.0
      %601 = vmatprep.subr.mxu0 0.0
      %602 = vmatpush1.msra.mxu0 0.0
      %603 = vmatprep.subr.mxu0 0.0
      %604 = vmatpush1.msra.mxu0 0.0
      %605 = vmatprep.subr.mxu0 0.0
      %606 = vmatpush1.msra.mxu0 0.0
      %607 = vmatprep.subr.mxu0 0.0
      %608 = vmatpush1.msra.mxu0 0.0
      %609 = vmatprep.subr.mxu0 0.0
      %610 = vmatpush1.msra.mxu0 0.0
      %611 = vmatprep.subr.mxu0 0.0
      %612 = vmatpush1.msra.mxu0 0.0
      %613 = vmatprep.subr.mxu0 0.0
      %614 = vmatpush1.msra.mxu0 0.0
      %615 = vmatprep.subr.mxu0 0.0
      %616 = vmatpush1.msra.mxu0 %v501
      %617 = vmatprep.subr.mxu0 0.0
      %618 = vmatpush1.msra.mxu0 %v500
      %619 = vmatprep.subr.mxu0 0.0
      %620 = vmatpush1.msra.mxu0 %v499
      %621 = vmatprep.subr.mxu0 0.0
      %622 = vmatpush1.msra.mxu0 %v498
      %623 = vmatprep.subr.mxu0 0.0
      %624 = vmatpush1.msra.mxu0 %v497
      %625 = vmatprep.subr.mxu0 0.0
      %626 = vmatpush1.msra.mxu0 %v496
      %627 = vmatprep.subr.mxu0 0.0
      %628 = vmatpush1.msra.mxu0 %v495
      %629 = vmatprep.subr.mxu0 0.0
      %630 = vmatpush1.msra.mxu0 %v494
      %631 = vmatprep.subr.mxu0 0.0
      %632 = vmatpush2.msra.mxu0 0.0
      %633 = vmatprep.subr.mxu0 0.0
      %634 = vmatpush2.msra.mxu0 0.0
      %635 = vmatprep.subr.mxu0 0.0
      %636 = vmatpush2.msra.mxu0 0.0
      %637 = vmatprep.subr.mxu0 0.0
      %638 = vmatpush2.msra.mxu0 0.0
      %639 = vmatprep.subr.mxu0 0.0
      %640 = vmatpush2.msra.mxu0 0.0
      %641 = vmatprep.subr.mxu0 0.0
      %642 = vmatpush2.msra.mxu0 0.0
      %643 = vmatprep.subr.mxu0 0.0
      %644 = vmatpush2.msra.mxu0 0.0
      %645 = vmatprep.subr.mxu0 0.0
      %646 = vmatpush2.msra.mxu0 0.0
      %647 = vmatprep.subr.mxu0 0.0
      %648 = vmatpush2.msra.mxu0 0.0
      %649 = vmatprep.subr.mxu0 0.0
      %650 = vmatpush2.msra.mxu0 0.0
      %651 = vmatprep.subr.mxu0 0.0
      %652 = vmatpush2.msra.mxu0 0.0
      %653 = vmatprep.subr.mxu0 0.0
      %654 = vmatpush2.msra.mxu0 0.0
      %655 = vmatprep.subr.mxu0 0.0
      %656 = vmatpush2.msra.mxu0 0.0
      %657 = vmatprep.subr.mxu0 0.0
      %658 = vmatpush2.msra.mxu0 0.0
      %659 = vmatprep.subr.mxu0 0.0
      %660 = vmatpush2.msra.mxu0 0.0
      %661 = vmatprep.subr.mxu0 0.0
      %662 = vmatpush2.msra.mxu0 0.0
      %663 = vmatprep.mubr.f32.mxu0 0.0
      %664 = vmatmul.mubr.f32.gmra.mxu0 %v504
      %v665 = vpop.f32.mrf.mxu0
      %v666 = vadd.f32 0.0, %v665
      %v667 = vpop.f32.mrf.mxu0
      %668 = vmatprep.mubr.f32.mxu0 0.0
      %669 = vmatmul.mubr.f32.gmra.mxu0 %v507
      %v670 = vpop.f32.mrf.mxu0
      %v671 = vadd.f32 0.0, %v670
      %v672 = vpop.f32.mrf.mxu0
      %673 = vmatprep.mubr.f32.mxu0 0.0
      %674 = vmatmul.mubr.f32.gmra.mxu0 %v510
      %v675 = vpop.f32.mrf.mxu0
      %v676 = vadd.f32 0.0, %v675
      %v677 = vpop.f32.mrf.mxu0
      %678 = vmatprep.mubr.f32.mxu0 0.0
      %679 = vmatmul.mubr.f32.gmra.mxu0 %v513
      %v680 = vpop.f32.mrf.mxu0
      %v681 = vadd.f32 0.0, %v680
      %v682 = vpop.f32.mrf.mxu0
      %683 = vmatprep.mubr.f32.mxu0 0.0
      %684 = vmatmul.mubr.f32.gmra.mxu0 %v516
      %v685 = vpop.f32.mrf.mxu0
      %v686 = vadd.f32 0.0, %v685
      %v687 = vpop.f32.mrf.mxu0
      %688 = vmatprep.mubr.f32.mxu0 0.0
      %689 = vmatmul.mubr.f32.gmra.mxu0 %v519
      %v690 = vpop.f32.mrf.mxu0
      %v691 = vadd.f32 0.0, %v690
      %v692 = vpop.f32.mrf.mxu0
      %693 = vmatprep.mubr.f32.mxu0 0.0
      %694 = vmatmul.mubr.f32.gmra.mxu0 %v522
      %v695 = vpop.f32.mrf.mxu0
      %v696 = vadd.f32 0.0, %v695
      %v697 = vpop.f32.mrf.mxu0
      %698 = vmatprep.mubr.f32.mxu0 0.0
      %699 = vmatmul.mubr.f32.gmra.mxu0 %v525
      %v700 = vpop.f32.mrf.mxu0
      %v701 = vadd.f32 0.0, %v700
      %v702 = vpop.f32.mrf.mxu0
      %703 = vmatprep.mubr.f32.mxu0 0.0
      %704 = vmatmul.mubr.f32.gmra.mxu0 %v528
      %v705 = vpop.f32.mrf.mxu0
      %v706 = vadd.f32 0.0, %v705
      %v707 = vpop.f32.mrf.mxu0
      %708 = vmatprep.mubr.f32.mxu0 0.0
      %709 = vmatmul.mubr.f32.gmra.mxu0 %v531
      %v710 = vpop.f32.mrf.mxu0
      %v711 = vadd.f32 0.0, %v710
      %v712 = vpop.f32.mrf.mxu0
      %713 = vmatprep.mubr.f32.mxu0 0.0
      %714 = vmatmul.mubr.f32.gmra.mxu0 %v534
      %v715 = vpop.f32.mrf.mxu0
      %v716 = vadd.f32 0.0, %v715
      %v717 = vpop.f32.mrf.mxu0
      %718 = vmatprep.mubr.f32.mxu0 0.0
      %719 = vmatmul.mubr.f32.gmra.mxu0 %v537
      %v720 = vpop.f32.mrf.mxu0
      %v721 = vadd.f32 0.0, %v720
      %v722 = vpop.f32.mrf.mxu0
      %723 = vmatprep.mubr.f32.mxu0 0.0
      %724 = vmatmul.mubr.f32.gmra.mxu0 %v540
      %v725 = vpop.f32.mrf.mxu0
      %v726 = vadd.f32 0.0, %v725
      %v727 = vpop.f32.mrf.mxu0
      %728 = vmatprep.mubr.f32.mxu0 0.0
      %729 = vmatmul.mubr.f32.gmra.mxu0 %v543
      %v730 = vpop.f32.mrf.mxu0
      %v731 = vadd.f32 0.0, %v730
      %v732 = vpop.f32.mrf.mxu0
      %733 = vmatprep.mubr.f32.mxu0 0.0
      %734 = vmatmul.mubr.f32.gmra.mxu0 %v546
      %v735 = vpop.f32.mrf.mxu0
      %v736 = vadd.f32 0.0, %v735
      %v737 = vpop.f32.mrf.mxu0
      %738 = vmatprep.mubr.f32.mxu0 0.0
      %739 = vmatmul.mubr.f32.gmra.mxu0 %v549
      %v740 = vpop.f32.mrf.mxu0
      %v741 = vadd.f32 0.0, %v740
      %v742 = vpop.f32.mrf.mxu0
      %743 = vmatprep.mubr.f32.mxu0 0.0
      %744 = vmatmul.mubr.f32.gmra.mxu0 %v552
      %v745 = vpop.f32.mrf.mxu0
      %v746 = vadd.f32 0.0, %v745
      %v747 = vpop.f32.mrf.mxu0
      %748 = vmatprep.mubr.f32.mxu0 0.0
      %749 = vmatmul.mubr.f32.gmra.mxu0 %v555
      %v750 = vpop.f32.mrf.mxu0
      %v751 = vadd.f32 0.0, %v750
      %v752 = vpop.f32.mrf.mxu0
      %753 = vmatprep.mubr.f32.mxu0 0.0
      %754 = vmatmul.mubr.f32.gmra.mxu0 %v558
      %v755 = vpop.f32.mrf.mxu0
      %v756 = vadd.f32 0.0, %v755
      %v757 = vpop.f32.mrf.mxu0
      %758 = vmatprep.mubr.f32.mxu0 0.0
      %759 = vmatmul.mubr.f32.gmra.mxu0 %v561
      %v760 = vpop.f32.mrf.mxu0
      %v761 = vadd.f32 0.0, %v760
      %v762 = vpop.f32.mrf.mxu0
      %763 = vmatprep.mubr.f32.mxu0 0.0
      %764 = vmatmul.mubr.f32.gmra.mxu0 %v564
      %v765 = vpop.f32.mrf.mxu0
      %v766 = vadd.f32 0.0, %v765
      %v767 = vpop.f32.mrf.mxu0
      %768 = vmatprep.mubr.f32.mxu0 0.0
      %769 = vmatmul.mubr.f32.gmra.mxu0 %v567
      %v770 = vpop.f32.mrf.mxu0
      %v771 = vadd.f32 0.0, %v770
      %v772 = vpop.f32.mrf.mxu0
      %773 = vmatprep.mubr.f32.mxu0 0.0
      %774 = vmatmul.mubr.f32.gmra.mxu0 %v570
      %v775 = vpop.f32.mrf.mxu0
      %v776 = vadd.f32 0.0, %v775
      %v777 = vpop.f32.mrf.mxu0
      %778 = vmatprep.mubr.f32.mxu0 0.0
      %779 = vmatmul.mubr.f32.gmra.mxu0 %v573
      %v780 = vpop.f32.mrf.mxu0
      %v781 = vadd.f32 0.0, %v780
      %v782 = vpop.f32.mrf.mxu0
      %783 = vmatprep.mubr.f32.mxu0 0.0
      %784 = vmatmul.mubr.f32.gmra.mxu0 %v576
      %v785 = vpop.f32.mrf.mxu0
      %v786 = vadd.f32 0.0, %v785
      %v787 = vpop.f32.mrf.mxu0
      %788 = vmatprep.mubr.f32.mxu0 0.0
      %789 = vmatmul.mubr.f32.gmra.mxu0 %v579
      %v790 = vpop.f32.mrf.mxu0
      %v791 = vadd.f32 0.0, %v790
      %v792 = vpop.f32.mrf.mxu0
      %793 = vmatprep.mubr.f32.mxu0 0.0
      %794 = vmatmul.mubr.f32.gmra.mxu0 %v582
      %v795 = vpop.f32.mrf.mxu0
      %v796 = vadd.f32 0.0, %v795
      %v797 = vpop.f32.mrf.mxu0
      %798 = vmatprep.mubr.f32.mxu0 0.0
      %799 = vmatmul.mubr.f32.gmra.mxu0 %v585
      %v800 = vpop.f32.mrf.mxu0
      %v801 = vadd.f32 0.0, %v800
      %v802 = vpop.f32.mrf.mxu0
      %803 = vmatprep.mubr.f32.mxu0 0.0
      %804 = vmatmul.mubr.f32.gmra.mxu0 %v588
      %v805 = vpop.f32.mrf.mxu0
      %v806 = vadd.f32 0.0, %v805
      %v807 = vpop.f32.mrf.mxu0
      %808 = vmatprep.mubr.f32.mxu0 0.0
      %809 = vmatmul.mubr.f32.gmra.mxu0 %v591
      %v810 = vpop.f32.mrf.mxu0
      %v811 = vadd.f32 0.0, %v810
      %v812 = vpop.f32.mrf.mxu0
      %813 = vmatprep.mubr.f32.mxu0 0.0
      %814 = vmatmul.mubr.f32.gmra.mxu0 %v594
      %v815 = vpop.f32.mrf.mxu0
      %v816 = vadd.f32 0.0, %v815
      %v817 = vpop.f32.mrf.mxu0
      %818 = vmatprep.mubr.f32.mxu0 0.0
      %819 = vmatmul.mubr.f32.gmra.mxu0 %v597
      %v820 = vpop.f32.mrf.mxu0
      %v821 = vadd.f32 0.0, %v820
      %v822 = vpop.f32.mrf.mxu0
      %823 = vdwg.mxu0
      %v824 = vpack.c.bf16 %v671, %v666
      %v825 = vpack.c.bf16 %v681, %v676
      %v826 = vpack.c.bf16 %v691, %v686
      %v827 = vpack.c.bf16 %v701, %v696
      %v828 = vpack.c.bf16 %v711, %v706
      %v829 = vpack.c.bf16 %v721, %v716
      %v830 = vpack.c.bf16 %v731, %v726
      %v831 = vpack.c.bf16 %v741, %v736
      %v832 = vpack.c.bf16 %v751, %v746
      %v833 = vpack.c.bf16 %v761, %v756
      %v834 = vpack.c.bf16 %v771, %v766
      %v835 = vpack.c.bf16 %v781, %v776
      %v836 = vpack.c.bf16 %v791, %v786
      %v837 = vpack.c.bf16 %v801, %v796
      %v838 = vpack.c.bf16 %v811, %v806
      %v839 = vpack.c.bf16 %v821, %v816
      %v840 = vld [vmem:[%s8] sm:$0xf]
      %v841 = vld [vmem:[%s8 + $0x4] sm:$0xf]
      %v844 = vunpack.c.l.b16 %v840
      %v845 = vunpack.c.l.b16 %v841
      %v846 = vpack.c.b16 %v845, %v844
      %vm848 = vcmask 130048
      %v850 = vsel %vm848, %v824, 0
      %v853 = vsel %vm848, %v825, 0
      %v856 = vsel %vm848, %v826, 0
      %v859 = vsel %vm848, %v827, 0
      %v862 = vsel %vm848, %v828, 0
      %v865 = vsel %vm848, %v829, 0
      %v868 = vsel %vm848, %v830, 0
      %v871 = vsel %vm848, %v831, 0
      %v874 = vsel %vm848, %v832, 0
      %v877 = vsel %vm848, %v833, 0
      %v880 = vsel %vm848, %v834, 0
      %v883 = vsel %vm848, %v835, 0
      %v886 = vsel %vm848, %v836, 0
      %v889 = vsel %vm848, %v837, 0
      %v892 = vsel %vm848, %v838, 0
      %v895 = vsel %vm848, %v839, 0
      %897 = vmatprep.subr.bf16.mxu0 0
      %898 = vmatpush1.bf16.msra.mxu0 0
      %899 = vmatprep.subr.bf16.mxu0 0
      %900 = vmatpush1.bf16.msra.mxu0 0
      %901 = vmatprep.subr.bf16.mxu0 0
      %902 = vmatpush1.bf16.msra.mxu0 0
      %903 = vmatprep.subr.bf16.mxu0 0
      %904 = vmatpush1.bf16.msra.mxu0 0
      %905 = vmatprep.subr.bf16.mxu0 0
      %906 = vmatpush1.bf16.msra.mxu0 0
      %907 = vmatprep.subr.bf16.mxu0 0
      %908 = vmatpush1.bf16.msra.mxu0 0
      %909 = vmatprep.subr.bf16.mxu0 0
      %910 = vmatpush1.bf16.msra.mxu0 0
      %911 = vmatprep.subr.bf16.mxu0 0
      %912 = vmatpush1.bf16.msra.mxu0 %v846
      %913 = vmatprep.subr.bf16.mxu0 0
      %914 = vmatpush2.bf16.msra.mxu0 0
      %915 = vmatprep.subr.bf16.mxu0 0
      %916 = vmatpush2.bf16.msra.mxu0 0
      %917 = vmatprep.subr.bf16.mxu0 0
      %918 = vmatpush2.bf16.msra.mxu0 0
      %919 = vmatprep.subr.bf16.mxu0 0
      %920 = vmatpush2.bf16.msra.mxu0 0
      %921 = vmatprep.subr.bf16.mxu0 0
      %922 = vmatpush2.bf16.msra.mxu0 0
      %923 = vmatprep.subr.bf16.mxu0 0
      %924 = vmatpush2.bf16.msra.mxu0 0
      %925 = vmatprep.subr.bf16.mxu0 0
      %926 = vmatpush2.bf16.msra.mxu0 0
      %927 = vmatprep.subr.bf16.mxu0 0
      %928 = vmatpush2.bf16.msra.mxu0 0
      %929 = vmatprep.mubr.bf16.mxu0 0
      %930 = vmatmul.mubr.bf16.gmra.mxu0 %v850
      %v931 = vpop.f32.mrf.mxu0
      %v932 = vadd.f32 0.0, %v931
      %v933 = vpop.f32.mrf.mxu0
      %v934 = vpop.f32.mrf.mxu0
      %v935 = vadd.f32 0.0, %v934
      %v936 = vpop.f32.mrf.mxu0
      %937 = vmatprep.mubr.bf16.mxu0 0
      %938 = vmatmul.mubr.bf16.gmra.mxu0 %v853
      %v939 = vpop.f32.mrf.mxu0
      %v940 = vadd.f32 0.0, %v939
      %v941 = vpop.f32.mrf.mxu0
      %v942 = vpop.f32.mrf.mxu0
      %v943 = vadd.f32 0.0, %v942
      %v944 = vpop.f32.mrf.mxu0
      %945 = vmatprep.mubr.bf16.mxu0 0
      %946 = vmatmul.mubr.bf16.gmra.mxu0 %v856
      %v947 = vpop.f32.mrf.mxu0
      %v948 = vadd.f32 0.0, %v947
      %v949 = vpop.f32.mrf.mxu0
      %v950 = vpop.f32.mrf.mxu0
      %v951 = vadd.f32 0.0, %v950
      %v952 = vpop.f32.mrf.mxu0
      %953 = vmatprep.mubr.bf16.mxu0 0
      %954 = vmatmul.mubr.bf16.gmra.mxu0 %v859
      %v955 = vpop.f32.mrf.mxu0
      %v956 = vadd.f32 0.0, %v955
      %v957 = vpop.f32.mrf.mxu0
      %v958 = vpop.f32.mrf.mxu0
      %v959 = vadd.f32 0.0, %v958
      %v960 = vpop.f32.mrf.mxu0
      %961 = vmatprep.mubr.bf16.mxu0 0
      %962 = vmatmul.mubr.bf16.gmra.mxu0 %v862
      %v963 = vpop.f32.mrf.mxu0
      %v964 = vadd.f32 0.0, %v963
      %v965 = vpop.f32.mrf.mxu0
      %v966 = vpop.f32.mrf.mxu0
      %v967 = vadd.f32 0.0, %v966
      %v968 = vpop.f32.mrf.mxu0
      %969 = vmatprep.mubr.bf16.mxu0 0
      %970 = vmatmul.mubr.bf16.gmra.mxu0 %v865
      %v971 = vpop.f32.mrf.mxu0
      %v972 = vadd.f32 0.0, %v971
      %v973 = vpop.f32.mrf.mxu0
      %v974 = vpop.f32.mrf.mxu0
      %v975 = vadd.f32 0.0, %v974
      %v976 = vpop.f32.mrf.mxu0
      %977 = vmatprep.mubr.bf16.mxu0 0
      %978 = vmatmul.mubr.bf16.gmra.mxu0 %v868
      %v979 = vpop.f32.mrf.mxu0
      %v980 = vadd.f32 0.0, %v979
      %v981 = vpop.f32.mrf.mxu0
      %v982 = vpop.f32.mrf.mxu0
      %v983 = vadd.f32 0.0, %v982
      %v984 = vpop.f32.mrf.mxu0
      %985 = vmatprep.mubr.bf16.mxu0 0
      %986 = vmatmul.mubr.bf16.gmra.mxu0 %v871
      %v987 = vpop.f32.mrf.mxu0
      %v988 = vadd.f32 0.0, %v987
      %v989 = vpop.f32.mrf.mxu0
      %v990 = vpop.f32.mrf.mxu0
      %v991 = vadd.f32 0.0, %v990
      %v992 = vpop.f32.mrf.mxu0
      %993 = vmatprep.mubr.bf16.mxu0 0
      %994 = vmatmul.mubr.bf16.gmra.mxu0 %v874
      %v995 = vpop.f32.mrf.mxu0
      %v996 = vadd.f32 0.0, %v995
      %v997 = vpop.f32.mrf.mxu0
      %v998 = vpop.f32.mrf.mxu0
      %v999 = vadd.f32 0.0, %v998
      %v1000 = vpop.f32.mrf.mxu0
      %1001 = vmatprep.mubr.bf16.mxu0 0
      %1002 = vmatmul.mubr.bf16.gmra.mxu0 %v877
      %v1003 = vpop.f32.mrf.mxu0
      %v1004 = vadd.f32 0.0, %v1003
      %v1005 = vpop.f32.mrf.mxu0
      %v1006 = vpop.f32.mrf.mxu0
      %v1007 = vadd.f32 0.0, %v1006
      %v1008 = vpop.f32.mrf.mxu0
      %1009 = vmatprep.mubr.bf16.mxu0 0
      %1010 = vmatmul.mubr.bf16.gmra.mxu0 %v880
      %v1011 = vpop.f32.mrf.mxu0
      %v1012 = vadd.f32 0.0, %v1011
      %v1013 = vpop.f32.mrf.mxu0
      %v1014 = vpop.f32.mrf.mxu0
      %v1015 = vadd.f32 0.0, %v1014
      %v1016 = vpop.f32.mrf.mxu0
      %1017 = vmatprep.mubr.bf16.mxu0 0
      %1018 = vmatmul.mubr.bf16.gmra.mxu0 %v883
      %v1019 = vpop.f32.mrf.mxu0
      %v1020 = vadd.f32 0.0, %v1019
      %v1021 = vpop.f32.mrf.mxu0
      %v1022 = vpop.f32.mrf.mxu0
      %v1023 = vadd.f32 0.0, %v1022
      %v1024 = vpop.f32.mrf.mxu0
      %1025 = vmatprep.mubr.bf16.mxu0 0
      %1026 = vmatmul.mubr.bf16.gmra.mxu0 %v886
      %v1027 = vpop.f32.mrf.mxu0
      %v1028 = vadd.f32 0.0, %v1027
      %v1029 = vpop.f32.mrf.mxu0
      %v1030 = vpop.f32.mrf.mxu0
      %v1031 = vadd.f32 0.0, %v1030
      %v1032 = vpop.f32.mrf.mxu0
      %1033 = vmatprep.mubr.bf16.mxu0 0
      %1034 = vmatmul.mubr.bf16.gmra.mxu0 %v889
      %v1035 = vpop.f32.mrf.mxu0
      %v1036 = vadd.f32 0.0, %v1035
      %v1037 = vpop.f32.mrf.mxu0
      %v1038 = vpop.f32.mrf.mxu0
      %v1039 = vadd.f32 0.0, %v1038
      %v1040 = vpop.f32.mrf.mxu0
      %1041 = vmatprep.mubr.bf16.mxu0 0
      %1042 = vmatmul.mubr.bf16.gmra.mxu0 %v892
      %v1043 = vpop.f32.mrf.mxu0
      %v1044 = vadd.f32 0.0, %v1043
      %v1045 = vpop.f32.mrf.mxu0
      %v1046 = vpop.f32.mrf.mxu0
      %v1047 = vadd.f32 0.0, %v1046
      %v1048 = vpop.f32.mrf.mxu0
      %1049 = vmatprep.mubr.bf16.mxu0 0
      %1050 = vmatmul.mubr.bf16.gmra.mxu0 %v895
      %v1051 = vpop.f32.mrf.mxu0
      %v1052 = vadd.f32 0.0, %v1051
      %v1053 = vpop.f32.mrf.mxu0
      %v1054 = vpop.f32.mrf.mxu0
      %v1055 = vadd.f32 0.0, %v1054
      %v1056 = vpop.f32.mrf.mxu0
      %1057 = vdwg.mxu0
      %v1058 = vlaneseq
      %v1059 = vshrl.u32 %v1058, 7
      %v1060 = vadd.s32 %v1059, 8
      %vm1061 = vcmp.ge.s32.totalorder %v1059, 1
      %vm1062 = vcmp.ge.s32.totalorder %v1060, 1
      %vm1063 = vcmp.le.s32.totalorder %v1059, 14
      %vm1064 = vcmp.le.s32.totalorder %v1060, 14
      %vm1095 = vcmask 1040384
      %v1096 = vrot.slane %v666, 7
      %v1097 = vrot.slane %v671, 7
      %v1098 = vsel %vm1095, %v1096, %v1097
      %v1099 = vrot.slane %v676, 7
      %v1100 = vsel %vm1095, %v1097, %v1099
      %v1101 = vrot.slane %v681, 7
      %v1102 = vsel %vm1095, %v1099, %v1101
      %v1103 = vrot.slane %v686, 7
      %v1104 = vsel %vm1095, %v1101, %v1103
      %v1105 = vrot.slane %v691, 7
      %v1106 = vsel %vm1095, %v1103, %v1105
      %v1107 = vrot.slane %v696, 7
      %v1108 = vsel %vm1095, %v1105, %v1107
      %v1109 = vrot.slane %v701, 7
      %v1110 = vsel %vm1095, %v1107, %v1109
      %v1111 = vrot.slane %v706, 7
      %v1112 = vsel %vm1095, %v1109, %v1111
      %v1113 = vrot.slane %v711, 7
      %v1114 = vsel %vm1095, %v1111, %v1113
      %v1115 = vrot.slane %v716, 7
      %v1116 = vsel %vm1095, %v1113, %v1115
      %v1117 = vrot.slane %v721, 7
      %v1118 = vsel %vm1095, %v1115, %v1117
      %v1119 = vrot.slane %v726, 7
      %v1120 = vsel %vm1095, %v1117, %v1119
      %v1121 = vrot.slane %v731, 7
      %v1122 = vsel %vm1095, %v1119, %v1121
      %v1123 = vrot.slane %v736, 7
      %v1124 = vsel %vm1095, %v1121, %v1123
      %v1125 = vrot.slane %v741, 7
      %v1126 = vsel %vm1095, %v1123, %v1125
      %v1127 = vrot.slane %v746, 7
      %v1128 = vsel %vm1095, %v1125, %v1127
      %v1129 = vrot.slane %v751, 7
      %v1130 = vsel %vm1095, %v1127, %v1129
      %v1131 = vrot.slane %v756, 7
      %v1132 = vsel %vm1095, %v1129, %v1131
      %v1133 = vrot.slane %v761, 7
      %v1134 = vsel %vm1095, %v1131, %v1133
      %v1135 = vrot.slane %v766, 7
      %v1136 = vsel %vm1095, %v1133, %v1135
      %v1137 = vrot.slane %v771, 7
      %v1138 = vsel %vm1095, %v1135, %v1137
      %v1139 = vrot.slane %v776, 7
      %v1140 = vsel %vm1095, %v1137, %v1139
      %v1141 = vrot.slane %v781, 7
      %v1142 = vsel %vm1095, %v1139, %v1141
      %v1143 = vrot.slane %v786, 7
      %v1144 = vsel %vm1095, %v1141, %v1143
      %v1145 = vrot.slane %v791, 7
      %v1146 = vsel %vm1095, %v1143, %v1145
      %v1147 = vrot.slane %v796, 7
      %v1148 = vsel %vm1095, %v1145, %v1147
      %v1149 = vrot.slane %v801, 7
      %v1150 = vsel %vm1095, %v1147, %v1149
      %v1151 = vrot.slane %v806, 7
      %v1152 = vsel %vm1095, %v1149, %v1151
      %v1153 = vrot.slane %v811, 7
      %v1154 = vsel %vm1095, %v1151, %v1153
      %v1185 = vsel %vm1095, 0.0, %v1096
      %v1186 = vsel %vm1061, %v1185, 0.0
      %v1187 = vsel %vm1062, %v1098, 0.0
      %v1188 = vsel %vm1061, %v1100, 0.0
      %v1189 = vsel %vm1062, %v1102, 0.0
      %v1190 = vsel %vm1061, %v1104, 0.0
      %v1191 = vsel %vm1062, %v1106, 0.0
      %v1192 = vsel %vm1061, %v1108, 0.0
      %v1193 = vsel %vm1062, %v1110, 0.0
      %v1194 = vsel %vm1061, %v1112, 0.0
      %v1195 = vsel %vm1062, %v1114, 0.0
      %v1196 = vsel %vm1061, %v1116, 0.0
      %v1197 = vsel %vm1062, %v1118, 0.0
      %v1198 = vsel %vm1061, %v1120, 0.0
      %v1199 = vsel %vm1062, %v1122, 0.0
      %v1200 = vsel %vm1061, %v1124, 0.0
      %v1201 = vsel %vm1062, %v1126, 0.0
      %v1202 = vsel %vm1061, %v1128, 0.0
      %v1203 = vsel %vm1062, %v1130, 0.0
      %v1204 = vsel %vm1061, %v1132, 0.0
      %v1205 = vsel %vm1062, %v1134, 0.0
      %v1206 = vsel %vm1061, %v1136, 0.0
      %v1207 = vsel %vm1062, %v1138, 0.0
      %v1208 = vsel %vm1061, %v1140, 0.0
      %v1209 = vsel %vm1062, %v1142, 0.0
      %v1210 = vsel %vm1061, %v1144, 0.0
      %v1211 = vsel %vm1062, %v1146, 0.0
      %v1212 = vsel %vm1061, %v1148, 0.0
      %v1213 = vsel %vm1062, %v1150, 0.0
      %v1214 = vsel %vm1061, %v1152, 0.0
      %v1215 = vsel %vm1062, %v1154, 0.0
      %vm1217 = vcmask 1046528
      %v1218 = vrot.slane %v666, 1
      %v1219 = vrot.slane %v671, 1
      %v1220 = vsel %vm1217, %v1218, %v1219
      %v1221 = vrot.slane %v676, 1
      %v1222 = vsel %vm1217, %v1219, %v1221
      %v1223 = vrot.slane %v681, 1
      %v1224 = vsel %vm1217, %v1221, %v1223
      %v1225 = vrot.slane %v686, 1
      %v1226 = vsel %vm1217, %v1223, %v1225
      %v1227 = vrot.slane %v691, 1
      %v1228 = vsel %vm1217, %v1225, %v1227
      %v1229 = vrot.slane %v696, 1
      %v1230 = vsel %vm1217, %v1227, %v1229
      %v1231 = vrot.slane %v701, 1
      %v1232 = vsel %vm1217, %v1229, %v1231
      %v1233 = vrot.slane %v706, 1
      %v1234 = vsel %vm1217, %v1231, %v1233
      %v1235 = vrot.slane %v711, 1
      %v1236 = vsel %vm1217, %v1233, %v1235
      %v1237 = vrot.slane %v716, 1
      %v1238 = vsel %vm1217, %v1235, %v1237
      %v1239 = vrot.slane %v721, 1
      %v1240 = vsel %vm1217, %v1237, %v1239
      %v1241 = vrot.slane %v726, 1
      %v1242 = vsel %vm1217, %v1239, %v1241
      %v1243 = vrot.slane %v731, 1
      %v1244 = vsel %vm1217, %v1241, %v1243
      %v1245 = vrot.slane %v736, 1
      %v1246 = vsel %vm1217, %v1243, %v1245
      %v1247 = vrot.slane %v741, 1
      %v1248 = vsel %vm1217, %v1245, %v1247
      %v1249 = vrot.slane %v746, 1
      %v1250 = vsel %vm1217, %v1247, %v1249
      %v1251 = vrot.slane %v751, 1
      %v1252 = vsel %vm1217, %v1249, %v1251
      %v1253 = vrot.slane %v756, 1
      %v1254 = vsel %vm1217, %v1251, %v1253
      %v1255 = vrot.slane %v761, 1
      %v1256 = vsel %vm1217, %v1253, %v1255
      %v1257 = vrot.slane %v766, 1
      %v1258 = vsel %vm1217, %v1255, %v1257
      %v1259 = vrot.slane %v771, 1
      %v1260 = vsel %vm1217, %v1257, %v1259
      %v1261 = vrot.slane %v776, 1
      %v1262 = vsel %vm1217, %v1259, %v1261
      %v1263 = vrot.slane %v781, 1
      %v1264 = vsel %vm1217, %v1261, %v1263
      %v1265 = vrot.slane %v786, 1
      %v1266 = vsel %vm1217, %v1263, %v1265
      %v1267 = vrot.slane %v791, 1
      %v1268 = vsel %vm1217, %v1265, %v1267
      %v1269 = vrot.slane %v796, 1
      %v1270 = vsel %vm1217, %v1267, %v1269
      %v1271 = vrot.slane %v801, 1
      %v1272 = vsel %vm1217, %v1269, %v1271
      %v1273 = vrot.slane %v806, 1
      %v1274 = vsel %vm1217, %v1271, %v1273
      %v1275 = vrot.slane %v811, 1
      %v1276 = vsel %vm1217, %v1273, %v1275
      %v1277 = vrot.slane %v816, 1
      %v1278 = vsel %vm1217, %v1275, %v1277
      %v1310 = vsel %vm1217, 0.0, %v1218
      %v1311 = vsel %vm1064, %v1310, 0.0
      %v1312 = vsel %vm1063, %v1220, 0.0
      %v1313 = vsel %vm1064, %v1222, 0.0
      %v1314 = vsel %vm1063, %v1224, 0.0
      %v1315 = vsel %vm1064, %v1226, 0.0
      %v1316 = vsel %vm1063, %v1228, 0.0
      %v1317 = vsel %vm1064, %v1230, 0.0
      %v1318 = vsel %vm1063, %v1232, 0.0
      %v1319 = vsel %vm1064, %v1234, 0.0
      %v1320 = vsel %vm1063, %v1236, 0.0
      %v1321 = vsel %vm1064, %v1238, 0.0
      %v1322 = vsel %vm1063, %v1240, 0.0
      %v1323 = vsel %vm1064, %v1242, 0.0
      %v1324 = vsel %vm1063, %v1244, 0.0
      %v1325 = vsel %vm1064, %v1246, 0.0
      %v1326 = vsel %vm1063, %v1248, 0.0
      %v1327 = vsel %vm1064, %v1250, 0.0
      %v1328 = vsel %vm1063, %v1252, 0.0
      %v1329 = vsel %vm1064, %v1254, 0.0
      %v1330 = vsel %vm1063, %v1256, 0.0
      %v1331 = vsel %vm1064, %v1258, 0.0
      %v1332 = vsel %vm1063, %v1260, 0.0
      %v1333 = vsel %vm1064, %v1262, 0.0
      %v1334 = vsel %vm1063, %v1264, 0.0
      %v1335 = vsel %vm1064, %v1266, 0.0
      %v1336 = vsel %vm1063, %v1268, 0.0
      %v1337 = vsel %vm1064, %v1270, 0.0
      %v1338 = vsel %vm1063, %v1272, 0.0
      %v1339 = vsel %vm1064, %v1274, 0.0
      %v1340 = vsel %vm1063, %v1276, 0.0
      %v1341 = vsel %vm1064, %v1278, 0.0
      %v1343 = vrot.slane %v816, 7
      %v1344 = vsel %vm1095, %v1153, %v1343
      %v1345 = vrot.slane %v821, 7
      %v1346 = vsel %vm1095, %v1343, %v1345
      %v1349 = vsel %vm1061, %v1344, 0.0
      %v1350 = vsel %vm1062, %v1346, 0.0
      %v1351 = vrot.slane %v821, 1
      %v1352 = vsel %vm1217, %v1277, %v1351
      %v1355 = vsel %vm1217, %v1351, 0.0
      %v1356 = vsel %vm1063, %v1352, 0.0
      %v1357 = vsel %vm1064, %v1355, 0.0
      %v1359 = vsel %vm1095, %v1345, 0.0
      %v1360 = vsel %vm1061, %v1359, 0.0
      %1362 = vrot.lane.b32.xlu0 0.0, 16
      %v1363 = vpop.permute.xlu0 %1362
      %1364 = vrot.lane.b32.xlu0 %v666, 16
      %v1365 = vpop.permute.xlu0 %1364
      %1366 = vrot.lane.b32.xlu0 %v671, 16
      %v1367 = vpop.permute.xlu0 %1366
      %1368 = vrot.lane.b32.xlu0 %v676, 16
      %v1369 = vpop.permute.xlu0 %1368
      %1370 = vrot.lane.b32.xlu0 %v681, 16
      %v1371 = vpop.permute.xlu0 %1370
      %1372 = vrot.lane.b32.xlu0 %v686, 16
      %v1373 = vpop.permute.xlu0 %1372
      %1374 = vrot.lane.b32.xlu0 %v691, 16
      %v1375 = vpop.permute.xlu0 %1374
      %1376 = vrot.lane.b32.xlu0 %v696, 16
      %v1377 = vpop.permute.xlu0 %1376
      %1378 = vrot.lane.b32.xlu0 %v701, 16
      %v1379 = vpop.permute.xlu0 %1378
      %1380 = vrot.lane.b32.xlu0 %v706, 16
      %v1381 = vpop.permute.xlu0 %1380
      %1382 = vrot.lane.b32.xlu0 %v711, 16
      %v1383 = vpop.permute.xlu0 %1382
      %1384 = vrot.lane.b32.xlu0 %v716, 16
      %v1385 = vpop.permute.xlu0 %1384
      %1386 = vrot.lane.b32.xlu0 %v721, 16
      %v1387 = vpop.permute.xlu0 %1386
      %1388 = vrot.lane.b32.xlu0 %v726, 16
      %v1389 = vpop.permute.xlu0 %1388
      %1390 = vrot.lane.b32.xlu0 %v731, 16
      %v1391 = vpop.permute.xlu0 %1390
      %1392 = vrot.lane.b32.xlu0 %v736, 16
      %v1393 = vpop.permute.xlu0 %1392
      %1394 = vrot.lane.b32.xlu0 %v741, 16
      %v1395 = vpop.permute.xlu0 %1394
      %1396 = vrot.lane.b32.xlu0 %v746, 16
      %v1397 = vpop.permute.xlu0 %1396
      %1398 = vrot.lane.b32.xlu0 %v751, 16
      %v1399 = vpop.permute.xlu0 %1398
      %1400 = vrot.lane.b32.xlu0 %v756, 16
      %v1401 = vpop.permute.xlu0 %1400
      %1402 = vrot.lane.b32.xlu0 %v761, 16
      %v1403 = vpop.permute.xlu0 %1402
      %1404 = vrot.lane.b32.xlu0 %v766, 16
      %v1405 = vpop.permute.xlu0 %1404
      %1406 = vrot.lane.b32.xlu0 %v771, 16
      %v1407 = vpop.permute.xlu0 %1406
      %1408 = vrot.lane.b32.xlu0 %v776, 16
      %v1409 = vpop.permute.xlu0 %1408
      %1410 = vrot.lane.b32.xlu0 %v781, 16
      %v1411 = vpop.permute.xlu0 %1410
      %1412 = vrot.lane.b32.xlu0 %v786, 16
      %v1413 = vpop.permute.xlu0 %1412
      %1414 = vrot.lane.b32.xlu0 %v791, 16
      %v1415 = vpop.permute.xlu0 %1414
      %1416 = vrot.lane.b32.xlu0 %v796, 16
      %v1417 = vpop.permute.xlu0 %1416
      %1418 = vrot.lane.b32.xlu0 %v801, 16
      %v1419 = vpop.permute.xlu0 %1418
      %1420 = vrot.lane.b32.xlu0 %v806, 16
      %v1421 = vpop.permute.xlu0 %1420
      %1422 = vrot.lane.b32.xlu0 %v811, 16
      %v1423 = vpop.permute.xlu0 %1422
      %1486 = vrot.lane.b32.xlu0 0.0, 32
      %v1487 = vpop.permute.xlu0 %1486
      %1488 = vrot.lane.b32.xlu0 %v1311, 32
      %v1489 = vpop.permute.xlu0 %1488
      %1490 = vrot.lane.b32.xlu0 %v1312, 32
      %v1491 = vpop.permute.xlu0 %1490
      %1492 = vrot.lane.b32.xlu0 %v1313, 32
      %v1493 = vpop.permute.xlu0 %1492
      %1494 = vrot.lane.b32.xlu0 %v1314, 32
      %v1495 = vpop.permute.xlu0 %1494
      %1496 = vrot.lane.b32.xlu0 %v1315, 32
      %v1497 = vpop.permute.xlu0 %1496
      %1498 = vrot.lane.b32.xlu0 %v1316, 32
      %v1499 = vpop.permute.xlu0 %1498
      %1500 = vrot.lane.b32.xlu0 %v1317, 32
      %v1501 = vpop.permute.xlu0 %1500
      %1502 = vrot.lane.b32.xlu0 %v1318, 32
      %v1503 = vpop.permute.xlu0 %1502
      %1504 = vrot.lane.b32.xlu0 %v1319, 32
      %v1505 = vpop.permute.xlu0 %1504
      %1506 = vrot.lane.b32.xlu0 %v1320, 32
      %v1507 = vpop.permute.xlu0 %1506
      %1508 = vrot.lane.b32.xlu0 %v1321, 32
      %v1509 = vpop.permute.xlu0 %1508
      %1510 = vrot.lane.b32.xlu0 %v1322, 32
      %v1511 = vpop.permute.xlu0 %1510
      %1512 = vrot.lane.b32.xlu0 %v1323, 32
      %v1513 = vpop.permute.xlu0 %1512
      %1514 = vrot.lane.b32.xlu0 %v1324, 32
      %v1515 = vpop.permute.xlu0 %1514
      %1516 = vrot.lane.b32.xlu0 %v1325, 32
      %v1517 = vpop.permute.xlu0 %1516
      %1518 = vrot.lane.b32.xlu0 %v1326, 32
      %v1519 = vpop.permute.xlu0 %1518
      %1520 = vrot.lane.b32.xlu0 %v1327, 32
      %v1521 = vpop.permute.xlu0 %1520
      %1522 = vrot.lane.b32.xlu0 %v1328, 32
      %v1523 = vpop.permute.xlu0 %1522
      %1524 = vrot.lane.b32.xlu0 %v1329, 32
      %v1525 = vpop.permute.xlu0 %1524
      %1526 = vrot.lane.b32.xlu0 %v1330, 32
      %v1527 = vpop.permute.xlu0 %1526
      %1528 = vrot.lane.b32.xlu0 %v1331, 32
      %v1529 = vpop.permute.xlu0 %1528
      %1530 = vrot.lane.b32.xlu0 %v1332, 32
      %v1531 = vpop.permute.xlu0 %1530
      %1532 = vrot.lane.b32.xlu0 %v1333, 32
      %v1533 = vpop.permute.xlu0 %1532
      %1534 = vrot.lane.b32.xlu0 %v1334, 32
      %v1535 = vpop.permute.xlu0 %1534
      %1536 = vrot.lane.b32.xlu0 %v1335, 32
      %v1537 = vpop.permute.xlu0 %1536
      %1538 = vrot.lane.b32.xlu0 %v1336, 32
      %v1539 = vpop.permute.xlu0 %1538
      %1540 = vrot.lane.b32.xlu0 %v1337, 32
      %v1541 = vpop.permute.xlu0 %1540
      %1542 = vrot.lane.b32.xlu0 %v1338, 32
      %v1543 = vpop.permute.xlu0 %1542
      %1544 = vrot.lane.b32.xlu0 %v1339, 32
      %v1545 = vpop.permute.xlu0 %1544
      %1546 = vrot.lane.b32.xlu0 %v1340, 32
      %v1547 = vpop.permute.xlu0 %1546
      %1548 = vrot.lane.b32.xlu0 %v1341, 32
      %v1549 = vpop.permute.xlu0 %1548
      %1614 = vrot.lane.b32.xlu0 %v1186, 48
      %v1615 = vpop.permute.xlu0 %1614
      %1616 = vrot.lane.b32.xlu0 %v1187, 48
      %v1617 = vpop.permute.xlu0 %1616
      %1618 = vrot.lane.b32.xlu0 %v1188, 48
      %v1619 = vpop.permute.xlu0 %1618
      %1620 = vrot.lane.b32.xlu0 %v1189, 48
      %v1621 = vpop.permute.xlu0 %1620
      %1622 = vrot.lane.b32.xlu0 %v1190, 48
      %v1623 = vpop.permute.xlu0 %1622
      %1624 = vrot.lane.b32.xlu0 %v1191, 48
      %v1625 = vpop.permute.xlu0 %1624
      %1626 = vrot.lane.b32.xlu0 %v1192, 48
      %v1627 = vpop.permute.xlu0 %1626
      %1628 = vrot.lane.b32.xlu0 %v1193, 48
      %v1629 = vpop.permute.xlu0 %1628
      %1630 = vrot.lane.b32.xlu0 %v1194, 48
      %v1631 = vpop.permute.xlu0 %1630
      %1632 = vrot.lane.b32.xlu0 %v1195, 48
      %v1633 = vpop.permute.xlu0 %1632
      %1634 = vrot.lane.b32.xlu0 %v1196, 48
      %v1635 = vpop.permute.xlu0 %1634
      %1636 = vrot.lane.b32.xlu0 %v1197, 48
      %v1637 = vpop.permute.xlu0 %1636
      %1638 = vrot.lane.b32.xlu0 %v1198, 48
      %v1639 = vpop.permute.xlu0 %1638
      %1640 = vrot.lane.b32.xlu0 %v1199, 48
      %v1641 = vpop.permute.xlu0 %1640
      %1642 = vrot.lane.b32.xlu0 %v1200, 48
      %v1643 = vpop.permute.xlu0 %1642
      %1644 = vrot.lane.b32.xlu0 %v1201, 48
      %v1645 = vpop.permute.xlu0 %1644
      %1646 = vrot.lane.b32.xlu0 %v1202, 48
      %v1647 = vpop.permute.xlu0 %1646
      %1648 = vrot.lane.b32.xlu0 %v1203, 48
      %v1649 = vpop.permute.xlu0 %1648
      %1650 = vrot.lane.b32.xlu0 %v1204, 48
      %v1651 = vpop.permute.xlu0 %1650
      %1652 = vrot.lane.b32.xlu0 %v1205, 48
      %v1653 = vpop.permute.xlu0 %1652
      %1654 = vrot.lane.b32.xlu0 %v1206, 48
      %v1655 = vpop.permute.xlu0 %1654
      %1656 = vrot.lane.b32.xlu0 %v1207, 48
      %v1657 = vpop.permute.xlu0 %1656
      %1658 = vrot.lane.b32.xlu0 %v1208, 48
      %v1659 = vpop.permute.xlu0 %1658
      %1660 = vrot.lane.b32.xlu0 %v1209, 48
      %v1661 = vpop.permute.xlu0 %1660
      %1662 = vrot.lane.b32.xlu0 %v1210, 48
      %v1663 = vpop.permute.xlu0 %1662
      %1664 = vrot.lane.b32.xlu0 %v1211, 48
      %v1665 = vpop.permute.xlu0 %1664
      %1666 = vrot.lane.b32.xlu0 %v1212, 48
      %v1667 = vpop.permute.xlu0 %1666
      %1668 = vrot.lane.b32.xlu0 %v1213, 48
      %v1669 = vpop.permute.xlu0 %1668
      %1670 = vrot.lane.b32.xlu0 %v1214, 48
      %v1671 = vpop.permute.xlu0 %1670
      %1672 = vrot.lane.b32.xlu0 %v1215, 48
      %v1673 = vpop.permute.xlu0 %1672
      %1674 = vrot.lane.b32.xlu0 %v1349, 48
      %v1675 = vpop.permute.xlu0 %1674
      %1676 = vrot.lane.b32.xlu0 %v1350, 48
      %v1677 = vpop.permute.xlu0 %1676
      %1710 = vrot.lane.b32.xlu0 %v666, 64
      %v1711 = vpop.permute.xlu0 %1710
      %1712 = vrot.lane.b32.xlu0 %v671, 64
      %v1713 = vpop.permute.xlu0 %1712
      %1714 = vrot.lane.b32.xlu0 %v676, 64
      %v1715 = vpop.permute.xlu0 %1714
      %1716 = vrot.lane.b32.xlu0 %v681, 64
      %v1717 = vpop.permute.xlu0 %1716
      %1718 = vrot.lane.b32.xlu0 %v686, 64
      %v1719 = vpop.permute.xlu0 %1718
      %1720 = vrot.lane.b32.xlu0 %v691, 64
      %v1721 = vpop.permute.xlu0 %1720
      %1722 = vrot.lane.b32.xlu0 %v696, 64
      %v1723 = vpop.permute.xlu0 %1722
      %1724 = vrot.lane.b32.xlu0 %v701, 64
      %v1725 = vpop.permute.xlu0 %1724
      %1726 = vrot.lane.b32.xlu0 %v706, 64
      %v1727 = vpop.permute.xlu0 %1726
      %1728 = vrot.lane.b32.xlu0 %v711, 64
      %v1729 = vpop.permute.xlu0 %1728
      %1730 = vrot.lane.b32.xlu0 %v716, 64
      %v1731 = vpop.permute.xlu0 %1730
      %1732 = vrot.lane.b32.xlu0 %v721, 64
      %v1733 = vpop.permute.xlu0 %1732
      %1734 = vrot.lane.b32.xlu0 %v726, 64
      %v1735 = vpop.permute.xlu0 %1734
      %1736 = vrot.lane.b32.xlu0 %v731, 64
      %v1737 = vpop.permute.xlu0 %1736
      %1738 = vrot.lane.b32.xlu0 %v736, 64
      %v1739 = vpop.permute.xlu0 %1738
      %1740 = vrot.lane.b32.xlu0 %v741, 64
      %v1741 = vpop.permute.xlu0 %1740
      %1742 = vrot.lane.b32.xlu0 %v746, 64
      %v1743 = vpop.permute.xlu0 %1742
      %1744 = vrot.lane.b32.xlu0 %v751, 64
      %v1745 = vpop.permute.xlu0 %1744
      %1746 = vrot.lane.b32.xlu0 %v756, 64
      %v1747 = vpop.permute.xlu0 %1746
      %1748 = vrot.lane.b32.xlu0 %v761, 64
      %v1749 = vpop.permute.xlu0 %1748
      %1750 = vrot.lane.b32.xlu0 %v766, 64
      %v1751 = vpop.permute.xlu0 %1750
      %1752 = vrot.lane.b32.xlu0 %v771, 64
      %v1753 = vpop.permute.xlu0 %1752
      %1754 = vrot.lane.b32.xlu0 %v776, 64
      %v1755 = vpop.permute.xlu0 %1754
      %1756 = vrot.lane.b32.xlu0 %v781, 64
      %v1757 = vpop.permute.xlu0 %1756
      %1758 = vrot.lane.b32.xlu0 %v786, 64
      %v1759 = vpop.permute.xlu0 %1758
      %1760 = vrot.lane.b32.xlu0 %v791, 64
      %v1761 = vpop.permute.xlu0 %1760
      %1762 = vrot.lane.b32.xlu0 %v796, 64
      %v1763 = vpop.permute.xlu0 %1762
      %1764 = vrot.lane.b32.xlu0 %v801, 64
      %v1765 = vpop.permute.xlu0 %1764
      %1766 = vrot.lane.b32.xlu0 %v806, 64
      %v1767 = vpop.permute.xlu0 %1766
      %1768 = vrot.lane.b32.xlu0 %v811, 64
      %v1769 = vpop.permute.xlu0 %1768
      %1770 = vrot.lane.b32.xlu0 %v816, 64
      %v1771 = vpop.permute.xlu0 %1770
      %1772 = vrot.lane.b32.xlu0 %v821, 64
      %v1773 = vpop.permute.xlu0 %1772
      %1808 = vrot.lane.b32.xlu0 %v1312, 80
      %v1809 = vpop.permute.xlu0 %1808
      %1810 = vrot.lane.b32.xlu0 %v1313, 80
      %v1811 = vpop.permute.xlu0 %1810
      %1812 = vrot.lane.b32.xlu0 %v1314, 80
      %v1813 = vpop.permute.xlu0 %1812
      %1814 = vrot.lane.b32.xlu0 %v1315, 80
      %v1815 = vpop.permute.xlu0 %1814
      %1816 = vrot.lane.b32.xlu0 %v1316, 80
      %v1817 = vpop.permute.xlu0 %1816
      %1818 = vrot.lane.b32.xlu0 %v1317, 80
      %v1819 = vpop.permute.xlu0 %1818
      %1820 = vrot.lane.b32.xlu0 %v1318, 80
      %v1821 = vpop.permute.xlu0 %1820
      %1822 = vrot.lane.b32.xlu0 %v1319, 80
      %v1823 = vpop.permute.xlu0 %1822
      %1824 = vrot.lane.b32.xlu0 %v1320, 80
      %v1825 = vpop.permute.xlu0 %1824
      %1826 = vrot.lane.b32.xlu0 %v1321, 80
      %v1827 = vpop.permute.xlu0 %1826
      %1828 = vrot.lane.b32.xlu0 %v1322, 80
      %v1829 = vpop.permute.xlu0 %1828
      %1830 = vrot.lane.b32.xlu0 %v1323, 80
      %v1831 = vpop.permute.xlu0 %1830
      %1832 = vrot.lane.b32.xlu0 %v1324, 80
      %v1833 = vpop.permute.xlu0 %1832
      %1834 = vrot.lane.b32.xlu0 %v1325, 80
      %v1835 = vpop.permute.xlu0 %1834
      %1836 = vrot.lane.b32.xlu0 %v1326, 80
      %v1837 = vpop.permute.xlu0 %1836
      %1838 = vrot.lane.b32.xlu0 %v1327, 80
      %v1839 = vpop.permute.xlu0 %1838
      %1840 = vrot.lane.b32.xlu0 %v1328, 80
      %v1841 = vpop.permute.xlu0 %1840
      %1842 = vrot.lane.b32.xlu0 %v1329, 80
      %v1843 = vpop.permute.xlu0 %1842
      %1844 = vrot.lane.b32.xlu0 %v1330, 80
      %v1845 = vpop.permute.xlu0 %1844
      %1846 = vrot.lane.b32.xlu0 %v1331, 80
      %v1847 = vpop.permute.xlu0 %1846
      %1848 = vrot.lane.b32.xlu0 %v1332, 80
      %v1849 = vpop.permute.xlu0 %1848
      %1850 = vrot.lane.b32.xlu0 %v1333, 80
      %v1851 = vpop.permute.xlu0 %1850
      %1852 = vrot.lane.b32.xlu0 %v1334, 80
      %v1853 = vpop.permute.xlu0 %1852
      %1854 = vrot.lane.b32.xlu0 %v1335, 80
      %v1855 = vpop.permute.xlu0 %1854
      %1856 = vrot.lane.b32.xlu0 %v1336, 80
      %v1857 = vpop.permute.xlu0 %1856
      %1858 = vrot.lane.b32.xlu0 %v1337, 80
      %v1859 = vpop.permute.xlu0 %1858
      %1860 = vrot.lane.b32.xlu0 %v1338, 80
      %v1861 = vpop.permute.xlu0 %1860
      %1862 = vrot.lane.b32.xlu0 %v1339, 80
      %v1863 = vpop.permute.xlu0 %1862
      %1864 = vrot.lane.b32.xlu0 %v1340, 80
      %v1865 = vpop.permute.xlu0 %1864
      %1866 = vrot.lane.b32.xlu0 %v1341, 80
      %v1867 = vpop.permute.xlu0 %1866
      %1868 = vrot.lane.b32.xlu0 %v1356, 80
      %v1869 = vpop.permute.xlu0 %1868
      %1870 = vrot.lane.b32.xlu0 %v1357, 80
      %v1871 = vpop.permute.xlu0 %1870
      %1905 = vrot.lane.b32.xlu0 %v1188, 96
      %v1906 = vpop.permute.xlu0 %1905
      %1907 = vrot.lane.b32.xlu0 %v1189, 96
      %v1908 = vpop.permute.xlu0 %1907
      %1909 = vrot.lane.b32.xlu0 %v1190, 96
      %v1910 = vpop.permute.xlu0 %1909
      %1911 = vrot.lane.b32.xlu0 %v1191, 96
      %v1912 = vpop.permute.xlu0 %1911
      %1913 = vrot.lane.b32.xlu0 %v1192, 96
      %v1914 = vpop.permute.xlu0 %1913
      %1915 = vrot.lane.b32.xlu0 %v1193, 96
      %v1916 = vpop.permute.xlu0 %1915
      %1917 = vrot.lane.b32.xlu0 %v1194, 96
      %v1918 = vpop.permute.xlu0 %1917
      %1919 = vrot.lane.b32.xlu0 %v1195, 96
      %v1920 = vpop.permute.xlu0 %1919
      %1921 = vrot.lane.b32.xlu0 %v1196, 96
      %v1922 = vpop.permute.xlu0 %1921
      %1923 = vrot.lane.b32.xlu0 %v1197, 96
      %v1924 = vpop.permute.xlu0 %1923
      %1925 = vrot.lane.b32.xlu0 %v1198, 96
      %v1926 = vpop.permute.xlu0 %1925
      %1927 = vrot.lane.b32.xlu0 %v1199, 96
      %v1928 = vpop.permute.xlu0 %1927
      %1929 = vrot.lane.b32.xlu0 %v1200, 96
      %v1930 = vpop.permute.xlu0 %1929
      %1931 = vrot.lane.b32.xlu0 %v1201, 96
      %v1932 = vpop.permute.xlu0 %1931
      %1933 = vrot.lane.b32.xlu0 %v1202, 96
      %v1934 = vpop.permute.xlu0 %1933
      %1935 = vrot.lane.b32.xlu0 %v1203, 96
      %v1936 = vpop.permute.xlu0 %1935
      %1937 = vrot.lane.b32.xlu0 %v1204, 96
      %v1938 = vpop.permute.xlu0 %1937
      %1939 = vrot.lane.b32.xlu0 %v1205, 96
      %v1940 = vpop.permute.xlu0 %1939
      %1941 = vrot.lane.b32.xlu0 %v1206, 96
      %v1942 = vpop.permute.xlu0 %1941
      %1943 = vrot.lane.b32.xlu0 %v1207, 96
      %v1944 = vpop.permute.xlu0 %1943
      %1945 = vrot.lane.b32.xlu0 %v1208, 96
      %v1946 = vpop.permute.xlu0 %1945
      %1947 = vrot.lane.b32.xlu0 %v1209, 96
      %v1948 = vpop.permute.xlu0 %1947
      %1949 = vrot.lane.b32.xlu0 %v1210, 96
      %v1950 = vpop.permute.xlu0 %1949
      %1951 = vrot.lane.b32.xlu0 %v1211, 96
      %v1952 = vpop.permute.xlu0 %1951
      %1953 = vrot.lane.b32.xlu0 %v1212, 96
      %v1954 = vpop.permute.xlu0 %1953
      %1955 = vrot.lane.b32.xlu0 %v1213, 96
      %v1956 = vpop.permute.xlu0 %1955
      %1957 = vrot.lane.b32.xlu0 %v1214, 96
      %v1958 = vpop.permute.xlu0 %1957
      %1959 = vrot.lane.b32.xlu0 %v1215, 96
      %v1960 = vpop.permute.xlu0 %1959
      %1961 = vrot.lane.b32.xlu0 %v1349, 96
      %v1962 = vpop.permute.xlu0 %1961
      %1963 = vrot.lane.b32.xlu0 %v1350, 96
      %v1964 = vpop.permute.xlu0 %1963
      %1965 = vrot.lane.b32.xlu0 %v1360, 96
      %v1966 = vpop.permute.xlu0 %1965
      %1967 = vrot.lane.b32.xlu0 0.0, 96
      %v1968 = vpop.permute.xlu0 %1967
      %2001 = vrot.lane.b32.xlu0 %v676, 112
      %v2002 = vpop.permute.xlu0 %2001
      %2003 = vrot.lane.b32.xlu0 %v681, 112
      %v2004 = vpop.permute.xlu0 %2003
      %2005 = vrot.lane.b32.xlu0 %v686, 112
      %v2006 = vpop.permute.xlu0 %2005
      %2007 = vrot.lane.b32.xlu0 %v691, 112
      %v2008 = vpop.permute.xlu0 %2007
      %2009 = vrot.lane.b32.xlu0 %v696, 112
      %v2010 = vpop.permute.xlu0 %2009
      %2011 = vrot.lane.b32.xlu0 %v701, 112
      %v2012 = vpop.permute.xlu0 %2011
      %2013 = vrot.lane.b32.xlu0 %v706, 112
      %v2014 = vpop.permute.xlu0 %2013
      %2015 = vrot.lane.b32.xlu0 %v711, 112
      %v2016 = vpop.permute.xlu0 %2015
      %2017 = vrot.lane.b32.xlu0 %v716, 112
      %v2018 = vpop.permute.xlu0 %2017
      %2019 = vrot.lane.b32.xlu0 %v721, 112
      %v2020 = vpop.permute.xlu0 %2019
      %2021 = vrot.lane.b32.xlu0 %v726, 112
      %v2022 = vpop.permute.xlu0 %2021
      %2023 = vrot.lane.b32.xlu0 %v731, 112
      %v2024 = vpop.permute.xlu0 %2023
      %2025 = vrot.lane.b32.xlu0 %v736, 112
      %v2026 = vpop.permute.xlu0 %2025
      %2027 = vrot.lane.b32.xlu0 %v741, 112
      %v2028 = vpop.permute.xlu0 %2027
      %2029 = vrot.lane.b32.xlu0 %v746, 112
      %v2030 = vpop.permute.xlu0 %2029
      %2031 = vrot.lane.b32.xlu0 %v751, 112
      %v2032 = vpop.permute.xlu0 %2031
      %2033 = vrot.lane.b32.xlu0 %v756, 112
      %v2034 = vpop.permute.xlu0 %2033
      %2035 = vrot.lane.b32.xlu0 %v761, 112
      %v2036 = vpop.permute.xlu0 %2035
      %2037 = vrot.lane.b32.xlu0 %v766, 112
      %v2038 = vpop.permute.xlu0 %2037
      %2039 = vrot.lane.b32.xlu0 %v771, 112
      %v2040 = vpop.permute.xlu0 %2039
      %2041 = vrot.lane.b32.xlu0 %v776, 112
      %v2042 = vpop.permute.xlu0 %2041
      %2043 = vrot.lane.b32.xlu0 %v781, 112
      %v2044 = vpop.permute.xlu0 %2043
      %2045 = vrot.lane.b32.xlu0 %v786, 112
      %v2046 = vpop.permute.xlu0 %2045
      %2047 = vrot.lane.b32.xlu0 %v791, 112
      %v2048 = vpop.permute.xlu0 %2047
      %2049 = vrot.lane.b32.xlu0 %v796, 112
      %v2050 = vpop.permute.xlu0 %2049
      %2051 = vrot.lane.b32.xlu0 %v801, 112
      %v2052 = vpop.permute.xlu0 %2051
      %2053 = vrot.lane.b32.xlu0 %v806, 112
      %v2054 = vpop.permute.xlu0 %2053
      %2055 = vrot.lane.b32.xlu0 %v811, 112
      %v2056 = vpop.permute.xlu0 %2055
      %2057 = vrot.lane.b32.xlu0 %v816, 112
      %v2058 = vpop.permute.xlu0 %2057
      %2059 = vrot.lane.b32.xlu0 %v821, 112
      %v2060 = vpop.permute.xlu0 %2059
      %2061 = vrot.lane.b32.xlu0 0.0, 112
      %v2062 = vpop.permute.xlu0 %2061
      %v2094 = vsel %vm848, 0.0, %v1363
      %v2095 = vsel %vm848, %v1186, %v1365
      %v2096 = vsel %vm848, %v1187, %v1367
      %v2097 = vsel %vm848, %v1188, %v1369
      %v2098 = vsel %vm848, %v1189, %v1371
      %v2099 = vsel %vm848, %v1190, %v1373
      %v2100 = vsel %vm848, %v1191, %v1375
      %v2101 = vsel %vm848, %v1192, %v1377
      %v2102 = vsel %vm848, %v1193, %v1379
      %v2103 = vsel %vm848, %v1194, %v1381
      %v2104 = vsel %vm848, %v1195, %v1383
      %v2105 = vsel %vm848, %v1196, %v1385
      %v2106 = vsel %vm848, %v1197, %v1387
      %v2107 = vsel %vm848, %v1198, %v1389
      %v2108 = vsel %vm848, %v1199, %v1391
      %v2109 = vsel %vm848, %v1200, %v1393
      %v2110 = vsel %vm848, %v1201, %v1395
      %v2111 = vsel %vm848, %v1202, %v1397
      %v2112 = vsel %vm848, %v1203, %v1399
      %v2113 = vsel %vm848, %v1204, %v1401
      %v2114 = vsel %vm848, %v1205, %v1403
      %v2115 = vsel %vm848, %v1206, %v1405
      %v2116 = vsel %vm848, %v1207, %v1407
      %v2117 = vsel %vm848, %v1208, %v1409
      %v2118 = vsel %vm848, %v1209, %v1411
      %v2119 = vsel %vm848, %v1210, %v1413
      %v2120 = vsel %vm848, %v1211, %v1415
      %v2121 = vsel %vm848, %v1212, %v1417
      %v2122 = vsel %vm848, %v1213, %v1419
      %v2123 = vsel %vm848, %v1214, %v1421
      %v2124 = vsel %vm848, %v1215, %v1423
      %vm2125 = vcmask 261120
      %v2126 = vsel %vm2125, %v2094, %v1487
      %v2127 = vsel %vm2125, %v2094, %v1489
      %v2128 = vsel %vm2125, %v2095, %v1491
      %v2129 = vsel %vm2125, %v2096, %v1493
      %v2130 = vsel %vm2125, %v2097, %v1495
      %v2131 = vsel %vm2125, %v2098, %v1497
      %v2132 = vsel %vm2125, %v2099, %v1499
      %v2133 = vsel %vm2125, %v2100, %v1501
      %v2134 = vsel %vm2125, %v2101, %v1503
      %v2135 = vsel %vm2125, %v2102, %v1505
      %v2136 = vsel %vm2125, %v2103, %v1507
      %v2137 = vsel %vm2125, %v2104, %v1509
      %v2138 = vsel %vm2125, %v2105, %v1511
      %v2139 = vsel %vm2125, %v2106, %v1513
      %v2140 = vsel %vm2125, %v2107, %v1515
      %v2141 = vsel %vm2125, %v2108, %v1517
      %v2142 = vsel %vm2125, %v2109, %v1519
      %v2143 = vsel %vm2125, %v2110, %v1521
      %v2144 = vsel %vm2125, %v2111, %v1523
      %v2145 = vsel %vm2125, %v2112, %v1525
      %v2146 = vsel %vm2125, %v2113, %v1527
      %v2147 = vsel %vm2125, %v2114, %v1529
      %v2148 = vsel %vm2125, %v2115, %v1531
      %v2149 = vsel %vm2125, %v2116, %v1533
      %v2150 = vsel %vm2125, %v2117, %v1535
      %v2151 = vsel %vm2125, %v2118, %v1537
      %v2152 = vsel %vm2125, %v2119, %v1539
      %v2153 = vsel %vm2125, %v2120, %v1541
      %v2154 = vsel %vm2125, %v2121, %v1543
      %v2155 = vsel %vm2125, %v2122, %v1545
      %v2156 = vsel %vm2125, %v2123, %v1547
      %v2157 = vsel %vm2125, %v2124, %v1549
      %vm2158 = vcmask 392192
      %v2159 = vsel %vm2158, %v2126, %v1615
      %v2160 = vsel %vm2158, %v2127, %v1617
      %v2161 = vsel %vm2158, %v2128, %v1619
      %v2162 = vsel %vm2158, %v2129, %v1621
      %v2163 = vsel %vm2158, %v2130, %v1623
      %v2164 = vsel %vm2158, %v2131, %v1625
      %v2165 = vsel %vm2158, %v2132, %v1627
      %v2166 = vsel %vm2158, %v2133, %v1629
      %v2167 = vsel %vm2158, %v2134, %v1631
      %v2168 = vsel %vm2158, %v2135, %v1633
      %v2169 = vsel %vm2158, %v2136, %v1635
      %v2170 = vsel %vm2158, %v2137, %v1637
      %v2171 = vsel %vm2158, %v2138, %v1639
      %v2172 = vsel %vm2158, %v2139, %v1641
      %v2173 = vsel %vm2158, %v2140, %v1643
      %v2174 = vsel %vm2158, %v2141, %v1645
      %v2175 = vsel %vm2158, %v2142, %v1647
      %v2176 = vsel %vm2158, %v2143, %v1649
      %v2177 = vsel %vm2158, %v2144, %v1651
      %v2178 = vsel %vm2158, %v2145, %v1653
      %v2179 = vsel %vm2158, %v2146, %v1655
      %v2180 = vsel %vm2158, %v2147, %v1657
      %v2181 = vsel %vm2158, %v2148, %v1659
      %v2182 = vsel %vm2158, %v2149, %v1661
      %v2183 = vsel %vm2158, %v2150, %v1663
      %v2184 = vsel %vm2158, %v2151, %v1665
      %v2185 = vsel %vm2158, %v2152, %v1667
      %v2186 = vsel %vm2158, %v2153, %v1669
      %v2187 = vsel %vm2158, %v2154, %v1671
      %v2188 = vsel %vm2158, %v2155, %v1673
      %v2189 = vsel %vm2158, %v2156, %v1675
      %v2190 = vsel %vm2158, %v2157, %v1677
      %v2191 = vsel %vm502, %v2159, %v1711
      %v2192 = vsel %vm502, %v2160, %v1713
      %v2193 = vsel %vm502, %v2161, %v1715
      %v2194 = vsel %vm502, %v2162, %v1717
      %v2195 = vsel %vm502, %v2163, %v1719
      %v2196 = vsel %vm502, %v2164, %v1721
      %v2197 = vsel %vm502, %v2165, %v1723
      %v2198 = vsel %vm502, %v2166, %v1725
      %v2199 = vsel %vm502, %v2167, %v1727
      %v2200 = vsel %vm502, %v2168, %v1729
      %v2201 = vsel %vm502, %v2169, %v1731
      %v2202 = vsel %vm502, %v2170, %v1733
      %v2203 = vsel %vm502, %v2171, %v1735
      %v2204 = vsel %vm502, %v2172, %v1737
      %v2205 = vsel %vm502, %v2173, %v1739
      %v2206 = vsel %vm502, %v2174, %v1741
      %v2207 = vsel %vm502, %v2175, %v1743
      %v2208 = vsel %vm502, %v2176, %v1745
      %v2209 = vsel %vm502, %v2177, %v1747
      %v2210 = vsel %vm502, %v2178, %v1749
      %v2211 = vsel %vm502, %v2179, %v1751
      %v2212 = vsel %vm502, %v2180, %v1753
      %v2213 = vsel %vm502, %v2181, %v1755
      %v2214 = vsel %vm502, %v2182, %v1757
      %v2215 = vsel %vm502, %v2183, %v1759
      %v2216 = vsel %vm502, %v2184, %v1761
      %v2217 = vsel %vm502, %v2185, %v1763
      %v2218 = vsel %vm502, %v2186, %v1765
      %v2219 = vsel %vm502, %v2187, %v1767
      %v2220 = vsel %vm502, %v2188, %v1769
      %v2221 = vsel %vm502, %v2189, %v1771
      %v2222 = vsel %vm502, %v2190, %v1773
      %vm2223 = vcmask 654336
      %v2224 = vsel %vm2223, %v2191, %v1809
      %v2225 = vsel %vm2223, %v2192, %v1811
      %v2226 = vsel %vm2223, %v2193, %v1813
      %v2227 = vsel %vm2223, %v2194, %v1815
      %v2228 = vsel %vm2223, %v2195, %v1817
      %v2229 = vsel %vm2223, %v2196, %v1819
      %v2230 = vsel %vm2223, %v2197, %v1821
      %v2231 = vsel %vm2223, %v2198, %v1823
      %v2232 = vsel %vm2223, %v2199, %v1825
      %v2233 = vsel %vm2223, %v2200, %v1827
      %v2234 = vsel %vm2223, %v2201, %v1829
      %v2235 = vsel %vm2223, %v2202, %v1831
      %v2236 = vsel %vm2223, %v2203, %v1833
      %v2237 = vsel %vm2223, %v2204, %v1835
      %v2238 = vsel %vm2223, %v2205, %v1837
      %v2239 = vsel %vm2223, %v2206, %v1839
      %v2240 = vsel %vm2223, %v2207, %v1841
      %v2241 = vsel %vm2223, %v2208, %v1843
      %v2242 = vsel %vm2223, %v2209, %v1845
      %v2243 = vsel %vm2223, %v2210, %v1847
      %v2244 = vsel %vm2223, %v2211, %v1849
      %v2245 = vsel %vm2223, %v2212, %v1851
      %v2246 = vsel %vm2223, %v2213, %v1853
      %v2247 = vsel %vm2223, %v2214, %v1855
      %v2248 = vsel %vm2223, %v2215, %v1857
      %v2249 = vsel %vm2223, %v2216, %v1859
      %v2250 = vsel %vm2223, %v2217, %v1861
      %v2251 = vsel %vm2223, %v2218, %v1863
      %v2252 = vsel %vm2223, %v2219, %v1865
      %v2253 = vsel %vm2223, %v2220, %v1867
      %v2254 = vsel %vm2223, %v2221, %v1869
      %v2255 = vsel %vm2223, %v2222, %v1871
      %vm2256 = vcmask 785408
      %v2257 = vsel %vm2256, %v2224, %v1906
      %v2258 = vsel %vm2256, %v2225, %v1908
      %v2259 = vsel %vm2256, %v2226, %v1910
      %v2260 = vsel %vm2256, %v2227, %v1912
      %v2261 = vsel %vm2256, %v2228, %v1914
      %v2262 = vsel %vm2256, %v2229, %v1916
      %v2263 = vsel %vm2256, %v2230, %v1918
      %v2264 = vsel %vm2256, %v2231, %v1920
      %v2265 = vsel %vm2256, %v2232, %v1922
      %v2266 = vsel %vm2256, %v2233, %v1924
      %v2267 = vsel %vm2256, %v2234, %v1926
      %v2268 = vsel %vm2256, %v2235, %v1928
      %v2269 = vsel %vm2256, %v2236, %v1930
      %v2270 = vsel %vm2256, %v2237, %v1932
      %v2271 = vsel %vm2256, %v2238, %v1934
      %v2272 = vsel %vm2256, %v2239, %v1936
      %v2273 = vsel %vm2256, %v2240, %v1938
      %v2274 = vsel %vm2256, %v2241, %v1940
      %v2275 = vsel %vm2256, %v2242, %v1942
      %v2276 = vsel %vm2256, %v2243, %v1944
      %v2277 = vsel %vm2256, %v2244, %v1946
      %v2278 = vsel %vm2256, %v2245, %v1948
      %v2279 = vsel %vm2256, %v2246, %v1950
      %v2280 = vsel %vm2256, %v2247, %v1952
      %v2281 = vsel %vm2256, %v2248, %v1954
      %v2282 = vsel %vm2256, %v2249, %v1956
      %v2283 = vsel %vm2256, %v2250, %v1958
      %v2284 = vsel %vm2256, %v2251, %v1960
      %v2285 = vsel %vm2256, %v2252, %v1962
      %v2286 = vsel %vm2256, %v2253, %v1964
      %v2287 = vsel %vm2256, %v2254, %v1966
      %v2288 = vsel %vm2256, %v2255, %v1968
      %vm2289 = vcmask 916480
      %v2290 = vsel %vm2289, %v2257, %v2002
      %v2291 = vsel %vm2289, %v2258, %v2004
      %v2292 = vsel %vm2289, %v2259, %v2006
      %v2293 = vsel %vm2289, %v2260, %v2008
      %v2294 = vsel %vm2289, %v2261, %v2010
      %v2295 = vsel %vm2289, %v2262, %v2012
      %v2296 = vsel %vm2289, %v2263, %v2014
      %v2297 = vsel %vm2289, %v2264, %v2016
      %v2298 = vsel %vm2289, %v2265, %v2018
      %v2299 = vsel %vm2289, %v2266, %v2020
      %v2300 = vsel %vm2289, %v2267, %v2022
      %v2301 = vsel %vm2289, %v2268, %v2024
      %v2302 = vsel %vm2289, %v2269, %v2026
      %v2303 = vsel %vm2289, %v2270, %v2028
      %v2304 = vsel %vm2289, %v2271, %v2030
      %v2305 = vsel %vm2289, %v2272, %v2032
      %v2306 = vsel %vm2289, %v2273, %v2034
      %v2307 = vsel %vm2289, %v2274, %v2036
      %v2308 = vsel %vm2289, %v2275, %v2038
      %v2309 = vsel %vm2289, %v2276, %v2040
      %v2310 = vsel %vm2289, %v2277, %v2042
      %v2311 = vsel %vm2289, %v2278, %v2044
      %v2312 = vsel %vm2289, %v2279, %v2046
      %v2313 = vsel %vm2289, %v2280, %v2048
      %v2314 = vsel %vm2289, %v2281, %v2050
      %v2315 = vsel %vm2289, %v2282, %v2052
      %v2316 = vsel %vm2289, %v2283, %v2054
      %v2317 = vsel %vm2289, %v2284, %v2056
      %v2318 = vsel %vm2289, %v2285, %v2058
      %v2319 = vsel %vm2289, %v2286, %v2060
      %v2320 = vsel %vm2289, %v2287, %v2062
      %v2321 = vsel %vm2289, %v2288, %v2062
      %v2322 = vpack.c.bf16 %v2291, %v2290
      %v2323 = vpack.c.bf16 %v1315, %v1314
      %v2324 = vpack.c.bf16 %v2293, %v2292
      %v2325 = vpack.c.bf16 %v1317, %v1316
      %v2326 = vpack.c.bf16 %v2295, %v2294
      %v2327 = vpack.c.bf16 %v1319, %v1318
      %v2328 = vpack.c.bf16 %v2297, %v2296
      %v2329 = vpack.c.bf16 %v1321, %v1320
      %v2330 = vpack.c.bf16 %v2299, %v2298
      %v2331 = vpack.c.bf16 %v1323, %v1322
      %v2332 = vpack.c.bf16 %v2301, %v2300
      %v2333 = vpack.c.bf16 %v1325, %v1324
      %v2334 = vpack.c.bf16 %v2303, %v2302
      %v2335 = vpack.c.bf16 %v1327, %v1326
      %v2336 = vpack.c.bf16 %v2305, %v2304
      %v2337 = vpack.c.bf16 %v1329, %v1328
      %v2338 = vpack.c.bf16 %v2307, %v2306
      %v2339 = vpack.c.bf16 %v1331, %v1330
      %v2340 = vpack.c.bf16 %v2309, %v2308
      %v2341 = vpack.c.bf16 %v1333, %v1332
      %v2342 = vpack.c.bf16 %v2311, %v2310
      %v2343 = vpack.c.bf16 %v1335, %v1334
      %v2344 = vpack.c.bf16 %v2313, %v2312
      %v2345 = vpack.c.bf16 %v1337, %v1336
      %v2346 = vpack.c.bf16 %v2315, %v2314
      %v2347 = vpack.c.bf16 %v1339, %v1338
      %v2348 = vpack.c.bf16 %v2317, %v2316
      %v2349 = vpack.c.bf16 %v1341, %v1340
      %v2350 = vpack.c.bf16 %v2319, %v2318
      %v2351 = vpack.c.bf16 %v1357, %v1356
      %v2352 = vpack.c.bf16 %v2321, %v2320
      %v2353 = vpack.c.bf16 0.0, 0.0
      %v2354 = vld [vmem:[%s4] sm:$0xf]
      %v2355 = vld [vmem:[%s4 + $0x4] sm:$0xf]
      %v2356 = vld [vmem:[%s4 + $0x8] sm:$0xf]
      %v2357 = vld [vmem:[%s4 + $0xc] sm:$0xf]
      %v2358 = vld [vmem:[%s4 + $0x10] sm:$0xf]
      %v2359 = vld [vmem:[%s4 + $0x14] sm:$0xf]
      %v2360 = vld [vmem:[%s4 + $0x18] sm:$0xf]
      %v2361 = vld [vmem:[%s4 + $0x1c] sm:$0xf]
      %v2362 = vld [vmem:[%s4 + $0x20] sm:$0xf]
      %v2363 = vld [vmem:[%s4 + $0x24] sm:$0xf]
      %v2364 = vld [vmem:[%s4 + $0x28] sm:$0xf]
      %v2365 = vld [vmem:[%s4 + $0x2c] sm:$0xf]
      %v2366 = vld [vmem:[%s4 + $0x30] sm:$0xf]
      %v2367 = vld [vmem:[%s4 + $0x34] sm:$0xf]
      %v2368 = vld [vmem:[%s4 + $0x38] sm:$0xf]
      %v2369 = vld [vmem:[%s4 + $0x3c] sm:$0xf]
      %v2370 = vld [vmem:[%s4 + $0x40] sm:$0xf]
      %v2371 = vld [vmem:[%s4 + $0x44] sm:$0xf]
      %v2372 = vld [vmem:[%s5] sm:$0x1]
      %v2374 = vlaneseq
      %v2375 = vshrl.u32 %v2374, 7
      %v2376 = vsub.s32 0, %v2375
      %v2377 = vrot.slane %v2372, %v2376
      %v2397 = vunpack.c.l.b16 %v2354
      %v2398 = vunpack.c.l.b16 %v2355
      %v2399 = vunpack.c.l.b16 %v2356
      %v2400 = vunpack.c.l.b16 %v2357
      %v2401 = vunpack.c.l.b16 %v2358
      %v2402 = vunpack.c.l.b16 %v2359
      %v2403 = vunpack.c.l.b16 %v2360
      %v2404 = vunpack.c.l.b16 %v2361
      %v2405 = vunpack.c.l.b16 %v2362
      %v2406 = vunpack.c.l.b16 %v2363
      %v2407 = vunpack.c.l.b16 %v2364
      %v2408 = vunpack.c.l.b16 %v2365
      %v2409 = vunpack.c.l.b16 %v2366
      %v2410 = vunpack.c.l.b16 %v2367
      %v2411 = vunpack.c.l.b16 %v2368
      %v2412 = vunpack.c.l.b16 %v2369
      %v2413 = vunpack.c.l.b16 %v2370
      %v2414 = vunpack.c.l.b16 %v2371
      %v2415 = vpack.c.b16 %v2398, %v2397
      %v2416 = vpack.c.b16 %v2400, %v2399
      %v2417 = vpack.c.b16 %v2402, %v2401
      %v2418 = vpack.c.b16 %v2404, %v2403
      %v2419 = vpack.c.b16 %v2406, %v2405
      %v2420 = vpack.c.b16 %v2408, %v2407
      %v2421 = vpack.c.b16 %v2410, %v2409
      %v2422 = vpack.c.b16 %v2412, %v2411
      %v2423 = vpack.c.b16 %v2414, %v2413
      %v2434 = vsel %vm848, %v2323, 0
      %v2437 = vsel %vm848, %v2325, 0
      %v2440 = vsel %vm848, %v2327, 0
      %v2443 = vsel %vm848, %v2329, 0
      %v2446 = vsel %vm848, %v2331, 0
      %v2449 = vsel %vm848, %v2333, 0
      %v2452 = vsel %vm848, %v2335, 0
      %v2455 = vsel %vm848, %v2337, 0
      %v2458 = vsel %vm848, %v2339, 0
      %v2461 = vsel %vm848, %v2341, 0
      %v2464 = vsel %vm848, %v2343, 0
      %v2467 = vsel %vm848, %v2345, 0
      %v2470 = vsel %vm848, %v2347, 0
      %v2473 = vsel %vm848, %v2349, 0
      %v2476 = vsel %vm848, %v2351, 0
      %v2479 = vsel %vm848, %v2353, 0
      %2481 = vmatprep.subr.bf16.mxu0 0
      %2482 = vmatpush1.bf16.msra.mxu0 %v2422
      %2483 = vmatprep.subr.bf16.mxu0 0
      %2484 = vmatpush1.bf16.msra.mxu0 %v2421
      %2485 = vmatprep.subr.bf16.mxu0 0
      %2486 = vmatpush1.bf16.msra.mxu0 %v2420
      %2487 = vmatprep.subr.bf16.mxu0 0
      %2488 = vmatpush1.bf16.msra.mxu0 %v2419
      %2489 = vmatprep.subr.bf16.mxu0 0
      %2490 = vmatpush1.bf16.msra.mxu0 %v2418
      %2491 = vmatprep.subr.bf16.mxu0 0
      %2492 = vmatpush1.bf16.msra.mxu0 %v2417
      %2493 = vmatprep.subr.bf16.mxu0 0
      %2494 = vmatpush1.bf16.msra.mxu0 %v2416
      %2495 = vmatprep.subr.bf16.mxu0 0
      %2496 = vmatpush1.bf16.msra.mxu0 %v2415
      %2497 = vmatprep.subr.bf16.mxu0 0
      %2498 = vmatpush2.bf16.msra.mxu0 0
      %2499 = vmatprep.subr.bf16.mxu0 0
      %2500 = vmatpush2.bf16.msra.mxu0 0
      %2501 = vmatprep.subr.bf16.mxu0 0
      %2502 = vmatpush2.bf16.msra.mxu0 0
      %2503 = vmatprep.subr.bf16.mxu0 0
      %2504 = vmatpush2.bf16.msra.mxu0 0
      %2505 = vmatprep.subr.bf16.mxu0 0
      %2506 = vmatpush2.bf16.msra.mxu0 0
      %2507 = vmatprep.subr.bf16.mxu0 0
      %2508 = vmatpush2.bf16.msra.mxu0 0
      %2509 = vmatprep.subr.bf16.mxu0 0
      %2510 = vmatpush2.bf16.msra.mxu0 0
      %2511 = vmatprep.subr.bf16.mxu0 0
      %2512 = vmatpush2.bf16.msra.mxu0 %v2423
      %2513 = vmatprep.mubr.bf16.mxu0 %v2434
      %2514 = vmatmul.mubr.bf16.gmra.mxu0 %v2322
      %v2515 = vpop.f32.mrf.mxu0
      %v2516 = vadd.f32 %v2377, %v2515
      %v2517 = vpop.f32.mrf.mxu0
      %v2518 = vpop.f32.mrf.mxu0
      %v2519 = vadd.f32 %v2377, %v2518
      %v2520 = vpop.f32.mrf.mxu0
      %2521 = vmatprep.mubr.bf16.mxu0 %v2437
      %2522 = vmatmul.mubr.bf16.gmra.mxu0 %v2324
      %v2523 = vpop.f32.mrf.mxu0
      %v2524 = vadd.f32 %v2377, %v2523
      %v2525 = vpop.f32.mrf.mxu0
      %v2526 = vpop.f32.mrf.mxu0
      %v2527 = vadd.f32 %v2377, %v2526
      %v2528 = vpop.f32.mrf.mxu0
      %2529 = vmatprep.mubr.bf16.mxu0 %v2440
      %2530 = vmatmul.mubr.bf16.gmra.mxu0 %v2326
      %v2531 = vpop.f32.mrf.mxu0
      %v2532 = vadd.f32 %v2377, %v2531
      %v2533 = vpop.f32.mrf.mxu0
      %v2534 = vpop.f32.mrf.mxu0
      %v2535 = vadd.f32 %v2377, %v2534
      %v2536 = vpop.f32.mrf.mxu0
      %2537 = vmatprep.mubr.bf16.mxu0 %v2443
      %2538 = vmatmul.mubr.bf16.gmra.mxu0 %v2328
      %v2539 = vpop.f32.mrf.mxu0
      %v2540 = vadd.f32 %v2377, %v2539
      %v2541 = vpop.f32.mrf.mxu0
      %v2542 = vpop.f32.mrf.mxu0
      %v2543 = vadd.f32 %v2377, %v2542
      %v2544 = vpop.f32.mrf.mxu0
      %2545 = vmatprep.mubr.bf16.mxu0 %v2446
      %2546 = vmatmul.mubr.bf16.gmra.mxu0 %v2330
      %v2547 = vpop.f32.mrf.mxu0
      %v2548 = vadd.f32 %v2377, %v2547
      %v2549 = vpop.f32.mrf.mxu0
      %v2550 = vpop.f32.mrf.mxu0
      %v2551 = vadd.f32 %v2377, %v2550
      %v2552 = vpop.f32.mrf.mxu0
      %2553 = vmatprep.mubr.bf16.mxu0 %v2449
      %2554 = vmatmul.mubr.bf16.gmra.mxu0 %v2332
      %v2555 = vpop.f32.mrf.mxu0
      %v2556 = vadd.f32 %v2377, %v2555
      %v2557 = vpop.f32.mrf.mxu0
      %v2558 = vpop.f32.mrf.mxu0
      %v2559 = vadd.f32 %v2377, %v2558
      %v2560 = vpop.f32.mrf.mxu0
      %2561 = vmatprep.mubr.bf16.mxu0 %v2452
      %2562 = vmatmul.mubr.bf16.gmra.mxu0 %v2334
      %v2563 = vpop.f32.mrf.mxu0
      %v2564 = vadd.f32 %v2377, %v2563
      %v2565 = vpop.f32.mrf.mxu0
      %v2566 = vpop.f32.mrf.mxu0
      %v2567 = vadd.f32 %v2377, %v2566
      %v2568 = vpop.f32.mrf.mxu0
      %2569 = vmatprep.mubr.bf16.mxu0 %v2455
      %2570 = vmatmul.mubr.bf16.gmra.mxu0 %v2336
      %v2571 = vpop.f32.mrf.mxu0
      %v2572 = vadd.f32 %v2377, %v2571
      %v2573 = vpop.f32.mrf.mxu0
      %v2574 = vpop.f32.mrf.mxu0
      %v2575 = vadd.f32 %v2377, %v2574
      %v2576 = vpop.f32.mrf.mxu0
      %2577 = vmatprep.mubr.bf16.mxu0 %v2458
      %2578 = vmatmul.mubr.bf16.gmra.mxu0 %v2338
      %v2579 = vpop.f32.mrf.mxu0
      %v2580 = vadd.f32 %v2377, %v2579
      %v2581 = vpop.f32.mrf.mxu0
      %v2582 = vpop.f32.mrf.mxu0
      %v2583 = vadd.f32 %v2377, %v2582
      %v2584 = vpop.f32.mrf.mxu0
      %2585 = vmatprep.mubr.bf16.mxu0 %v2461
      %2586 = vmatmul.mubr.bf16.gmra.mxu0 %v2340
      %v2587 = vpop.f32.mrf.mxu0
      %v2588 = vadd.f32 %v2377, %v2587
      %v2589 = vpop.f32.mrf.mxu0
      %v2590 = vpop.f32.mrf.mxu0
      %v2591 = vadd.f32 %v2377, %v2590
      %v2592 = vpop.f32.mrf.mxu0
      %2593 = vmatprep.mubr.bf16.mxu0 %v2464
      %2594 = vmatmul.mubr.bf16.gmra.mxu0 %v2342
      %v2595 = vpop.f32.mrf.mxu0
      %v2596 = vadd.f32 %v2377, %v2595
      %v2597 = vpop.f32.mrf.mxu0
      %v2598 = vpop.f32.mrf.mxu0
      %v2599 = vadd.f32 %v2377, %v2598
      %v2600 = vpop.f32.mrf.mxu0
      %2601 = vmatprep.mubr.bf16.mxu0 %v2467
      %2602 = vmatmul.mubr.bf16.gmra.mxu0 %v2344
      %v2603 = vpop.f32.mrf.mxu0
      %v2604 = vadd.f32 %v2377, %v2603
      %v2605 = vpop.f32.mrf.mxu0
      %v2606 = vpop.f32.mrf.mxu0
      %v2607 = vadd.f32 %v2377, %v2606
      %v2608 = vpop.f32.mrf.mxu0
      %2609 = vmatprep.mubr.bf16.mxu0 %v2470
      %2610 = vmatmul.mubr.bf16.gmra.mxu0 %v2346
      %v2611 = vpop.f32.mrf.mxu0
      %v2612 = vadd.f32 %v2377, %v2611
      %v2613 = vpop.f32.mrf.mxu0
      %v2614 = vpop.f32.mrf.mxu0
      %v2615 = vadd.f32 %v2377, %v2614
      %v2616 = vpop.f32.mrf.mxu0
      %2617 = vmatprep.mubr.bf16.mxu0 %v2473
      %2618 = vmatmul.mubr.bf16.gmra.mxu0 %v2348
      %v2619 = vpop.f32.mrf.mxu0
      %v2620 = vadd.f32 %v2377, %v2619
      %v2621 = vpop.f32.mrf.mxu0
      %v2622 = vpop.f32.mrf.mxu0
      %v2623 = vadd.f32 %v2377, %v2622
      %v2624 = vpop.f32.mrf.mxu0
      %2625 = vmatprep.mubr.bf16.mxu0 %v2476
      %2626 = vmatmul.mubr.bf16.gmra.mxu0 %v2350
      %v2627 = vpop.f32.mrf.mxu0
      %v2628 = vadd.f32 %v2377, %v2627
      %v2629 = vpop.f32.mrf.mxu0
      %v2630 = vpop.f32.mrf.mxu0
      %v2631 = vadd.f32 %v2377, %v2630
      %v2632 = vpop.f32.mrf.mxu0
      %2633 = vmatprep.mubr.bf16.mxu0 %v2479
      %2634 = vmatmul.mubr.bf16.gmra.mxu0 %v2352
      %v2635 = vpop.f32.mrf.mxu0
      %v2636 = vadd.f32 %v2377, %v2635
      %v2637 = vpop.f32.mrf.mxu0
      %v2638 = vpop.f32.mrf.mxu0
      %v2639 = vadd.f32 %v2377, %v2638
      %v2640 = vpop.f32.mrf.mxu0
      %2641 = vdwg.mxu0
      %v2642 = vmax.f32 %v2516, 0.0
      %v2643 = vmax.f32 %v2519, 0.0
      %v2644 = vmax.f32 %v2524, 0.0
      %v2645 = vmax.f32 %v2527, 0.0
      %v2646 = vmax.f32 %v2532, 0.0
      %v2647 = vmax.f32 %v2535, 0.0
      %v2648 = vmax.f32 %v2540, 0.0
      %v2649 = vmax.f32 %v2543, 0.0
      %v2650 = vmax.f32 %v2548, 0.0
      %v2651 = vmax.f32 %v2551, 0.0
      %v2652 = vmax.f32 %v2556, 0.0
      %v2653 = vmax.f32 %v2559, 0.0
      %v2654 = vmax.f32 %v2564, 0.0
      %v2655 = vmax.f32 %v2567, 0.0
      %v2656 = vmax.f32 %v2572, 0.0
      %v2657 = vmax.f32 %v2575, 0.0
      %v2658 = vmax.f32 %v2580, 0.0
      %v2659 = vmax.f32 %v2583, 0.0
      %v2660 = vmax.f32 %v2588, 0.0
      %v2661 = vmax.f32 %v2591, 0.0
      %v2662 = vmax.f32 %v2596, 0.0
      %v2663 = vmax.f32 %v2599, 0.0
      %v2664 = vmax.f32 %v2604, 0.0
      %v2665 = vmax.f32 %v2607, 0.0
      %v2666 = vmax.f32 %v2612, 0.0
      %v2667 = vmax.f32 %v2615, 0.0
      %v2668 = vmax.f32 %v2620, 0.0
      %v2669 = vmax.f32 %v2623, 0.0
      %v2670 = vmax.f32 %v2628, 0.0
      %v2671 = vmax.f32 %v2631, 0.0
      %v2672 = vmax.f32 %v2636, 0.0
      %v2673 = vmax.f32 %v2639, 0.0
      %v2674 = vld [vmem:[%s3] sm:$0xff]
      %v2675 = vld [vmem:[%s3 + $0x8] sm:$0xff]
      %v2676 = vld [vmem:[%s3 + $0x10] sm:$0xff]
      %v2677 = vld [vmem:[%s3 + $0x18] sm:$0xff]
      %v2678 = vld [vmem:[%s3 + $0x20] sm:$0xff]
      %v2679 = vld [vmem:[%s3 + $0x28] sm:$0xff]
      %v2680 = vld [vmem:[%s3 + $0x30] sm:$0xff]
      %v2681 = vld [vmem:[%s3 + $0x38] sm:$0xff]
      %v2682 = vld [vmem:[%s3 + $0x40] sm:$0xff]
      %v2683 = vld [vmem:[%s3 + $0x48] sm:$0xff]
      %v2684 = vld [vmem:[%s3 + $0x50] sm:$0xff]
      %v2685 = vld [vmem:[%s3 + $0x58] sm:$0xff]
      %v2686 = vld [vmem:[%s3 + $0x60] sm:$0xff]
      %v2687 = vld [vmem:[%s3 + $0x68] sm:$0xff]
      %v2688 = vld [vmem:[%s3 + $0x70] sm:$0xff]
      %v2689 = vld [vmem:[%s3 + $0x78] sm:$0xff]
      %v2690 = vld [vmem:[%s3 + $0x80] sm:$0xff]
      %v2691 = vld [vmem:[%s3 + $0x88] sm:$0xff]
      %v2692 = vld [vmem:[%s3 + $0x90] sm:$0xff]
      %v2693 = vld [vmem:[%s3 + $0x98] sm:$0xff]
      %v2694 = vld [vmem:[%s3 + $0xa0] sm:$0xff]
      %v2695 = vld [vmem:[%s3 + $0xa8] sm:$0xff]
      %v2696 = vld [vmem:[%s3 + $0xb0] sm:$0xff]
      %v2697 = vld [vmem:[%s3 + $0xb8] sm:$0xff]
      %v2698 = vld [vmem:[%s3 + $0xc0] sm:$0xff]
      %v2699 = vld [vmem:[%s3 + $0xc8] sm:$0xff]
      %v2700 = vld [vmem:[%s3 + $0xd0] sm:$0xff]
      %v2701 = vld [vmem:[%s3 + $0xd8] sm:$0xff]
      %v2702 = vld [vmem:[%s3 + $0xe0] sm:$0xff]
      %v2703 = vld [vmem:[%s3 + $0xe8] sm:$0xff]
      %v2704 = vld [vmem:[%s3 + $0xf0] sm:$0xff]
      %v2705 = vld [vmem:[%s3 + $0xf8] sm:$0xff]
      %v2706 = vld [vmem:[%s455] sm:$0xff]
      %v2707 = vld [vmem:[%s455 + $0x8] sm:$0xff]
      %v2708 = vld [vmem:[%s455 + $0x10] sm:$0xff]
      %v2709 = vld [vmem:[%s455 + $0x18] sm:$0xff]
      %v2710 = vld [vmem:[%s455 + $0x20] sm:$0xff]
      %v2711 = vld [vmem:[%s455 + $0x28] sm:$0xff]
      %v2712 = vld [vmem:[%s455 + $0x30] sm:$0xff]
      %v2713 = vld [vmem:[%s455 + $0x38] sm:$0xff]
      %v2715 = vsel %vm502, %v2674, 0
      %v2718 = vsel %vm502, %v2675, 0
      %v2721 = vsel %vm502, %v2676, 0
      %v2724 = vsel %vm502, %v2677, 0
      %v2727 = vsel %vm502, %v2678, 0
      %v2730 = vsel %vm502, %v2679, 0
      %v2733 = vsel %vm502, %v2680, 0
      %v2736 = vsel %vm502, %v2681, 0
      %v2739 = vsel %vm502, %v2682, 0
      %v2742 = vsel %vm502, %v2683, 0
      %v2745 = vsel %vm502, %v2684, 0
      %v2748 = vsel %vm502, %v2685, 0
      %v2751 = vsel %vm502, %v2686, 0
      %v2754 = vsel %vm502, %v2687, 0
      %v2757 = vsel %vm502, %v2688, 0
      %v2760 = vsel %vm502, %v2689, 0
      %v2763 = vsel %vm502, %v2690, 0
      %v2766 = vsel %vm502, %v2691, 0
      %v2769 = vsel %vm502, %v2692, 0
      %v2772 = vsel %vm502, %v2693, 0
      %v2775 = vsel %vm502, %v2694, 0
      %v2778 = vsel %vm502, %v2695, 0
      %v2781 = vsel %vm502, %v2696, 0
      %v2784 = vsel %vm502, %v2697, 0
      %v2787 = vsel %vm502, %v2698, 0
      %v2790 = vsel %vm502, %v2699, 0
      %v2793 = vsel %vm502, %v2700, 0
      %v2796 = vsel %vm502, %v2701, 0
      %v2799 = vsel %vm502, %v2702, 0
      %v2802 = vsel %vm502, %v2703, 0
      %v2805 = vsel %vm502, %v2704, 0
      %v2808 = vsel %vm502, %v2705, 0
      %2810 = vmatprep.subr.mxu0 0.0
      %2811 = vmatpush1.msra.mxu0 0.0
      %2812 = vmatprep.subr.mxu0 0.0
      %2813 = vmatpush1.msra.mxu0 0.0
      %2814 = vmatprep.subr.mxu0 0.0
      %2815 = vmatpush1.msra.mxu0 0.0
      %2816 = vmatprep.subr.mxu0 0.0
      %2817 = vmatpush1.msra.mxu0 0.0
      %2818 = vmatprep.subr.mxu0 0.0
      %2819 = vmatpush1.msra.mxu0 0.0
      %2820 = vmatprep.subr.mxu0 0.0
      %2821 = vmatpush1.msra.mxu0 0.0
      %2822 = vmatprep.subr.mxu0 0.0
      %2823 = vmatpush1.msra.mxu0 0.0
      %2824 = vmatprep.subr.mxu0 0.0
      %2825 = vmatpush1.msra.mxu0 0.0
      %2826 = vmatprep.subr.mxu0 0.0
      %2827 = vmatpush1.msra.mxu0 %v2713
      %2828 = vmatprep.subr.mxu0 0.0
      %2829 = vmatpush1.msra.mxu0 %v2712
      %2830 = vmatprep.subr.mxu0 0.0
      %2831 = vmatpush1.msra.mxu0 %v2711
      %2832 = vmatprep.subr.mxu0 0.0
      %2833 = vmatpush1.msra.mxu0 %v2710
      %2834 = vmatprep.subr.mxu0 0.0
      %2835 = vmatpush1.msra.mxu0 %v2709
      %2836 = vmatprep.subr.mxu0 0.0
      %2837 = vmatpush1.msra.mxu0 %v2708
      %2838 = vmatprep.subr.mxu0 0.0
      %2839 = vmatpush1.msra.mxu0 %v2707
      %2840 = vmatprep.subr.mxu0 0.0
      %2841 = vmatpush1.msra.mxu0 %v2706
      %2842 = vmatprep.subr.mxu0 0.0
      %2843 = vmatpush2.msra.mxu0 0.0
      %2844 = vmatprep.subr.mxu0 0.0
      %2845 = vmatpush2.msra.mxu0 0.0
      %2846 = vmatprep.subr.mxu0 0.0
      %2847 = vmatpush2.msra.mxu0 0.0
      %2848 = vmatprep.subr.mxu0 0.0
      %2849 = vmatpush2.msra.mxu0 0.0
      %2850 = vmatprep.subr.mxu0 0.0
      %2851 = vmatpush2.msra.mxu0 0.0
      %2852 = vmatprep.subr.mxu0 0.0
      %2853 = vmatpush2.msra.mxu0 0.0
      %2854 = vmatprep.subr.mxu0 0.0
      %2855 = vmatpush2.msra.mxu0 0.0
      %2856 = vmatprep.subr.mxu0 0.0
      %2857 = vmatpush2.msra.mxu0 0.0
      %2858 = vmatprep.subr.mxu0 0.0
      %2859 = vmatpush2.msra.mxu0 0.0
      %2860 = vmatprep.subr.mxu0 0.0
      %2861 = vmatpush2.msra.mxu0 0.0
      %2862 = vmatprep.subr.mxu0 0.0
      %2863 = vmatpush2.msra.mxu0 0.0
      %2864 = vmatprep.subr.mxu0 0.0
      %2865 = vmatpush2.msra.mxu0 0.0
      %2866 = vmatprep.subr.mxu0 0.0
      %2867 = vmatpush2.msra.mxu0 0.0
      %2868 = vmatprep.subr.mxu0 0.0
      %2869 = vmatpush2.msra.mxu0 0.0
      %2870 = vmatprep.subr.mxu0 0.0
      %2871 = vmatpush2.msra.mxu0 0.0
      %2872 = vmatprep.subr.mxu0 0.0
      %2873 = vmatpush2.msra.mxu0 0.0
      %2874 = vmatprep.mubr.f32.mxu0 0.0
      %2875 = vmatmul.mubr.f32.gmra.mxu0 %v2715
      %v2876 = vpop.f32.mrf.mxu0
      %v2877 = vadd.f32 0.0, %v2876
      %v2878 = vpop.f32.mrf.mxu0
      %2879 = vmatprep.mubr.f32.mxu0 0.0
      %2880 = vmatmul.mubr.f32.gmra.mxu0 %v2718
      %v2881 = vpop.f32.mrf.mxu0
      %v2882 = vadd.f32 0.0, %v2881
      %v2883 = vpop.f32.mrf.mxu0
      %2884 = vmatprep.mubr.f32.mxu0 0.0
      %2885 = vmatmul.mubr.f32.gmra.mxu0 %v2721
      %v2886 = vpop.f32.mrf.mxu0
      %v2887 = vadd.f32 0.0, %v2886
      %v2888 = vpop.f32.mrf.mxu0
      %2889 = vmatprep.mubr.f32.mxu0 0.0
      %2890 = vmatmul.mubr.f32.gmra.mxu0 %v2724
      %v2891 = vpop.f32.mrf.mxu0
      %v2892 = vadd.f32 0.0, %v2891
      %v2893 = vpop.f32.mrf.mxu0
      %2894 = vmatprep.mubr.f32.mxu0 0.0
      %2895 = vmatmul.mubr.f32.gmra.mxu0 %v2727
      %v2896 = vpop.f32.mrf.mxu0
      %v2897 = vadd.f32 0.0, %v2896
      %v2898 = vpop.f32.mrf.mxu0
      %2899 = vmatprep.mubr.f32.mxu0 0.0
      %2900 = vmatmul.mubr.f32.gmra.mxu0 %v2730
      %v2901 = vpop.f32.mrf.mxu0
      %v2902 = vadd.f32 0.0, %v2901
      %v2903 = vpop.f32.mrf.mxu0
      %2904 = vmatprep.mubr.f32.mxu0 0.0
      %2905 = vmatmul.mubr.f32.gmra.mxu0 %v2733
      %v2906 = vpop.f32.mrf.mxu0
      %v2907 = vadd.f32 0.0, %v2906
      %v2908 = vpop.f32.mrf.mxu0
      %2909 = vmatprep.mubr.f32.mxu0 0.0
      %2910 = vmatmul.mubr.f32.gmra.mxu0 %v2736
      %v2911 = vpop.f32.mrf.mxu0
      %v2912 = vadd.f32 0.0, %v2911
      %v2913 = vpop.f32.mrf.mxu0
      %2914 = vmatprep.mubr.f32.mxu0 0.0
      %2915 = vmatmul.mubr.f32.gmra.mxu0 %v2739
      %v2916 = vpop.f32.mrf.mxu0
      %v2917 = vadd.f32 0.0, %v2916
      %v2918 = vpop.f32.mrf.mxu0
      %2919 = vmatprep.mubr.f32.mxu0 0.0
      %2920 = vmatmul.mubr.f32.gmra.mxu0 %v2742
      %v2921 = vpop.f32.mrf.mxu0
      %v2922 = vadd.f32 0.0, %v2921
      %v2923 = vpop.f32.mrf.mxu0
      %2924 = vmatprep.mubr.f32.mxu0 0.0
      %2925 = vmatmul.mubr.f32.gmra.mxu0 %v2745
      %v2926 = vpop.f32.mrf.mxu0
      %v2927 = vadd.f32 0.0, %v2926
      %v2928 = vpop.f32.mrf.mxu0
      %2929 = vmatprep.mubr.f32.mxu0 0.0
      %2930 = vmatmul.mubr.f32.gmra.mxu0 %v2748
      %v2931 = vpop.f32.mrf.mxu0
      %v2932 = vadd.f32 0.0, %v2931
      %v2933 = vpop.f32.mrf.mxu0
      %2934 = vmatprep.mubr.f32.mxu0 0.0
      %2935 = vmatmul.mubr.f32.gmra.mxu0 %v2751
      %v2936 = vpop.f32.mrf.mxu0
      %v2937 = vadd.f32 0.0, %v2936
      %v2938 = vpop.f32.mrf.mxu0
      %2939 = vmatprep.mubr.f32.mxu0 0.0
      %2940 = vmatmul.mubr.f32.gmra.mxu0 %v2754
      %v2941 = vpop.f32.mrf.mxu0
      %v2942 = vadd.f32 0.0, %v2941
      %v2943 = vpop.f32.mrf.mxu0
      %2944 = vmatprep.mubr.f32.mxu0 0.0
      %2945 = vmatmul.mubr.f32.gmra.mxu0 %v2757
      %v2946 = vpop.f32.mrf.mxu0
      %v2947 = vadd.f32 0.0, %v2946
      %v2948 = vpop.f32.mrf.mxu0
      %2949 = vmatprep.mubr.f32.mxu0 0.0
      %2950 = vmatmul.mubr.f32.gmra.mxu0 %v2760
      %v2951 = vpop.f32.mrf.mxu0
      %v2952 = vadd.f32 0.0, %v2951
      %v2953 = vpop.f32.mrf.mxu0
      %2954 = vmatprep.mubr.f32.mxu0 0.0
      %2955 = vmatmul.mubr.f32.gmra.mxu0 %v2763
      %v2956 = vpop.f32.mrf.mxu0
      %v2957 = vadd.f32 0.0, %v2956
      %v2958 = vpop.f32.mrf.mxu0
      %2959 = vmatprep.mubr.f32.mxu0 0.0
      %2960 = vmatmul.mubr.f32.gmra.mxu0 %v2766
      %v2961 = vpop.f32.mrf.mxu0
      %v2962 = vadd.f32 0.0, %v2961
      %v2963 = vpop.f32.mrf.mxu0
      %2964 = vmatprep.mubr.f32.mxu0 0.0
      %2965 = vmatmul.mubr.f32.gmra.mxu0 %v2769
      %v2966 = vpop.f32.mrf.mxu0
      %v2967 = vadd.f32 0.0, %v2966
      %v2968 = vpop.f32.mrf.mxu0
      %2969 = vmatprep.mubr.f32.mxu0 0.0
      %2970 = vmatmul.mubr.f32.gmra.mxu0 %v2772
      %v2971 = vpop.f32.mrf.mxu0
      %v2972 = vadd.f32 0.0, %v2971
      %v2973 = vpop.f32.mrf.mxu0
      %2974 = vmatprep.mubr.f32.mxu0 0.0
      %2975 = vmatmul.mubr.f32.gmra.mxu0 %v2775
      %v2976 = vpop.f32.mrf.mxu0
      %v2977 = vadd.f32 0.0, %v2976
      %v2978 = vpop.f32.mrf.mxu0
      %2979 = vmatprep.mubr.f32.mxu0 0.0
      %2980 = vmatmul.mubr.f32.gmra.mxu0 %v2778
      %v2981 = vpop.f32.mrf.mxu0
      %v2982 = vadd.f32 0.0, %v2981
      %v2983 = vpop.f32.mrf.mxu0
      %2984 = vmatprep.mubr.f32.mxu0 0.0
      %2985 = vmatmul.mubr.f32.gmra.mxu0 %v2781
      %v2986 = vpop.f32.mrf.mxu0
      %v2987 = vadd.f32 0.0, %v2986
      %v2988 = vpop.f32.mrf.mxu0
      %2989 = vmatprep.mubr.f32.mxu0 0.0
      %2990 = vmatmul.mubr.f32.gmra.mxu0 %v2784
      %v2991 = vpop.f32.mrf.mxu0
      %v2992 = vadd.f32 0.0, %v2991
      %v2993 = vpop.f32.mrf.mxu0
      %2994 = vmatprep.mubr.f32.mxu0 0.0
      %2995 = vmatmul.mubr.f32.gmra.mxu0 %v2787
      %v2996 = vpop.f32.mrf.mxu0
      %v2997 = vadd.f32 0.0, %v2996
      %v2998 = vpop.f32.mrf.mxu0
      %2999 = vmatprep.mubr.f32.mxu0 0.0
      %3000 = vmatmul.mubr.f32.gmra.mxu0 %v2790
      %v3001 = vpop.f32.mrf.mxu0
      %v3002 = vadd.f32 0.0, %v3001
      %v3003 = vpop.f32.mrf.mxu0
      %3004 = vmatprep.mubr.f32.mxu0 0.0
      %3005 = vmatmul.mubr.f32.gmra.mxu0 %v2793
      %v3006 = vpop.f32.mrf.mxu0
      %v3007 = vadd.f32 0.0, %v3006
      %v3008 = vpop.f32.mrf.mxu0
      %3009 = vmatprep.mubr.f32.mxu0 0.0
      %3010 = vmatmul.mubr.f32.gmra.mxu0 %v2796
      %v3011 = vpop.f32.mrf.mxu0
      %v3012 = vadd.f32 0.0, %v3011
      %v3013 = vpop.f32.mrf.mxu0
      %3014 = vmatprep.mubr.f32.mxu0 0.0
      %3015 = vmatmul.mubr.f32.gmra.mxu0 %v2799
      %v3016 = vpop.f32.mrf.mxu0
      %v3017 = vadd.f32 0.0, %v3016
      %v3018 = vpop.f32.mrf.mxu0
      %3019 = vmatprep.mubr.f32.mxu0 0.0
      %3020 = vmatmul.mubr.f32.gmra.mxu0 %v2802
      %v3021 = vpop.f32.mrf.mxu0
      %v3022 = vadd.f32 0.0, %v3021
      %v3023 = vpop.f32.mrf.mxu0
      %3024 = vmatprep.mubr.f32.mxu0 0.0
      %3025 = vmatmul.mubr.f32.gmra.mxu0 %v2805
      %v3026 = vpop.f32.mrf.mxu0
      %v3027 = vadd.f32 0.0, %v3026
      %v3028 = vpop.f32.mrf.mxu0
      %3029 = vmatprep.mubr.f32.mxu0 0.0
      %3030 = vmatmul.mubr.f32.gmra.mxu0 %v2808
      %v3031 = vpop.f32.mrf.mxu0
      %v3032 = vadd.f32 0.0, %v3031
      %v3033 = vpop.f32.mrf.mxu0
      %3034 = vdwg.mxu0
      %v3035 = vpack.c.bf16 %v2882, %v2877
      %v3036 = vpack.c.bf16 %v2892, %v2887
      %v3037 = vpack.c.bf16 %v2902, %v2897
      %v3038 = vpack.c.bf16 %v2912, %v2907
      %v3039 = vpack.c.bf16 %v2922, %v2917
      %v3040 = vpack.c.bf16 %v2932, %v2927
      %v3041 = vpack.c.bf16 %v2942, %v2937
      %v3042 = vpack.c.bf16 %v2952, %v2947
      %v3043 = vpack.c.bf16 %v2962, %v2957
      %v3044 = vpack.c.bf16 %v2972, %v2967
      %v3045 = vpack.c.bf16 %v2982, %v2977
      %v3046 = vpack.c.bf16 %v2992, %v2987
      %v3047 = vpack.c.bf16 %v3002, %v2997
      %v3048 = vpack.c.bf16 %v3012, %v3007
      %v3049 = vpack.c.bf16 %v3022, %v3017
      %v3050 = vpack.c.bf16 %v3032, %v3027
      %v3051 = vld [vmem:[%s9] sm:$0xf]
      %v3052 = vld [vmem:[%s9 + $0x4] sm:$0xf]
      %v3053 = vld [vmem:[%s10] sm:$0x1]
      %v3055 = vlaneseq
      %v3056 = vshrl.u32 %v3055, 7
      %v3057 = vsub.s32 0, %v3056
      %v3058 = vrot.slane %v3053, %v3057
      %v3062 = vunpack.c.l.b16 %v3051
      %v3063 = vunpack.c.l.b16 %v3052
      %v3064 = vpack.c.b16 %v3063, %v3062
      %v3067 = vsel %vm848, %v3035, 0
      %v3070 = vsel %vm848, %v3036, 0
      %v3073 = vsel %vm848, %v3037, 0
      %v3076 = vsel %vm848, %v3038, 0
      %v3079 = vsel %vm848, %v3039, 0
      %v3082 = vsel %vm848, %v3040, 0
      %v3085 = vsel %vm848, %v3041, 0
      %v3088 = vsel %vm848, %v3042, 0
      %v3091 = vsel %vm848, %v3043, 0
      %v3094 = vsel %vm848, %v3044, 0
      %v3097 = vsel %vm848, %v3045, 0
      %v3100 = vsel %vm848, %v3046, 0
      %v3103 = vsel %vm848, %v3047, 0
      %v3106 = vsel %vm848, %v3048, 0
      %v3109 = vsel %vm848, %v3049, 0
      %v3112 = vsel %vm848, %v3050, 0
      %3114 = vmatprep.subr.bf16.mxu0 0
      %3115 = vmatpush1.bf16.msra.mxu0 0
      %3116 = vmatprep.subr.bf16.mxu0 0
      %3117 = vmatpush1.bf16.msra.mxu0 0
      %3118 = vmatprep.subr.bf16.mxu0 0
      %3119 = vmatpush1.bf16.msra.mxu0 0
      %3120 = vmatprep.subr.bf16.mxu0 0
      %3121 = vmatpush1.bf16.msra.mxu0 0
      %3122 = vmatprep.subr.bf16.mxu0 0
      %3123 = vmatpush1.bf16.msra.mxu0 0
      %3124 = vmatprep.subr.bf16.mxu0 0
      %3125 = vmatpush1.bf16.msra.mxu0 0
      %3126 = vmatprep.subr.bf16.mxu0 0
      %3127 = vmatpush1.bf16.msra.mxu0 0
      %3128 = vmatprep.subr.bf16.mxu0 0
      %3129 = vmatpush1.bf16.msra.mxu0 %v3064
      %3130 = vmatprep.subr.bf16.mxu0 0
      %3131 = vmatpush2.bf16.msra.mxu0 0
      %3132 = vmatprep.subr.bf16.mxu0 0
      %3133 = vmatpush2.bf16.msra.mxu0 0
      %3134 = vmatprep.subr.bf16.mxu0 0
      %3135 = vmatpush2.bf16.msra.mxu0 0
      %3136 = vmatprep.subr.bf16.mxu0 0
      %3137 = vmatpush2.bf16.msra.mxu0 0
      %3138 = vmatprep.subr.bf16.mxu0 0
      %3139 = vmatpush2.bf16.msra.mxu0 0
      %3140 = vmatprep.subr.bf16.mxu0 0
      %3141 = vmatpush2.bf16.msra.mxu0 0
      %3142 = vmatprep.subr.bf16.mxu0 0
      %3143 = vmatpush2.bf16.msra.mxu0 0
      %3144 = vmatprep.subr.bf16.mxu0 0
      %3145 = vmatpush2.bf16.msra.mxu0 0
      %3146 = vmatprep.mubr.bf16.mxu0 0
      %3147 = vmatmul.mubr.bf16.gmra.mxu0 %v3067
      %v3148 = vpop.f32.mrf.mxu0
      %v3149 = vadd.f32 %v3058, %v3148
      %v3150 = vpop.f32.mrf.mxu0
      %v3151 = vpop.f32.mrf.mxu0
      %v3152 = vadd.f32 %v3058, %v3151
      %v3153 = vpop.f32.mrf.mxu0
      %3154 = vmatprep.mubr.bf16.mxu0 0
      %3155 = vmatmul.mubr.bf16.gmra.mxu0 %v3070
      %v3156 = vpop.f32.mrf.mxu0
      %v3157 = vadd.f32 %v3058, %v3156
      %v3158 = vpop.f32.mrf.mxu0
      %v3159 = vpop.f32.mrf.mxu0
      %v3160 = vadd.f32 %v3058, %v3159
      %v3161 = vpop.f32.mrf.mxu0
      %3162 = vmatprep.mubr.bf16.mxu0 0
      %3163 = vmatmul.mubr.bf16.gmra.mxu0 %v3073
      %v3164 = vpop.f32.mrf.mxu0
      %v3165 = vadd.f32 %v3058, %v3164
      %v3166 = vpop.f32.mrf.mxu0
      %v3167 = vpop.f32.mrf.mxu0
      %v3168 = vadd.f32 %v3058, %v3167
      %v3169 = vpop.f32.mrf.mxu0
      %3170 = vmatprep.mubr.bf16.mxu0 0
      %3171 = vmatmul.mubr.bf16.gmra.mxu0 %v3076
      %v3172 = vpop.f32.mrf.mxu0
      %v3173 = vadd.f32 %v3058, %v3172
      %v3174 = vpop.f32.mrf.mxu0
      %v3175 = vpop.f32.mrf.mxu0
      %v3176 = vadd.f32 %v3058, %v3175
      %v3177 = vpop.f32.mrf.mxu0
      %3178 = vmatprep.mubr.bf16.mxu0 0
      %3179 = vmatmul.mubr.bf16.gmra.mxu0 %v3079
      %v3180 = vpop.f32.mrf.mxu0
      %v3181 = vadd.f32 %v3058, %v3180
      %v3182 = vpop.f32.mrf.mxu0
      %v3183 = vpop.f32.mrf.mxu0
      %v3184 = vadd.f32 %v3058, %v3183
      %v3185 = vpop.f32.mrf.mxu0
      %3186 = vmatprep.mubr.bf16.mxu0 0
      %3187 = vmatmul.mubr.bf16.gmra.mxu0 %v3082
      %v3188 = vpop.f32.mrf.mxu0
      %v3189 = vadd.f32 %v3058, %v3188
      %v3190 = vpop.f32.mrf.mxu0
      %v3191 = vpop.f32.mrf.mxu0
      %v3192 = vadd.f32 %v3058, %v3191
      %v3193 = vpop.f32.mrf.mxu0
      %3194 = vmatprep.mubr.bf16.mxu0 0
      %3195 = vmatmul.mubr.bf16.gmra.mxu0 %v3085
      %v3196 = vpop.f32.mrf.mxu0
      %v3197 = vadd.f32 %v3058, %v3196
      %v3198 = vpop.f32.mrf.mxu0
      %v3199 = vpop.f32.mrf.mxu0
      %v3200 = vadd.f32 %v3058, %v3199
      %v3201 = vpop.f32.mrf.mxu0
      %3202 = vmatprep.mubr.bf16.mxu0 0
      %3203 = vmatmul.mubr.bf16.gmra.mxu0 %v3088
      %v3204 = vpop.f32.mrf.mxu0
      %v3205 = vadd.f32 %v3058, %v3204
      %v3206 = vpop.f32.mrf.mxu0
      %v3207 = vpop.f32.mrf.mxu0
      %v3208 = vadd.f32 %v3058, %v3207
      %v3209 = vpop.f32.mrf.mxu0
      %3210 = vmatprep.mubr.bf16.mxu0 0
      %3211 = vmatmul.mubr.bf16.gmra.mxu0 %v3091
      %v3212 = vpop.f32.mrf.mxu0
      %v3213 = vadd.f32 %v3058, %v3212
      %v3214 = vpop.f32.mrf.mxu0
      %v3215 = vpop.f32.mrf.mxu0
      %v3216 = vadd.f32 %v3058, %v3215
      %v3217 = vpop.f32.mrf.mxu0
      %3218 = vmatprep.mubr.bf16.mxu0 0
      %3219 = vmatmul.mubr.bf16.gmra.mxu0 %v3094
      %v3220 = vpop.f32.mrf.mxu0
      %v3221 = vadd.f32 %v3058, %v3220
      %v3222 = vpop.f32.mrf.mxu0
      %v3223 = vpop.f32.mrf.mxu0
      %v3224 = vadd.f32 %v3058, %v3223
      %v3225 = vpop.f32.mrf.mxu0
      %3226 = vmatprep.mubr.bf16.mxu0 0
      %3227 = vmatmul.mubr.bf16.gmra.mxu0 %v3097
      %v3228 = vpop.f32.mrf.mxu0
      %v3229 = vadd.f32 %v3058, %v3228
      %v3230 = vpop.f32.mrf.mxu0
      %v3231 = vpop.f32.mrf.mxu0
      %v3232 = vadd.f32 %v3058, %v3231
      %v3233 = vpop.f32.mrf.mxu0
      %3234 = vmatprep.mubr.bf16.mxu0 0
      %3235 = vmatmul.mubr.bf16.gmra.mxu0 %v3100
      %v3236 = vpop.f32.mrf.mxu0
      %v3237 = vadd.f32 %v3058, %v3236
      %v3238 = vpop.f32.mrf.mxu0
      %v3239 = vpop.f32.mrf.mxu0
      %v3240 = vadd.f32 %v3058, %v3239
      %v3241 = vpop.f32.mrf.mxu0
      %3242 = vmatprep.mubr.bf16.mxu0 0
      %3243 = vmatmul.mubr.bf16.gmra.mxu0 %v3103
      %v3244 = vpop.f32.mrf.mxu0
      %v3245 = vadd.f32 %v3058, %v3244
      %v3246 = vpop.f32.mrf.mxu0
      %v3247 = vpop.f32.mrf.mxu0
      %v3248 = vadd.f32 %v3058, %v3247
      %v3249 = vpop.f32.mrf.mxu0
      %3250 = vmatprep.mubr.bf16.mxu0 0
      %3251 = vmatmul.mubr.bf16.gmra.mxu0 %v3106
      %v3252 = vpop.f32.mrf.mxu0
      %v3253 = vadd.f32 %v3058, %v3252
      %v3254 = vpop.f32.mrf.mxu0
      %v3255 = vpop.f32.mrf.mxu0
      %v3256 = vadd.f32 %v3058, %v3255
      %v3257 = vpop.f32.mrf.mxu0
      %3258 = vmatprep.mubr.bf16.mxu0 0
      %3259 = vmatmul.mubr.bf16.gmra.mxu0 %v3109
      %v3260 = vpop.f32.mrf.mxu0
      %v3261 = vadd.f32 %v3058, %v3260
      %v3262 = vpop.f32.mrf.mxu0
      %v3263 = vpop.f32.mrf.mxu0
      %v3264 = vadd.f32 %v3058, %v3263
      %v3265 = vpop.f32.mrf.mxu0
      %3266 = vmatprep.mubr.bf16.mxu0 0
      %3267 = vmatmul.mubr.bf16.gmra.mxu0 %v3112
      %v3268 = vpop.f32.mrf.mxu0
      %v3269 = vadd.f32 %v3058, %v3268
      %v3270 = vpop.f32.mrf.mxu0
      %v3271 = vpop.f32.mrf.mxu0
      %v3272 = vadd.f32 %v3058, %v3271
      %v3273 = vpop.f32.mrf.mxu0
      %3274 = vdwg.mxu0
      %v3275 = vadd.f32 %v2642, %v3149
      %v3276 = vadd.f32 %v2643, %v3152
      %v3277 = vadd.f32 %v2644, %v3157
      %v3278 = vadd.f32 %v2645, %v3160
      %v3279 = vadd.f32 %v2646, %v3165
      %v3280 = vadd.f32 %v2647, %v3168
      %v3281 = vadd.f32 %v2648, %v3173
      %v3282 = vadd.f32 %v2649, %v3176
      %v3283 = vadd.f32 %v2650, %v3181
      %v3284 = vadd.f32 %v2651, %v3184
      %v3285 = vadd.f32 %v2652, %v3189
      %v3286 = vadd.f32 %v2653, %v3192
      %v3287 = vadd.f32 %v2654, %v3197
      %v3288 = vadd.f32 %v2655, %v3200
      %v3289 = vadd.f32 %v2656, %v3205
      %v3290 = vadd.f32 %v2657, %v3208
      %v3291 = vadd.f32 %v2658, %v3213
      %v3292 = vadd.f32 %v2659, %v3216
      %v3293 = vadd.f32 %v2660, %v3221
      %v3294 = vadd.f32 %v2661, %v3224
      %v3295 = vadd.f32 %v2662, %v3229
      %v3296 = vadd.f32 %v2663, %v3232
      %v3297 = vadd.f32 %v2664, %v3237
      %v3298 = vadd.f32 %v2665, %v3240
      %v3299 = vadd.f32 %v2666, %v3245
      %v3300 = vadd.f32 %v2667, %v3248
      %v3301 = vadd.f32 %v2668, %v3253
      %v3302 = vadd.f32 %v2669, %v3256
      %v3303 = vadd.f32 %v2670, %v3261
      %v3304 = vadd.f32 %v2671, %v3264
      %v3305 = vadd.f32 %v2672, %v3269
      %v3306 = vadd.f32 %v2673, %v3272
      %v3337 = vrot.slane %v3275, 7
      %v3338 = vrot.slane %v3276, 7
      %v3339 = vsel %vm1095, %v3337, %v3338
      %v3340 = vrot.slane %v3277, 7
      %v3341 = vsel %vm1095, %v3338, %v3340
      %v3342 = vrot.slane %v3278, 7
      %v3343 = vsel %vm1095, %v3340, %v3342
      %v3344 = vrot.slane %v3279, 7
      %v3345 = vsel %vm1095, %v3342, %v3344
      %v3346 = vrot.slane %v3280, 7
      %v3347 = vsel %vm1095, %v3344, %v3346
      %v3348 = vrot.slane %v3281, 7
      %v3349 = vsel %vm1095, %v3346, %v3348
      %v3350 = vrot.slane %v3282, 7
      %v3351 = vsel %vm1095, %v3348, %v3350
      %v3352 = vrot.slane %v3283, 7
      %v3353 = vsel %vm1095, %v3350, %v3352
      %v3354 = vrot.slane %v3284, 7
      %v3355 = vsel %vm1095, %v3352, %v3354
      %v3356 = vrot.slane %v3285, 7
      %v3357 = vsel %vm1095, %v3354, %v3356
      %v3358 = vrot.slane %v3286, 7
      %v3359 = vsel %vm1095, %v3356, %v3358
      %v3360 = vrot.slane %v3287, 7
      %v3361 = vsel %vm1095, %v3358, %v3360
      %v3362 = vrot.slane %v3288, 7
      %v3363 = vsel %vm1095, %v3360, %v3362
      %v3364 = vrot.slane %v3289, 7
      %v3365 = vsel %vm1095, %v3362, %v3364
      %v3366 = vrot.slane %v3290, 7
      %v3367 = vsel %vm1095, %v3364, %v3366
      %v3368 = vrot.slane %v3291, 7
      %v3369 = vsel %vm1095, %v3366, %v3368
      %v3370 = vrot.slane %v3292, 7
      %v3371 = vsel %vm1095, %v3368, %v3370
      %v3372 = vrot.slane %v3293, 7
      %v3373 = vsel %vm1095, %v3370, %v3372
      %v3374 = vrot.slane %v3294, 7
      %v3375 = vsel %vm1095, %v3372, %v3374
      %v3376 = vrot.slane %v3295, 7
      %v3377 = vsel %vm1095, %v3374, %v3376
      %v3378 = vrot.slane %v3296, 7
      %v3379 = vsel %vm1095, %v3376, %v3378
      %v3380 = vrot.slane %v3297, 7
      %v3381 = vsel %vm1095, %v3378, %v3380
      %v3382 = vrot.slane %v3298, 7
      %v3383 = vsel %vm1095, %v3380, %v3382
      %v3384 = vrot.slane %v3299, 7
      %v3385 = vsel %vm1095, %v3382, %v3384
      %v3386 = vrot.slane %v3300, 7
      %v3387 = vsel %vm1095, %v3384, %v3386
      %v3388 = vrot.slane %v3301, 7
      %v3389 = vsel %vm1095, %v3386, %v3388
      %v3390 = vrot.slane %v3302, 7
      %v3391 = vsel %vm1095, %v3388, %v3390
      %v3392 = vrot.slane %v3303, 7
      %v3393 = vsel %vm1095, %v3390, %v3392
      %v3394 = vrot.slane %v3304, 7
      %v3395 = vsel %vm1095, %v3392, %v3394
      %v3426 = vsel %vm1095, 0.0, %v3337
      %v3427 = vsel %vm1061, %v3426, 0.0
      %v3428 = vsel %vm1062, %v3339, 0.0
      %v3429 = vsel %vm1061, %v3341, 0.0
      %v3430 = vsel %vm1062, %v3343, 0.0
      %v3431 = vsel %vm1061, %v3345, 0.0
      %v3432 = vsel %vm1062, %v3347, 0.0
      %v3433 = vsel %vm1061, %v3349, 0.0
      %v3434 = vsel %vm1062, %v3351, 0.0
      %v3435 = vsel %vm1061, %v3353, 0.0
      %v3436 = vsel %vm1062, %v3355, 0.0
      %v3437 = vsel %vm1061, %v3357, 0.0
      %v3438 = vsel %vm1062, %v3359, 0.0
      %v3439 = vsel %vm1061, %v3361, 0.0
      %v3440 = vsel %vm1062, %v3363, 0.0
      %v3441 = vsel %vm1061, %v3365, 0.0
      %v3442 = vsel %vm1062, %v3367, 0.0
      %v3443 = vsel %vm1061, %v3369, 0.0
      %v3444 = vsel %vm1062, %v3371, 0.0
      %v3445 = vsel %vm1061, %v3373, 0.0
      %v3446 = vsel %vm1062, %v3375, 0.0
      %v3447 = vsel %vm1061, %v3377, 0.0
      %v3448 = vsel %vm1062, %v3379, 0.0
      %v3449 = vsel %vm1061, %v3381, 0.0
      %v3450 = vsel %vm1062, %v3383, 0.0
      %v3451 = vsel %vm1061, %v3385, 0.0
      %v3452 = vsel %vm1062, %v3387, 0.0
      %v3453 = vsel %vm1061, %v3389, 0.0
      %v3454 = vsel %vm1062, %v3391, 0.0
      %v3455 = vsel %vm1061, %v3393, 0.0
      %v3456 = vsel %vm1062, %v3395, 0.0
      %v3458 = vrot.slane %v3275, 1
      %v3459 = vrot.slane %v3276, 1
      %v3460 = vsel %vm1217, %v3458, %v3459
      %v3461 = vrot.slane %v3277, 1
      %v3462 = vsel %vm1217, %v3459, %v3461
      %v3463 = vrot.slane %v3278, 1
      %v3464 = vsel %vm1217, %v3461, %v3463
      %v3465 = vrot.slane %v3279, 1
      %v3466 = vsel %vm1217, %v3463, %v3465
      %v3467 = vrot.slane %v3280, 1
      %v3468 = vsel %vm1217, %v3465, %v3467
      %v3469 = vrot.slane %v3281, 1
      %v3470 = vsel %vm1217, %v3467, %v3469
      %v3471 = vrot.slane %v3282, 1
      %v3472 = vsel %vm1217, %v3469, %v3471
      %v3473 = vrot.slane %v3283, 1
      %v3474 = vsel %vm1217, %v3471, %v3473
      %v3475 = vrot.slane %v3284, 1
      %v3476 = vsel %vm1217, %v3473, %v3475
      %v3477 = vrot.slane %v3285, 1
      %v3478 = vsel %vm1217, %v3475, %v3477
      %v3479 = vrot.slane %v3286, 1
      %v3480 = vsel %vm1217, %v3477, %v3479
      %v3481 = vrot.slane %v3287, 1
      %v3482 = vsel %vm1217, %v3479, %v3481
      %v3483 = vrot.slane %v3288, 1
      %v3484 = vsel %vm1217, %v3481, %v3483
      %v3485 = vrot.slane %v3289, 1
      %v3486 = vsel %vm1217, %v3483, %v3485
      %v3487 = vrot.slane %v3290, 1
      %v3488 = vsel %vm1217, %v3485, %v3487
      %v3489 = vrot.slane %v3291, 1
      %v3490 = vsel %vm1217, %v3487, %v3489
      %v3491 = vrot.slane %v3292, 1
      %v3492 = vsel %vm1217, %v3489, %v3491
      %v3493 = vrot.slane %v3293, 1
      %v3494 = vsel %vm1217, %v3491, %v3493
      %v3495 = vrot.slane %v3294, 1
      %v3496 = vsel %vm1217, %v3493, %v3495
      %v3497 = vrot.slane %v3295, 1
      %v3498 = vsel %vm1217, %v3495, %v3497
      %v3499 = vrot.slane %v3296, 1
      %v3500 = vsel %vm1217, %v3497, %v3499
      %v3501 = vrot.slane %v3297, 1
      %v3502 = vsel %vm1217, %v3499, %v3501
      %v3503 = vrot.slane %v3298, 1
      %v3504 = vsel %vm1217, %v3501, %v3503
      %v3505 = vrot.slane %v3299, 1
      %v3506 = vsel %vm1217, %v3503, %v3505
      %v3507 = vrot.slane %v3300, 1
      %v3508 = vsel %vm1217, %v3505, %v3507
      %v3509 = vrot.slane %v3301, 1
      %v3510 = vsel %vm1217, %v3507, %v3509
      %v3511 = vrot.slane %v3302, 1
      %v3512 = vsel %vm1217, %v3509, %v3511
      %v3513 = vrot.slane %v3303, 1
      %v3514 = vsel %vm1217, %v3511, %v3513
      %v3515 = vrot.slane %v3304, 1
      %v3516 = vsel %vm1217, %v3513, %v3515
      %v3517 = vrot.slane %v3305, 1
      %v3518 = vsel %vm1217, %v3515, %v3517
      %v3550 = vsel %vm1217, 0.0, %v3458
      %v3551 = vsel %vm1064, %v3550, 0.0
      %v3552 = vsel %vm1063, %v3460, 0.0
      %v3553 = vsel %vm1064, %v3462, 0.0
      %v3554 = vsel %vm1063, %v3464, 0.0
      %v3555 = vsel %vm1064, %v3466, 0.0
      %v3556 = vsel %vm1063, %v3468, 0.0
      %v3557 = vsel %vm1064, %v3470, 0.0
      %v3558 = vsel %vm1063, %v3472, 0.0
      %v3559 = vsel %vm1064, %v3474, 0.0
      %v3560 = vsel %vm1063, %v3476, 0.0
      %v3561 = vsel %vm1064, %v3478, 0.0
      %v3562 = vsel %vm1063, %v3480, 0.0
      %v3563 = vsel %vm1064, %v3482, 0.0
      %v3564 = vsel %vm1063, %v3484, 0.0
      %v3565 = vsel %vm1064, %v3486, 0.0
      %v3566 = vsel %vm1063, %v3488, 0.0
      %v3567 = vsel %vm1064, %v3490, 0.0
      %v3568 = vsel %vm1063, %v3492, 0.0
      %v3569 = vsel %vm1064, %v3494, 0.0
      %v3570 = vsel %vm1063, %v3496, 0.0
      %v3571 = vsel %vm1064, %v3498, 0.0
      %v3572 = vsel %vm1063, %v3500, 0.0
      %v3573 = vsel %vm1064, %v3502, 0.0
      %v3574 = vsel %vm1063, %v3504, 0.0
      %v3575 = vsel %vm1064, %v3506, 0.0
      %v3576 = vsel %vm1063, %v3508, 0.0
      %v3577 = vsel %vm1064, %v3510, 0.0
      %v3578 = vsel %vm1063, %v3512, 0.0
      %v3579 = vsel %vm1064, %v3514, 0.0
      %v3580 = vsel %vm1063, %v3516, 0.0
      %v3581 = vsel %vm1064, %v3518, 0.0
      %v3583 = vrot.slane %v3305, 7
      %v3584 = vsel %vm1095, %v3394, %v3583
      %v3585 = vrot.slane %v3306, 7
      %v3586 = vsel %vm1095, %v3583, %v3585
      %v3589 = vsel %vm1061, %v3584, 0.0
      %v3590 = vsel %vm1062, %v3586, 0.0
      %v3591 = vrot.slane %v3306, 1
      %v3592 = vsel %vm1217, %v3517, %v3591
      %v3595 = vsel %vm1217, %v3591, 0.0
      %v3596 = vsel %vm1063, %v3592, 0.0
      %v3597 = vsel %vm1064, %v3595, 0.0
      %v3599 = vsel %vm1095, %v3585, 0.0
      %v3600 = vsel %vm1061, %v3599, 0.0
      %3601 = vrot.lane.b32.xlu0 0.0, 8
      %v3602 = vpop.permute.xlu0 %3601
      %3603 = vrot.lane.b32.xlu0 %v3275, 8
      %v3604 = vpop.permute.xlu0 %3603
      %3605 = vrot.lane.b32.xlu0 %v3276, 8
      %v3606 = vpop.permute.xlu0 %3605
      %3607 = vrot.lane.b32.xlu0 %v3277, 8
      %v3608 = vpop.permute.xlu0 %3607
      %3609 = vrot.lane.b32.xlu0 %v3278, 8
      %v3610 = vpop.permute.xlu0 %3609
      %3611 = vrot.lane.b32.xlu0 %v3279, 8
      %v3612 = vpop.permute.xlu0 %3611
      %3613 = vrot.lane.b32.xlu0 %v3280, 8
      %v3614 = vpop.permute.xlu0 %3613
      %3615 = vrot.lane.b32.xlu0 %v3281, 8
      %v3616 = vpop.permute.xlu0 %3615
      %3617 = vrot.lane.b32.xlu0 %v3282, 8
      %v3618 = vpop.permute.xlu0 %3617
      %3619 = vrot.lane.b32.xlu0 %v3283, 8
      %v3620 = vpop.permute.xlu0 %3619
      %3621 = vrot.lane.b32.xlu0 %v3284, 8
      %v3622 = vpop.permute.xlu0 %3621
      %3623 = vrot.lane.b32.xlu0 %v3285, 8
      %v3624 = vpop.permute.xlu0 %3623
      %3625 = vrot.lane.b32.xlu0 %v3286, 8
      %v3626 = vpop.permute.xlu0 %3625
      %3627 = vrot.lane.b32.xlu0 %v3287, 8
      %v3628 = vpop.permute.xlu0 %3627
      %3629 = vrot.lane.b32.xlu0 %v3288, 8
      %v3630 = vpop.permute.xlu0 %3629
      %3631 = vrot.lane.b32.xlu0 %v3289, 8
      %v3632 = vpop.permute.xlu0 %3631
      %3633 = vrot.lane.b32.xlu0 %v3290, 8
      %v3634 = vpop.permute.xlu0 %3633
      %3635 = vrot.lane.b32.xlu0 %v3291, 8
      %v3636 = vpop.permute.xlu0 %3635
      %3637 = vrot.lane.b32.xlu0 %v3292, 8
      %v3638 = vpop.permute.xlu0 %3637
      %3639 = vrot.lane.b32.xlu0 %v3293, 8
      %v3640 = vpop.permute.xlu0 %3639
      %3641 = vrot.lane.b32.xlu0 %v3294, 8
      %v3642 = vpop.permute.xlu0 %3641
      %3643 = vrot.lane.b32.xlu0 %v3295, 8
      %v3644 = vpop.permute.xlu0 %3643
      %3645 = vrot.lane.b32.xlu0 %v3296, 8
      %v3646 = vpop.permute.xlu0 %3645
      %3647 = vrot.lane.b32.xlu0 %v3297, 8
      %v3648 = vpop.permute.xlu0 %3647
      %3649 = vrot.lane.b32.xlu0 %v3298, 8
      %v3650 = vpop.permute.xlu0 %3649
      %3651 = vrot.lane.b32.xlu0 %v3299, 8
      %v3652 = vpop.permute.xlu0 %3651
      %3653 = vrot.lane.b32.xlu0 %v3300, 8
      %v3654 = vpop.permute.xlu0 %3653
      %3655 = vrot.lane.b32.xlu0 %v3301, 8
      %v3656 = vpop.permute.xlu0 %3655
      %3657 = vrot.lane.b32.xlu0 %v3302, 8
      %v3658 = vpop.permute.xlu0 %3657
      %3659 = vrot.lane.b32.xlu0 %v3303, 8
      %v3660 = vpop.permute.xlu0 %3659
      %3661 = vrot.lane.b32.xlu0 %v3304, 8
      %v3662 = vpop.permute.xlu0 %3661
      %3725 = vrot.lane.b32.xlu0 %v3551, 16
      %v3726 = vpop.permute.xlu0 %3725
      %3727 = vrot.lane.b32.xlu0 %v3552, 16
      %v3728 = vpop.permute.xlu0 %3727
      %3729 = vrot.lane.b32.xlu0 %v3553, 16
      %v3730 = vpop.permute.xlu0 %3729
      %3731 = vrot.lane.b32.xlu0 %v3554, 16
      %v3732 = vpop.permute.xlu0 %3731
      %3733 = vrot.lane.b32.xlu0 %v3555, 16
      %v3734 = vpop.permute.xlu0 %3733
      %3735 = vrot.lane.b32.xlu0 %v3556, 16
      %v3736 = vpop.permute.xlu0 %3735
      %3737 = vrot.lane.b32.xlu0 %v3557, 16
      %v3738 = vpop.permute.xlu0 %3737
      %3739 = vrot.lane.b32.xlu0 %v3558, 16
      %v3740 = vpop.permute.xlu0 %3739
      %3741 = vrot.lane.b32.xlu0 %v3559, 16
      %v3742 = vpop.permute.xlu0 %3741
      %3743 = vrot.lane.b32.xlu0 %v3560, 16
      %v3744 = vpop.permute.xlu0 %3743
      %3745 = vrot.lane.b32.xlu0 %v3561, 16
      %v3746 = vpop.permute.xlu0 %3745
      %3747 = vrot.lane.b32.xlu0 %v3562, 16
      %v3748 = vpop.permute.xlu0 %3747
      %3749 = vrot.lane.b32.xlu0 %v3563, 16
      %v3750 = vpop.permute.xlu0 %3749
      %3751 = vrot.lane.b32.xlu0 %v3564, 16
      %v3752 = vpop.permute.xlu0 %3751
      %3753 = vrot.lane.b32.xlu0 %v3565, 16
      %v3754 = vpop.permute.xlu0 %3753
      %3755 = vrot.lane.b32.xlu0 %v3566, 16
      %v3756 = vpop.permute.xlu0 %3755
      %3757 = vrot.lane.b32.xlu0 %v3567, 16
      %v3758 = vpop.permute.xlu0 %3757
      %3759 = vrot.lane.b32.xlu0 %v3568, 16
      %v3760 = vpop.permute.xlu0 %3759
      %3761 = vrot.lane.b32.xlu0 %v3569, 16
      %v3762 = vpop.permute.xlu0 %3761
      %3763 = vrot.lane.b32.xlu0 %v3570, 16
      %v3764 = vpop.permute.xlu0 %3763
      %3765 = vrot.lane.b32.xlu0 %v3571, 16
      %v3766 = vpop.permute.xlu0 %3765
      %3767 = vrot.lane.b32.xlu0 %v3572, 16
      %v3768 = vpop.permute.xlu0 %3767
      %3769 = vrot.lane.b32.xlu0 %v3573, 16
      %v3770 = vpop.permute.xlu0 %3769
      %3771 = vrot.lane.b32.xlu0 %v3574, 16
      %v3772 = vpop.permute.xlu0 %3771
      %3773 = vrot.lane.b32.xlu0 %v3575, 16
      %v3774 = vpop.permute.xlu0 %3773
      %3775 = vrot.lane.b32.xlu0 %v3576, 16
      %v3776 = vpop.permute.xlu0 %3775
      %3777 = vrot.lane.b32.xlu0 %v3577, 16
      %v3778 = vpop.permute.xlu0 %3777
      %3779 = vrot.lane.b32.xlu0 %v3578, 16
      %v3780 = vpop.permute.xlu0 %3779
      %3781 = vrot.lane.b32.xlu0 %v3579, 16
      %v3782 = vpop.permute.xlu0 %3781
      %3783 = vrot.lane.b32.xlu0 %v3580, 16
      %v3784 = vpop.permute.xlu0 %3783
      %3785 = vrot.lane.b32.xlu0 %v3581, 16
      %v3786 = vpop.permute.xlu0 %3785
      %3850 = vrot.lane.b32.xlu0 %v3427, 24
      %v3851 = vpop.permute.xlu0 %3850
      %3852 = vrot.lane.b32.xlu0 %v3428, 24
      %v3853 = vpop.permute.xlu0 %3852
      %3854 = vrot.lane.b32.xlu0 %v3429, 24
      %v3855 = vpop.permute.xlu0 %3854
      %3856 = vrot.lane.b32.xlu0 %v3430, 24
      %v3857 = vpop.permute.xlu0 %3856
      %3858 = vrot.lane.b32.xlu0 %v3431, 24
      %v3859 = vpop.permute.xlu0 %3858
      %3860 = vrot.lane.b32.xlu0 %v3432, 24
      %v3861 = vpop.permute.xlu0 %3860
      %3862 = vrot.lane.b32.xlu0 %v3433, 24
      %v3863 = vpop.permute.xlu0 %3862
      %3864 = vrot.lane.b32.xlu0 %v3434, 24
      %v3865 = vpop.permute.xlu0 %3864
      %3866 = vrot.lane.b32.xlu0 %v3435, 24
      %v3867 = vpop.permute.xlu0 %3866
      %3868 = vrot.lane.b32.xlu0 %v3436, 24
      %v3869 = vpop.permute.xlu0 %3868
      %3870 = vrot.lane.b32.xlu0 %v3437, 24
      %v3871 = vpop.permute.xlu0 %3870
      %3872 = vrot.lane.b32.xlu0 %v3438, 24
      %v3873 = vpop.permute.xlu0 %3872
      %3874 = vrot.lane.b32.xlu0 %v3439, 24
      %v3875 = vpop.permute.xlu0 %3874
      %3876 = vrot.lane.b32.xlu0 %v3440, 24
      %v3877 = vpop.permute.xlu0 %3876
      %3878 = vrot.lane.b32.xlu0 %v3441, 24
      %v3879 = vpop.permute.xlu0 %3878
      %3880 = vrot.lane.b32.xlu0 %v3442, 24
      %v3881 = vpop.permute.xlu0 %3880
      %3882 = vrot.lane.b32.xlu0 %v3443, 24
      %v3883 = vpop.permute.xlu0 %3882
      %3884 = vrot.lane.b32.xlu0 %v3444, 24
      %v3885 = vpop.permute.xlu0 %3884
      %3886 = vrot.lane.b32.xlu0 %v3445, 24
      %v3887 = vpop.permute.xlu0 %3886
      %3888 = vrot.lane.b32.xlu0 %v3446, 24
      %v3889 = vpop.permute.xlu0 %3888
      %3890 = vrot.lane.b32.xlu0 %v3447, 24
      %v3891 = vpop.permute.xlu0 %3890
      %3892 = vrot.lane.b32.xlu0 %v3448, 24
      %v3893 = vpop.permute.xlu0 %3892
      %3894 = vrot.lane.b32.xlu0 %v3449, 24
      %v3895 = vpop.permute.xlu0 %3894
      %3896 = vrot.lane.b32.xlu0 %v3450, 24
      %v3897 = vpop.permute.xlu0 %3896
      %3898 = vrot.lane.b32.xlu0 %v3451, 24
      %v3899 = vpop.permute.xlu0 %3898
      %3900 = vrot.lane.b32.xlu0 %v3452, 24
      %v3901 = vpop.permute.xlu0 %3900
      %3902 = vrot.lane.b32.xlu0 %v3453, 24
      %v3903 = vpop.permute.xlu0 %3902
      %3904 = vrot.lane.b32.xlu0 %v3454, 24
      %v3905 = vpop.permute.xlu0 %3904
      %3906 = vrot.lane.b32.xlu0 %v3455, 24
      %v3907 = vpop.permute.xlu0 %3906
      %3908 = vrot.lane.b32.xlu0 %v3456, 24
      %v3909 = vpop.permute.xlu0 %3908
      %3910 = vrot.lane.b32.xlu0 %v3589, 24
      %v3911 = vpop.permute.xlu0 %3910
      %3912 = vrot.lane.b32.xlu0 %v3590, 24
      %v3913 = vpop.permute.xlu0 %3912
      %3946 = vrot.lane.b32.xlu0 %v3275, 32
      %v3947 = vpop.permute.xlu0 %3946
      %3948 = vrot.lane.b32.xlu0 %v3276, 32
      %v3949 = vpop.permute.xlu0 %3948
      %3950 = vrot.lane.b32.xlu0 %v3277, 32
      %v3951 = vpop.permute.xlu0 %3950
      %3952 = vrot.lane.b32.xlu0 %v3278, 32
      %v3953 = vpop.permute.xlu0 %3952
      %3954 = vrot.lane.b32.xlu0 %v3279, 32
      %v3955 = vpop.permute.xlu0 %3954
      %3956 = vrot.lane.b32.xlu0 %v3280, 32
      %v3957 = vpop.permute.xlu0 %3956
      %3958 = vrot.lane.b32.xlu0 %v3281, 32
      %v3959 = vpop.permute.xlu0 %3958
      %3960 = vrot.lane.b32.xlu0 %v3282, 32
      %v3961 = vpop.permute.xlu0 %3960
      %3962 = vrot.lane.b32.xlu0 %v3283, 32
      %v3963 = vpop.permute.xlu0 %3962
      %3964 = vrot.lane.b32.xlu0 %v3284, 32
      %v3965 = vpop.permute.xlu0 %3964
      %3966 = vrot.lane.b32.xlu0 %v3285, 32
      %v3967 = vpop.permute.xlu0 %3966
      %3968 = vrot.lane.b32.xlu0 %v3286, 32
      %v3969 = vpop.permute.xlu0 %3968
      %3970 = vrot.lane.b32.xlu0 %v3287, 32
      %v3971 = vpop.permute.xlu0 %3970
      %3972 = vrot.lane.b32.xlu0 %v3288, 32
      %v3973 = vpop.permute.xlu0 %3972
      %3974 = vrot.lane.b32.xlu0 %v3289, 32
      %v3975 = vpop.permute.xlu0 %3974
      %3976 = vrot.lane.b32.xlu0 %v3290, 32
      %v3977 = vpop.permute.xlu0 %3976
      %3978 = vrot.lane.b32.xlu0 %v3291, 32
      %v3979 = vpop.permute.xlu0 %3978
      %3980 = vrot.lane.b32.xlu0 %v3292, 32
      %v3981 = vpop.permute.xlu0 %3980
      %3982 = vrot.lane.b32.xlu0 %v3293, 32
      %v3983 = vpop.permute.xlu0 %3982
      %3984 = vrot.lane.b32.xlu0 %v3294, 32
      %v3985 = vpop.permute.xlu0 %3984
      %3986 = vrot.lane.b32.xlu0 %v3295, 32
      %v3987 = vpop.permute.xlu0 %3986
      %3988 = vrot.lane.b32.xlu0 %v3296, 32
      %v3989 = vpop.permute.xlu0 %3988
      %3990 = vrot.lane.b32.xlu0 %v3297, 32
      %v3991 = vpop.permute.xlu0 %3990
      %3992 = vrot.lane.b32.xlu0 %v3298, 32
      %v3993 = vpop.permute.xlu0 %3992
      %3994 = vrot.lane.b32.xlu0 %v3299, 32
      %v3995 = vpop.permute.xlu0 %3994
      %3996 = vrot.lane.b32.xlu0 %v3300, 32
      %v3997 = vpop.permute.xlu0 %3996
      %3998 = vrot.lane.b32.xlu0 %v3301, 32
      %v3999 = vpop.permute.xlu0 %3998
      %4000 = vrot.lane.b32.xlu0 %v3302, 32
      %v4001 = vpop.permute.xlu0 %4000
      %4002 = vrot.lane.b32.xlu0 %v3303, 32
      %v4003 = vpop.permute.xlu0 %4002
      %4004 = vrot.lane.b32.xlu0 %v3304, 32
      %v4005 = vpop.permute.xlu0 %4004
      %4006 = vrot.lane.b32.xlu0 %v3305, 32
      %v4007 = vpop.permute.xlu0 %4006
      %4008 = vrot.lane.b32.xlu0 %v3306, 32
      %v4009 = vpop.permute.xlu0 %4008
      %4044 = vrot.lane.b32.xlu0 %v3552, 40
      %v4045 = vpop.permute.xlu0 %4044
      %4046 = vrot.lane.b32.xlu0 %v3553, 40
      %v4047 = vpop.permute.xlu0 %4046
      %4048 = vrot.lane.b32.xlu0 %v3554, 40
      %v4049 = vpop.permute.xlu0 %4048
      %4050 = vrot.lane.b32.xlu0 %v3555, 40
      %v4051 = vpop.permute.xlu0 %4050
      %4052 = vrot.lane.b32.xlu0 %v3556, 40
      %v4053 = vpop.permute.xlu0 %4052
      %4054 = vrot.lane.b32.xlu0 %v3557, 40
      %v4055 = vpop.permute.xlu0 %4054
      %4056 = vrot.lane.b32.xlu0 %v3558, 40
      %v4057 = vpop.permute.xlu0 %4056
      %4058 = vrot.lane.b32.xlu0 %v3559, 40
      %v4059 = vpop.permute.xlu0 %4058
      %4060 = vrot.lane.b32.xlu0 %v3560, 40
      %v4061 = vpop.permute.xlu0 %4060
      %4062 = vrot.lane.b32.xlu0 %v3561, 40
      %v4063 = vpop.permute.xlu0 %4062
      %4064 = vrot.lane.b32.xlu0 %v3562, 40
      %v4065 = vpop.permute.xlu0 %4064
      %4066 = vrot.lane.b32.xlu0 %v3563, 40
      %v4067 = vpop.permute.xlu0 %4066
      %4068 = vrot.lane.b32.xlu0 %v3564, 40
      %v4069 = vpop.permute.xlu0 %4068
      %4070 = vrot.lane.b32.xlu0 %v3565, 40
      %v4071 = vpop.permute.xlu0 %4070
      %4072 = vrot.lane.b32.xlu0 %v3566, 40
      %v4073 = vpop.permute.xlu0 %4072
      %4074 = vrot.lane.b32.xlu0 %v3567, 40
      %v4075 = vpop.permute.xlu0 %4074
      %4076 = vrot.lane.b32.xlu0 %v3568, 40
      %v4077 = vpop.permute.xlu0 %4076
      %4078 = vrot.lane.b32.xlu0 %v3569, 40
      %v4079 = vpop.permute.xlu0 %4078
      %4080 = vrot.lane.b32.xlu0 %v3570, 40
      %v4081 = vpop.permute.xlu0 %4080
      %4082 = vrot.lane.b32.xlu0 %v3571, 40
      %v4083 = vpop.permute.xlu0 %4082
      %4084 = vrot.lane.b32.xlu0 %v3572, 40
      %v4085 = vpop.permute.xlu0 %4084
      %4086 = vrot.lane.b32.xlu0 %v3573, 40
      %v4087 = vpop.permute.xlu0 %4086
      %4088 = vrot.lane.b32.xlu0 %v3574, 40
      %v4089 = vpop.permute.xlu0 %4088
      %4090 = vrot.lane.b32.xlu0 %v3575, 40
      %v4091 = vpop.permute.xlu0 %4090
      %4092 = vrot.lane.b32.xlu0 %v3576, 40
      %v4093 = vpop.permute.xlu0 %4092
      %4094 = vrot.lane.b32.xlu0 %v3577, 40
      %v4095 = vpop.permute.xlu0 %4094
      %4096 = vrot.lane.b32.xlu0 %v3578, 40
      %v4097 = vpop.permute.xlu0 %4096
      %4098 = vrot.lane.b32.xlu0 %v3579, 40
      %v4099 = vpop.permute.xlu0 %4098
      %4100 = vrot.lane.b32.xlu0 %v3580, 40
      %v4101 = vpop.permute.xlu0 %4100
      %4102 = vrot.lane.b32.xlu0 %v3581, 40
      %v4103 = vpop.permute.xlu0 %4102
      %4104 = vrot.lane.b32.xlu0 %v3596, 40
      %v4105 = vpop.permute.xlu0 %4104
      %4106 = vrot.lane.b32.xlu0 %v3597, 40
      %v4107 = vpop.permute.xlu0 %4106
      %4141 = vrot.lane.b32.xlu0 %v3429, 48
      %v4142 = vpop.permute.xlu0 %4141
      %4143 = vrot.lane.b32.xlu0 %v3430, 48
      %v4144 = vpop.permute.xlu0 %4143
      %4145 = vrot.lane.b32.xlu0 %v3431, 48
      %v4146 = vpop.permute.xlu0 %4145
      %4147 = vrot.lane.b32.xlu0 %v3432, 48
      %v4148 = vpop.permute.xlu0 %4147
      %4149 = vrot.lane.b32.xlu0 %v3433, 48
      %v4150 = vpop.permute.xlu0 %4149
      %4151 = vrot.lane.b32.xlu0 %v3434, 48
      %v4152 = vpop.permute.xlu0 %4151
      %4153 = vrot.lane.b32.xlu0 %v3435, 48
      %v4154 = vpop.permute.xlu0 %4153
      %4155 = vrot.lane.b32.xlu0 %v3436, 48
      %v4156 = vpop.permute.xlu0 %4155
      %4157 = vrot.lane.b32.xlu0 %v3437, 48
      %v4158 = vpop.permute.xlu0 %4157
      %4159 = vrot.lane.b32.xlu0 %v3438, 48
      %v4160 = vpop.permute.xlu0 %4159
      %4161 = vrot.lane.b32.xlu0 %v3439, 48
      %v4162 = vpop.permute.xlu0 %4161
      %4163 = vrot.lane.b32.xlu0 %v3440, 48
      %v4164 = vpop.permute.xlu0 %4163
      %4165 = vrot.lane.b32.xlu0 %v3441, 48
      %v4166 = vpop.permute.xlu0 %4165
      %4167 = vrot.lane.b32.xlu0 %v3442, 48
      %v4168 = vpop.permute.xlu0 %4167
      %4169 = vrot.lane.b32.xlu0 %v3443, 48
      %v4170 = vpop.permute.xlu0 %4169
      %4171 = vrot.lane.b32.xlu0 %v3444, 48
      %v4172 = vpop.permute.xlu0 %4171
      %4173 = vrot.lane.b32.xlu0 %v3445, 48
      %v4174 = vpop.permute.xlu0 %4173
      %4175 = vrot.lane.b32.xlu0 %v3446, 48
      %v4176 = vpop.permute.xlu0 %4175
      %4177 = vrot.lane.b32.xlu0 %v3447, 48
      %v4178 = vpop.permute.xlu0 %4177
      %4179 = vrot.lane.b32.xlu0 %v3448, 48
      %v4180 = vpop.permute.xlu0 %4179
      %4181 = vrot.lane.b32.xlu0 %v3449, 48
      %v4182 = vpop.permute.xlu0 %4181
      %4183 = vrot.lane.b32.xlu0 %v3450, 48
      %v4184 = vpop.permute.xlu0 %4183
      %4185 = vrot.lane.b32.xlu0 %v3451, 48
      %v4186 = vpop.permute.xlu0 %4185
      %4187 = vrot.lane.b32.xlu0 %v3452, 48
      %v4188 = vpop.permute.xlu0 %4187
      %4189 = vrot.lane.b32.xlu0 %v3453, 48
      %v4190 = vpop.permute.xlu0 %4189
      %4191 = vrot.lane.b32.xlu0 %v3454, 48
      %v4192 = vpop.permute.xlu0 %4191
      %4193 = vrot.lane.b32.xlu0 %v3455, 48
      %v4194 = vpop.permute.xlu0 %4193
      %4195 = vrot.lane.b32.xlu0 %v3456, 48
      %v4196 = vpop.permute.xlu0 %4195
      %4197 = vrot.lane.b32.xlu0 %v3589, 48
      %v4198 = vpop.permute.xlu0 %4197
      %4199 = vrot.lane.b32.xlu0 %v3590, 48
      %v4200 = vpop.permute.xlu0 %4199
      %4201 = vrot.lane.b32.xlu0 %v3600, 48
      %v4202 = vpop.permute.xlu0 %4201
      %4203 = vrot.lane.b32.xlu0 0.0, 48
      %v4204 = vpop.permute.xlu0 %4203
      %4237 = vrot.lane.b32.xlu0 %v3277, 56
      %v4238 = vpop.permute.xlu0 %4237
      %4239 = vrot.lane.b32.xlu0 %v3278, 56
      %v4240 = vpop.permute.xlu0 %4239
      %4241 = vrot.lane.b32.xlu0 %v3279, 56
      %v4242 = vpop.permute.xlu0 %4241
      %4243 = vrot.lane.b32.xlu0 %v3280, 56
      %v4244 = vpop.permute.xlu0 %4243
      %4245 = vrot.lane.b32.xlu0 %v3281, 56
      %v4246 = vpop.permute.xlu0 %4245
      %4247 = vrot.lane.b32.xlu0 %v3282, 56
      %v4248 = vpop.permute.xlu0 %4247
      %4249 = vrot.lane.b32.xlu0 %v3283, 56
      %v4250 = vpop.permute.xlu0 %4249
      %4251 = vrot.lane.b32.xlu0 %v3284, 56
      %v4252 = vpop.permute.xlu0 %4251
      %4253 = vrot.lane.b32.xlu0 %v3285, 56
      %v4254 = vpop.permute.xlu0 %4253
      %4255 = vrot.lane.b32.xlu0 %v3286, 56
      %v4256 = vpop.permute.xlu0 %4255
      %4257 = vrot.lane.b32.xlu0 %v3287, 56
      %v4258 = vpop.permute.xlu0 %4257
      %4259 = vrot.lane.b32.xlu0 %v3288, 56
      %v4260 = vpop.permute.xlu0 %4259
      %4261 = vrot.lane.b32.xlu0 %v3289, 56
      %v4262 = vpop.permute.xlu0 %4261
      %4263 = vrot.lane.b32.xlu0 %v3290, 56
      %v4264 = vpop.permute.xlu0 %4263
      %4265 = vrot.lane.b32.xlu0 %v3291, 56
      %v4266 = vpop.permute.xlu0 %4265
      %4267 = vrot.lane.b32.xlu0 %v3292, 56
      %v4268 = vpop.permute.xlu0 %4267
      %4269 = vrot.lane.b32.xlu0 %v3293, 56
      %v4270 = vpop.permute.xlu0 %4269
      %4271 = vrot.lane.b32.xlu0 %v3294, 56
      %v4272 = vpop.permute.xlu0 %4271
      %4273 = vrot.lane.b32.xlu0 %v3295, 56
      %v4274 = vpop.permute.xlu0 %4273
      %4275 = vrot.lane.b32.xlu0 %v3296, 56
      %v4276 = vpop.permute.xlu0 %4275
      %4277 = vrot.lane.b32.xlu0 %v3297, 56
      %v4278 = vpop.permute.xlu0 %4277
      %4279 = vrot.lane.b32.xlu0 %v3298, 56
      %v4280 = vpop.permute.xlu0 %4279
      %4281 = vrot.lane.b32.xlu0 %v3299, 56
      %v4282 = vpop.permute.xlu0 %4281
      %4283 = vrot.lane.b32.xlu0 %v3300, 56
      %v4284 = vpop.permute.xlu0 %4283
      %4285 = vrot.lane.b32.xlu0 %v3301, 56
      %v4286 = vpop.permute.xlu0 %4285
      %4287 = vrot.lane.b32.xlu0 %v3302, 56
      %v4288 = vpop.permute.xlu0 %4287
      %4289 = vrot.lane.b32.xlu0 %v3303, 56
      %v4290 = vpop.permute.xlu0 %4289
      %4291 = vrot.lane.b32.xlu0 %v3304, 56
      %v4292 = vpop.permute.xlu0 %4291
      %4293 = vrot.lane.b32.xlu0 %v3305, 56
      %v4294 = vpop.permute.xlu0 %4293
      %4295 = vrot.lane.b32.xlu0 %v3306, 56
      %v4296 = vpop.permute.xlu0 %4295
      %4297 = vrot.lane.b32.xlu0 0.0, 56
      %v4298 = vpop.permute.xlu0 %4297
      %4330 = vrot.lane.b32.xlu0 %v3554, 64
      %v4331 = vpop.permute.xlu0 %4330
      %4332 = vrot.lane.b32.xlu0 %v3555, 64
      %v4333 = vpop.permute.xlu0 %4332
      %4334 = vrot.lane.b32.xlu0 %v3556, 64
      %v4335 = vpop.permute.xlu0 %4334
      %4336 = vrot.lane.b32.xlu0 %v3557, 64
      %v4337 = vpop.permute.xlu0 %4336
      %4338 = vrot.lane.b32.xlu0 %v3558, 64
      %v4339 = vpop.permute.xlu0 %4338
      %4340 = vrot.lane.b32.xlu0 %v3559, 64
      %v4341 = vpop.permute.xlu0 %4340
      %4342 = vrot.lane.b32.xlu0 %v3560, 64
      %v4343 = vpop.permute.xlu0 %4342
      %4344 = vrot.lane.b32.xlu0 %v3561, 64
      %v4345 = vpop.permute.xlu0 %4344
      %4346 = vrot.lane.b32.xlu0 %v3562, 64
      %v4347 = vpop.permute.xlu0 %4346
      %4348 = vrot.lane.b32.xlu0 %v3563, 64
      %v4349 = vpop.permute.xlu0 %4348
      %4350 = vrot.lane.b32.xlu0 %v3564, 64
      %v4351 = vpop.permute.xlu0 %4350
      %4352 = vrot.lane.b32.xlu0 %v3565, 64
      %v4353 = vpop.permute.xlu0 %4352
      %4354 = vrot.lane.b32.xlu0 %v3566, 64
      %v4355 = vpop.permute.xlu0 %4354
      %4356 = vrot.lane.b32.xlu0 %v3567, 64
      %v4357 = vpop.permute.xlu0 %4356
      %4358 = vrot.lane.b32.xlu0 %v3568, 64
      %v4359 = vpop.permute.xlu0 %4358
      %4360 = vrot.lane.b32.xlu0 %v3569, 64
      %v4361 = vpop.permute.xlu0 %4360
      %4362 = vrot.lane.b32.xlu0 %v3570, 64
      %v4363 = vpop.permute.xlu0 %4362
      %4364 = vrot.lane.b32.xlu0 %v3571, 64
      %v4365 = vpop.permute.xlu0 %4364
      %4366 = vrot.lane.b32.xlu0 %v3572, 64
      %v4367 = vpop.permute.xlu0 %4366
      %4368 = vrot.lane.b32.xlu0 %v3573, 64
      %v4369 = vpop.permute.xlu0 %4368
      %4370 = vrot.lane.b32.xlu0 %v3574, 64
      %v4371 = vpop.permute.xlu0 %4370
      %4372 = vrot.lane.b32.xlu0 %v3575, 64
      %v4373 = vpop.permute.xlu0 %4372
      %4374 = vrot.lane.b32.xlu0 %v3576, 64
      %v4375 = vpop.permute.xlu0 %4374
      %4376 = vrot.lane.b32.xlu0 %v3577, 64
      %v4377 = vpop.permute.xlu0 %4376
      %4378 = vrot.lane.b32.xlu0 %v3578, 64
      %v4379 = vpop.permute.xlu0 %4378
      %4380 = vrot.lane.b32.xlu0 %v3579, 64
      %v4381 = vpop.permute.xlu0 %4380
      %4382 = vrot.lane.b32.xlu0 %v3580, 64
      %v4383 = vpop.permute.xlu0 %4382
      %4384 = vrot.lane.b32.xlu0 %v3581, 64
      %v4385 = vpop.permute.xlu0 %4384
      %4386 = vrot.lane.b32.xlu0 %v3596, 64
      %v4387 = vpop.permute.xlu0 %4386
      %4388 = vrot.lane.b32.xlu0 %v3597, 64
      %v4389 = vpop.permute.xlu0 %4388
      %4390 = vrot.lane.b32.xlu0 0.0, 64
      %v4391 = vpop.permute.xlu0 %4390
      %vm4423 = vcmask 64512
      %v4424 = vsel %vm4423, 0.0, %v3602
      %v4425 = vsel %vm4423, %v3427, %v3604
      %v4426 = vsel %vm4423, %v3428, %v3606
      %v4427 = vsel %vm4423, %v3429, %v3608
      %v4428 = vsel %vm4423, %v3430, %v3610
      %v4429 = vsel %vm4423, %v3431, %v3612
      %v4430 = vsel %vm4423, %v3432, %v3614
      %v4431 = vsel %vm4423, %v3433, %v3616
      %v4432 = vsel %vm4423, %v3434, %v3618
      %v4433 = vsel %vm4423, %v3435, %v3620
      %v4434 = vsel %vm4423, %v3436, %v3622
      %v4435 = vsel %vm4423, %v3437, %v3624
      %v4436 = vsel %vm4423, %v3438, %v3626
      %v4437 = vsel %vm4423, %v3439, %v3628
      %v4438 = vsel %vm4423, %v3440, %v3630
      %v4439 = vsel %vm4423, %v3441, %v3632
      %v4440 = vsel %vm4423, %v3442, %v3634
      %v4441 = vsel %vm4423, %v3443, %v3636
      %v4442 = vsel %vm4423, %v3444, %v3638
      %v4443 = vsel %vm4423, %v3445, %v3640
      %v4444 = vsel %vm4423, %v3446, %v3642
      %v4445 = vsel %vm4423, %v3447, %v3644
      %v4446 = vsel %vm4423, %v3448, %v3646
      %v4447 = vsel %vm4423, %v3449, %v3648
      %v4448 = vsel %vm4423, %v3450, %v3650
      %v4449 = vsel %vm4423, %v3451, %v3652
      %v4450 = vsel %vm4423, %v3452, %v3654
      %v4451 = vsel %vm4423, %v3453, %v3656
      %v4452 = vsel %vm4423, %v3454, %v3658
      %v4453 = vsel %vm4423, %v3455, %v3660
      %v4454 = vsel %vm4423, %v3456, %v3662
      %v4455 = vsel %vm848, %v4424, %v1363
      %v4456 = vsel %vm848, %v4424, %v3726
      %v4457 = vsel %vm848, %v4425, %v3728
      %v4458 = vsel %vm848, %v4426, %v3730
      %v4459 = vsel %vm848, %v4427, %v3732
      %v4460 = vsel %vm848, %v4428, %v3734
      %v4461 = vsel %vm848, %v4429, %v3736
      %v4462 = vsel %vm848, %v4430, %v3738
      %v4463 = vsel %vm848, %v4431, %v3740
      %v4464 = vsel %vm848, %v4432, %v3742
      %v4465 = vsel %vm848, %v4433, %v3744
      %v4466 = vsel %vm848, %v4434, %v3746
      %v4467 = vsel %vm848, %v4435, %v3748
      %v4468 = vsel %vm848, %v4436, %v3750
      %v4469 = vsel %vm848, %v4437, %v3752
      %v4470 = vsel %vm848, %v4438, %v3754
      %v4471 = vsel %vm848, %v4439, %v3756
      %v4472 = vsel %vm848, %v4440, %v3758
      %v4473 = vsel %vm848, %v4441, %v3760
      %v4474 = vsel %vm848, %v4442, %v3762
      %v4475 = vsel %vm848, %v4443, %v3764
      %v4476 = vsel %vm848, %v4444, %v3766
      %v4477 = vsel %vm848, %v4445, %v3768
      %v4478 = vsel %vm848, %v4446, %v3770
      %v4479 = vsel %vm848, %v4447, %v3772
      %v4480 = vsel %vm848, %v4448, %v3774
      %v4481 = vsel %vm848, %v4449, %v3776
      %v4482 = vsel %vm848, %v4450, %v3778
      %v4483 = vsel %vm848, %v4451, %v3780
      %v4484 = vsel %vm848, %v4452, %v3782
      %v4485 = vsel %vm848, %v4453, %v3784
      %v4486 = vsel %vm848, %v4454, %v3786
      %vm4487 = vcmask 195584
      %v4488 = vsel %vm4487, %v4455, %v3851
      %v4489 = vsel %vm4487, %v4456, %v3853
      %v4490 = vsel %vm4487, %v4457, %v3855
      %v4491 = vsel %vm4487, %v4458, %v3857
      %v4492 = vsel %vm4487, %v4459, %v3859
      %v4493 = vsel %vm4487, %v4460, %v3861
      %v4494 = vsel %vm4487, %v4461, %v3863
      %v4495 = vsel %vm4487, %v4462, %v3865
      %v4496 = vsel %vm4487, %v4463, %v3867
      %v4497 = vsel %vm4487, %v4464, %v3869
      %v4498 = vsel %vm4487, %v4465, %v3871
      %v4499 = vsel %vm4487, %v4466, %v3873
      %v4500 = vsel %vm4487, %v4467, %v3875
      %v4501 = vsel %vm4487, %v4468, %v3877
      %v4502 = vsel %vm4487, %v4469, %v3879
      %v4503 = vsel %vm4487, %v4470, %v3881
      %v4504 = vsel %vm4487, %v4471, %v3883
      %v4505 = vsel %vm4487, %v4472, %v3885
      %v4506 = vsel %vm4487, %v4473, %v3887
      %v4507 = vsel %vm4487, %v4474, %v3889
      %v4508 = vsel %vm4487, %v4475, %v3891
      %v4509 = vsel %vm4487, %v4476, %v3893
      %v4510 = vsel %vm4487, %v4477, %v3895
      %v4511 = vsel %vm4487, %v4478, %v3897
      %v4512 = vsel %vm4487, %v4479, %v3899
      %v4513 = vsel %vm4487, %v4480, %v3901
      %v4514 = vsel %vm4487, %v4481, %v3903
      %v4515 = vsel %vm4487, %v4482, %v3905
      %v4516 = vsel %vm4487, %v4483, %v3907
      %v4517 = vsel %vm4487, %v4484, %v3909
      %v4518 = vsel %vm4487, %v4485, %v3911
      %v4519 = vsel %vm4487, %v4486, %v3913
      %v4520 = vsel %vm2125, %v4488, %v3947
      %v4521 = vsel %vm2125, %v4489, %v3949
      %v4522 = vsel %vm2125, %v4490, %v3951
      %v4523 = vsel %vm2125, %v4491, %v3953
      %v4524 = vsel %vm2125, %v4492, %v3955
      %v4525 = vsel %vm2125, %v4493, %v3957
      %v4526 = vsel %vm2125, %v4494, %v3959
      %v4527 = vsel %vm2125, %v4495, %v3961
      %v4528 = vsel %vm2125, %v4496, %v3963
      %v4529 = vsel %vm2125, %v4497, %v3965
      %v4530 = vsel %vm2125, %v4498, %v3967
      %v4531 = vsel %vm2125, %v4499, %v3969
      %v4532 = vsel %vm2125, %v4500, %v3971
      %v4533 = vsel %vm2125, %v4501, %v3973
      %v4534 = vsel %vm2125, %v4502, %v3975
      %v4535 = vsel %vm2125, %v4503, %v3977
      %v4536 = vsel %vm2125, %v4504, %v3979
      %v4537 = vsel %vm2125, %v4505, %v3981
      %v4538 = vsel %vm2125, %v4506, %v3983
      %v4539 = vsel %vm2125, %v4507, %v3985
      %v4540 = vsel %vm2125, %v4508, %v3987
      %v4541 = vsel %vm2125, %v4509, %v3989
      %v4542 = vsel %vm2125, %v4510, %v3991
      %v4543 = vsel %vm2125, %v4511, %v3993
      %v4544 = vsel %vm2125, %v4512, %v3995
      %v4545 = vsel %vm2125, %v4513, %v3997
      %v4546 = vsel %vm2125, %v4514, %v3999
      %v4547 = vsel %vm2125, %v4515, %v4001
      %v4548 = vsel %vm2125, %v4516, %v4003
      %v4549 = vsel %vm2125, %v4517, %v4005
      %v4550 = vsel %vm2125, %v4518, %v4007
      %v4551 = vsel %vm2125, %v4519, %v4009
      %vm4552 = vcmask 326656
      %v4553 = vsel %vm4552, %v4520, %v4045
      %v4554 = vsel %vm4552, %v4521, %v4047
      %v4555 = vsel %vm4552, %v4522, %v4049
      %v4556 = vsel %vm4552, %v4523, %v4051
      %v4557 = vsel %vm4552, %v4524, %v4053
      %v4558 = vsel %vm4552, %v4525, %v4055
      %v4559 = vsel %vm4552, %v4526, %v4057
      %v4560 = vsel %vm4552, %v4527, %v4059
      %v4561 = vsel %vm4552, %v4528, %v4061
      %v4562 = vsel %vm4552, %v4529, %v4063
      %v4563 = vsel %vm4552, %v4530, %v4065
      %v4564 = vsel %vm4552, %v4531, %v4067
      %v4565 = vsel %vm4552, %v4532, %v4069
      %v4566 = vsel %vm4552, %v4533, %v4071
      %v4567 = vsel %vm4552, %v4534, %v4073
      %v4568 = vsel %vm4552, %v4535, %v4075
      %v4569 = vsel %vm4552, %v4536, %v4077
      %v4570 = vsel %vm4552, %v4537, %v4079
      %v4571 = vsel %vm4552, %v4538, %v4081
      %v4572 = vsel %vm4552, %v4539, %v4083
      %v4573 = vsel %vm4552, %v4540, %v4085
      %v4574 = vsel %vm4552, %v4541, %v4087
      %v4575 = vsel %vm4552, %v4542, %v4089
      %v4576 = vsel %vm4552, %v4543, %v4091
      %v4577 = vsel %vm4552, %v4544, %v4093
      %v4578 = vsel %vm4552, %v4545, %v4095
      %v4579 = vsel %vm4552, %v4546, %v4097
      %v4580 = vsel %vm4552, %v4547, %v4099
      %v4581 = vsel %vm4552, %v4548, %v4101
      %v4582 = vsel %vm4552, %v4549, %v4103
      %v4583 = vsel %vm4552, %v4550, %v4105
      %v4584 = vsel %vm4552, %v4551, %v4107
      %v4585 = vsel %vm2158, %v4553, %v4142
      %v4586 = vsel %vm2158, %v4554, %v4144
      %v4587 = vsel %vm2158, %v4555, %v4146
      %v4588 = vsel %vm2158, %v4556, %v4148
      %v4589 = vsel %vm2158, %v4557, %v4150
      %v4590 = vsel %vm2158, %v4558, %v4152
      %v4591 = vsel %vm2158, %v4559, %v4154
      %v4592 = vsel %vm2158, %v4560, %v4156
      %v4593 = vsel %vm2158, %v4561, %v4158
      %v4594 = vsel %vm2158, %v4562, %v4160
      %v4595 = vsel %vm2158, %v4563, %v4162
      %v4596 = vsel %vm2158, %v4564, %v4164
      %v4597 = vsel %vm2158, %v4565, %v4166
      %v4598 = vsel %vm2158, %v4566, %v4168
      %v4599 = vsel %vm2158, %v4567, %v4170
      %v4600 = vsel %vm2158, %v4568, %v4172
      %v4601 = vsel %vm2158, %v4569, %v4174
      %v4602 = vsel %vm2158, %v4570, %v4176
      %v4603 = vsel %vm2158, %v4571, %v4178
      %v4604 = vsel %vm2158, %v4572, %v4180
      %v4605 = vsel %vm2158, %v4573, %v4182
      %v4606 = vsel %vm2158, %v4574, %v4184
      %v4607 = vsel %vm2158, %v4575, %v4186
      %v4608 = vsel %vm2158, %v4576, %v4188
      %v4609 = vsel %vm2158, %v4577, %v4190
      %v4610 = vsel %vm2158, %v4578, %v4192
      %v4611 = vsel %vm2158, %v4579, %v4194
      %v4612 = vsel %vm2158, %v4580, %v4196
      %v4613 = vsel %vm2158, %v4581, %v4198
      %v4614 = vsel %vm2158, %v4582, %v4200
      %v4615 = vsel %vm2158, %v4583, %v4202
      %v4616 = vsel %vm2158, %v4584, %v4204
      %vm4617 = vcmask 457728
      %v4618 = vsel %vm4617, %v4585, %v4238
      %v4619 = vsel %vm4617, %v4586, %v4240
      %v4620 = vsel %vm4617, %v4587, %v4242
      %v4621 = vsel %vm4617, %v4588, %v4244
      %v4622 = vsel %vm4617, %v4589, %v4246
      %v4623 = vsel %vm4617, %v4590, %v4248
      %v4624 = vsel %vm4617, %v4591, %v4250
      %v4625 = vsel %vm4617, %v4592, %v4252
      %v4626 = vsel %vm4617, %v4593, %v4254
      %v4627 = vsel %vm4617, %v4594, %v4256
      %v4628 = vsel %vm4617, %v4595, %v4258
      %v4629 = vsel %vm4617, %v4596, %v4260
      %v4630 = vsel %vm4617, %v4597, %v4262
      %v4631 = vsel %vm4617, %v4598, %v4264
      %v4632 = vsel %vm4617, %v4599, %v4266
      %v4633 = vsel %vm4617, %v4600, %v4268
      %v4634 = vsel %vm4617, %v4601, %v4270
      %v4635 = vsel %vm4617, %v4602, %v4272
      %v4636 = vsel %vm4617, %v4603, %v4274
      %v4637 = vsel %vm4617, %v4604, %v4276
      %v4638 = vsel %vm4617, %v4605, %v4278
      %v4639 = vsel %vm4617, %v4606, %v4280
      %v4640 = vsel %vm4617, %v4607, %v4282
      %v4641 = vsel %vm4617, %v4608, %v4284
      %v4642 = vsel %vm4617, %v4609, %v4286
      %v4643 = vsel %vm4617, %v4610, %v4288
      %v4644 = vsel %vm4617, %v4611, %v4290
      %v4645 = vsel %vm4617, %v4612, %v4292
      %v4646 = vsel %vm4617, %v4613, %v4294
      %v4647 = vsel %vm4617, %v4614, %v4296
      %v4648 = vsel %vm4617, %v4615, %v4298
      %v4649 = vsel %vm4617, %v4616, %v4298
      %v4650 = vsel %vm502, %v4618, %v4331
      %v4651 = vsel %vm502, %v4619, %v4333
      %v4652 = vsel %vm502, %v4620, %v4335
      %v4653 = vsel %vm502, %v4621, %v4337
      %v4654 = vsel %vm502, %v4622, %v4339
      %v4655 = vsel %vm502, %v4623, %v4341
      %v4656 = vsel %vm502, %v4624, %v4343
      %v4657 = vsel %vm502, %v4625, %v4345
      %v4658 = vsel %vm502, %v4626, %v4347
      %v4659 = vsel %vm502, %v4627, %v4349
      %v4660 = vsel %vm502, %v4628, %v4351
      %v4661 = vsel %vm502, %v4629, %v4353
      %v4662 = vsel %vm502, %v4630, %v4355
      %v4663 = vsel %vm502, %v4631, %v4357
      %v4664 = vsel %vm502, %v4632, %v4359
      %v4665 = vsel %vm502, %v4633, %v4361
      %v4666 = vsel %vm502, %v4634, %v4363
      %v4667 = vsel %vm502, %v4635, %v4365
      %v4668 = vsel %vm502, %v4636, %v4367
      %v4669 = vsel %vm502, %v4637, %v4369
      %v4670 = vsel %vm502, %v4638, %v4371
      %v4671 = vsel %vm502, %v4639, %v4373
      %v4672 = vsel %vm502, %v4640, %v4375
      %v4673 = vsel %vm502, %v4641, %v4377
      %v4674 = vsel %vm502, %v4642, %v4379
      %v4675 = vsel %vm502, %v4643, %v4381
      %v4676 = vsel %vm502, %v4644, %v4383
      %v4677 = vsel %vm502, %v4645, %v4385
      %v4678 = vsel %vm502, %v4646, %v4387
      %v4679 = vsel %vm502, %v4647, %v4389
      %v4680 = vsel %vm502, %v4648, %v4391
      %v4681 = vsel %vm502, %v4649, %v4391
      %v4682 = vpack.c.bf16 %v4651, %v4650
      %v4683 = vpack.c.bf16 %v4653, %v4652
      %v4684 = vpack.c.bf16 %v4655, %v4654
      %v4685 = vpack.c.bf16 %v4657, %v4656
      %v4686 = vpack.c.bf16 %v4659, %v4658
      %v4687 = vpack.c.bf16 %v4661, %v4660
      %v4688 = vpack.c.bf16 %v4663, %v4662
      %v4689 = vpack.c.bf16 %v4665, %v4664
      %v4690 = vpack.c.bf16 %v4667, %v4666
      %v4691 = vpack.c.bf16 %v4669, %v4668
      %v4692 = vpack.c.bf16 %v4671, %v4670
      %v4693 = vpack.c.bf16 %v4673, %v4672
      %v4694 = vpack.c.bf16 %v4675, %v4674
      %v4695 = vpack.c.bf16 %v4677, %v4676
      %v4696 = vpack.c.bf16 %v4679, %v4678
      %v4697 = vpack.c.bf16 %v4681, %v4680
      %v4698 = vld [vmem:[%s6] sm:$0xf]
      %v4699 = vld [vmem:[%s6 + $0x4] sm:$0xf]
      %v4700 = vld [vmem:[%s6 + $0x8] sm:$0xf]
      %v4701 = vld [vmem:[%s6 + $0xc] sm:$0xf]
      %v4702 = vld [vmem:[%s6 + $0x10] sm:$0xf]
      %v4703 = vld [vmem:[%s6 + $0x14] sm:$0xf]
      %v4704 = vld [vmem:[%s6 + $0x18] sm:$0xf]
      %v4705 = vld [vmem:[%s6 + $0x1c] sm:$0xf]
      %v4706 = vld [vmem:[%s6 + $0x20] sm:$0xf]
      %v4707 = vld [vmem:[%s7] sm:$0x1]
      %v4709 = vlaneseq
      %v4710 = vshrl.u32 %v4709, 7
      %v4711 = vsub.s32 0, %v4710
      %v4712 = vrot.slane %v4707, %v4711
      %v4723 = vunpack.c.l.b16 %v4698
      %v4724 = vunpack.c.l.b16 %v4699
      %v4725 = vunpack.c.l.b16 %v4700
      %v4726 = vunpack.c.l.b16 %v4701
      %v4727 = vunpack.c.l.b16 %v4702
      %v4728 = vunpack.c.l.b16 %v4703
      %v4729 = vunpack.c.l.b16 %v4704
      %v4730 = vunpack.c.l.b16 %v4705
      %v4731 = vunpack.c.l.b16 %v4706
      %v4732 = vpack.c.b16 %v4724, %v4723
      %v4733 = vpack.c.b16 %v4726, %v4725
      %v4734 = vpack.c.b16 %v4728, %v4727
      %v4735 = vpack.c.b16 %v4730, %v4729
      %v4736 = vpack.c.b16 %v4731, %v4731
      %vm4741 = vcmask 588800
      %v4743 = vsel %vm4741, %v4682, 0
      %v4746 = vsel %vm4741, %v4683, 0
      %v4749 = vsel %vm4741, %v4684, 0
      %v4752 = vsel %vm4741, %v4685, 0
      %v4755 = vsel %vm4741, %v4686, 0
      %v4758 = vsel %vm4741, %v4687, 0
      %v4761 = vsel %vm4741, %v4688, 0
      %v4764 = vsel %vm4741, %v4689, 0
      %v4767 = vsel %vm4741, %v4690, 0
      %v4770 = vsel %vm4741, %v4691, 0
      %v4773 = vsel %vm4741, %v4692, 0
      %v4776 = vsel %vm4741, %v4693, 0
      %v4779 = vsel %vm4741, %v4694, 0
      %v4782 = vsel %vm4741, %v4695, 0
      %v4785 = vsel %vm4741, %v4696, 0
      %v4788 = vsel %vm4741, %v4697, 0
      %vm4790 = vcmask 1043456
      %v4792 = vsel %vm4790, %v4736, 0
      %4794 = vmatprep.subr.bf16.mxu0 0
      %4795 = vmatpush1.bf16.msra.mxu0 0
      %4796 = vmatprep.subr.bf16.mxu0 0
      %4797 = vmatpush1.bf16.msra.mxu0 0
      %4798 = vmatprep.subr.bf16.mxu0 0
      %4799 = vmatpush1.bf16.msra.mxu0 0
      %4800 = vmatprep.subr.bf16.mxu0 0
      %4801 = vmatpush1.bf16.msra.mxu0 %v4792
      %4802 = vmatprep.subr.bf16.mxu0 0
      %4803 = vmatpush1.bf16.msra.mxu0 %v4735
      %4804 = vmatprep.subr.bf16.mxu0 0
      %4805 = vmatpush1.bf16.msra.mxu0 %v4734
      %4806 = vmatprep.subr.bf16.mxu0 0
      %4807 = vmatpush1.bf16.msra.mxu0 %v4733
      %4808 = vmatprep.subr.bf16.mxu0 0
      %4809 = vmatpush1.bf16.msra.mxu0 %v4732
      %4810 = vmatprep.subr.bf16.mxu0 0
      %4811 = vmatpush2.bf16.msra.mxu0 0
      %4812 = vmatprep.subr.bf16.mxu0 0
      %4813 = vmatpush2.bf16.msra.mxu0 0
      %4814 = vmatprep.subr.bf16.mxu0 0
      %4815 = vmatpush2.bf16.msra.mxu0 0
      %4816 = vmatprep.subr.bf16.mxu0 0
      %4817 = vmatpush2.bf16.msra.mxu0 0
      %4818 = vmatprep.subr.bf16.mxu0 0
      %4819 = vmatpush2.bf16.msra.mxu0 0
      %4820 = vmatprep.subr.bf16.mxu0 0
      %4821 = vmatpush2.bf16.msra.mxu0 0
      %4822 = vmatprep.subr.bf16.mxu0 0
      %4823 = vmatpush2.bf16.msra.mxu0 0
      %4824 = vmatprep.subr.bf16.mxu0 0
      %4825 = vmatpush2.bf16.msra.mxu0 0
      %4826 = vmatprep.mubr.bf16.mxu0 0
      %4827 = vmatmul.mubr.bf16.gmra.mxu0 %v4743
      %v4828 = vpop.f32.mrf.mxu0
      %v4829 = vadd.f32 %v4712, %v4828
      %v4830 = vpop.f32.mrf.mxu0
      %v4831 = vpop.f32.mrf.mxu0
      %v4832 = vadd.f32 %v4712, %v4831
      %v4833 = vpop.f32.mrf.mxu0
      %4834 = vmatprep.mubr.bf16.mxu0 0
      %4835 = vmatmul.mubr.bf16.gmra.mxu0 %v4746
      %v4836 = vpop.f32.mrf.mxu0
      %v4837 = vadd.f32 %v4712, %v4836
      %v4838 = vpop.f32.mrf.mxu0
      %v4839 = vpop.f32.mrf.mxu0
      %v4840 = vadd.f32 %v4712, %v4839
      %v4841 = vpop.f32.mrf.mxu0
      %4842 = vmatprep.mubr.bf16.mxu0 0
      %4843 = vmatmul.mubr.bf16.gmra.mxu0 %v4749
      %v4844 = vpop.f32.mrf.mxu0
      %v4845 = vadd.f32 %v4712, %v4844
      %v4846 = vpop.f32.mrf.mxu0
      %v4847 = vpop.f32.mrf.mxu0
      %v4848 = vadd.f32 %v4712, %v4847
      %v4849 = vpop.f32.mrf.mxu0
      %4850 = vmatprep.mubr.bf16.mxu0 0
      %4851 = vmatmul.mubr.bf16.gmra.mxu0 %v4752
      %v4852 = vpop.f32.mrf.mxu0
      %v4853 = vadd.f32 %v4712, %v4852
      %v4854 = vpop.f32.mrf.mxu0
      %v4855 = vpop.f32.mrf.mxu0
      %v4856 = vadd.f32 %v4712, %v4855
      %v4857 = vpop.f32.mrf.mxu0
      %4858 = vmatprep.mubr.bf16.mxu0 0
      %4859 = vmatmul.mubr.bf16.gmra.mxu0 %v4755
      %v4860 = vpop.f32.mrf.mxu0
      %v4861 = vadd.f32 %v4712, %v4860
      %v4862 = vpop.f32.mrf.mxu0
      %v4863 = vpop.f32.mrf.mxu0
      %v4864 = vadd.f32 %v4712, %v4863
      %v4865 = vpop.f32.mrf.mxu0
      %4866 = vmatprep.mubr.bf16.mxu0 0
      %4867 = vmatmul.mubr.bf16.gmra.mxu0 %v4758
      %v4868 = vpop.f32.mrf.mxu0
      %v4869 = vadd.f32 %v4712, %v4868
      %v4870 = vpop.f32.mrf.mxu0
      %v4871 = vpop.f32.mrf.mxu0
      %v4872 = vadd.f32 %v4712, %v4871
      %v4873 = vpop.f32.mrf.mxu0
      %4874 = vmatprep.mubr.bf16.mxu0 0
      %4875 = vmatmul.mubr.bf16.gmra.mxu0 %v4761
      %v4876 = vpop.f32.mrf.mxu0
      %v4877 = vadd.f32 %v4712, %v4876
      %v4878 = vpop.f32.mrf.mxu0
      %v4879 = vpop.f32.mrf.mxu0
      %v4880 = vadd.f32 %v4712, %v4879
      %v4881 = vpop.f32.mrf.mxu0
      %4882 = vmatprep.mubr.bf16.mxu0 0
      %4883 = vmatmul.mubr.bf16.gmra.mxu0 %v4764
      %v4884 = vpop.f32.mrf.mxu0
      %v4885 = vadd.f32 %v4712, %v4884
      %v4886 = vpop.f32.mrf.mxu0
      %v4887 = vpop.f32.mrf.mxu0
      %v4888 = vadd.f32 %v4712, %v4887
      %v4889 = vpop.f32.mrf.mxu0
      %4890 = vmatprep.mubr.bf16.mxu0 0
      %4891 = vmatmul.mubr.bf16.gmra.mxu0 %v4767
      %v4892 = vpop.f32.mrf.mxu0
      %v4893 = vadd.f32 %v4712, %v4892
      %v4894 = vpop.f32.mrf.mxu0
      %v4895 = vpop.f32.mrf.mxu0
      %v4896 = vadd.f32 %v4712, %v4895
      %v4897 = vpop.f32.mrf.mxu0
      %4898 = vmatprep.mubr.bf16.mxu0 0
      %4899 = vmatmul.mubr.bf16.gmra.mxu0 %v4770
      %v4900 = vpop.f32.mrf.mxu0
      %v4901 = vadd.f32 %v4712, %v4900
      %v4902 = vpop.f32.mrf.mxu0
      %v4903 = vpop.f32.mrf.mxu0
      %v4904 = vadd.f32 %v4712, %v4903
      %v4905 = vpop.f32.mrf.mxu0
      %4906 = vmatprep.mubr.bf16.mxu0 0
      %4907 = vmatmul.mubr.bf16.gmra.mxu0 %v4773
      %v4908 = vpop.f32.mrf.mxu0
      %v4909 = vadd.f32 %v4712, %v4908
      %v4910 = vpop.f32.mrf.mxu0
      %v4911 = vpop.f32.mrf.mxu0
      %v4912 = vadd.f32 %v4712, %v4911
      %v4913 = vpop.f32.mrf.mxu0
      %4914 = vmatprep.mubr.bf16.mxu0 0
      %4915 = vmatmul.mubr.bf16.gmra.mxu0 %v4776
      %v4916 = vpop.f32.mrf.mxu0
      %v4917 = vadd.f32 %v4712, %v4916
      %v4918 = vpop.f32.mrf.mxu0
      %v4919 = vpop.f32.mrf.mxu0
      %v4920 = vadd.f32 %v4712, %v4919
      %v4921 = vpop.f32.mrf.mxu0
      %4922 = vmatprep.mubr.bf16.mxu0 0
      %4923 = vmatmul.mubr.bf16.gmra.mxu0 %v4779
      %v4924 = vpop.f32.mrf.mxu0
      %v4925 = vadd.f32 %v4712, %v4924
      %v4926 = vpop.f32.mrf.mxu0
      %v4927 = vpop.f32.mrf.mxu0
      %v4928 = vadd.f32 %v4712, %v4927
      %v4929 = vpop.f32.mrf.mxu0
      %4930 = vmatprep.mubr.bf16.mxu0 0
      %4931 = vmatmul.mubr.bf16.gmra.mxu0 %v4782
      %v4932 = vpop.f32.mrf.mxu0
      %v4933 = vadd.f32 %v4712, %v4932
      %v4934 = vpop.f32.mrf.mxu0
      %v4935 = vpop.f32.mrf.mxu0
      %v4936 = vadd.f32 %v4712, %v4935
      %v4937 = vpop.f32.mrf.mxu0
      %4938 = vmatprep.mubr.bf16.mxu0 0
      %4939 = vmatmul.mubr.bf16.gmra.mxu0 %v4785
      %v4940 = vpop.f32.mrf.mxu0
      %v4941 = vadd.f32 %v4712, %v4940
      %v4942 = vpop.f32.mrf.mxu0
      %v4943 = vpop.f32.mrf.mxu0
      %v4944 = vadd.f32 %v4712, %v4943
      %v4945 = vpop.f32.mrf.mxu0
      %4946 = vmatprep.mubr.bf16.mxu0 0
      %4947 = vmatmul.mubr.bf16.gmra.mxu0 %v4788
      %v4948 = vpop.f32.mrf.mxu0
      %v4949 = vadd.f32 %v4712, %v4948
      %v4950 = vpop.f32.mrf.mxu0
      %v4951 = vpop.f32.mrf.mxu0
      %v4952 = vadd.f32 %v4712, %v4951
      %v4953 = vpop.f32.mrf.mxu0
      %4954 = vdwg.mxu0
      %v4955 = vadd.f32 %v4829, %v932
      %v4956 = vadd.f32 %v4832, %v935
      %v4957 = vadd.f32 %v4837, %v940
      %v4958 = vadd.f32 %v4840, %v943
      %v4959 = vadd.f32 %v4845, %v948
      %v4960 = vadd.f32 %v4848, %v951
      %v4961 = vadd.f32 %v4853, %v956
      %v4962 = vadd.f32 %v4856, %v959
      %v4963 = vadd.f32 %v4861, %v964
      %v4964 = vadd.f32 %v4864, %v967
      %v4965 = vadd.f32 %v4869, %v972
      %v4966 = vadd.f32 %v4872, %v975
      %v4967 = vadd.f32 %v4877, %v980
      %v4968 = vadd.f32 %v4880, %v983
      %v4969 = vadd.f32 %v4885, %v988
      %v4970 = vadd.f32 %v4888, %v991
      %v4971 = vadd.f32 %v4893, %v996
      %v4972 = vadd.f32 %v4896, %v999
      %v4973 = vadd.f32 %v4901, %v1004
      %v4974 = vadd.f32 %v4904, %v1007
      %v4975 = vadd.f32 %v4909, %v1012
      %v4976 = vadd.f32 %v4912, %v1015
      %v4977 = vadd.f32 %v4917, %v1020
      %v4978 = vadd.f32 %v4920, %v1023
      %v4979 = vadd.f32 %v4925, %v1028
      %v4980 = vadd.f32 %v4928, %v1031
      %v4981 = vadd.f32 %v4933, %v1036
      %v4982 = vadd.f32 %v4936, %v1039
      %v4983 = vadd.f32 %v4941, %v1044
      %v4984 = vadd.f32 %v4944, %v1047
      %v4985 = vadd.f32 %v4949, %v1052
      %v4986 = vadd.f32 %v4952, %v1055
      %v4987 = vmax.f32 %v4955, 0.0
      %v4988 = vmax.f32 %v4956, 0.0
      %v4989 = vmax.f32 %v4957, 0.0
      %v4990 = vmax.f32 %v4958, 0.0
      %v4991 = vmax.f32 %v4959, 0.0
      %v4992 = vmax.f32 %v4960, 0.0
      %v4993 = vmax.f32 %v4961, 0.0
      %v4994 = vmax.f32 %v4962, 0.0
      %v4995 = vmax.f32 %v4963, 0.0
      %v4996 = vmax.f32 %v4964, 0.0
      %v4997 = vmax.f32 %v4965, 0.0
      %v4998 = vmax.f32 %v4966, 0.0
      %v4999 = vmax.f32 %v4967, 0.0
      %v5000 = vmax.f32 %v4968, 0.0
      %v5001 = vmax.f32 %v4969, 0.0
      %v5002 = vmax.f32 %v4970, 0.0
      %v5003 = vmax.f32 %v4971, 0.0
      %v5004 = vmax.f32 %v4972, 0.0
      %v5005 = vmax.f32 %v4973, 0.0
      %v5006 = vmax.f32 %v4974, 0.0
      %v5007 = vmax.f32 %v4975, 0.0
      %v5008 = vmax.f32 %v4976, 0.0
      %v5009 = vmax.f32 %v4977, 0.0
      %v5010 = vmax.f32 %v4978, 0.0
      %v5011 = vmax.f32 %v4979, 0.0
      %v5012 = vmax.f32 %v4980, 0.0
      %v5013 = vmax.f32 %v4981, 0.0
      %v5014 = vmax.f32 %v4982, 0.0
      %v5015 = vmax.f32 %v4983, 0.0
      %v5016 = vmax.f32 %v4984, 0.0
      %v5017 = vmax.f32 %v4985, 0.0
      %v5018 = vmax.f32 %v4986, 0.0
      %v5049 = vrot.slane %v4987, 7
      %v5050 = vrot.slane %v4988, 7
      %v5051 = vsel %vm1095, %v5049, %v5050
      %v5052 = vrot.slane %v4989, 7
      %v5053 = vsel %vm1095, %v5050, %v5052
      %v5054 = vrot.slane %v4990, 7
      %v5055 = vsel %vm1095, %v5052, %v5054
      %v5056 = vrot.slane %v4991, 7
      %v5057 = vsel %vm1095, %v5054, %v5056
      %v5058 = vrot.slane %v4992, 7
      %v5059 = vsel %vm1095, %v5056, %v5058
      %v5060 = vrot.slane %v4993, 7
      %v5061 = vsel %vm1095, %v5058, %v5060
      %v5062 = vrot.slane %v4994, 7
      %v5063 = vsel %vm1095, %v5060, %v5062
      %v5064 = vrot.slane %v4995, 7
      %v5065 = vsel %vm1095, %v5062, %v5064
      %v5066 = vrot.slane %v4996, 7
      %v5067 = vsel %vm1095, %v5064, %v5066
      %v5068 = vrot.slane %v4997, 7
      %v5069 = vsel %vm1095, %v5066, %v5068
      %v5070 = vrot.slane %v4998, 7
      %v5071 = vsel %vm1095, %v5068, %v5070
      %v5072 = vrot.slane %v4999, 7
      %v5073 = vsel %vm1095, %v5070, %v5072
      %v5074 = vrot.slane %v5000, 7
      %v5075 = vsel %vm1095, %v5072, %v5074
      %v5076 = vrot.slane %v5001, 7
      %v5077 = vsel %vm1095, %v5074, %v5076
      %v5078 = vrot.slane %v5002, 7
      %v5079 = vsel %vm1095, %v5076, %v5078
      %v5080 = vrot.slane %v5003, 7
      %v5081 = vsel %vm1095, %v5078, %v5080
      %v5082 = vrot.slane %v5004, 7
      %v5083 = vsel %vm1095, %v5080, %v5082
      %v5084 = vrot.slane %v5005, 7
      %v5085 = vsel %vm1095, %v5082, %v5084
      %v5086 = vrot.slane %v5006, 7
      %v5087 = vsel %vm1095, %v5084, %v5086
      %v5088 = vrot.slane %v5007, 7
      %v5089 = vsel %vm1095, %v5086, %v5088
      %v5090 = vrot.slane %v5008, 7
      %v5091 = vsel %vm1095, %v5088, %v5090
      %v5092 = vrot.slane %v5009, 7
      %v5093 = vsel %vm1095, %v5090, %v5092
      %v5094 = vrot.slane %v5010, 7
      %v5095 = vsel %vm1095, %v5092, %v5094
      %v5096 = vrot.slane %v5011, 7
      %v5097 = vsel %vm1095, %v5094, %v5096
      %v5098 = vrot.slane %v5012, 7
      %v5099 = vsel %vm1095, %v5096, %v5098
      %v5100 = vrot.slane %v5013, 7
      %v5101 = vsel %vm1095, %v5098, %v5100
      %v5102 = vrot.slane %v5014, 7
      %v5103 = vsel %vm1095, %v5100, %v5102
      %v5104 = vrot.slane %v5015, 7
      %v5105 = vsel %vm1095, %v5102, %v5104
      %v5106 = vrot.slane %v5016, 7
      %v5107 = vsel %vm1095, %v5104, %v5106
      %v5138 = vsel %vm1095, 0.0, %v5049
      %v5139 = vsel %vm1061, %v5138, 0.0
      %v5140 = vsel %vm1062, %v5051, 0.0
      %v5141 = vsel %vm1061, %v5053, 0.0
      %v5142 = vsel %vm1062, %v5055, 0.0
      %v5143 = vsel %vm1061, %v5057, 0.0
      %v5144 = vsel %vm1062, %v5059, 0.0
      %v5145 = vsel %vm1061, %v5061, 0.0
      %v5146 = vsel %vm1062, %v5063, 0.0
      %v5147 = vsel %vm1061, %v5065, 0.0
      %v5148 = vsel %vm1062, %v5067, 0.0
      %v5149 = vsel %vm1061, %v5069, 0.0
      %v5150 = vsel %vm1062, %v5071, 0.0
      %v5151 = vsel %vm1061, %v5073, 0.0
      %v5152 = vsel %vm1062, %v5075, 0.0
      %v5153 = vsel %vm1061, %v5077, 0.0
      %v5154 = vsel %vm1062, %v5079, 0.0
      %v5155 = vsel %vm1061, %v5081, 0.0
      %v5156 = vsel %vm1062, %v5083, 0.0
      %v5157 = vsel %vm1061, %v5085, 0.0
      %v5158 = vsel %vm1062, %v5087, 0.0
      %v5159 = vsel %vm1061, %v5089, 0.0
      %v5160 = vsel %vm1062, %v5091, 0.0
      %v5161 = vsel %vm1061, %v5093, 0.0
      %v5162 = vsel %vm1062, %v5095, 0.0
      %v5163 = vsel %vm1061, %v5097, 0.0
      %v5164 = vsel %vm1062, %v5099, 0.0
      %v5165 = vsel %vm1061, %v5101, 0.0
      %v5166 = vsel %vm1062, %v5103, 0.0
      %v5167 = vsel %vm1061, %v5105, 0.0
      %v5168 = vsel %vm1062, %v5107, 0.0
      %v5170 = vrot.slane %v4987, 1
      %v5171 = vrot.slane %v4988, 1
      %v5172 = vsel %vm1217, %v5170, %v5171
      %v5173 = vrot.slane %v4989, 1
      %v5174 = vsel %vm1217, %v5171, %v5173
      %v5175 = vrot.slane %v4990, 1
      %v5176 = vsel %vm1217, %v5173, %v5175
      %v5177 = vrot.slane %v4991, 1
      %v5178 = vsel %vm1217, %v5175, %v5177
      %v5179 = vrot.slane %v4992, 1
      %v5180 = vsel %vm1217, %v5177, %v5179
      %v5181 = vrot.slane %v4993, 1
      %v5182 = vsel %vm1217, %v5179, %v5181
      %v5183 = vrot.slane %v4994, 1
      %v5184 = vsel %vm1217, %v5181, %v5183
      %v5185 = vrot.slane %v4995, 1
      %v5186 = vsel %vm1217, %v5183, %v5185
      %v5187 = vrot.slane %v4996, 1
      %v5188 = vsel %vm1217, %v5185, %v5187
      %v5189 = vrot.slane %v4997, 1
      %v5190 = vsel %vm1217, %v5187, %v5189
      %v5191 = vrot.slane %v4998, 1
      %v5192 = vsel %vm1217, %v5189, %v5191
      %v5193 = vrot.slane %v4999, 1
      %v5194 = vsel %vm1217, %v5191, %v5193
      %v5195 = vrot.slane %v5000, 1
      %v5196 = vsel %vm1217, %v5193, %v5195
      %v5197 = vrot.slane %v5001, 1
      %v5198 = vsel %vm1217, %v5195, %v5197
      %v5199 = vrot.slane %v5002, 1
      %v5200 = vsel %vm1217, %v5197, %v5199
      %v5201 = vrot.slane %v5003, 1
      %v5202 = vsel %vm1217, %v5199, %v5201
      %v5203 = vrot.slane %v5004, 1
      %v5204 = vsel %vm1217, %v5201, %v5203
      %v5205 = vrot.slane %v5005, 1
      %v5206 = vsel %vm1217, %v5203, %v5205
      %v5207 = vrot.slane %v5006, 1
      %v5208 = vsel %vm1217, %v5205, %v5207
      %v5209 = vrot.slane %v5007, 1
      %v5210 = vsel %vm1217, %v5207, %v5209
      %v5211 = vrot.slane %v5008, 1
      %v5212 = vsel %vm1217, %v5209, %v5211
      %v5213 = vrot.slane %v5009, 1
      %v5214 = vsel %vm1217, %v5211, %v5213
      %v5215 = vrot.slane %v5010, 1
      %v5216 = vsel %vm1217, %v5213, %v5215
      %v5217 = vrot.slane %v5011, 1
      %v5218 = vsel %vm1217, %v5215, %v5217
      %v5219 = vrot.slane %v5012, 1
      %v5220 = vsel %vm1217, %v5217, %v5219
      %v5221 = vrot.slane %v5013, 1
      %v5222 = vsel %vm1217, %v5219, %v5221
      %v5223 = vrot.slane %v5014, 1
      %v5224 = vsel %vm1217, %v5221, %v5223
      %v5225 = vrot.slane %v5015, 1
      %v5226 = vsel %vm1217, %v5223, %v5225
      %v5227 = vrot.slane %v5016, 1
      %v5228 = vsel %vm1217, %v5225, %v5227
      %v5229 = vrot.slane %v5017, 1
      %v5230 = vsel %vm1217, %v5227, %v5229
      %v5262 = vsel %vm1217, 0.0, %v5170
      %v5263 = vsel %vm1064, %v5262, 0.0
      %v5264 = vsel %vm1063, %v5172, 0.0
      %v5265 = vsel %vm1064, %v5174, 0.0
      %v5266 = vsel %vm1063, %v5176, 0.0
      %v5267 = vsel %vm1064, %v5178, 0.0
      %v5268 = vsel %vm1063, %v5180, 0.0
      %v5269 = vsel %vm1064, %v5182, 0.0
      %v5270 = vsel %vm1063, %v5184, 0.0
      %v5271 = vsel %vm1064, %v5186, 0.0
      %v5272 = vsel %vm1063, %v5188, 0.0
      %v5273 = vsel %vm1064, %v5190, 0.0
      %v5274 = vsel %vm1063, %v5192, 0.0
      %v5275 = vsel %vm1064, %v5194, 0.0
      %v5276 = vsel %vm1063, %v5196, 0.0
      %v5277 = vsel %vm1064, %v5198, 0.0
      %v5278 = vsel %vm1063, %v5200, 0.0
      %v5279 = vsel %vm1064, %v5202, 0.0
      %v5280 = vsel %vm1063, %v5204, 0.0
      %v5281 = vsel %vm1064, %v5206, 0.0
      %v5282 = vsel %vm1063, %v5208, 0.0
      %v5283 = vsel %vm1064, %v5210, 0.0
      %v5284 = vsel %vm1063, %v5212, 0.0
      %v5285 = vsel %vm1064, %v5214, 0.0
      %v5286 = vsel %vm1063, %v5216, 0.0
      %v5287 = vsel %vm1064, %v5218, 0.0
      %v5288 = vsel %vm1063, %v5220, 0.0
      %v5289 = vsel %vm1064, %v5222, 0.0
      %v5290 = vsel %vm1063, %v5224, 0.0
      %v5291 = vsel %vm1064, %v5226, 0.0
      %v5292 = vsel %vm1063, %v5228, 0.0
      %v5293 = vsel %vm1064, %v5230, 0.0
      %v5295 = vrot.slane %v5017, 7
      %v5296 = vsel %vm1095, %v5106, %v5295
      %v5297 = vrot.slane %v5018, 7
      %v5298 = vsel %vm1095, %v5295, %v5297
      %v5301 = vsel %vm1061, %v5296, 0.0
      %v5302 = vsel %vm1062, %v5298, 0.0
      %v5303 = vrot.slane %v5018, 1
      %v5304 = vsel %vm1217, %v5229, %v5303
      %v5307 = vsel %vm1217, %v5303, 0.0
      %v5308 = vsel %vm1063, %v5304, 0.0
      %v5309 = vsel %vm1064, %v5307, 0.0
      %v5311 = vsel %vm1095, %v5297, 0.0
      %v5312 = vsel %vm1061, %v5311, 0.0
      %5313 = vrot.lane.b32.xlu0 %v4987, 8
      %v5314 = vpop.permute.xlu0 %5313
      %5315 = vrot.lane.b32.xlu0 %v4988, 8
      %v5316 = vpop.permute.xlu0 %5315
      %5317 = vrot.lane.b32.xlu0 %v4989, 8
      %v5318 = vpop.permute.xlu0 %5317
      %5319 = vrot.lane.b32.xlu0 %v4990, 8
      %v5320 = vpop.permute.xlu0 %5319
      %5321 = vrot.lane.b32.xlu0 %v4991, 8
      %v5322 = vpop.permute.xlu0 %5321
      %5323 = vrot.lane.b32.xlu0 %v4992, 8
      %v5324 = vpop.permute.xlu0 %5323
      %5325 = vrot.lane.b32.xlu0 %v4993, 8
      %v5326 = vpop.permute.xlu0 %5325
      %5327 = vrot.lane.b32.xlu0 %v4994, 8
      %v5328 = vpop.permute.xlu0 %5327
      %5329 = vrot.lane.b32.xlu0 %v4995, 8
      %v5330 = vpop.permute.xlu0 %5329
      %5331 = vrot.lane.b32.xlu0 %v4996, 8
      %v5332 = vpop.permute.xlu0 %5331
      %5333 = vrot.lane.b32.xlu0 %v4997, 8
      %v5334 = vpop.permute.xlu0 %5333
      %5335 = vrot.lane.b32.xlu0 %v4998, 8
      %v5336 = vpop.permute.xlu0 %5335
      %5337 = vrot.lane.b32.xlu0 %v4999, 8
      %v5338 = vpop.permute.xlu0 %5337
      %5339 = vrot.lane.b32.xlu0 %v5000, 8
      %v5340 = vpop.permute.xlu0 %5339
      %5341 = vrot.lane.b32.xlu0 %v5001, 8
      %v5342 = vpop.permute.xlu0 %5341
      %5343 = vrot.lane.b32.xlu0 %v5002, 8
      %v5344 = vpop.permute.xlu0 %5343
      %5345 = vrot.lane.b32.xlu0 %v5003, 8
      %v5346 = vpop.permute.xlu0 %5345
      %5347 = vrot.lane.b32.xlu0 %v5004, 8
      %v5348 = vpop.permute.xlu0 %5347
      %5349 = vrot.lane.b32.xlu0 %v5005, 8
      %v5350 = vpop.permute.xlu0 %5349
      %5351 = vrot.lane.b32.xlu0 %v5006, 8
      %v5352 = vpop.permute.xlu0 %5351
      %5353 = vrot.lane.b32.xlu0 %v5007, 8
      %v5354 = vpop.permute.xlu0 %5353
      %5355 = vrot.lane.b32.xlu0 %v5008, 8
      %v5356 = vpop.permute.xlu0 %5355
      %5357 = vrot.lane.b32.xlu0 %v5009, 8
      %v5358 = vpop.permute.xlu0 %5357
      %5359 = vrot.lane.b32.xlu0 %v5010, 8
      %v5360 = vpop.permute.xlu0 %5359
      %5361 = vrot.lane.b32.xlu0 %v5011, 8
      %v5362 = vpop.permute.xlu0 %5361
      %5363 = vrot.lane.b32.xlu0 %v5012, 8
      %v5364 = vpop.permute.xlu0 %5363
      %5365 = vrot.lane.b32.xlu0 %v5013, 8
      %v5366 = vpop.permute.xlu0 %5365
      %5367 = vrot.lane.b32.xlu0 %v5014, 8
      %v5368 = vpop.permute.xlu0 %5367
      %5369 = vrot.lane.b32.xlu0 %v5015, 8
      %v5370 = vpop.permute.xlu0 %5369
      %5371 = vrot.lane.b32.xlu0 %v5016, 8
      %v5372 = vpop.permute.xlu0 %5371
      %5434 = vrot.lane.b32.xlu0 %v5263, 16
      %v5435 = vpop.permute.xlu0 %5434
      %5436 = vrot.lane.b32.xlu0 %v5264, 16
      %v5437 = vpop.permute.xlu0 %5436
      %5438 = vrot.lane.b32.xlu0 %v5265, 16
      %v5439 = vpop.permute.xlu0 %5438
      %5440 = vrot.lane.b32.xlu0 %v5266, 16
      %v5441 = vpop.permute.xlu0 %5440
      %5442 = vrot.lane.b32.xlu0 %v5267, 16
      %v5443 = vpop.permute.xlu0 %5442
      %5444 = vrot.lane.b32.xlu0 %v5268, 16
      %v5445 = vpop.permute.xlu0 %5444
      %5446 = vrot.lane.b32.xlu0 %v5269, 16
      %v5447 = vpop.permute.xlu0 %5446
      %5448 = vrot.lane.b32.xlu0 %v5270, 16
      %v5449 = vpop.permute.xlu0 %5448
      %5450 = vrot.lane.b32.xlu0 %v5271, 16
      %v5451 = vpop.permute.xlu0 %5450
      %5452 = vrot.lane.b32.xlu0 %v5272, 16
      %v5453 = vpop.permute.xlu0 %5452
      %5454 = vrot.lane.b32.xlu0 %v5273, 16
      %v5455 = vpop.permute.xlu0 %5454
      %5456 = vrot.lane.b32.xlu0 %v5274, 16
      %v5457 = vpop.permute.xlu0 %5456
      %5458 = vrot.lane.b32.xlu0 %v5275, 16
      %v5459 = vpop.permute.xlu0 %5458
      %5460 = vrot.lane.b32.xlu0 %v5276, 16
      %v5461 = vpop.permute.xlu0 %5460
      %5462 = vrot.lane.b32.xlu0 %v5277, 16
      %v5463 = vpop.permute.xlu0 %5462
      %5464 = vrot.lane.b32.xlu0 %v5278, 16
      %v5465 = vpop.permute.xlu0 %5464
      %5466 = vrot.lane.b32.xlu0 %v5279, 16
      %v5467 = vpop.permute.xlu0 %5466
      %5468 = vrot.lane.b32.xlu0 %v5280, 16
      %v5469 = vpop.permute.xlu0 %5468
      %5470 = vrot.lane.b32.xlu0 %v5281, 16
      %v5471 = vpop.permute.xlu0 %5470
      %5472 = vrot.lane.b32.xlu0 %v5282, 16
      %v5473 = vpop.permute.xlu0 %5472
      %5474 = vrot.lane.b32.xlu0 %v5283, 16
      %v5475 = vpop.permute.xlu0 %5474
      %5476 = vrot.lane.b32.xlu0 %v5284, 16
      %v5477 = vpop.permute.xlu0 %5476
      %5478 = vrot.lane.b32.xlu0 %v5285, 16
      %v5479 = vpop.permute.xlu0 %5478
      %5480 = vrot.lane.b32.xlu0 %v5286, 16
      %v5481 = vpop.permute.xlu0 %5480
      %5482 = vrot.lane.b32.xlu0 %v5287, 16
      %v5483 = vpop.permute.xlu0 %5482
      %5484 = vrot.lane.b32.xlu0 %v5288, 16
      %v5485 = vpop.permute.xlu0 %5484
      %5486 = vrot.lane.b32.xlu0 %v5289, 16
      %v5487 = vpop.permute.xlu0 %5486
      %5488 = vrot.lane.b32.xlu0 %v5290, 16
      %v5489 = vpop.permute.xlu0 %5488
      %5490 = vrot.lane.b32.xlu0 %v5291, 16
      %v5491 = vpop.permute.xlu0 %5490
      %5492 = vrot.lane.b32.xlu0 %v5292, 16
      %v5493 = vpop.permute.xlu0 %5492
      %5494 = vrot.lane.b32.xlu0 %v5293, 16
      %v5495 = vpop.permute.xlu0 %5494
      %5559 = vrot.lane.b32.xlu0 %v5139, 24
      %v5560 = vpop.permute.xlu0 %5559
      %5561 = vrot.lane.b32.xlu0 %v5140, 24
      %v5562 = vpop.permute.xlu0 %5561
      %5563 = vrot.lane.b32.xlu0 %v5141, 24
      %v5564 = vpop.permute.xlu0 %5563
      %5565 = vrot.lane.b32.xlu0 %v5142, 24
      %v5566 = vpop.permute.xlu0 %5565
      %5567 = vrot.lane.b32.xlu0 %v5143, 24
      %v5568 = vpop.permute.xlu0 %5567
      %5569 = vrot.lane.b32.xlu0 %v5144, 24
      %v5570 = vpop.permute.xlu0 %5569
      %5571 = vrot.lane.b32.xlu0 %v5145, 24
      %v5572 = vpop.permute.xlu0 %5571
      %5573 = vrot.lane.b32.xlu0 %v5146, 24
      %v5574 = vpop.permute.xlu0 %5573
      %5575 = vrot.lane.b32.xlu0 %v5147, 24
      %v5576 = vpop.permute.xlu0 %5575
      %5577 = vrot.lane.b32.xlu0 %v5148, 24
      %v5578 = vpop.permute.xlu0 %5577
      %5579 = vrot.lane.b32.xlu0 %v5149, 24
      %v5580 = vpop.permute.xlu0 %5579
      %5581 = vrot.lane.b32.xlu0 %v5150, 24
      %v5582 = vpop.permute.xlu0 %5581
      %5583 = vrot.lane.b32.xlu0 %v5151, 24
      %v5584 = vpop.permute.xlu0 %5583
      %5585 = vrot.lane.b32.xlu0 %v5152, 24
      %v5586 = vpop.permute.xlu0 %5585
      %5587 = vrot.lane.b32.xlu0 %v5153, 24
      %v5588 = vpop.permute.xlu0 %5587
      %5589 = vrot.lane.b32.xlu0 %v5154, 24
      %v5590 = vpop.permute.xlu0 %5589
      %5591 = vrot.lane.b32.xlu0 %v5155, 24
      %v5592 = vpop.permute.xlu0 %5591
      %5593 = vrot.lane.b32.xlu0 %v5156, 24
      %v5594 = vpop.permute.xlu0 %5593
      %5595 = vrot.lane.b32.xlu0 %v5157, 24
      %v5596 = vpop.permute.xlu0 %5595
      %5597 = vrot.lane.b32.xlu0 %v5158, 24
      %v5598 = vpop.permute.xlu0 %5597
      %5599 = vrot.lane.b32.xlu0 %v5159, 24
      %v5600 = vpop.permute.xlu0 %5599
      %5601 = vrot.lane.b32.xlu0 %v5160, 24
      %v5602 = vpop.permute.xlu0 %5601
      %5603 = vrot.lane.b32.xlu0 %v5161, 24
      %v5604 = vpop.permute.xlu0 %5603
      %5605 = vrot.lane.b32.xlu0 %v5162, 24
      %v5606 = vpop.permute.xlu0 %5605
      %5607 = vrot.lane.b32.xlu0 %v5163, 24
      %v5608 = vpop.permute.xlu0 %5607
      %5609 = vrot.lane.b32.xlu0 %v5164, 24
      %v5610 = vpop.permute.xlu0 %5609
      %5611 = vrot.lane.b32.xlu0 %v5165, 24
      %v5612 = vpop.permute.xlu0 %5611
      %5613 = vrot.lane.b32.xlu0 %v5166, 24
      %v5614 = vpop.permute.xlu0 %5613
      %5615 = vrot.lane.b32.xlu0 %v5167, 24
      %v5616 = vpop.permute.xlu0 %5615
      %5617 = vrot.lane.b32.xlu0 %v5168, 24
      %v5618 = vpop.permute.xlu0 %5617
      %5619 = vrot.lane.b32.xlu0 %v5301, 24
      %v5620 = vpop.permute.xlu0 %5619
      %5621 = vrot.lane.b32.xlu0 %v5302, 24
      %v5622 = vpop.permute.xlu0 %5621
      %5655 = vrot.lane.b32.xlu0 %v4987, 32
      %v5656 = vpop.permute.xlu0 %5655
      %5657 = vrot.lane.b32.xlu0 %v4988, 32
      %v5658 = vpop.permute.xlu0 %5657
      %5659 = vrot.lane.b32.xlu0 %v4989, 32
      %v5660 = vpop.permute.xlu0 %5659
      %5661 = vrot.lane.b32.xlu0 %v4990, 32
      %v5662 = vpop.permute.xlu0 %5661
      %5663 = vrot.lane.b32.xlu0 %v4991, 32
      %v5664 = vpop.permute.xlu0 %5663
      %5665 = vrot.lane.b32.xlu0 %v4992, 32
      %v5666 = vpop.permute.xlu0 %5665
      %5667 = vrot.lane.b32.xlu0 %v4993, 32
      %v5668 = vpop.permute.xlu0 %5667
      %5669 = vrot.lane.b32.xlu0 %v4994, 32
      %v5670 = vpop.permute.xlu0 %5669
      %5671 = vrot.lane.b32.xlu0 %v4995, 32
      %v5672 = vpop.permute.xlu0 %5671
      %5673 = vrot.lane.b32.xlu0 %v4996, 32
      %v5674 = vpop.permute.xlu0 %5673
      %5675 = vrot.lane.b32.xlu0 %v4997, 32
      %v5676 = vpop.permute.xlu0 %5675
      %5677 = vrot.lane.b32.xlu0 %v4998, 32
      %v5678 = vpop.permute.xlu0 %5677
      %5679 = vrot.lane.b32.xlu0 %v4999, 32
      %v5680 = vpop.permute.xlu0 %5679
      %5681 = vrot.lane.b32.xlu0 %v5000, 32
      %v5682 = vpop.permute.xlu0 %5681
      %5683 = vrot.lane.b32.xlu0 %v5001, 32
      %v5684 = vpop.permute.xlu0 %5683
      %5685 = vrot.lane.b32.xlu0 %v5002, 32
      %v5686 = vpop.permute.xlu0 %5685
      %5687 = vrot.lane.b32.xlu0 %v5003, 32
      %v5688 = vpop.permute.xlu0 %5687
      %5689 = vrot.lane.b32.xlu0 %v5004, 32
      %v5690 = vpop.permute.xlu0 %5689
      %5691 = vrot.lane.b32.xlu0 %v5005, 32
      %v5692 = vpop.permute.xlu0 %5691
      %5693 = vrot.lane.b32.xlu0 %v5006, 32
      %v5694 = vpop.permute.xlu0 %5693
      %5695 = vrot.lane.b32.xlu0 %v5007, 32
      %v5696 = vpop.permute.xlu0 %5695
      %5697 = vrot.lane.b32.xlu0 %v5008, 32
      %v5698 = vpop.permute.xlu0 %5697
      %5699 = vrot.lane.b32.xlu0 %v5009, 32
      %v5700 = vpop.permute.xlu0 %5699
      %5701 = vrot.lane.b32.xlu0 %v5010, 32
      %v5702 = vpop.permute.xlu0 %5701
      %5703 = vrot.lane.b32.xlu0 %v5011, 32
      %v5704 = vpop.permute.xlu0 %5703
      %5705 = vrot.lane.b32.xlu0 %v5012, 32
      %v5706 = vpop.permute.xlu0 %5705
      %5707 = vrot.lane.b32.xlu0 %v5013, 32
      %v5708 = vpop.permute.xlu0 %5707
      %5709 = vrot.lane.b32.xlu0 %v5014, 32
      %v5710 = vpop.permute.xlu0 %5709
      %5711 = vrot.lane.b32.xlu0 %v5015, 32
      %v5712 = vpop.permute.xlu0 %5711
      %5713 = vrot.lane.b32.xlu0 %v5016, 32
      %v5714 = vpop.permute.xlu0 %5713
      %5715 = vrot.lane.b32.xlu0 %v5017, 32
      %v5716 = vpop.permute.xlu0 %5715
      %5717 = vrot.lane.b32.xlu0 %v5018, 32
      %v5718 = vpop.permute.xlu0 %5717
      %5753 = vrot.lane.b32.xlu0 %v5264, 40
      %v5754 = vpop.permute.xlu0 %5753
      %5755 = vrot.lane.b32.xlu0 %v5265, 40
      %v5756 = vpop.permute.xlu0 %5755
      %5757 = vrot.lane.b32.xlu0 %v5266, 40
      %v5758 = vpop.permute.xlu0 %5757
      %5759 = vrot.lane.b32.xlu0 %v5267, 40
      %v5760 = vpop.permute.xlu0 %5759
      %5761 = vrot.lane.b32.xlu0 %v5268, 40
      %v5762 = vpop.permute.xlu0 %5761
      %5763 = vrot.lane.b32.xlu0 %v5269, 40
      %v5764 = vpop.permute.xlu0 %5763
      %5765 = vrot.lane.b32.xlu0 %v5270, 40
      %v5766 = vpop.permute.xlu0 %5765
      %5767 = vrot.lane.b32.xlu0 %v5271, 40
      %v5768 = vpop.permute.xlu0 %5767
      %5769 = vrot.lane.b32.xlu0 %v5272, 40
      %v5770 = vpop.permute.xlu0 %5769
      %5771 = vrot.lane.b32.xlu0 %v5273, 40
      %v5772 = vpop.permute.xlu0 %5771
      %5773 = vrot.lane.b32.xlu0 %v5274, 40
      %v5774 = vpop.permute.xlu0 %5773
      %5775 = vrot.lane.b32.xlu0 %v5275, 40
      %v5776 = vpop.permute.xlu0 %5775
      %5777 = vrot.lane.b32.xlu0 %v5276, 40
      %v5778 = vpop.permute.xlu0 %5777
      %5779 = vrot.lane.b32.xlu0 %v5277, 40
      %v5780 = vpop.permute.xlu0 %5779
      %5781 = vrot.lane.b32.xlu0 %v5278, 40
      %v5782 = vpop.permute.xlu0 %5781
      %5783 = vrot.lane.b32.xlu0 %v5279, 40
      %v5784 = vpop.permute.xlu0 %5783
      %5785 = vrot.lane.b32.xlu0 %v5280, 40
      %v5786 = vpop.permute.xlu0 %5785
      %5787 = vrot.lane.b32.xlu0 %v5281, 40
      %v5788 = vpop.permute.xlu0 %5787
      %5789 = vrot.lane.b32.xlu0 %v5282, 40
      %v5790 = vpop.permute.xlu0 %5789
      %5791 = vrot.lane.b32.xlu0 %v5283, 40
      %v5792 = vpop.permute.xlu0 %5791
      %5793 = vrot.lane.b32.xlu0 %v5284, 40
      %v5794 = vpop.permute.xlu0 %5793
      %5795 = vrot.lane.b32.xlu0 %v5285, 40
      %v5796 = vpop.permute.xlu0 %5795
      %5797 = vrot.lane.b32.xlu0 %v5286, 40
      %v5798 = vpop.permute.xlu0 %5797
      %5799 = vrot.lane.b32.xlu0 %v5287, 40
      %v5800 = vpop.permute.xlu0 %5799
      %5801 = vrot.lane.b32.xlu0 %v5288, 40
      %v5802 = vpop.permute.xlu0 %5801
      %5803 = vrot.lane.b32.xlu0 %v5289, 40
      %v5804 = vpop.permute.xlu0 %5803
      %5805 = vrot.lane.b32.xlu0 %v5290, 40
      %v5806 = vpop.permute.xlu0 %5805
      %5807 = vrot.lane.b32.xlu0 %v5291, 40
      %v5808 = vpop.permute.xlu0 %5807
      %5809 = vrot.lane.b32.xlu0 %v5292, 40
      %v5810 = vpop.permute.xlu0 %5809
      %5811 = vrot.lane.b32.xlu0 %v5293, 40
      %v5812 = vpop.permute.xlu0 %5811
      %5813 = vrot.lane.b32.xlu0 %v5308, 40
      %v5814 = vpop.permute.xlu0 %5813
      %5815 = vrot.lane.b32.xlu0 %v5309, 40
      %v5816 = vpop.permute.xlu0 %5815
      %5850 = vrot.lane.b32.xlu0 %v5141, 48
      %v5851 = vpop.permute.xlu0 %5850
      %5852 = vrot.lane.b32.xlu0 %v5142, 48
      %v5853 = vpop.permute.xlu0 %5852
      %5854 = vrot.lane.b32.xlu0 %v5143, 48
      %v5855 = vpop.permute.xlu0 %5854
      %5856 = vrot.lane.b32.xlu0 %v5144, 48
      %v5857 = vpop.permute.xlu0 %5856
      %5858 = vrot.lane.b32.xlu0 %v5145, 48
      %v5859 = vpop.permute.xlu0 %5858
      %5860 = vrot.lane.b32.xlu0 %v5146, 48
      %v5861 = vpop.permute.xlu0 %5860
      %5862 = vrot.lane.b32.xlu0 %v5147, 48
      %v5863 = vpop.permute.xlu0 %5862
      %5864 = vrot.lane.b32.xlu0 %v5148, 48
      %v5865 = vpop.permute.xlu0 %5864
      %5866 = vrot.lane.b32.xlu0 %v5149, 48
      %v5867 = vpop.permute.xlu0 %5866
      %5868 = vrot.lane.b32.xlu0 %v5150, 48
      %v5869 = vpop.permute.xlu0 %5868
      %5870 = vrot.lane.b32.xlu0 %v5151, 48
      %v5871 = vpop.permute.xlu0 %5870
      %5872 = vrot.lane.b32.xlu0 %v5152, 48
      %v5873 = vpop.permute.xlu0 %5872
      %5874 = vrot.lane.b32.xlu0 %v5153, 48
      %v5875 = vpop.permute.xlu0 %5874
      %5876 = vrot.lane.b32.xlu0 %v5154, 48
      %v5877 = vpop.permute.xlu0 %5876
      %5878 = vrot.lane.b32.xlu0 %v5155, 48
      %v5879 = vpop.permute.xlu0 %5878
      %5880 = vrot.lane.b32.xlu0 %v5156, 48
      %v5881 = vpop.permute.xlu0 %5880
      %5882 = vrot.lane.b32.xlu0 %v5157, 48
      %v5883 = vpop.permute.xlu0 %5882
      %5884 = vrot.lane.b32.xlu0 %v5158, 48
      %v5885 = vpop.permute.xlu0 %5884
      %5886 = vrot.lane.b32.xlu0 %v5159, 48
      %v5887 = vpop.permute.xlu0 %5886
      %5888 = vrot.lane.b32.xlu0 %v5160, 48
      %v5889 = vpop.permute.xlu0 %5888
      %5890 = vrot.lane.b32.xlu0 %v5161, 48
      %v5891 = vpop.permute.xlu0 %5890
      %5892 = vrot.lane.b32.xlu0 %v5162, 48
      %v5893 = vpop.permute.xlu0 %5892
      %5894 = vrot.lane.b32.xlu0 %v5163, 48
      %v5895 = vpop.permute.xlu0 %5894
      %5896 = vrot.lane.b32.xlu0 %v5164, 48
      %v5897 = vpop.permute.xlu0 %5896
      %5898 = vrot.lane.b32.xlu0 %v5165, 48
      %v5899 = vpop.permute.xlu0 %5898
      %5900 = vrot.lane.b32.xlu0 %v5166, 48
      %v5901 = vpop.permute.xlu0 %5900
      %5902 = vrot.lane.b32.xlu0 %v5167, 48
      %v5903 = vpop.permute.xlu0 %5902
      %5904 = vrot.lane.b32.xlu0 %v5168, 48
      %v5905 = vpop.permute.xlu0 %5904
      %5906 = vrot.lane.b32.xlu0 %v5301, 48
      %v5907 = vpop.permute.xlu0 %5906
      %5908 = vrot.lane.b32.xlu0 %v5302, 48
      %v5909 = vpop.permute.xlu0 %5908
      %5910 = vrot.lane.b32.xlu0 %v5312, 48
      %v5911 = vpop.permute.xlu0 %5910
      %5943 = vrot.lane.b32.xlu0 %v4989, 56
      %v5944 = vpop.permute.xlu0 %5943
      %5945 = vrot.lane.b32.xlu0 %v4990, 56
      %v5946 = vpop.permute.xlu0 %5945
      %5947 = vrot.lane.b32.xlu0 %v4991, 56
      %v5948 = vpop.permute.xlu0 %5947
      %5949 = vrot.lane.b32.xlu0 %v4992, 56
      %v5950 = vpop.permute.xlu0 %5949
      %5951 = vrot.lane.b32.xlu0 %v4993, 56
      %v5952 = vpop.permute.xlu0 %5951
      %5953 = vrot.lane.b32.xlu0 %v4994, 56
      %v5954 = vpop.permute.xlu0 %5953
      %5955 = vrot.lane.b32.xlu0 %v4995, 56
      %v5956 = vpop.permute.xlu0 %5955
      %5957 = vrot.lane.b32.xlu0 %v4996, 56
      %v5958 = vpop.permute.xlu0 %5957
      %5959 = vrot.lane.b32.xlu0 %v4997, 56
      %v5960 = vpop.permute.xlu0 %5959
      %5961 = vrot.lane.b32.xlu0 %v4998, 56
      %v5962 = vpop.permute.xlu0 %5961
      %5963 = vrot.lane.b32.xlu0 %v4999, 56
      %v5964 = vpop.permute.xlu0 %5963
      %5965 = vrot.lane.b32.xlu0 %v5000, 56
      %v5966 = vpop.permute.xlu0 %5965
      %5967 = vrot.lane.b32.xlu0 %v5001, 56
      %v5968 = vpop.permute.xlu0 %5967
      %5969 = vrot.lane.b32.xlu0 %v5002, 56
      %v5970 = vpop.permute.xlu0 %5969
      %5971 = vrot.lane.b32.xlu0 %v5003, 56
      %v5972 = vpop.permute.xlu0 %5971
      %5973 = vrot.lane.b32.xlu0 %v5004, 56
      %v5974 = vpop.permute.xlu0 %5973
      %5975 = vrot.lane.b32.xlu0 %v5005, 56
      %v5976 = vpop.permute.xlu0 %5975
      %5977 = vrot.lane.b32.xlu0 %v5006, 56
      %v5978 = vpop.permute.xlu0 %5977
      %5979 = vrot.lane.b32.xlu0 %v5007, 56
      %v5980 = vpop.permute.xlu0 %5979
      %5981 = vrot.lane.b32.xlu0 %v5008, 56
      %v5982 = vpop.permute.xlu0 %5981
      %5983 = vrot.lane.b32.xlu0 %v5009, 56
      %v5984 = vpop.permute.xlu0 %5983
      %5985 = vrot.lane.b32.xlu0 %v5010, 56
      %v5986 = vpop.permute.xlu0 %5985
      %5987 = vrot.lane.b32.xlu0 %v5011, 56
      %v5988 = vpop.permute.xlu0 %5987
      %5989 = vrot.lane.b32.xlu0 %v5012, 56
      %v5990 = vpop.permute.xlu0 %5989
      %5991 = vrot.lane.b32.xlu0 %v5013, 56
      %v5992 = vpop.permute.xlu0 %5991
      %5993 = vrot.lane.b32.xlu0 %v5014, 56
      %v5994 = vpop.permute.xlu0 %5993
      %5995 = vrot.lane.b32.xlu0 %v5015, 56
      %v5996 = vpop.permute.xlu0 %5995
      %5997 = vrot.lane.b32.xlu0 %v5016, 56
      %v5998 = vpop.permute.xlu0 %5997
      %5999 = vrot.lane.b32.xlu0 %v5017, 56
      %v6000 = vpop.permute.xlu0 %5999
      %6001 = vrot.lane.b32.xlu0 %v5018, 56
      %v6002 = vpop.permute.xlu0 %6001
      %6033 = vrot.lane.b32.xlu0 %v5266, 64
      %v6034 = vpop.permute.xlu0 %6033
      %6035 = vrot.lane.b32.xlu0 %v5267, 64
      %v6036 = vpop.permute.xlu0 %6035
      %6037 = vrot.lane.b32.xlu0 %v5268, 64
      %v6038 = vpop.permute.xlu0 %6037
      %6039 = vrot.lane.b32.xlu0 %v5269, 64
      %v6040 = vpop.permute.xlu0 %6039
      %6041 = vrot.lane.b32.xlu0 %v5270, 64
      %v6042 = vpop.permute.xlu0 %6041
      %6043 = vrot.lane.b32.xlu0 %v5271, 64
      %v6044 = vpop.permute.xlu0 %6043
      %6045 = vrot.lane.b32.xlu0 %v5272, 64
      %v6046 = vpop.permute.xlu0 %6045
      %6047 = vrot.lane.b32.xlu0 %v5273, 64
      %v6048 = vpop.permute.xlu0 %6047
      %6049 = vrot.lane.b32.xlu0 %v5274, 64
      %v6050 = vpop.permute.xlu0 %6049
      %6051 = vrot.lane.b32.xlu0 %v5275, 64
      %v6052 = vpop.permute.xlu0 %6051
      %6053 = vrot.lane.b32.xlu0 %v5276, 64
      %v6054 = vpop.permute.xlu0 %6053
      %6055 = vrot.lane.b32.xlu0 %v5277, 64
      %v6056 = vpop.permute.xlu0 %6055
      %6057 = vrot.lane.b32.xlu0 %v5278, 64
      %v6058 = vpop.permute.xlu0 %6057
      %6059 = vrot.lane.b32.xlu0 %v5279, 64
      %v6060 = vpop.permute.xlu0 %6059
      %6061 = vrot.lane.b32.xlu0 %v5280, 64
      %v6062 = vpop.permute.xlu0 %6061
      %6063 = vrot.lane.b32.xlu0 %v5281, 64
      %v6064 = vpop.permute.xlu0 %6063
      %6065 = vrot.lane.b32.xlu0 %v5282, 64
      %v6066 = vpop.permute.xlu0 %6065
      %6067 = vrot.lane.b32.xlu0 %v5283, 64
      %v6068 = vpop.permute.xlu0 %6067
      %6069 = vrot.lane.b32.xlu0 %v5284, 64
      %v6070 = vpop.permute.xlu0 %6069
      %6071 = vrot.lane.b32.xlu0 %v5285, 64
      %v6072 = vpop.permute.xlu0 %6071
      %6073 = vrot.lane.b32.xlu0 %v5286, 64
      %v6074 = vpop.permute.xlu0 %6073
      %6075 = vrot.lane.b32.xlu0 %v5287, 64
      %v6076 = vpop.permute.xlu0 %6075
      %6077 = vrot.lane.b32.xlu0 %v5288, 64
      %v6078 = vpop.permute.xlu0 %6077
      %6079 = vrot.lane.b32.xlu0 %v5289, 64
      %v6080 = vpop.permute.xlu0 %6079
      %6081 = vrot.lane.b32.xlu0 %v5290, 64
      %v6082 = vpop.permute.xlu0 %6081
      %6083 = vrot.lane.b32.xlu0 %v5291, 64
      %v6084 = vpop.permute.xlu0 %6083
      %6085 = vrot.lane.b32.xlu0 %v5292, 64
      %v6086 = vpop.permute.xlu0 %6085
      %6087 = vrot.lane.b32.xlu0 %v5293, 64
      %v6088 = vpop.permute.xlu0 %6087
      %6089 = vrot.lane.b32.xlu0 %v5308, 64
      %v6090 = vpop.permute.xlu0 %6089
      %6091 = vrot.lane.b32.xlu0 %v5309, 64
      %v6092 = vpop.permute.xlu0 %6091
      %v6123 = vsel %vm4423, %v5139, %v5314
      %v6124 = vsel %vm4423, %v5140, %v5316
      %v6125 = vsel %vm4423, %v5141, %v5318
      %v6126 = vsel %vm4423, %v5142, %v5320
      %v6127 = vsel %vm4423, %v5143, %v5322
      %v6128 = vsel %vm4423, %v5144, %v5324
      %v6129 = vsel %vm4423, %v5145, %v5326
      %v6130 = vsel %vm4423, %v5146, %v5328
      %v6131 = vsel %vm4423, %v5147, %v5330
      %v6132 = vsel %vm4423, %v5148, %v5332
      %v6133 = vsel %vm4423, %v5149, %v5334
      %v6134 = vsel %vm4423, %v5150, %v5336
      %v6135 = vsel %vm4423, %v5151, %v5338
      %v6136 = vsel %vm4423, %v5152, %v5340
      %v6137 = vsel %vm4423, %v5153, %v5342
      %v6138 = vsel %vm4423, %v5154, %v5344
      %v6139 = vsel %vm4423, %v5155, %v5346
      %v6140 = vsel %vm4423, %v5156, %v5348
      %v6141 = vsel %vm4423, %v5157, %v5350
      %v6142 = vsel %vm4423, %v5158, %v5352
      %v6143 = vsel %vm4423, %v5159, %v5354
      %v6144 = vsel %vm4423, %v5160, %v5356
      %v6145 = vsel %vm4423, %v5161, %v5358
      %v6146 = vsel %vm4423, %v5162, %v5360
      %v6147 = vsel %vm4423, %v5163, %v5362
      %v6148 = vsel %vm4423, %v5164, %v5364
      %v6149 = vsel %vm4423, %v5165, %v5366
      %v6150 = vsel %vm4423, %v5166, %v5368
      %v6151 = vsel %vm4423, %v5167, %v5370
      %v6152 = vsel %vm4423, %v5168, %v5372
      %v6153 = vsel %vm848, %v4424, %v5435
      %v6154 = vsel %vm848, %v6123, %v5437
      %v6155 = vsel %vm848, %v6124, %v5439
      %v6156 = vsel %vm848, %v6125, %v5441
      %v6157 = vsel %vm848, %v6126, %v5443
      %v6158 = vsel %vm848, %v6127, %v5445
      %v6159 = vsel %vm848, %v6128, %v5447
      %v6160 = vsel %vm848, %v6129, %v5449
      %v6161 = vsel %vm848, %v6130, %v5451
      %v6162 = vsel %vm848, %v6131, %v5453
      %v6163 = vsel %vm848, %v6132, %v5455
      %v6164 = vsel %vm848, %v6133, %v5457
      %v6165 = vsel %vm848, %v6134, %v5459
      %v6166 = vsel %vm848, %v6135, %v5461
      %v6167 = vsel %vm848, %v6136, %v5463
      %v6168 = vsel %vm848, %v6137, %v5465
      %v6169 = vsel %vm848, %v6138, %v5467
      %v6170 = vsel %vm848, %v6139, %v5469
      %v6171 = vsel %vm848, %v6140, %v5471
      %v6172 = vsel %vm848, %v6141, %v5473
      %v6173 = vsel %vm848, %v6142, %v5475
      %v6174 = vsel %vm848, %v6143, %v5477
      %v6175 = vsel %vm848, %v6144, %v5479
      %v6176 = vsel %vm848, %v6145, %v5481
      %v6177 = vsel %vm848, %v6146, %v5483
      %v6178 = vsel %vm848, %v6147, %v5485
      %v6179 = vsel %vm848, %v6148, %v5487
      %v6180 = vsel %vm848, %v6149, %v5489
      %v6181 = vsel %vm848, %v6150, %v5491
      %v6182 = vsel %vm848, %v6151, %v5493
      %v6183 = vsel %vm848, %v6152, %v5495
      %v6184 = vsel %vm4487, %v4455, %v5560
      %v6185 = vsel %vm4487, %v6153, %v5562
      %v6186 = vsel %vm4487, %v6154, %v5564
      %v6187 = vsel %vm4487, %v6155, %v5566
      %v6188 = vsel %vm4487, %v6156, %v5568
      %v6189 = vsel %vm4487, %v6157, %v5570
      %v6190 = vsel %vm4487, %v6158, %v5572
      %v6191 = vsel %vm4487, %v6159, %v5574
      %v6192 = vsel %vm4487, %v6160, %v5576
      %v6193 = vsel %vm4487, %v6161, %v5578
      %v6194 = vsel %vm4487, %v6162, %v5580
      %v6195 = vsel %vm4487, %v6163, %v5582
      %v6196 = vsel %vm4487, %v6164, %v5584
      %v6197 = vsel %vm4487, %v6165, %v5586
      %v6198 = vsel %vm4487, %v6166, %v5588
      %v6199 = vsel %vm4487, %v6167, %v5590
      %v6200 = vsel %vm4487, %v6168, %v5592
      %v6201 = vsel %vm4487, %v6169, %v5594
      %v6202 = vsel %vm4487, %v6170, %v5596
      %v6203 = vsel %vm4487, %v6171, %v5598
      %v6204 = vsel %vm4487, %v6172, %v5600
      %v6205 = vsel %vm4487, %v6173, %v5602
      %v6206 = vsel %vm4487, %v6174, %v5604
      %v6207 = vsel %vm4487, %v6175, %v5606
      %v6208 = vsel %vm4487, %v6176, %v5608
      %v6209 = vsel %vm4487, %v6177, %v5610
      %v6210 = vsel %vm4487, %v6178, %v5612
      %v6211 = vsel %vm4487, %v6179, %v5614
      %v6212 = vsel %vm4487, %v6180, %v5616
      %v6213 = vsel %vm4487, %v6181, %v5618
      %v6214 = vsel %vm4487, %v6182, %v5620
      %v6215 = vsel %vm4487, %v6183, %v5622
      %v6216 = vsel %vm2125, %v6184, %v5656
      %v6217 = vsel %vm2125, %v6185, %v5658
      %v6218 = vsel %vm2125, %v6186, %v5660
      %v6219 = vsel %vm2125, %v6187, %v5662
      %v6220 = vsel %vm2125, %v6188, %v5664
      %v6221 = vsel %vm2125, %v6189, %v5666
      %v6222 = vsel %vm2125, %v6190, %v5668
      %v6223 = vsel %vm2125, %v6191, %v5670
      %v6224 = vsel %vm2125, %v6192, %v5672
      %v6225 = vsel %vm2125, %v6193, %v5674
      %v6226 = vsel %vm2125, %v6194, %v5676
      %v6227 = vsel %vm2125, %v6195, %v5678
      %v6228 = vsel %vm2125, %v6196, %v5680
      %v6229 = vsel %vm2125, %v6197, %v5682
      %v6230 = vsel %vm2125, %v6198, %v5684
      %v6231 = vsel %vm2125, %v6199, %v5686
      %v6232 = vsel %vm2125, %v6200, %v5688
      %v6233 = vsel %vm2125, %v6201, %v5690
      %v6234 = vsel %vm2125, %v6202, %v5692
      %v6235 = vsel %vm2125, %v6203, %v5694
      %v6236 = vsel %vm2125, %v6204, %v5696
      %v6237 = vsel %vm2125, %v6205, %v5698
      %v6238 = vsel %vm2125, %v6206, %v5700
      %v6239 = vsel %vm2125, %v6207, %v5702
      %v6240 = vsel %vm2125, %v6208, %v5704
      %v6241 = vsel %vm2125, %v6209, %v5706
      %v6242 = vsel %vm2125, %v6210, %v5708
      %v6243 = vsel %vm2125, %v6211, %v5710
      %v6244 = vsel %vm2125, %v6212, %v5712
      %v6245 = vsel %vm2125, %v6213, %v5714
      %v6246 = vsel %vm2125, %v6214, %v5716
      %v6247 = vsel %vm2125, %v6215, %v5718
      %v6248 = vsel %vm4552, %v6216, %v5754
      %v6249 = vsel %vm4552, %v6217, %v5756
      %v6250 = vsel %vm4552, %v6218, %v5758
      %v6251 = vsel %vm4552, %v6219, %v5760
      %v6252 = vsel %vm4552, %v6220, %v5762
      %v6253 = vsel %vm4552, %v6221, %v5764
      %v6254 = vsel %vm4552, %v6222, %v5766
      %v6255 = vsel %vm4552, %v6223, %v5768
      %v6256 = vsel %vm4552, %v6224, %v5770
      %v6257 = vsel %vm4552, %v6225, %v5772
      %v6258 = vsel %vm4552, %v6226, %v5774
      %v6259 = vsel %vm4552, %v6227, %v5776
      %v6260 = vsel %vm4552, %v6228, %v5778
      %v6261 = vsel %vm4552, %v6229, %v5780
      %v6262 = vsel %vm4552, %v6230, %v5782
      %v6263 = vsel %vm4552, %v6231, %v5784
      %v6264 = vsel %vm4552, %v6232, %v5786
      %v6265 = vsel %vm4552, %v6233, %v5788
      %v6266 = vsel %vm4552, %v6234, %v5790
      %v6267 = vsel %vm4552, %v6235, %v5792
      %v6268 = vsel %vm4552, %v6236, %v5794
      %v6269 = vsel %vm4552, %v6237, %v5796
      %v6270 = vsel %vm4552, %v6238, %v5798
      %v6271 = vsel %vm4552, %v6239, %v5800
      %v6272 = vsel %vm4552, %v6240, %v5802
      %v6273 = vsel %vm4552, %v6241, %v5804
      %v6274 = vsel %vm4552, %v6242, %v5806
      %v6275 = vsel %vm4552, %v6243, %v5808
      %v6276 = vsel %vm4552, %v6244, %v5810
      %v6277 = vsel %vm4552, %v6245, %v5812
      %v6278 = vsel %vm4552, %v6246, %v5814
      %v6279 = vsel %vm4552, %v6247, %v5816
      %v6280 = vsel %vm2158, %v6248, %v5851
      %v6281 = vsel %vm2158, %v6249, %v5853
      %v6282 = vsel %vm2158, %v6250, %v5855
      %v6283 = vsel %vm2158, %v6251, %v5857
      %v6284 = vsel %vm2158, %v6252, %v5859
      %v6285 = vsel %vm2158, %v6253, %v5861
      %v6286 = vsel %vm2158, %v6254, %v5863
      %v6287 = vsel %vm2158, %v6255, %v5865
      %v6288 = vsel %vm2158, %v6256, %v5867
      %v6289 = vsel %vm2158, %v6257, %v5869
      %v6290 = vsel %vm2158, %v6258, %v5871
      %v6291 = vsel %vm2158, %v6259, %v5873
      %v6292 = vsel %vm2158, %v6260, %v5875
      %v6293 = vsel %vm2158, %v6261, %v5877
      %v6294 = vsel %vm2158, %v6262, %v5879
      %v6295 = vsel %vm2158, %v6263, %v5881
      %v6296 = vsel %vm2158, %v6264, %v5883
      %v6297 = vsel %vm2158, %v6265, %v5885
      %v6298 = vsel %vm2158, %v6266, %v5887
      %v6299 = vsel %vm2158, %v6267, %v5889
      %v6300 = vsel %vm2158, %v6268, %v5891
      %v6301 = vsel %vm2158, %v6269, %v5893
      %v6302 = vsel %vm2158, %v6270, %v5895
      %v6303 = vsel %vm2158, %v6271, %v5897
      %v6304 = vsel %vm2158, %v6272, %v5899
      %v6305 = vsel %vm2158, %v6273, %v5901
      %v6306 = vsel %vm2158, %v6274, %v5903
      %v6307 = vsel %vm2158, %v6275, %v5905
      %v6308 = vsel %vm2158, %v6276, %v5907
      %v6309 = vsel %vm2158, %v6277, %v5909
      %v6310 = vsel %vm2158, %v6278, %v5911
      %v6311 = vsel %vm2158, %v6279, %v4204
      %v6312 = vsel %vm4617, %v6280, %v5944
      %v6313 = vsel %vm4617, %v6281, %v5946
      %v6314 = vsel %vm4617, %v6282, %v5948
      %v6315 = vsel %vm4617, %v6283, %v5950
      %v6316 = vsel %vm4617, %v6284, %v5952
      %v6317 = vsel %vm4617, %v6285, %v5954
      %v6318 = vsel %vm4617, %v6286, %v5956
      %v6319 = vsel %vm4617, %v6287, %v5958
      %v6320 = vsel %vm4617, %v6288, %v5960
      %v6321 = vsel %vm4617, %v6289, %v5962
      %v6322 = vsel %vm4617, %v6290, %v5964
      %v6323 = vsel %vm4617, %v6291, %v5966
      %v6324 = vsel %vm4617, %v6292, %v5968
      %v6325 = vsel %vm4617, %v6293, %v5970
      %v6326 = vsel %vm4617, %v6294, %v5972
      %v6327 = vsel %vm4617, %v6295, %v5974
      %v6328 = vsel %vm4617, %v6296, %v5976
      %v6329 = vsel %vm4617, %v6297, %v5978
      %v6330 = vsel %vm4617, %v6298, %v5980
      %v6331 = vsel %vm4617, %v6299, %v5982
      %v6332 = vsel %vm4617, %v6300, %v5984
      %v6333 = vsel %vm4617, %v6301, %v5986
      %v6334 = vsel %vm4617, %v6302, %v5988
      %v6335 = vsel %vm4617, %v6303, %v5990
      %v6336 = vsel %vm4617, %v6304, %v5992
      %v6337 = vsel %vm4617, %v6305, %v5994
      %v6338 = vsel %vm4617, %v6306, %v5996
      %v6339 = vsel %vm4617, %v6307, %v5998
      %v6340 = vsel %vm4617, %v6308, %v6000
      %v6341 = vsel %vm4617, %v6309, %v6002
      %v6342 = vsel %vm4617, %v6310, %v4298
      %v6343 = vsel %vm4617, %v6311, %v4298
      %v6344 = vsel %vm502, %v6312, %v6034
      %v6345 = vsel %vm502, %v6313, %v6036
      %v6346 = vsel %vm502, %v6314, %v6038
      %v6347 = vsel %vm502, %v6315, %v6040
      %v6348 = vsel %vm502, %v6316, %v6042
      %v6349 = vsel %vm502, %v6317, %v6044
      %v6350 = vsel %vm502, %v6318, %v6046
      %v6351 = vsel %vm502, %v6319, %v6048
      %v6352 = vsel %vm502, %v6320, %v6050
      %v6353 = vsel %vm502, %v6321, %v6052
      %v6354 = vsel %vm502, %v6322, %v6054
      %v6355 = vsel %vm502, %v6323, %v6056
      %v6356 = vsel %vm502, %v6324, %v6058
      %v6357 = vsel %vm502, %v6325, %v6060
      %v6358 = vsel %vm502, %v6326, %v6062
      %v6359 = vsel %vm502, %v6327, %v6064
      %v6360 = vsel %vm502, %v6328, %v6066
      %v6361 = vsel %vm502, %v6329, %v6068
      %v6362 = vsel %vm502, %v6330, %v6070
      %v6363 = vsel %vm502, %v6331, %v6072
      %v6364 = vsel %vm502, %v6332, %v6074
      %v6365 = vsel %vm502, %v6333, %v6076
      %v6366 = vsel %vm502, %v6334, %v6078
      %v6367 = vsel %vm502, %v6335, %v6080
      %v6368 = vsel %vm502, %v6336, %v6082
      %v6369 = vsel %vm502, %v6337, %v6084
      %v6370 = vsel %vm502, %v6338, %v6086
      %v6371 = vsel %vm502, %v6339, %v6088
      %v6372 = vsel %vm502, %v6340, %v6090
      %v6373 = vsel %vm502, %v6341, %v6092
      %v6374 = vsel %vm502, %v6342, %v4391
      %v6375 = vsel %vm502, %v6343, %v4391
      %v6376 = vpack.c.bf16 %v6345, %v6344
      %v6377 = vpack.c.bf16 %v6347, %v6346
      %v6378 = vpack.c.bf16 %v6349, %v6348
      %v6379 = vpack.c.bf16 %v6351, %v6350
      %v6380 = vpack.c.bf16 %v6353, %v6352
      %v6381 = vpack.c.bf16 %v6355, %v6354
      %v6382 = vpack.c.bf16 %v6357, %v6356
      %v6383 = vpack.c.bf16 %v6359, %v6358
      %v6384 = vpack.c.bf16 %v6361, %v6360
      %v6385 = vpack.c.bf16 %v6363, %v6362
      %v6386 = vpack.c.bf16 %v6365, %v6364
      %v6387 = vpack.c.bf16 %v6367, %v6366
      %v6388 = vpack.c.bf16 %v6369, %v6368
      %v6389 = vpack.c.bf16 %v6371, %v6370
      %v6390 = vpack.c.bf16 %v6373, %v6372
      %v6391 = vpack.c.bf16 %v6375, %v6374
      %v6392 = vld [vmem:[%s11] sm:$0xf]
      %v6393 = vld [vmem:[%s11 + $0x4] sm:$0xf]
      %v6394 = vld [vmem:[%s11 + $0x8] sm:$0xf]
      %v6395 = vld [vmem:[%s11 + $0xc] sm:$0xf]
      %v6396 = vld [vmem:[%s11 + $0x10] sm:$0xf]
      %v6397 = vld [vmem:[%s11 + $0x14] sm:$0xf]
      %v6398 = vld [vmem:[%s11 + $0x18] sm:$0xf]
      %v6399 = vld [vmem:[%s11 + $0x1c] sm:$0xf]
      %v6400 = vld [vmem:[%s11 + $0x20] sm:$0xf]
      %v6401 = vld [vmem:[%s12] sm:$0x1]
      %v6403 = vlaneseq
      %v6404 = vshrl.u32 %v6403, 7
      %v6405 = vsub.s32 0, %v6404
      %v6406 = vrot.slane %v6401, %v6405
      %v6417 = vunpack.c.l.b16 %v6392
      %v6418 = vunpack.c.l.b16 %v6393
      %v6419 = vunpack.c.l.b16 %v6394
      %v6420 = vunpack.c.l.b16 %v6395
      %v6421 = vunpack.c.l.b16 %v6396
      %v6422 = vunpack.c.l.b16 %v6397
      %v6423 = vunpack.c.l.b16 %v6398
      %v6424 = vunpack.c.l.b16 %v6399
      %v6425 = vunpack.c.l.b16 %v6400
      %v6426 = vpack.c.b16 %v6418, %v6417
      %v6427 = vpack.c.b16 %v6420, %v6419
      %v6428 = vpack.c.b16 %v6422, %v6421
      %v6429 = vpack.c.b16 %v6424, %v6423
      %v6430 = vpack.c.b16 %v6425, %v6425
      %v6436 = vsel %vm4741, %v6376, 0
      %v6439 = vsel %vm4741, %v6377, 0
      %v6442 = vsel %vm4741, %v6378, 0
      %v6445 = vsel %vm4741, %v6379, 0
      %v6448 = vsel %vm4741, %v6380, 0
      %v6451 = vsel %vm4741, %v6381, 0
      %v6454 = vsel %vm4741, %v6382, 0
      %v6457 = vsel %vm4741, %v6383, 0
      %v6460 = vsel %vm4741, %v6384, 0
      %v6463 = vsel %vm4741, %v6385, 0
      %v6466 = vsel %vm4741, %v6386, 0
      %v6469 = vsel %vm4741, %v6387, 0
      %v6472 = vsel %vm4741, %v6388, 0
      %v6475 = vsel %vm4741, %v6389, 0
      %v6478 = vsel %vm4741, %v6390, 0
      %v6481 = vsel %vm4741, %v6391, 0
      %v6484 = vsel %vm4790, %v6430, 0
      %6486 = vmatprep.subr.bf16.mxu0 0
      %6487 = vmatpush1.bf16.msra.mxu0 0
      %6488 = vmatprep.subr.bf16.mxu0 0
      %6489 = vmatpush1.bf16.msra.mxu0 0
      %6490 = vmatprep.subr.bf16.mxu0 0
      %6491 = vmatpush1.bf16.msra.mxu0 0
      %6492 = vmatprep.subr.bf16.mxu0 0
      %6493 = vmatpush1.bf16.msra.mxu0 %v6484
      %6494 = vmatprep.subr.bf16.mxu0 0
      %6495 = vmatpush1.bf16.msra.mxu0 %v6429
      %6496 = vmatprep.subr.bf16.mxu0 0
      %6497 = vmatpush1.bf16.msra.mxu0 %v6428
      %6498 = vmatprep.subr.bf16.mxu0 0
      %6499 = vmatpush1.bf16.msra.mxu0 %v6427
      %6500 = vmatprep.subr.bf16.mxu0 0
      %6501 = vmatpush1.bf16.msra.mxu0 %v6426
      %6502 = vmatprep.subr.bf16.mxu0 0
      %6503 = vmatpush2.bf16.msra.mxu0 0
      %6504 = vmatprep.subr.bf16.mxu0 0
      %6505 = vmatpush2.bf16.msra.mxu0 0
      %6506 = vmatprep.subr.bf16.mxu0 0
      %6507 = vmatpush2.bf16.msra.mxu0 0
      %6508 = vmatprep.subr.bf16.mxu0 0
      %6509 = vmatpush2.bf16.msra.mxu0 0
      %6510 = vmatprep.subr.bf16.mxu0 0
      %6511 = vmatpush2.bf16.msra.mxu0 0
      %6512 = vmatprep.subr.bf16.mxu0 0
      %6513 = vmatpush2.bf16.msra.mxu0 0
      %6514 = vmatprep.subr.bf16.mxu0 0
      %6515 = vmatpush2.bf16.msra.mxu0 0
      %6516 = vmatprep.subr.bf16.mxu0 0
      %6517 = vmatpush2.bf16.msra.mxu0 0
      %6518 = vmatprep.mubr.bf16.mxu0 0
      %6519 = vmatmul.mubr.bf16.gmra.mxu0 %v6436
      %v6520 = vpop.f32.mrf.mxu0
      %v6521 = vadd.f32 %v6406, %v6520
      %v6522 = vpop.f32.mrf.mxu0
      %v6523 = vpop.f32.mrf.mxu0
      %v6524 = vadd.f32 %v6406, %v6523
      %v6525 = vpop.f32.mrf.mxu0
      %6526 = vmatprep.mubr.bf16.mxu0 0
      %6527 = vmatmul.mubr.bf16.gmra.mxu0 %v6439
      %v6528 = vpop.f32.mrf.mxu0
      %v6529 = vadd.f32 %v6406, %v6528
      %v6530 = vpop.f32.mrf.mxu0
      %v6531 = vpop.f32.mrf.mxu0
      %v6532 = vadd.f32 %v6406, %v6531
      %v6533 = vpop.f32.mrf.mxu0
      %6534 = vmatprep.mubr.bf16.mxu0 0
      %6535 = vmatmul.mubr.bf16.gmra.mxu0 %v6442
      %v6536 = vpop.f32.mrf.mxu0
      %v6537 = vadd.f32 %v6406, %v6536
      %v6538 = vpop.f32.mrf.mxu0
      %v6539 = vpop.f32.mrf.mxu0
      %v6540 = vadd.f32 %v6406, %v6539
      %v6541 = vpop.f32.mrf.mxu0
      %6542 = vmatprep.mubr.bf16.mxu0 0
      %6543 = vmatmul.mubr.bf16.gmra.mxu0 %v6445
      %v6544 = vpop.f32.mrf.mxu0
      %v6545 = vadd.f32 %v6406, %v6544
      %v6546 = vpop.f32.mrf.mxu0
      %v6547 = vpop.f32.mrf.mxu0
      %v6548 = vadd.f32 %v6406, %v6547
      %v6549 = vpop.f32.mrf.mxu0
      %6550 = vmatprep.mubr.bf16.mxu0 0
      %6551 = vmatmul.mubr.bf16.gmra.mxu0 %v6448
      %v6552 = vpop.f32.mrf.mxu0
      %v6553 = vadd.f32 %v6406, %v6552
      %v6554 = vpop.f32.mrf.mxu0
      %v6555 = vpop.f32.mrf.mxu0
      %v6556 = vadd.f32 %v6406, %v6555
      %v6557 = vpop.f32.mrf.mxu0
      %6558 = vmatprep.mubr.bf16.mxu0 0
      %6559 = vmatmul.mubr.bf16.gmra.mxu0 %v6451
      %v6560 = vpop.f32.mrf.mxu0
      %v6561 = vadd.f32 %v6406, %v6560
      %v6562 = vpop.f32.mrf.mxu0
      %v6563 = vpop.f32.mrf.mxu0
      %v6564 = vadd.f32 %v6406, %v6563
      %v6565 = vpop.f32.mrf.mxu0
      %6566 = vmatprep.mubr.bf16.mxu0 0
      %6567 = vmatmul.mubr.bf16.gmra.mxu0 %v6454
      %v6568 = vpop.f32.mrf.mxu0
      %v6569 = vadd.f32 %v6406, %v6568
      %v6570 = vpop.f32.mrf.mxu0
      %v6571 = vpop.f32.mrf.mxu0
      %v6572 = vadd.f32 %v6406, %v6571
      %v6573 = vpop.f32.mrf.mxu0
      %6574 = vmatprep.mubr.bf16.mxu0 0
      %6575 = vmatmul.mubr.bf16.gmra.mxu0 %v6457
      %v6576 = vpop.f32.mrf.mxu0
      %v6577 = vadd.f32 %v6406, %v6576
      %v6578 = vpop.f32.mrf.mxu0
      %v6579 = vpop.f32.mrf.mxu0
      %v6580 = vadd.f32 %v6406, %v6579
      %v6581 = vpop.f32.mrf.mxu0
      %6582 = vmatprep.mubr.bf16.mxu0 0
      %6583 = vmatmul.mubr.bf16.gmra.mxu0 %v6460
      %v6584 = vpop.f32.mrf.mxu0
      %v6585 = vadd.f32 %v6406, %v6584
      %v6586 = vpop.f32.mrf.mxu0
      %v6587 = vpop.f32.mrf.mxu0
      %v6588 = vadd.f32 %v6406, %v6587
      %v6589 = vpop.f32.mrf.mxu0
      %6590 = vmatprep.mubr.bf16.mxu0 0
      %6591 = vmatmul.mubr.bf16.gmra.mxu0 %v6463
      %v6592 = vpop.f32.mrf.mxu0
      %v6593 = vadd.f32 %v6406, %v6592
      %v6594 = vpop.f32.mrf.mxu0
      %v6595 = vpop.f32.mrf.mxu0
      %v6596 = vadd.f32 %v6406, %v6595
      %v6597 = vpop.f32.mrf.mxu0
      %6598 = vmatprep.mubr.bf16.mxu0 0
      %6599 = vmatmul.mubr.bf16.gmra.mxu0 %v6466
      %v6600 = vpop.f32.mrf.mxu0
      %v6601 = vadd.f32 %v6406, %v6600
      %v6602 = vpop.f32.mrf.mxu0
      %v6603 = vpop.f32.mrf.mxu0
      %v6604 = vadd.f32 %v6406, %v6603
      %v6605 = vpop.f32.mrf.mxu0
      %6606 = vmatprep.mubr.bf16.mxu0 0
      %6607 = vmatmul.mubr.bf16.gmra.mxu0 %v6469
      %v6608 = vpop.f32.mrf.mxu0
      %v6609 = vadd.f32 %v6406, %v6608
      %v6610 = vpop.f32.mrf.mxu0
      %v6611 = vpop.f32.mrf.mxu0
      %v6612 = vadd.f32 %v6406, %v6611
      %v6613 = vpop.f32.mrf.mxu0
      %6614 = vmatprep.mubr.bf16.mxu0 0
      %6615 = vmatmul.mubr.bf16.gmra.mxu0 %v6472
      %v6616 = vpop.f32.mrf.mxu0
      %v6617 = vadd.f32 %v6406, %v6616
      %v6618 = vpop.f32.mrf.mxu0
      %v6619 = vpop.f32.mrf.mxu0
      %v6620 = vadd.f32 %v6406, %v6619
      %v6621 = vpop.f32.mrf.mxu0
      %6622 = vmatprep.mubr.bf16.mxu0 0
      %6623 = vmatmul.mubr.bf16.gmra.mxu0 %v6475
      %v6624 = vpop.f32.mrf.mxu0
      %v6625 = vadd.f32 %v6406, %v6624
      %v6626 = vpop.f32.mrf.mxu0
      %v6627 = vpop.f32.mrf.mxu0
      %v6628 = vadd.f32 %v6406, %v6627
      %v6629 = vpop.f32.mrf.mxu0
      %6630 = vmatprep.mubr.bf16.mxu0 0
      %6631 = vmatmul.mubr.bf16.gmra.mxu0 %v6478
      %v6632 = vpop.f32.mrf.mxu0
      %v6633 = vadd.f32 %v6406, %v6632
      %v6634 = vpop.f32.mrf.mxu0
      %v6635 = vpop.f32.mrf.mxu0
      %v6636 = vadd.f32 %v6406, %v6635
      %v6637 = vpop.f32.mrf.mxu0
      %6638 = vmatprep.mubr.bf16.mxu0 0
      %6639 = vmatmul.mubr.bf16.gmra.mxu0 %v6481
      %v6640 = vpop.f32.mrf.mxu0
      %v6641 = vadd.f32 %v6406, %v6640
      %v6642 = vpop.f32.mrf.mxu0
      %v6643 = vpop.f32.mrf.mxu0
      %v6644 = vadd.f32 %v6406, %v6643
      %v6645 = vpop.f32.mrf.mxu0
      %6646 = vdwg.mxu0
      %v6647 = vsub.f32 0.0, %v6521
      %v6648 = vsub.f32 0.0, %v6524
      %v6649 = vsub.f32 0.0, %v6529
      %v6650 = vsub.f32 0.0, %v6532
      %v6651 = vsub.f32 0.0, %v6537
      %v6652 = vsub.f32 0.0, %v6540
      %v6653 = vsub.f32 0.0, %v6545
      %v6654 = vsub.f32 0.0, %v6548
      %v6655 = vsub.f32 0.0, %v6553
      %v6656 = vsub.f32 0.0, %v6556
      %v6657 = vsub.f32 0.0, %v6561
      %v6658 = vsub.f32 0.0, %v6564
      %v6659 = vsub.f32 0.0, %v6569
      %v6660 = vsub.f32 0.0, %v6572
      %v6661 = vsub.f32 0.0, %v6577
      %v6662 = vsub.f32 0.0, %v6580
      %v6663 = vsub.f32 0.0, %v6585
      %v6664 = vsub.f32 0.0, %v6588
      %v6665 = vsub.f32 0.0, %v6593
      %v6666 = vsub.f32 0.0, %v6596
      %v6667 = vsub.f32 0.0, %v6601
      %v6668 = vsub.f32 0.0, %v6604
      %v6669 = vsub.f32 0.0, %v6609
      %v6670 = vsub.f32 0.0, %v6612
      %v6671 = vsub.f32 0.0, %v6617
      %v6672 = vsub.f32 0.0, %v6620
      %v6673 = vsub.f32 0.0, %v6625
      %v6674 = vsub.f32 0.0, %v6628
      %v6675 = vsub.f32 0.0, %v6633
      %v6676 = vsub.f32 0.0, %v6636
      %v6677 = vsub.f32 0.0, %v6641
      %v6678 = vsub.f32 0.0, %v6644
      %v6679 = vmul.f32 %v6647, 1.442695
      %v6680 = vpow.pop %v6679
      %v6681 = vmul.f32 %v6648, 1.442695
      %v6682 = vpow.pop %v6681
      %v6683 = vmul.f32 %v6649, 1.442695
      %v6684 = vpow.pop %v6683
      %v6685 = vmul.f32 %v6650, 1.442695
      %v6686 = vpow.pop %v6685
      %v6687 = vmul.f32 %v6651, 1.442695
      %v6688 = vpow.pop %v6687
      %v6689 = vmul.f32 %v6652, 1.442695
      %v6690 = vpow.pop %v6689
      %v6691 = vmul.f32 %v6653, 1.442695
      %v6692 = vpow.pop %v6691
      %v6693 = vmul.f32 %v6654, 1.442695
      %v6694 = vpow.pop %v6693
      %v6695 = vmul.f32 %v6655, 1.442695
      %v6696 = vpow.pop %v6695
      %v6697 = vmul.f32 %v6656, 1.442695
      %v6698 = vpow.pop %v6697
      %v6699 = vmul.f32 %v6657, 1.442695
      %v6700 = vpow.pop %v6699
      %v6701 = vmul.f32 %v6658, 1.442695
      %v6702 = vpow.pop %v6701
      %v6703 = vmul.f32 %v6659, 1.442695
      %v6704 = vpow.pop %v6703
      %v6705 = vmul.f32 %v6660, 1.442695
      %v6706 = vpow.pop %v6705
      %v6707 = vmul.f32 %v6661, 1.442695
      %v6708 = vpow.pop %v6707
      %v6709 = vmul.f32 %v6662, 1.442695
      %v6710 = vpow.pop %v6709
      %v6711 = vmul.f32 %v6663, 1.442695
      %v6712 = vpow.pop %v6711
      %v6713 = vmul.f32 %v6664, 1.442695
      %v6714 = vpow.pop %v6713
      %v6715 = vmul.f32 %v6665, 1.442695
      %v6716 = vpow.pop %v6715
      %v6717 = vmul.f32 %v6666, 1.442695
      %v6718 = vpow.pop %v6717
      %v6719 = vmul.f32 %v6667, 1.442695
      %v6720 = vpow.pop %v6719
      %v6721 = vmul.f32 %v6668, 1.442695
      %v6722 = vpow.pop %v6721
      %v6723 = vmul.f32 %v6669, 1.442695
      %v6724 = vpow.pop %v6723
      %v6725 = vmul.f32 %v6670, 1.442695
      %v6726 = vpow.pop %v6725
      %v6727 = vmul.f32 %v6671, 1.442695
      %v6728 = vpow.pop %v6727
      %v6729 = vmul.f32 %v6672, 1.442695
      %v6730 = vpow.pop %v6729
      %v6731 = vmul.f32 %v6673, 1.442695
      %v6732 = vpow.pop %v6731
      %v6733 = vmul.f32 %v6674, 1.442695
      %v6734 = vpow.pop %v6733
      %v6735 = vmul.f32 %v6675, 1.442695
      %v6736 = vpow.pop %v6735
      %v6737 = vmul.f32 %v6676, 1.442695
      %v6738 = vpow.pop %v6737
      %v6739 = vmul.f32 %v6677, 1.442695
      %v6740 = vpow.pop %v6739
      %v6741 = vmul.f32 %v6678, 1.442695
      %v6742 = vpow.pop %v6741
      %v6743 = vadd.f32 %v6680, 1.0
      %v6744 = vadd.f32 %v6682, 1.0
      %v6745 = vadd.f32 %v6684, 1.0
      %v6746 = vadd.f32 %v6686, 1.0
      %v6747 = vadd.f32 %v6688, 1.0
      %v6748 = vadd.f32 %v6690, 1.0
      %v6749 = vadd.f32 %v6692, 1.0
      %v6750 = vadd.f32 %v6694, 1.0
      %v6751 = vadd.f32 %v6696, 1.0
      %v6752 = vadd.f32 %v6698, 1.0
      %v6753 = vadd.f32 %v6700, 1.0
      %v6754 = vadd.f32 %v6702, 1.0
      %v6755 = vadd.f32 %v6704, 1.0
      %v6756 = vadd.f32 %v6706, 1.0
      %v6757 = vadd.f32 %v6708, 1.0
      %v6758 = vadd.f32 %v6710, 1.0
      %v6759 = vadd.f32 %v6712, 1.0
      %v6760 = vadd.f32 %v6714, 1.0
      %v6761 = vadd.f32 %v6716, 1.0
      %v6762 = vadd.f32 %v6718, 1.0
      %v6763 = vadd.f32 %v6720, 1.0
      %v6764 = vadd.f32 %v6722, 1.0
      %v6765 = vadd.f32 %v6724, 1.0
      %v6766 = vadd.f32 %v6726, 1.0
      %v6767 = vadd.f32 %v6728, 1.0
      %v6768 = vadd.f32 %v6730, 1.0
      %v6769 = vadd.f32 %v6732, 1.0
      %v6770 = vadd.f32 %v6734, 1.0
      %v6771 = vadd.f32 %v6736, 1.0
      %v6772 = vadd.f32 %v6738, 1.0
      %v6773 = vadd.f32 %v6740, 1.0
      %v6774 = vadd.f32 %v6742, 1.0
      %v6775 = vrcp.pop %v6743
      %v6776 = vmul.f32 1.0, %v6775
      %v6777 = vrcp.pop %v6744
      %v6778 = vmul.f32 1.0, %v6777
      %v6779 = vrcp.pop %v6745
      %v6780 = vmul.f32 1.0, %v6779
      %v6781 = vrcp.pop %v6746
      %v6782 = vmul.f32 1.0, %v6781
      %v6783 = vrcp.pop %v6747
      %v6784 = vmul.f32 1.0, %v6783
      %v6785 = vrcp.pop %v6748
      %v6786 = vmul.f32 1.0, %v6785
      %v6787 = vrcp.pop %v6749
      %v6788 = vmul.f32 1.0, %v6787
      %v6789 = vrcp.pop %v6750
      %v6790 = vmul.f32 1.0, %v6789
      %v6791 = vrcp.pop %v6751
      %v6792 = vmul.f32 1.0, %v6791
      %v6793 = vrcp.pop %v6752
      %v6794 = vmul.f32 1.0, %v6793
      %v6795 = vrcp.pop %v6753
      %v6796 = vmul.f32 1.0, %v6795
      %v6797 = vrcp.pop %v6754
      %v6798 = vmul.f32 1.0, %v6797
      %v6799 = vrcp.pop %v6755
      %v6800 = vmul.f32 1.0, %v6799
      %v6801 = vrcp.pop %v6756
      %v6802 = vmul.f32 1.0, %v6801
      %v6803 = vrcp.pop %v6757
      %v6804 = vmul.f32 1.0, %v6803
      %v6805 = vrcp.pop %v6758
      %v6806 = vmul.f32 1.0, %v6805
      %v6807 = vrcp.pop %v6759
      %v6808 = vmul.f32 1.0, %v6807
      %v6809 = vrcp.pop %v6760
      %v6810 = vmul.f32 1.0, %v6809
      %v6811 = vrcp.pop %v6761
      %v6812 = vmul.f32 1.0, %v6811
      %v6813 = vrcp.pop %v6762
      %v6814 = vmul.f32 1.0, %v6813
      %v6815 = vrcp.pop %v6763
      %v6816 = vmul.f32 1.0, %v6815
      %v6817 = vrcp.pop %v6764
      %v6818 = vmul.f32 1.0, %v6817
      %v6819 = vrcp.pop %v6765
      %v6820 = vmul.f32 1.0, %v6819
      %v6821 = vrcp.pop %v6766
      %v6822 = vmul.f32 1.0, %v6821
      %v6823 = vrcp.pop %v6767
      %v6824 = vmul.f32 1.0, %v6823
      %v6825 = vrcp.pop %v6768
      %v6826 = vmul.f32 1.0, %v6825
      %v6827 = vrcp.pop %v6769
      %v6828 = vmul.f32 1.0, %v6827
      %v6829 = vrcp.pop %v6770
      %v6830 = vmul.f32 1.0, %v6829
      %v6831 = vrcp.pop %v6771
      %v6832 = vmul.f32 1.0, %v6831
      %v6833 = vrcp.pop %v6772
      %v6834 = vmul.f32 1.0, %v6833
      %v6835 = vrcp.pop %v6773
      %v6836 = vmul.f32 1.0, %v6835
      %v6837 = vrcp.pop %v6774
      %v6838 = vmul.f32 1.0, %v6837
      %vm6839 = vcmask 23552
      %6840 = vst.msk [vmem:[%s460] sm:$0xff] %vm6839, %v6776
      %6841 = vst.msk [vmem:[%s460 + $0x8] sm:$0xff] %vm6839, %v6778
      %6842 = vst.msk [vmem:[%s460 + $0x10] sm:$0xff] %vm6839, %v6780
      %6843 = vst.msk [vmem:[%s460 + $0x18] sm:$0xff] %vm6839, %v6782
      %6844 = vst.msk [vmem:[%s460 + $0x20] sm:$0xff] %vm6839, %v6784
      %6845 = vst.msk [vmem:[%s460 + $0x28] sm:$0xff] %vm6839, %v6786
      %6846 = vst.msk [vmem:[%s460 + $0x30] sm:$0xff] %vm6839, %v6788
      %6847 = vst.msk [vmem:[%s460 + $0x38] sm:$0xff] %vm6839, %v6790
      %6848 = vst.msk [vmem:[%s460 + $0x40] sm:$0xff] %vm6839, %v6792
      %6849 = vst.msk [vmem:[%s460 + $0x48] sm:$0xff] %vm6839, %v6794
      %6850 = vst.msk [vmem:[%s460 + $0x50] sm:$0xff] %vm6839, %v6796
      %6851 = vst.msk [vmem:[%s460 + $0x58] sm:$0xff] %vm6839, %v6798
      %6852 = vst.msk [vmem:[%s460 + $0x60] sm:$0xff] %vm6839, %v6800
      %6853 = vst.msk [vmem:[%s460 + $0x68] sm:$0xff] %vm6839, %v6802
      %6854 = vst.msk [vmem:[%s460 + $0x70] sm:$0xff] %vm6839, %v6804
      %6855 = vst.msk [vmem:[%s460 + $0x78] sm:$0xff] %vm6839, %v6806
      %6856 = vst.msk [vmem:[%s460 + $0x80] sm:$0xff] %vm6839, %v6808
      %6857 = vst.msk [vmem:[%s460 + $0x88] sm:$0xff] %vm6839, %v6810
      %6858 = vst.msk [vmem:[%s460 + $0x90] sm:$0xff] %vm6839, %v6812
      %6859 = vst.msk [vmem:[%s460 + $0x98] sm:$0xff] %vm6839, %v6814
      %6860 = vst.msk [vmem:[%s460 + $0xa0] sm:$0xff] %vm6839, %v6816
      %6861 = vst.msk [vmem:[%s460 + $0xa8] sm:$0xff] %vm6839, %v6818
      %6862 = vst.msk [vmem:[%s460 + $0xb0] sm:$0xff] %vm6839, %v6820
      %6863 = vst.msk [vmem:[%s460 + $0xb8] sm:$0xff] %vm6839, %v6822
      %6864 = vst.msk [vmem:[%s460 + $0xc0] sm:$0xff] %vm6839, %v6824
      %6865 = vst.msk [vmem:[%s460 + $0xc8] sm:$0xff] %vm6839, %v6826
      %6866 = vst.msk [vmem:[%s460 + $0xd0] sm:$0xff] %vm6839, %v6828
      %6867 = vst.msk [vmem:[%s460 + $0xd8] sm:$0xff] %vm6839, %v6830
      %6868 = vst.msk [vmem:[%s460 + $0xe0] sm:$0xff] %vm6839, %v6832
      %6869 = vst.msk [vmem:[%s460 + $0xe8] sm:$0xff] %vm6839, %v6834
      %6870 = vst.msk [vmem:[%s460 + $0xf0] sm:$0xff] %vm6839, %v6836
      %6871 = vst.msk [vmem:[%s460 + $0xf8] sm:$0xff] %vm6839, %v6838
      %p6872 = scmp.lt.s32.totalorder %s24, 1
      %s6873 = scalar_select %p6872, %s24, 1
      %s6874 = smul.addr %s6873, 32
      %s6875 = smul.addr %s6874, 8
      %s6876 = scalar_lea.vmem %s13, %s6875
      // Predicated region
      $region73: #{_lambda_.5} parent=71 // pred_check
        %p6877 = pneg %p325
      $region74: #{_lambda_.5} parent=71 // pred_check_branch
        %6879 = sbr.rel (%p6877) target = $region76
      $region75: #{_lambda_.5} parent=71 // pred_region
        _
      $region76: #{_lambda_.5} parent=71 // pred_fallthru
        _
    $region72: #{_lambda_.5} parent=5 // pred_fallthru
      _
    %p6880 = scmp.le.s32.totalorder 2, %s19
    // Predicated region
    $region77: #{_lambda_.5} parent=5 // pred_check
      %p6881 = pneg %p6880
    $region78: #{_lambda_.5} parent=5 // pred_check_branch
      %6883 = sbr.rel (%p6881) target = $region80
    $region79: #{_lambda_.5} parent=5 // pred_region
      %s6884 = ssub.s32 %s19, 2
      // Predicated region
      $region81: #{_lambda_.5} parent=79 // pred_check
        %p6885 = pneg %p331
      $region82: #{_lambda_.5} parent=79 // pred_check_branch
        %6887 = sbr.rel (%p6885) target = $region84
      $region83: #{_lambda_.5} parent=79 // pred_region
        %p6888 = scmp.lt.s32.totalorder %s25, 1
        %s6889 = scalar_select %p6888, %s25, 1
        %s6890 = smul.addr %s6889, 32
        %s6891 = smul.addr %s6890, 8
        %s6892 = scalar_lea.vmem %s13, %s6891
      $region84: #{_lambda_.5} parent=79 // pred_fallthru
        _
    $region80: #{_lambda_.5} parent=5 // pred_fallthru
      _
  $region6: #{_lambda_.5} parent=0 // loop_footer
    %s23 = sadd.s32 1, %s19
  $region7: #{_lambda_.5} parent=0 // loop_footer_branch
    %18 = sbr.rel target = $region3
  $region8: #{_lambda_.5} parent=0 // loop_exit
    _

</llo_original>
